<compile_context>
chip_gen: v7x
topology: tpu7x:2x2x1
jax: 0.10.0
libtpu: 0.0.40
codegen_flags: <defaults>
</compile_context>

<pallas_src>
import functools

import jax
import jax.numpy as jnp
from jax.experimental import pallas as pl
from jax.experimental.pallas import tpu as pltpu

IN_FEATURES = 4096
HIDDEN = 1200
HIDDEN_PAD = 1280          # 1200 padded up to a multiple of 128 (lane-aligned)


def _round_up(x, m):
    return ((x + m - 1) // m) * m


def _fused_mlp_kernel(x_ref, w1_ref, b1_ref, w2_ref, b2_ref, w3_ref, b3_ref,
                      o_ref, h1_acc):
    """Fused relu(fc1) -> relu(fc2) -> fc3.

    Grid axis 0 walks K-tiles of fc1 (the dominant weight stream). fc1's output
    is accumulated in f32 VMEM scratch; on the last K step the small fc2/fc3
    matmuls run against VMEM-resident weights and the result is stored once.
    """
    k = pl.program_id(0)

    @pl.when(k == 0)
    def _():
        h1_acc[...] = jnp.zeros_like(h1_acc)

    # bf16 x bf16 -> f32 accumulate on the MXU.
    h1_acc[...] += jnp.dot(x_ref[...], w1_ref[...],
                           preferred_element_type=jnp.float32)

    @pl.when(k == pl.num_programs(0) - 1)
    def _():
        # f32 bias + relu epilogue (cheap; v5e-friendly — no bf16 VALU there).
        h1 = jnp.maximum(h1_acc[...] + b1_ref[...], 0.0)
        h2 = jnp.dot(h1.astype(jnp.bfloat16), w2_ref[...],
                     preferred_element_type=jnp.float32)
        h2 = jnp.maximum(h2 + b2_ref[...], 0.0)
        h3 = jnp.dot(h2.astype(jnp.bfloat16), w3_ref[...],
                     preferred_element_type=jnp.float32)
        o_ref[...] = (h3 + b3_ref[...]).astype(o_ref.dtype)


def fused_mlp_encoder(h_bf16, params, *, tk=1024):
    """h_bf16: (Mp, 4096) bf16, Mp a multiple of 16.  Returns (Mp, Npad) f32."""
    Mp, K = h_bf16.shape
    H = params["w1"].shape[1]          # 1280
    Np = params["w3"].shape[1]         # padded output dim (multiple of 128)
    assert K % tk == 0, (K, tk)
    nk = K // tk

    return pl.pallas_call(
        _fused_mlp_kernel,
        out_shape=jax.ShapeDtypeStruct((Mp, Np), jnp.float32),
        grid_spec=pltpu.PrefetchScalarGridSpec(
            num_scalar_prefetch=0,
            grid=(nk,),
            in_specs=[
                pl.BlockSpec((Mp, tk), lambda k: (0, k)),   # x tile      (bf16)
                pl.BlockSpec((tk, H), lambda k: (k, 0)),    # w1 tile     (bf16, streamed)
                pl.BlockSpec((1, H), lambda k: (0, 0)),     # b1          (f32, resident)
                pl.BlockSpec((H, H), lambda k: (0, 0)),     # w2          (bf16, resident)
                pl.BlockSpec((1, H), lambda k: (0, 0)),     # b2
                pl.BlockSpec((H, Np), lambda k: (0, 0)),    # w3          (bf16, resident)
                pl.BlockSpec((1, Np), lambda k: (0, 0)),    # b3
            ],
            out_specs=pl.BlockSpec((Mp, Np), lambda k: (0, 0)),
            scratch_shapes=[pltpu.VMEM((Mp, H), jnp.float32)],  # fc1 accumulator
        ),
        compiler_params=pltpu.CompilerParams(
            dimension_semantics=("arbitrary",),      # K is a reduction axis
            vmem_limit_bytes=32 * 1024 * 1024,       # ~13 MB actually used
        ),
    )(h_bf16, params["w1"], params["b1"], params["w2"], params["b2"],
      params["w3"], params["b3"])


def init_mlp_encoder_params(key, output_dim):
    """torch.nn.Linear-style U(-1/sqrt(in), 1/sqrt(in)) init.

    Weights are stored transposed as (in, out), zero-padded to lane-aligned
    shapes, and cast to bf16.  Biases stay f32 (padded with zeros).
    """
    out_pad = _round_up(max(output_dim, 1), 128)

    def linear_init(k, fan_in, fan_out, pad_in, pad_out):
        kw, kb = jax.random.split(k)
        bound = 1.0 / jnp.sqrt(fan_in)
        w = jax.random.uniform(kw, (fan_in, fan_out), jnp.float32, -bound, bound)
        b = jax.random.uniform(kb, (fan_out,), jnp.float32, -bound, bound)
        w = jnp.pad(w, ((0, pad_in - fan_in), (0, pad_out - fan_out)))
        b = jnp.pad(b, (0, pad_out - fan_out)).reshape(1, pad_out)
        return w.astype(jnp.bfloat16), b.astype(jnp.float32)

    k1, k2, k3 = jax.random.split(key, 3)
    w1, b1 = linear_init(k1, IN_FEATURES, HIDDEN, IN_FEATURES, HIDDEN_PAD)
    w2, b2 = linear_init(k2, HIDDEN, HIDDEN, HIDDEN_PAD, HIDDEN_PAD)
    w3, b3 = linear_init(k3, HIDDEN, output_dim, HIDDEN_PAD, out_pad)
    # conv_z (Conv2d(64, output_dim, 4)) is unused in forward(); intentionally skipped.
    return {"w1": w1, "b1": b1, "w2": w2, "b2": b2, "w3": w3, "b3": b3}


def mlp_encoder_forward(x, params, output_dim):
    """Pallas implementation of MLPEncoder.forward.  x: NCHW with C*H*W == 4096."""
    B = x.shape[0]
    h = x.reshape(-1, IN_FEATURES)                 # == x.view(-1, 64*64)
    M = h.shape[0]

    # Pad rows to a bf16-friendly sublane multiple (16).  At tiny batch the kernel
    # is pure weight-streaming; larger batches amortize the same weight stream.
    Mp = _round_up(max(M, 16), 16)
    if Mp != M:
        h = jnp.pad(h, ((0, Mp - M), (0, 0)))
    h = h.astype(jnp.bfloat16)

    out = fused_mlp_encoder(h, params)             # (Mp, out_pad) f32
    z = out[:M, :output_dim].reshape(B, -1)        # == h.view(x.size(0), output_dim)
    return z


def mlp_encoder_reference(x, params, output_dim):
    """Plain-JAX reference with the same bf16-weight / f32-accumulate numerics."""
    h = x.reshape(-1, IN_FEATURES).astype(jnp.bfloat16)
    h1 = jnp.dot(h, params["w1"], preferred_element_type=jnp.float32) + params["b1"]
    h1 = jnp.maximum(h1, 0.0)
    h2 = jnp.dot(h1.astype(jnp.bfloat16), params["w2"],
                 preferred_element_type=jnp.float32) + params["b2"]
    h2 = jnp.maximum(h2, 0.0)
    h3 = jnp.dot(h2.astype(jnp.bfloat16), params["w3"],
                 preferred_element_type=jnp.float32) + params["b3"]
    return h3[:, :output_dim].reshape(x.shape[0], -1)


if __name__ == "__main__":
    output_dim = 20
    key = jax.random.PRNGKey(0)
    kx, kp = jax.random.split(key)

    # MLPEncoder flattens to 4096 features, so spatial must be 64x64 (NCHW, C=1).
    x = jax.random.normal(kx, (2, 1, 64, 64), dtype=jnp.float32)
    params = init_mlp_encoder_params(kp, output_dim)

    fwd = jax.jit(functools.partial(mlp_encoder_forward, output_dim=output_dim))
    z = jax.block_until_ready(fwd(x, params))

    z_ref = mlp_encoder_reference(x, params, output_dim)
    assert z.shape == (2, output_dim), z.shape
    assert jnp.allclose(z, z_ref, atol=2e-3, rtol=2e-3), "mismatch vs reference"

    print("KERNEL_OK")
</pallas_src>

<mosaic_0001>
module attributes {stable_mosaic.version = 11 : i64} {
  func.func @_fused_mlp_kernel(%arg0: i32, %arg1: memref<16x1024xbf16, #tpu.memory_space<vmem>>, %arg2: memref<1024x1280xbf16, #tpu.memory_space<vmem>>, %arg3: memref<1x1280xf32, #tpu.memory_space<vmem>>, %arg4: memref<1280x1280xbf16, #tpu.memory_space<vmem>>, %arg5: memref<1x1280xf32, #tpu.memory_space<vmem>>, %arg6: memref<1280x128xbf16, #tpu.memory_space<vmem>>, %arg7: memref<1x128xf32, #tpu.memory_space<vmem>>, %arg8: memref<16x128xf32, #tpu.memory_space<vmem>>, %arg9: memref<16x1280xf32, #tpu.memory_space<vmem>>) attributes {dimension_semantics = [#tpu.dimension_semantics<arbitrary>], iteration_bounds = array<i64: 4>, scalar_prefetch = 0 : i64, scratch_operands = 1 : i64, tpu.core_type = #tpu.core_type<tc>, window_params = [{transform_indices = @transform_0, window_bounds = array<i64: 16, 1024>}, {transform_indices = @transform_1, window_bounds = array<i64: 1024, 1280>}, {pipeline_mode = #tpu.pipeline_mode<synchronous>, transform_indices = @transform_2, window_bounds = array<i64: 1, 1280>}, {pipeline_mode = #tpu.pipeline_mode<synchronous>, transform_indices = @transform_3, window_bounds = array<i64: 1280, 1280>}, {pipeline_mode = #tpu.pipeline_mode<synchronous>, transform_indices = @transform_4, window_bounds = array<i64: 1, 1280>}, {pipeline_mode = #tpu.pipeline_mode<synchronous>, transform_indices = @transform_5, window_bounds = array<i64: 1280, 128>}, {pipeline_mode = #tpu.pipeline_mode<synchronous>, transform_indices = @transform_6, window_bounds = array<i64: 1, 128>}, {pipeline_mode = #tpu.pipeline_mode<synchronous>, transform_indices = @transform_7, window_bounds = array<i64: 16, 128>}]} {
    %c0_i32 = arith.constant 0 : i32
    %0 = arith.cmpi eq, %arg0, %c0_i32 : i32
    %1 = arith.extui %0 : i1 to i32
    %c0_i32_0 = arith.constant 0 : i32
    %2 = arith.cmpi ne, %1, %c0_i32_0 : i32
    scf.if %2 {
      %cst_9 = arith.constant 0.000000e+00 : f32
      %12 = vector.broadcast %cst_9 : f32 to vector<16x1280xf32>
      %c0_10 = arith.constant 0 : index
      %c0_11 = arith.constant 0 : index
      %13 = vector.load %arg9[%c0_10, %c0_11] : memref<16x1280xf32, #tpu.memory_space<vmem>>, vector<16x1280xf32>
      tpu.vector_store %arg9[%c0_10, %c0_11], %12 {strides = array<i32>} : memref<16x1280xf32, #tpu.memory_space<vmem>>, vector<16x1280xf32>,
    } else {
    }
    %c0 = arith.constant 0 : index
    %c0_1 = arith.constant 0 : index
    %3 = vector.load %arg9[%c0, %c0_1] : memref<16x1280xf32, #tpu.memory_space<vmem>>, vector<16x1280xf32>
    %c0_2 = arith.constant 0 : index
    %c0_3 = arith.constant 0 : index
    %4 = vector.load %arg1[%c0_2, %c0_3] : memref<16x1024xbf16, #tpu.memory_space<vmem>>, vector<16x1024xbf16>
    %c0_4 = arith.constant 0 : index
    %c0_5 = arith.constant 0 : index
    %5 = vector.load %arg2[%c0_4, %c0_5] : memref<1024x1280xbf16, #tpu.memory_space<vmem>>, vector<1024x1280xbf16>
    %cst = arith.constant dense<0.000000e+00> : vector<16x1280xf32>
    %6 = tpu.matmul %4, %5, %cst {dimension_numbers = #tpu.dot_dimension_numbers<[1], [0], [0], [1], [0, 0, 1, 1], [], []>} : vector<16x1024xbf16>, vector<1024x1280xbf16>, vector<16x1280xf32> -> vector<16x1280xf32>
    %7 = arith.addf %3, %6 : vector<16x1280xf32>
    %c0_6 = arith.constant 0 : index
    %c0_7 = arith.constant 0 : index
    %8 = vector.load %arg9[%c0_6, %c0_7] : memref<16x1280xf32, #tpu.memory_space<vmem>>, vector<16x1280xf32>
    tpu.vector_store %arg9[%c0_6, %c0_7], %7 {strides = array<i32>} : memref<16x1280xf32, #tpu.memory_space<vmem>>, vector<16x1280xf32>,
    %c3_i32 = arith.constant 3 : i32
    %9 = arith.cmpi eq, %arg0, %c3_i32 : i32
    %10 = arith.extui %9 : i1 to i32
    %c0_i32_8 = arith.constant 0 : i32
    %11 = arith.cmpi ne, %10, %c0_i32_8 : i32
    scf.if %11 {
      %c0_9 = arith.constant 0 : index
      %c0_10 = arith.constant 0 : index
      %12 = vector.load %arg9[%c0_9, %c0_10] : memref<16x1280xf32, #tpu.memory_space<vmem>>, vector<16x1280xf32>
      %c0_11 = arith.constant 0 : index
      %c0_12 = arith.constant 0 : index
      %13 = vector.load %arg3[%c0_11, %c0_12] : memref<1x1280xf32, #tpu.memory_space<vmem>>, vector<1x1280xf32>
      %14 = vector.broadcast %13 : vector<1x1280xf32> to vector<16x1280xf32>
      %15 = arith.addf %12, %14 : vector<16x1280xf32>
      %cst_13 = arith.constant 0.000000e+00 : f32
      %16 = vector.broadcast %cst_13 : f32 to vector<16x1280xf32>
      %17 = arith.maximumf %15, %16 : vector<16x1280xf32>
      %18 = arith.truncf %17 : vector<16x1280xf32> to vector<16x1280xbf16>
      %c0_14 = arith.constant 0 : index
      %c0_15 = arith.constant 0 : index
      %19 = vector.load %arg4[%c0_14, %c0_15] : memref<1280x1280xbf16, #tpu.memory_space<vmem>>, vector<1280x1280xbf16>
      %cst_16 = arith.constant dense<0.000000e+00> : vector<16x1280xf32>
      %20 = tpu.matmul %18, %19, %cst_16 {dimension_numbers = #tpu.dot_dimension_numbers<[1], [0], [0], [1], [0, 0, 1, 1], [], []>} : vector<16x1280xbf16>, vector<1280x1280xbf16>, vector<16x1280xf32> -> vector<16x1280xf32>
      %c0_17 = arith.constant 0 : index
      %c0_18 = arith.constant 0 : index
      %21 = vector.load %arg5[%c0_17, %c0_18] : memref<1x1280xf32, #tpu.memory_space<vmem>>, vector<1x1280xf32>
      %22 = vector.broadcast %21 : vector<1x1280xf32> to vector<16x1280xf32>
      %23 = arith.addf %20, %22 : vector<16x1280xf32>
      %cst_19 = arith.constant 0.000000e+00 : f32
      %24 = vector.broadcast %cst_19 : f32 to vector<16x1280xf32>
      %25 = arith.maximumf %23, %24 : vector<16x1280xf32>
      %26 = arith.truncf %25 : vector<16x1280xf32> to vector<16x1280xbf16>
      %c0_20 = arith.constant 0 : index
      %c0_21 = arith.constant 0 : index
      %27 = vector.load %arg6[%c0_20, %c0_21] : memref<1280x128xbf16, #tpu.memory_space<vmem>>, vector<1280x128xbf16>
      %cst_22 = arith.constant dense<0.000000e+00> : vector<16x128xf32>
      %28 = tpu.matmul %26, %27, %cst_22 {dimension_numbers = #tpu.dot_dimension_numbers<[1], [0], [0], [1], [0, 0, 1, 1], [], []>} : vector<16x1280xbf16>, vector<1280x128xbf16>, vector<16x128xf32> -> vector<16x128xf32>
      %c0_23 = arith.constant 0 : index
      %c0_24 = arith.constant 0 : index
      %29 = vector.load %arg7[%c0_23, %c0_24] : memref<1x128xf32, #tpu.memory_space<vmem>>, vector<1x128xf32>
      %30 = vector.broadcast %29 : vector<1x128xf32> to vector<16x128xf32>
      %31 = arith.addf %28, %30 : vector<16x128xf32>
      %c0_25 = arith.constant 0 : index
      %c0_26 = arith.constant 0 : index
      %32 = vector.load %arg8[%c0_25, %c0_26] : memref<16x128xf32, #tpu.memory_space<vmem>>, vector<16x128xf32>
      tpu.vector_store %arg8[%c0_25, %c0_26], %31 {strides = array<i32>} : memref<16x128xf32, #tpu.memory_space<vmem>>, vector<16x128xf32>,
    } else {
    }
    return
  }
  func.func @transform_0(%arg0: i32) -> (i32, i32) {
    %c0_i32 = arith.constant 0 : i32
    %c0_i32_0 = arith.constant 0 : i32
    return %c0_i32, %arg0 : i32, i32
  }
  func.func @transform_1(%arg0: i32) -> (i32, i32) {
    %c0_i32 = arith.constant 0 : i32
    %c0_i32_0 = arith.constant 0 : i32
    return %arg0, %c0_i32 : i32, i32
  }
  func.func @transform_2(%arg0: i32) -> (i32, i32) {
    %c0_i32 = arith.constant 0 : i32
    %c0_i32_0 = arith.constant 0 : i32
    %c0_i32_1 = arith.constant 0 : i32
    return %c0_i32, %c0_i32_0 : i32, i32
  }
  func.func @transform_3(%arg0: i32) -> (i32, i32) {
    %c0_i32 = arith.constant 0 : i32
    %c0_i32_0 = arith.constant 0 : i32
    %c0_i32_1 = arith.constant 0 : i32
    return %c0_i32, %c0_i32_0 : i32, i32
  }
  func.func @transform_4(%arg0: i32) -> (i32, i32) {
    %c0_i32 = arith.constant 0 : i32
    %c0_i32_0 = arith.constant 0 : i32
    %c0_i32_1 = arith.constant 0 : i32
    return %c0_i32, %c0_i32_0 : i32, i32
  }
  func.func @transform_5(%arg0: i32) -> (i32, i32) {
    %c0_i32 = arith.constant 0 : i32
    %c0_i32_0 = arith.constant 0 : i32
    %c0_i32_1 = arith.constant 0 : i32
    return %c0_i32, %c0_i32_0 : i32, i32
  }
  func.func @transform_6(%arg0: i32) -> (i32, i32) {
    %c0_i32 = arith.constant 0 : i32
    %c0_i32_0 = arith.constant 0 : i32
    %c0_i32_1 = arith.constant 0 : i32
    return %c0_i32, %c0_i32_0 : i32, i32
  }
  func.func @transform_7(%arg0: i32) -> (i32, i32) {
    %c0_i32 = arith.constant 0 : i32
    %c0_i32_0 = arith.constant 0 : i32
    %c0_i32_1 = arith.constant 0 : i32
    return %c0_i32, %c0_i32_0 : i32, i32
  }
}

</mosaic_0001>

<llo_original>
// kernel: mlp_encoder_forward.1
$region0: #{mlp_encoder_forward.1}
  #allocation0 [shape = 'u32[]', space=smem, size = 0x4, offset = 0x4, fixed_abs, tag = 'smem constant byte address 0x4 - core index']
  #allocation1 [shape = 'u32[144,128]{1,0:T(1,128)}', space=vmem, size = 0x12000, scoped, tag = 'internal scratch']
  #allocation2 [shape = 'f32[16,1280]{1,0:T(8,128)}', space=vmem, size = 0x14000, scoped, tag = 'scratch operand']
  %s0 = inlined_call_operand.vmem [shape: bf16[16,4096], index: 0, kind: input, shape index: {}]
  %s1 = inlined_call_operand.hbm [shape: bf16[4096,1280], index: 1, kind: input, shape index: {}]
  %s2 = inlined_call_operand.hbm [shape: f32[1,1280], index: 2, kind: input, shape index: {}]
  %s3 = inlined_call_operand.hbm [shape: bf16[1280,1280], index: 3, kind: input, shape index: {}]
  %s4 = inlined_call_operand.hbm [shape: f32[1,1280], index: 4, kind: input, shape index: {}]
  %s5 = inlined_call_operand.hbm [shape: bf16[1280,128], index: 5, kind: input, shape index: {}]
  %s6 = inlined_call_operand.hbm [shape: f32[1,128], index: 6, kind: input, shape index: {}]
  %s7 = inlined_call_operand.vmem [shape: f32[16,128], index: 7, kind: output, shape index: {}]
  %s8 = sld [smem:[#allocation0]]
  $region116: #{mlp_encoder_forward.1} parent=0
    _
  %s10 = ssub.s32 1, %s8
  %s11 = scalar_select 0, %s10, %s8
  $region1: #{mlp_encoder_forward.1} parent=0
    #allocation3 [shape = 'u8[65536]{0}', space=vmem, size = 0x10000, scoped, tag = 'input window, operand 0']
    #allocation4 [shape = 'u8[5242880]{0}', space=vmem, size = 0x500000, scoped, tag = 'input window, operand 1']
    #allocation5 [shape = 's32[2]{0}', space=sflag, size = 0x8, scoped, tag = 'scoped memory for mlp_encoder_forward.1']
    #allocation6 [shape = 'u8[5120]{0}', space=vmem, size = 0x1400, scoped, tag = 'input window, operand 2, single buffered']
    #allocation7 [shape = 's32[1]{0}', space=sflag, size = 0x4, scoped, tag = 'scoped memory for mlp_encoder_forward.1']
    #allocation8 [shape = 'u8[3276800]{0}', space=vmem, size = 0x320000, scoped, tag = 'input window, operand 3, single buffered']
    #allocation9 [shape = 'u8[5120]{0}', space=vmem, size = 0x1400, scoped, tag = 'input window, operand 4, single buffered']
    #allocation10 [shape = 's32[1]{0}', space=sflag, size = 0x4, scoped, tag = 'scoped memory for mlp_encoder_forward.1']
    #allocation11 [shape = 'u8[327680]{0}', space=vmem, size = 0x50000, scoped, tag = 'input window, operand 5, single buffered']
    #allocation12 [shape = 'u8[512]{0}', space=vmem, size = 0x400, scoped, tag = 'input window, operand 6, single buffered']
    #allocation13 [shape = 's32[1]{0}', space=sflag, size = 0x4, scoped, tag = 'scoped memory for mlp_encoder_forward.1']
    %12 = vsyncpa [#allocation5], 0
    %s13 = scalar_lea.sflag [#allocation5], 1
    %14 = vsyncpa %s13, 0
    %15 = vsyncpa [#allocation7], 0
    %16 = vsyncpa [#allocation10], 0
    %17 = vsyncpa [#allocation13], 0
    loop: start=0, step=1, limit=6
    $region2: #{mlp_encoder_forward.1} parent=1 // loop_pre_header
      _
    $region3: #{mlp_encoder_forward.1} parent=1 // loop_header
      %s19 = sphi 0, %s23
      %p20 = scmp.ge.s32.totalorder %s19, 6
      %s29 = sphi 0, %s31
      %s32 = sphi 0, %s29
      %s33 = sphi 0, %s32
      %s49 = sphi 0, %s33
      %s55 = sphi 0, %s57
      %s58 = sphi 0, %s55
      %s59 = sphi 0, %s58
      %s75 = sphi 0, %s59
      %s79 = sphi 0, %s79
      %s81 = sphi 0, %s79
      %s82 = sphi 0, %s81
      %s96 = sphi 0, %s82
      %s100 = sphi 0, %s100
      %s102 = sphi 0, %s100
      %s103 = sphi 0, %s102
      %s117 = sphi 0, %s103
      %s121 = sphi 0, %s121
      %s123 = sphi 0, %s121
      %s124 = sphi 0, %s123
      %s138 = sphi 0, %s124
      %s142 = sphi 0, %s142
      %s144 = sphi 0, %s142
      %s145 = sphi 0, %s144
      %s159 = sphi 0, %s145
      %s163 = sphi 0, %s163
      %s165 = sphi 0, %s163
      %s166 = sphi 0, %s165
      %s180 = sphi 0, %s166
      %s184 = sphi 0, %s184
      %s186 = sphi 0, %s184
      %s187 = sphi 0, %s186
      %s201 = sphi 0, %s187
    $region4: #{mlp_encoder_forward.1} parent=1 // loop_header_branch
      %22 = sbr.rel (%p20) target = $region8
    $region5: #{mlp_encoder_forward.1} parent=1 // loop_body
      %s24 = ssub.s32 %s19, 1
      %s25 = ssub.s32 %s19, 2
      %s26 = sadd.s32 %s19, 1
      %s27 = ssub.s32 %s19, %s26
      %p28 = scmp.eq.s32.totalorder %s27, 0
      %s30 = sadd.s32 %s29, 1
      %s31 = scalar_select %p28, %s29, %s30
      %p34 = pneg %p28
      %p35 = scmp.eq.s32.totalorder %s19, 3
      %p36 = por %p34, %p35
      %p37 = scmp.ne.s32.totalorder %s29, %s32
      %p38 = scmp.eq.s32.totalorder %s19, 0
      %p39 = por %p37, %p38
      %p40 = scmp.ne.s32.totalorder %s29, %s32
      %p41 = scmp.eq.s32.totalorder %s24, 3
      %p42 = por %p40, %p41
      %p43 = scmp.ne.s32.totalorder %s32, %s33
      %p44 = scmp.eq.s32.totalorder %s24, 0
      %p45 = por %p43, %p44
      %p46 = scmp.ne.s32.totalorder %s32, %s33
      %p47 = scmp.eq.s32.totalorder %s25, 3
      %p48 = por %p46, %p47
      %p50 = scmp.ne.s32.totalorder %s33, %s49
      %p51 = scmp.eq.s32.totalorder %s25, 0
      %p52 = por %p50, %p51
      %s53 = ssub.s32 %s19, %s26
      %p54 = scmp.eq.s32.totalorder %s53, 0
      %s56 = sadd.s32 %s55, 1
      %s57 = scalar_select %p54, %s55, %s56
      %p60 = pneg %p54
      %p61 = scmp.eq.s32.totalorder %s19, 3
      %p62 = por %p60, %p61
      %p63 = scmp.ne.s32.totalorder %s55, %s58
      %p64 = scmp.eq.s32.totalorder %s19, 0
      %p65 = por %p63, %p64
      %p66 = scmp.ne.s32.totalorder %s55, %s58
      %p67 = scmp.eq.s32.totalorder %s24, 3
      %p68 = por %p66, %p67
      %p69 = scmp.ne.s32.totalorder %s58, %s59
      %p70 = scmp.eq.s32.totalorder %s24, 0
      %p71 = por %p69, %p70
      %p72 = scmp.ne.s32.totalorder %s58, %s59
      %p73 = scmp.eq.s32.totalorder %s25, 3
      %p74 = por %p72, %p73
      %p76 = scmp.ne.s32.totalorder %s59, %s75
      %p77 = scmp.eq.s32.totalorder %s25, 0
      %p78 = por %p76, %p77
      %s80 = sadd.s32 %s79, 1
      %p83 = scmp.eq.s32.totalorder %s19, 3
      %p84 = scmp.ne.s32.totalorder %s79, %s81
      %p85 = scmp.eq.s32.totalorder %s19, 0
      %p86 = por %p84, %p85
      %p87 = scmp.ne.s32.totalorder %s79, %s81
      %p88 = scmp.eq.s32.totalorder %s24, 3
      %p89 = por %p87, %p88
      %p90 = scmp.ne.s32.totalorder %s81, %s82
      %p91 = scmp.eq.s32.totalorder %s24, 0
      %p92 = por %p90, %p91
      %p93 = scmp.ne.s32.totalorder %s81, %s82
      %p94 = scmp.eq.s32.totalorder %s25, 3
      %p95 = por %p93, %p94
      %p97 = scmp.ne.s32.totalorder %s82, %s96
      %p98 = scmp.eq.s32.totalorder %s25, 0
      %p99 = por %p97, %p98
      %s101 = sadd.s32 %s100, 1
      %p104 = scmp.eq.s32.totalorder %s19, 3
      %p105 = scmp.ne.s32.totalorder %s100, %s102
      %p106 = scmp.eq.s32.totalorder %s19, 0
      %p107 = por %p105, %p106
      %p108 = scmp.ne.s32.totalorder %s100, %s102
      %p109 = scmp.eq.s32.totalorder %s24, 3
      %p110 = por %p108, %p109
      %p111 = scmp.ne.s32.totalorder %s102, %s103
      %p112 = scmp.eq.s32.totalorder %s24, 0
      %p113 = por %p111, %p112
      %p114 = scmp.ne.s32.totalorder %s102, %s103
      %p115 = scmp.eq.s32.totalorder %s25, 3
      %p116 = por %p114, %p115
      %p118 = scmp.ne.s32.totalorder %s103, %s117
      %p119 = scmp.eq.s32.totalorder %s25, 0
      %p120 = por %p118, %p119
      %s122 = sadd.s32 %s121, 1
      %p125 = scmp.eq.s32.totalorder %s19, 3
      %p126 = scmp.ne.s32.totalorder %s121, %s123
      %p127 = scmp.eq.s32.totalorder %s19, 0
      %p128 = por %p126, %p127
      %p129 = scmp.ne.s32.totalorder %s121, %s123
      %p130 = scmp.eq.s32.totalorder %s24, 3
      %p131 = por %p129, %p130
      %p132 = scmp.ne.s32.totalorder %s123, %s124
      %p133 = scmp.eq.s32.totalorder %s24, 0
      %p134 = por %p132, %p133
      %p135 = scmp.ne.s32.totalorder %s123, %s124
      %p136 = scmp.eq.s32.totalorder %s25, 3
      %p137 = por %p135, %p136
      %p139 = scmp.ne.s32.totalorder %s124, %s138
      %p140 = scmp.eq.s32.totalorder %s25, 0
      %p141 = por %p139, %p140
      %s143 = sadd.s32 %s142, 1
      %p146 = scmp.eq.s32.totalorder %s19, 3
      %p147 = scmp.ne.s32.totalorder %s142, %s144
      %p148 = scmp.eq.s32.totalorder %s19, 0
      %p149 = por %p147, %p148
      %p150 = scmp.ne.s32.totalorder %s142, %s144
      %p151 = scmp.eq.s32.totalorder %s24, 3
      %p152 = por %p150, %p151
      %p153 = scmp.ne.s32.totalorder %s144, %s145
      %p154 = scmp.eq.s32.totalorder %s24, 0
      %p155 = por %p153, %p154
      %p156 = scmp.ne.s32.totalorder %s144, %s145
      %p157 = scmp.eq.s32.totalorder %s25, 3
      %p158 = por %p156, %p157
      %p160 = scmp.ne.s32.totalorder %s145, %s159
      %p161 = scmp.eq.s32.totalorder %s25, 0
      %p162 = por %p160, %p161
      %s164 = sadd.s32 %s163, 1
      %p167 = scmp.eq.s32.totalorder %s19, 3
      %p168 = scmp.ne.s32.totalorder %s163, %s165
      %p169 = scmp.eq.s32.totalorder %s19, 0
      %p170 = por %p168, %p169
      %p171 = scmp.ne.s32.totalorder %s163, %s165
      %p172 = scmp.eq.s32.totalorder %s24, 3
      %p173 = por %p171, %p172
      %p174 = scmp.ne.s32.totalorder %s165, %s166
      %p175 = scmp.eq.s32.totalorder %s24, 0
      %p176 = por %p174, %p175
      %p177 = scmp.ne.s32.totalorder %s165, %s166
      %p178 = scmp.eq.s32.totalorder %s25, 3
      %p179 = por %p177, %p178
      %p181 = scmp.ne.s32.totalorder %s166, %s180
      %p182 = scmp.eq.s32.totalorder %s25, 0
      %p183 = por %p181, %p182
      %s185 = sadd.s32 %s184, 1
      %p188 = scmp.eq.s32.totalorder %s19, 3
      %p189 = scmp.ne.s32.totalorder %s184, %s186
      %p190 = scmp.eq.s32.totalorder %s19, 0
      %p191 = por %p189, %p190
      %p192 = scmp.ne.s32.totalorder %s184, %s186
      %p193 = scmp.eq.s32.totalorder %s24, 3
      %p194 = por %p192, %p193
      %p195 = scmp.ne.s32.totalorder %s186, %s187
      %p196 = scmp.eq.s32.totalorder %s24, 0
      %p197 = por %p195, %p196
      %p198 = scmp.ne.s32.totalorder %s186, %s187
      %p199 = scmp.eq.s32.totalorder %s25, 3
      %p200 = por %p198, %p199
      %p202 = scmp.ne.s32.totalorder %s187, %s201
      %p203 = scmp.eq.s32.totalorder %s25, 0
      %p204 = por %p202, %p203
      %p205 = scmp.le.s32.totalorder 1, %s19
      %p206 = scmp.lt.s32.totalorder %s19, 5
      %p207 = pnand %p205, %p206
      %p208 = pneg %p207
      // Predicated region
      $region9: #{mlp_encoder_forward.1} parent=5 // pred_check
        _
      $region10: #{mlp_encoder_forward.1} parent=5 // pred_check_branch
        %210 = sbr.rel (%p207) target = $region12
      $region11: #{mlp_encoder_forward.1} parent=5 // pred_region
        %s211 = ssub.s32 %s19, 1
        // Predicated region
        $region13: #{mlp_encoder_forward.1} parent=11 // pred_check
          %p212 = pneg %p92
        $region14: #{mlp_encoder_forward.1} parent=11 // pred_check_branch
          %214 = sbr.rel (%p212) target = $region16
        $region15: #{mlp_encoder_forward.1} parent=11 // pred_region
          %s216 = ssub.s32 160, 160
          %217 = vsyncadd [#allocation7], %s216
          %s219 = sshll.u32 [#allocation6], 4
          %s220 = int_to_ptr.vmem [resolvable:$true] %s219
          %222 = dma.hbm_to_vmem [thread:$0]  %s2, 160, %s220, [#allocation7]
        $region16: #{mlp_encoder_forward.1} parent=11 // pred_fallthru
          _
        // Predicated region
        $region17: #{mlp_encoder_forward.1} parent=11 // pred_check
          %p223 = pneg %p113
        $region18: #{mlp_encoder_forward.1} parent=11 // pred_check_branch
          %225 = sbr.rel (%p223) target = $region20
        $region19: #{mlp_encoder_forward.1} parent=11 // pred_region
          %s227 = ssub.s32 102400, 102400
          %228 = vsyncadd [#allocation7], %s227
          %s229 = sshll.u32 [#allocation8], 4
          %s230 = int_to_ptr.vmem [resolvable:$true] %s229
          %235 = dma.hbm_to_vmem [thread:$0]  %s3, 102400, %s230, [#allocation7], 640, 640, 40
        $region20: #{mlp_encoder_forward.1} parent=11 // pred_fallthru
          _
        // Predicated region
        $region21: #{mlp_encoder_forward.1} parent=11 // pred_check
          %p236 = pneg %p134
        $region22: #{mlp_encoder_forward.1} parent=11 // pred_check_branch
          %238 = sbr.rel (%p236) target = $region24
        $region23: #{mlp_encoder_forward.1} parent=11 // pred_region
          %s240 = ssub.s32 160, 160
          %241 = vsyncadd [#allocation10], %s240
          %s243 = sshll.u32 [#allocation9], 4
          %s244 = int_to_ptr.vmem [resolvable:$true] %s243
          %246 = dma.hbm_to_vmem [thread:$0]  %s4, 160, %s244, [#allocation10]
        $region24: #{mlp_encoder_forward.1} parent=11 // pred_fallthru
          _
        // Predicated region
        $region25: #{mlp_encoder_forward.1} parent=11 // pred_check
          %p247 = pneg %p155
        $region26: #{mlp_encoder_forward.1} parent=11 // pred_check_branch
          %249 = sbr.rel (%p247) target = $region28
        $region27: #{mlp_encoder_forward.1} parent=11 // pred_region
          %s251 = ssub.s32 10240, 10240
          %252 = vsyncadd [#allocation10], %s251
          %s253 = sshll.u32 [#allocation11], 4
          %s254 = int_to_ptr.vmem [resolvable:$true] %s253
          %259 = dma.hbm_to_vmem [thread:$0]  %s5, 10240, %s254, [#allocation10], 64, 64, 4
        $region28: #{mlp_encoder_forward.1} parent=11 // pred_fallthru
          _
        // Predicated region
        $region29: #{mlp_encoder_forward.1} parent=11 // pred_check
          %p260 = pneg %p176
        $region30: #{mlp_encoder_forward.1} parent=11 // pred_check_branch
          %262 = sbr.rel (%p260) target = $region32
        $region31: #{mlp_encoder_forward.1} parent=11 // pred_region
          %s264 = ssub.s32 16, 16
          %265 = vsyncadd [#allocation13], %s264
          %s267 = sshll.u32 [#allocation12], 4
          %s268 = int_to_ptr.vmem [resolvable:$true] %s267
          %270 = dma.hbm_to_vmem [thread:$0]  %s6, 16, %s268, [#allocation13]
        $region32: #{mlp_encoder_forward.1} parent=11 // pred_fallthru
          _
      $region12: #{mlp_encoder_forward.1} parent=5 // pred_fallthru
        _
      %p271 = scmp.lt.s32.totalorder %s19, 4
      // Predicated region
      $region33: #{mlp_encoder_forward.1} parent=5 // pred_check
        %p272 = pneg %p271
      $region34: #{mlp_encoder_forward.1} parent=5 // pred_check_branch
        %274 = sbr.rel (%p272) target = $region36
      $region35: #{mlp_encoder_forward.1} parent=5 // pred_region
        // Predicated region
        $region37: #{mlp_encoder_forward.1} parent=35 // pred_check
          %p275 = pneg %p39
        $region38: #{mlp_encoder_forward.1} parent=35 // pred_check_branch
          %277 = sbr.rel (%p275) target = $region40
        $region39: #{mlp_encoder_forward.1} parent=35 // pred_region
          %s278 = sand.u32 %s29, 1
          %s279 = sand.u32 %s29, 1
          %s280 = smul.addr %s279, 64
          %s281 = scalar_lea.vmem [#allocation3], %s280
          %s282 = smul.u32 8, %s19
          %s283 = smul.addr %s282, 4
          %s284 = scalar_lea.vmem %s0, %s283
          // Predicated region
          $region41: #{mlp_encoder_forward.1} parent=39 // pred_check
            _
          $region42: #{mlp_encoder_forward.1} parent=39 // pred_check_branch
            %286 = sbr.rel (0) target = $region44
          $region43: #{mlp_encoder_forward.1} parent=39 // pred_region
            // Predicated region
            $region45: #{mlp_encoder_forward.1} parent=43 // pred_check
              _
            $region46: #{mlp_encoder_forward.1} parent=43 // pred_check_branch
              %288 = sbr.rel (0) target = $region48
            $region47: #{mlp_encoder_forward.1} parent=43 // pred_region
              loop: start=0, step=1, limit=1
              $region49: #{mlp_encoder_forward.1} parent=47 // loop_pre_header
                _
              $region50: #{mlp_encoder_forward.1} parent=47 // loop_header
                %s290 = sphi 0, %s294
                %p291 = scmp.ge.s32.totalorder %s290, 1
                %s295 = sphi %s284, %s284
                %s296 = sphi %s281, %s281
              $region51: #{mlp_encoder_forward.1} parent=47 // loop_header_branch
                %293 = sbr.rel (%p291) target = $region55
              $region52: #{mlp_encoder_forward.1} parent=47 // loop_body
                %v297 = vld [vmem:[%s295] sm:$0xff]
                %298 = vst [vmem:[%s296] sm:$0xff] %v297
                %v299 = vld [vmem:[%s295 + $0x8] sm:$0xff]
                %300 = vst [vmem:[%s296 + $0x8] sm:$0xff] %v299
                %v301 = vld [vmem:[%s295 + $0x10] sm:$0xff]
                %302 = vst [vmem:[%s296 + $0x10] sm:$0xff] %v301
                %v303 = vld [vmem:[%s295 + $0x18] sm:$0xff]
                %304 = vst [vmem:[%s296 + $0x18] sm:$0xff] %v303
                %v305 = vld [vmem:[%s295 + $0x80] sm:$0xff]
                %306 = vst [vmem:[%s296 + $0x20] sm:$0xff] %v305
                %v307 = vld [vmem:[%s295 + $0x88] sm:$0xff]
                %308 = vst [vmem:[%s296 + $0x28] sm:$0xff] %v307
                %v309 = vld [vmem:[%s295 + $0x90] sm:$0xff]
                %310 = vst [vmem:[%s296 + $0x30] sm:$0xff] %v309
                %v311 = vld [vmem:[%s295 + $0x98] sm:$0xff]
                %312 = vst [vmem:[%s296 + $0x38] sm:$0xff] %v311
              $region53: #{mlp_encoder_forward.1} parent=47 // loop_footer
                %s294 = sadd.s32 1, %s290
              $region54: #{mlp_encoder_forward.1} parent=47 // loop_footer_branch
                %289 = sbr.rel target = $region50
              $region55: #{mlp_encoder_forward.1} parent=47 // loop_exit
                _
            $region48: #{mlp_encoder_forward.1} parent=43 // pred_fallthru
              _
            // Predicated region
            $region56: #{mlp_encoder_forward.1} parent=43 // pred_check
              _
            $region57: #{mlp_encoder_forward.1} parent=43 // pred_check_branch
              %314 = sbr.rel target = $region59
            $region58: #{mlp_encoder_forward.1} parent=43 // pred_region
              _
            $region59: #{mlp_encoder_forward.1} parent=43 // pred_fallthru
              _
          $region44: #{mlp_encoder_forward.1} parent=39 // pred_fallthru
            _
          %315 = vnop
        $region40: #{mlp_encoder_forward.1} parent=35 // pred_fallthru
          _
        // Predicated region
        $region60: #{mlp_encoder_forward.1} parent=35 // pred_check
          %p316 = pneg %p65
        $region61: #{mlp_encoder_forward.1} parent=35 // pred_check_branch
          %318 = sbr.rel (%p316) target = $region63
        $region62: #{mlp_encoder_forward.1} parent=35 // pred_region
          %s319 = sand.u32 %s55, 1
          %s320 = scalar_lea.sflag [#allocation5], %s319
          %s321 = sand.u32 %s55, 1
          %s322 = smul.addr %s321, 5120
          %s323 = scalar_lea.vmem [#allocation4], %s322
          %s324 = smul.u32 128, %s19
          %s326 = ssub.s32 81920, 81920
          %327 = vsyncadd %s320, %s326
          %s328 = smul.addr %s324, 10
          %s329 = smul.addr %s328, 64
          %s330 = scalar_lea.hbm %s1, %s329
          %s331 = sshll.u32 %s323, 4
          %s332 = int_to_ptr.vmem [resolvable:$true] %s331
          %337 = dma.hbm_to_vmem [thread:$0]  %s330, 81920, %s332, %s320, 640, 640, 40
        $region63: #{mlp_encoder_forward.1} parent=35 // pred_fallthru
          _
      $region36: #{mlp_encoder_forward.1} parent=5 // pred_fallthru
        _
      %p338 = scmp.le.s32.totalorder 1, %s19
      %p339 = scmp.lt.s32.totalorder %s19, 5
      %p340 = pnand %p338, %p339
      %p341 = pneg %p340
      // Predicated region
      $region64: #{mlp_encoder_forward.1} parent=5 // pred_check
        _
      $region65: #{mlp_encoder_forward.1} parent=5 // pred_check_branch
        %343 = sbr.rel (%p340) target = $region67
      $region66: #{mlp_encoder_forward.1} parent=5 // pred_region
        %s344 = ssub.s32 %s19, 1
        %s345 = sand.u32 %s32, 1
        %s346 = sand.u32 %s32, 1
        %s347 = smul.addr %s346, 64
        %s348 = scalar_lea.vmem [#allocation3], %s347
        // Predicated region
        $region68: #{mlp_encoder_forward.1} parent=66 // pred_check
          %p349 = pneg %p45
        $region69: #{mlp_encoder_forward.1} parent=66 // pred_check_branch
          %351 = sbr.rel (%p349) target = $region71
        $region70: #{mlp_encoder_forward.1} parent=66 // pred_region
          _
        $region71: #{mlp_encoder_forward.1} parent=66 // pred_fallthru
          _
        %s352 = sand.u32 %s58, 1
        %s353 = scalar_lea.sflag [#allocation5], %s352
        %s354 = sand.u32 %s58, 1
        %s355 = smul.addr %s354, 5120
        %s356 = scalar_lea.vmem [#allocation4], %s355
        // Predicated region
        $region72: #{mlp_encoder_forward.1} parent=66 // pred_check
          %p357 = pneg %p71
        $region73: #{mlp_encoder_forward.1} parent=66 // pred_check_branch
          %359 = sbr.rel (%p357) target = $region75
        $region74: #{mlp_encoder_forward.1} parent=66 // pred_region
          %360 = dma.done %s353, 81920
        $region75: #{mlp_encoder_forward.1} parent=66 // pred_fallthru
          _
        // Predicated region
        $region76: #{mlp_encoder_forward.1} parent=66 // pred_check
          %p361 = pneg %p92
        $region77: #{mlp_encoder_forward.1} parent=66 // pred_check_branch
          %363 = sbr.rel (%p361) target = $region79
        $region78: #{mlp_encoder_forward.1} parent=66 // pred_region
          %364 = dma.done [#allocation7], 160
        $region79: #{mlp_encoder_forward.1} parent=66 // pred_fallthru
          _
        // Predicated region
        $region80: #{mlp_encoder_forward.1} parent=66 // pred_check
          %p365 = pneg %p113
        $region81: #{mlp_encoder_forward.1} parent=66 // pred_check_branch
          %367 = sbr.rel (%p365) target = $region83
        $region82: #{mlp_encoder_forward.1} parent=66 // pred_region
          %368 = dma.done [#allocation7], 102400
        $region83: #{mlp_encoder_forward.1} parent=66 // pred_fallthru
          _
        // Predicated region
        $region84: #{mlp_encoder_forward.1} parent=66 // pred_check
          %p369 = pneg %p134
        $region85: #{mlp_encoder_forward.1} parent=66 // pred_check_branch
          %371 = sbr.rel (%p369) target = $region87
        $region86: #{mlp_encoder_forward.1} parent=66 // pred_region
          %372 = dma.done [#allocation10], 160
        $region87: #{mlp_encoder_forward.1} parent=66 // pred_fallthru
          _
        // Predicated region
        $region88: #{mlp_encoder_forward.1} parent=66 // pred_check
          %p373 = pneg %p155
        $region89: #{mlp_encoder_forward.1} parent=66 // pred_check_branch
          %375 = sbr.rel (%p373) target = $region91
        $region90: #{mlp_encoder_forward.1} parent=66 // pred_region
          %376 = dma.done [#allocation10], 10240
        $region91: #{mlp_encoder_forward.1} parent=66 // pred_fallthru
          _
        // Predicated region
        $region92: #{mlp_encoder_forward.1} parent=66 // pred_check
          %p377 = pneg %p176
        $region93: #{mlp_encoder_forward.1} parent=66 // pred_check_branch
          %379 = sbr.rel (%p377) target = $region95
        $region94: #{mlp_encoder_forward.1} parent=66 // pred_region
          %380 = dma.done [#allocation13], 16
        $region95: #{mlp_encoder_forward.1} parent=66 // pred_fallthru
          _
        %s381 = sand.u32 %s32, 1
        %s382 = sand.u32 %s32, 1
        %s383 = smul.addr %s382, 64
        %s384 = scalar_lea.vmem [#allocation3], %s383
        %p385 = pneg %p45
        %p386 = pneg %p42
        %s387 = sand.u32 %s58, 1
        %s388 = scalar_lea.sflag [#allocation5], %s387
        %s389 = sand.u32 %s58, 1
        %s390 = smul.addr %s389, 5120
        %s391 = scalar_lea.vmem [#allocation4], %s390
        %p392 = pneg %p71
        %p393 = pneg %p68
        %p394 = pneg %p92
        %p395 = pneg %p89
        %p396 = pneg %p113
        %p397 = pneg %p110
        %p398 = pneg %p134
        %p399 = pneg %p131
        %p400 = pneg %p155
        %p401 = pneg %p152
        %p402 = pneg %p176
        %p403 = pneg %p173
        %p404 = pneg %p197
        %p405 = pneg %p194
        %s406 = smul.u32 8, %s24
        %s407 = smul.u32 128, %s24
        %p409 = scmp.eq.s32.totalorder %s24, 0
        // Predicated region
        $region96: #{mlp_encoder_forward.1} parent=66 // pred_check
          %p410 = pneg %p409
        $region97: #{mlp_encoder_forward.1} parent=66 // pred_check_branch
          %412 = sbr.rel (%p410) target = $region99
        $region98: #{mlp_encoder_forward.1} parent=66 // pred_region
          %413 = vst [vmem:[#allocation2] sm:$0xff] 0.0
          %414 = vst [vmem:[#allocation2 + $0x8] sm:$0xff] 0.0
          %415 = vst [vmem:[#allocation2 + $0x10] sm:$0xff] 0.0
          %416 = vst [vmem:[#allocation2 + $0x18] sm:$0xff] 0.0
          %417 = vst [vmem:[#allocation2 + $0x20] sm:$0xff] 0.0
          %418 = vst [vmem:[#allocation2 + $0x28] sm:$0xff] 0.0
          %419 = vst [vmem:[#allocation2 + $0x30] sm:$0xff] 0.0
          %420 = vst [vmem:[#allocation2 + $0x38] sm:$0xff] 0.0
          %421 = vst [vmem:[#allocation2 + $0x40] sm:$0xff] 0.0
          %422 = vst [vmem:[#allocation2 + $0x48] sm:$0xff] 0.0
          %423 = vst [vmem:[#allocation2 + $0x50] sm:$0xff] 0.0
          %424 = vst [vmem:[#allocation2 + $0x58] sm:$0xff] 0.0
          %425 = vst [vmem:[#allocation2 + $0x60] sm:$0xff] 0.0
          %426 = vst [vmem:[#allocation2 + $0x68] sm:$0xff] 0.0
          %427 = vst [vmem:[#allocation2 + $0x70] sm:$0xff] 0.0
          %428 = vst [vmem:[#allocation2 + $0x78] sm:$0xff] 0.0
          %429 = vst [vmem:[#allocation2 + $0x80] sm:$0xff] 0.0
          %430 = vst [vmem:[#allocation2 + $0x88] sm:$0xff] 0.0
          %431 = vst [vmem:[#allocation2 + $0x90] sm:$0xff] 0.0
          %432 = vst [vmem:[#allocation2 + $0x98] sm:$0xff] 0.0
        $region99: #{mlp_encoder_forward.1} parent=66 // pred_fallthru
          _
        %v433 = vld [vmem:[#allocation2] sm:$0xff]
        %v434 = vld [vmem:[#allocation2 + $0x8] sm:$0xff]
        %v435 = vld [vmem:[#allocation2 + $0x10] sm:$0xff]
        %v436 = vld [vmem:[#allocation2 + $0x18] sm:$0xff]
        %v437 = vld [vmem:[#allocation2 + $0x20] sm:$0xff]
        %v438 = vld [vmem:[#allocation2 + $0x28] sm:$0xff]
        %v439 = vld [vmem:[#allocation2 + $0x30] sm:$0xff]
        %v440 = vld [vmem:[#allocation2 + $0x38] sm:$0xff]
        %v441 = vld [vmem:[#allocation2 + $0x40] sm:$0xff]
        %v442 = vld [vmem:[#allocation2 + $0x48] sm:$0xff]
        %v443 = vld [vmem:[#allocation2 + $0x50] sm:$0xff]
        %v444 = vld [vmem:[#allocation2 + $0x58] sm:$0xff]
        %v445 = vld [vmem:[#allocation2 + $0x60] sm:$0xff]
        %v446 = vld [vmem:[#allocation2 + $0x68] sm:$0xff]
        %v447 = vld [vmem:[#allocation2 + $0x70] sm:$0xff]
        %v448 = vld [vmem:[#allocation2 + $0x78] sm:$0xff]
        %v449 = vld [vmem:[#allocation2 + $0x80] sm:$0xff]
        %v450 = vld [vmem:[#allocation2 + $0x88] sm:$0xff]
        %v451 = vld [vmem:[#allocation2 + $0x90] sm:$0xff]
        %v452 = vld [vmem:[#allocation2 + $0x98] sm:$0xff]
        %v453 = vld [vmem:[%s348] sm:$0xff]
        %v454 = vld [vmem:[%s348 + $0x8] sm:$0xff]
        %v455 = vld [vmem:[%s348 + $0x10] sm:$0xff]
        %v456 = vld [vmem:[%s348 + $0x18] sm:$0xff]
        %v457 = vld [vmem:[%s348 + $0x20] sm:$0xff]
        %v458 = vld [vmem:[%s348 + $0x28] sm:$0xff]
        %v459 = vld [vmem:[%s348 + $0x30] sm:$0xff]
        %v460 = vld [vmem:[%s348 + $0x38] sm:$0xff]
        %v461 = vld [vmem:[%s356] sm:$0xff]
        %v462 = vld [vmem:[%s356 + $0x8] sm:$0xff]
        %v463 = vld [vmem:[%s356 + $0x10] sm:$0xff]
        %v464 = vld [vmem:[%s356 + $0x18] sm:$0xff]
        %v465 = vld [vmem:[%s356 + $0x20] sm:$0xff]
        %v466 = vld [vmem:[%s356 + $0x28] sm:$0xff]
        %v467 = vld [vmem:[%s356 + $0x30] sm:$0xff]
        %v468 = vld [vmem:[%s356 + $0x38] sm:$0xff]
        %v469 = vld [vmem:[%s356 + $0x40] sm:$0xff]
        %v470 = vld [vmem:[%s356 + $0x48] sm:$0xff]
        %v471 = vld [vmem:[%s356 + $0x50] sm:$0xff]
        %v472 = vld [vmem:[%s356 + $0x58] sm:$0xff]
        %v473 = vld [vmem:[%s356 + $0x60] sm:$0xff]
        %v474 = vld [vmem:[%s356 + $0x68] sm:$0xff]
        %v475 = vld [vmem:[%s356 + $0x70] sm:$0xff]
        %v476 = vld [vmem:[%s356 + $0x78] sm:$0xff]
        %v477 = vld [vmem:[%s356 + $0x80] sm:$0xff]
        %v478 = vld [vmem:[%s356 + $0x88] sm:$0xff]
        %v479 = vld [vmem:[%s356 + $0x90] sm:$0xff]
        %v480 = vld [vmem:[%s356 + $0x98] sm:$0xff]
        %v481 = vld [vmem:[%s356 + $0xa0] sm:$0xff]
        %v482 = vld [vmem:[%s356 + $0xa8] sm:$0xff]
        %v483 = vld [vmem:[%s356 + $0xb0] sm:$0xff]
        %v484 = vld [vmem:[%s356 + $0xb8] sm:$0xff]
        %v485 = vld [vmem:[%s356 + $0xc0] sm:$0xff]
        %v486 = vld [vmem:[%s356 + $0xc8] sm:$0xff]
        %v487 = vld [vmem:[%s356 + $0xd0] sm:$0xff]
        %v488 = vld [vmem:[%s356 + $0xd8] sm:$0xff]
        %v489 = vld [vmem:[%s356 + $0xe0] sm:$0xff]
        %v490 = vld [vmem:[%s356 + $0xe8] sm:$0xff]
        %v491 = vld [vmem:[%s356 + $0xf0] sm:$0xff]
        %v492 = vld [vmem:[%s356 + $0xf8] sm:$0xff]
        %v493 = vld [vmem:[%s356 + $0x100] sm:$0xff]
        %v494 = vld [vmem:[%s356 + $0x108] sm:$0xff]
        %v495 = vld [vmem:[%s356 + $0x110] sm:$0xff]
        %v496 = vld [vmem:[%s356 + $0x118] sm:$0xff]
        %v497 = vld [vmem:[%s356 + $0x120] sm:$0xff]
        %v498 = vld [vmem:[%s356 + $0x128] sm:$0xff]
        %v499 = vld [vmem:[%s356 + $0x130] sm:$0xff]
        %v500 = vld [vmem:[%s356 + $0x138] sm:$0xff]
        %v501 = vld [vmem:[%s356 + $0x140] sm:$0xff]
        %v502 = vld [vmem:[%s356 + $0x148] sm:$0xff]
        %v503 = vld [vmem:[%s356 + $0x150] sm:$0xff]
        %v504 = vld [vmem:[%s356 + $0x158] sm:$0xff]
        %v505 = vld [vmem:[%s356 + $0x160] sm:$0xff]
        %v506 = vld [vmem:[%s356 + $0x168] sm:$0xff]
        %v507 = vld [vmem:[%s356 + $0x170] sm:$0xff]
        %v508 = vld [vmem:[%s356 + $0x178] sm:$0xff]
        %v509 = vld [vmem:[%s356 + $0x180] sm:$0xff]
        %v510 = vld [vmem:[%s356 + $0x188] sm:$0xff]
        %v511 = vld [vmem:[%s356 + $0x190] sm:$0xff]
        %v512 = vld [vmem:[%s356 + $0x198] sm:$0xff]
        %v513 = vld [vmem:[%s356 + $0x1a0] sm:$0xff]
        %v514 = vld [vmem:[%s356 + $0x1a8] sm:$0xff]
        %v515 = vld [vmem:[%s356 + $0x1b0] sm:$0xff]
        %v516 = vld [vmem:[%s356 + $0x1b8] sm:$0xff]
        %v517 = vld [vmem:[%s356 + $0x1c0] sm:$0xff]
        %v518 = vld [vmem:[%s356 + $0x1c8] sm:$0xff]
        %v519 = vld [vmem:[%s356 + $0x1d0] sm:$0xff]
        %v520 = vld [vmem:[%s356 + $0x1d8] sm:$0xff]
        %v521 = vld [vmem:[%s356 + $0x1e0] sm:$0xff]
        %v522 = vld [vmem:[%s356 + $0x1e8] sm:$0xff]
        %v523 = vld [vmem:[%s356 + $0x1f0] sm:$0xff]
        %v524 = vld [vmem:[%s356 + $0x1f8] sm:$0xff]
        %v525 = vld [vmem:[%s356 + $0x200] sm:$0xff]
        %v526 = vld [vmem:[%s356 + $0x208] sm:$0xff]
        %v527 = vld [vmem:[%s356 + $0x210] sm:$0xff]
        %v528 = vld [vmem:[%s356 + $0x218] sm:$0xff]
        %v529 = vld [vmem:[%s356 + $0x220] sm:$0xff]
        %v530 = vld [vmem:[%s356 + $0x228] sm:$0xff]
        %v531 = vld [vmem:[%s356 + $0x230] sm:$0xff]
        %v532 = vld [vmem:[%s356 + $0x238] sm:$0xff]
        %v533 = vld [vmem:[%s356 + $0x240] sm:$0xff]
        %v534 = vld [vmem:[%s356 + $0x248] sm:$0xff]
        %v535 = vld [vmem:[%s356 + $0x250] sm:$0xff]
        %v536 = vld [vmem:[%s356 + $0x258] sm:$0xff]
        %v537 = vld [vmem:[%s356 + $0x260] sm:$0xff]
        %v538 = vld [vmem:[%s356 + $0x268] sm:$0xff]
        %v539 = vld [vmem:[%s356 + $0x270] sm:$0xff]
        %v540 = vld [vmem:[%s356 + $0x278] sm:$0xff]
        %v541 = vld [vmem:[%s356 + $0x280] sm:$0xff]
        %v542 = vld [vmem:[%s356 + $0x288] sm:$0xff]
        %v543 = vld [vmem:[%s356 + $0x290] sm:$0xff]
        %v544 = vld [vmem:[%s356 + $0x298] sm:$0xff]
        %v545 = vld [vmem:[%s356 + $0x2a0] sm:$0xff]
        %v546 = vld [vmem:[%s356 + $0x2a8] sm:$0xff]
        %v547 = vld [vmem:[%s356 + $0x2b0] sm:$0xff]
        %v548 = vld [vmem:[%s356 + $0x2b8] sm:$0xff]
        %v549 = vld [vmem:[%s356 + $0x2c0] sm:$0xff]
        %v550 = vld [vmem:[%s356 + $0x2c8] sm:$0xff]
        %v551 = vld [vmem:[%s356 + $0x2d0] sm:$0xff]
        %v552 = vld [vmem:[%s356 + $0x2d8] sm:$0xff]
        %v553 = vld [vmem:[%s356 + $0x2e0] sm:$0xff]
        %v554 = vld [vmem:[%s356 + $0x2e8] sm:$0xff]
        %v555 = vld [vmem:[%s356 + $0x2f0] sm:$0xff]
        %v556 = vld [vmem:[%s356 + $0x2f8] sm:$0xff]
        %v557 = vld [vmem:[%s356 + $0x300] sm:$0xff]
        %v558 = vld [vmem:[%s356 + $0x308] sm:$0xff]
        %v559 = vld [vmem:[%s356 + $0x310] sm:$0xff]
        %v560 = vld [vmem:[%s356 + $0x318] sm:$0xff]
        %v561 = vld [vmem:[%s356 + $0x320] sm:$0xff]
        %v562 = vld [vmem:[%s356 + $0x328] sm:$0xff]
        %v563 = vld [vmem:[%s356 + $0x330] sm:$0xff]
        %v564 = vld [vmem:[%s356 + $0x338] sm:$0xff]
        %v565 = vld [vmem:[%s356 + $0x340] sm:$0xff]
        %v566 = vld [vmem:[%s356 + $0x348] sm:$0xff]
        %v567 = vld [vmem:[%s356 + $0x350] sm:$0xff]
        %v568 = vld [vmem:[%s356 + $0x358] sm:$0xff]
        %v569 = vld [vmem:[%s356 + $0x360] sm:$0xff]
        %v570 = vld [vmem:[%s356 + $0x368] sm:$0xff]
        %v571 = vld [vmem:[%s356 + $0x370] sm:$0xff]
        %v572 = vld [vmem:[%s356 + $0x378] sm:$0xff]
        %v573 = vld [vmem:[%s356 + $0x380] sm:$0xff]
        %v574 = vld [vmem:[%s356 + $0x388] sm:$0xff]
        %v575 = vld [vmem:[%s356 + $0x390] sm:$0xff]
        %v576 = vld [vmem:[%s356 + $0x398] sm:$0xff]
        %v577 = vld [vmem:[%s356 + $0x3a0] sm:$0xff]
        %v578 = vld [vmem:[%s356 + $0x3a8] sm:$0xff]
        %v579 = vld [vmem:[%s356 + $0x3b0] sm:$0xff]
        %v580 = vld [vmem:[%s356 + $0x3b8] sm:$0xff]
        %v581 = vld [vmem:[%s356 + $0x3c0] sm:$0xff]
        %v582 = vld [vmem:[%s356 + $0x3c8] sm:$0xff]
        %v583 = vld [vmem:[%s356 + $0x3d0] sm:$0xff]
        %v584 = vld [vmem:[%s356 + $0x3d8] sm:$0xff]
        %v585 = vld [vmem:[%s356 + $0x3e0] sm:$0xff]
        %v586 = vld [vmem:[%s356 + $0x3e8] sm:$0xff]
        %v587 = vld [vmem:[%s356 + $0x3f0] sm:$0xff]
        %v588 = vld [vmem:[%s356 + $0x3f8] sm:$0xff]
        %v589 = vld [vmem:[%s356 + $0x400] sm:$0xff]
        %v590 = vld [vmem:[%s356 + $0x408] sm:$0xff]
        %v591 = vld [vmem:[%s356 + $0x410] sm:$0xff]
        %v592 = vld [vmem:[%s356 + $0x418] sm:$0xff]
        %v593 = vld [vmem:[%s356 + $0x420] sm:$0xff]
        %v594 = vld [vmem:[%s356 + $0x428] sm:$0xff]
        %v595 = vld [vmem:[%s356 + $0x430] sm:$0xff]
        %v596 = vld [vmem:[%s356 + $0x438] sm:$0xff]
        %v597 = vld [vmem:[%s356 + $0x440] sm:$0xff]
        %v598 = vld [vmem:[%s356 + $0x448] sm:$0xff]
        %v599 = vld [vmem:[%s356 + $0x450] sm:$0xff]
        %v600 = vld [vmem:[%s356 + $0x458] sm:$0xff]
        %v601 = vld [vmem:[%s356 + $0x460] sm:$0xff]
        %v602 = vld [vmem:[%s356 + $0x468] sm:$0xff]
        %v603 = vld [vmem:[%s356 + $0x470] sm:$0xff]
        %v604 = vld [vmem:[%s356 + $0x478] sm:$0xff]
        %v605 = vld [vmem:[%s356 + $0x480] sm:$0xff]
        %v606 = vld [vmem:[%s356 + $0x488] sm:$0xff]
        %v607 = vld [vmem:[%s356 + $0x490] sm:$0xff]
        %v608 = vld [vmem:[%s356 + $0x498] sm:$0xff]
        %v609 = vld [vmem:[%s356 + $0x4a0] sm:$0xff]
        %v610 = vld [vmem:[%s356 + $0x4a8] sm:$0xff]
        %v611 = vld [vmem:[%s356 + $0x4b0] sm:$0xff]
        %v612 = vld [vmem:[%s356 + $0x4b8] sm:$0xff]
        %v613 = vld [vmem:[%s356 + $0x4c0] sm:$0xff]
        %v614 = vld [vmem:[%s356 + $0x4c8] sm:$0xff]
        %v615 = vld [vmem:[%s356 + $0x4d0] sm:$0xff]
        %v616 = vld [vmem:[%s356 + $0x4d8] sm:$0xff]
        %v617 = vld [vmem:[%s356 + $0x4e0] sm:$0xff]
        %v618 = vld [vmem:[%s356 + $0x4e8] sm:$0xff]
        %v619 = vld [vmem:[%s356 + $0x4f0] sm:$0xff]
        %v620 = vld [vmem:[%s356 + $0x4f8] sm:$0xff]
        %v621 = vld [vmem:[%s356 + $0x500] sm:$0xff]
        %v622 = vld [vmem:[%s356 + $0x508] sm:$0xff]
        %v623 = vld [vmem:[%s356 + $0x510] sm:$0xff]
        %v624 = vld [vmem:[%s356 + $0x518] sm:$0xff]
        %v625 = vld [vmem:[%s356 + $0x520] sm:$0xff]
        %v626 = vld [vmem:[%s356 + $0x528] sm:$0xff]
        %v627 = vld [vmem:[%s356 + $0x530] sm:$0xff]
        %v628 = vld [vmem:[%s356 + $0x538] sm:$0xff]
        %v629 = vld [vmem:[%s356 + $0x540] sm:$0xff]
        %v630 = vld [vmem:[%s356 + $0x548] sm:$0xff]
        %v631 = vld [vmem:[%s356 + $0x550] sm:$0xff]
        %v632 = vld [vmem:[%s356 + $0x558] sm:$0xff]
        %v633 = vld [vmem:[%s356 + $0x560] sm:$0xff]
        %v634 = vld [vmem:[%s356 + $0x568] sm:$0xff]
        %v635 = vld [vmem:[%s356 + $0x570] sm:$0xff]
        %v636 = vld [vmem:[%s356 + $0x578] sm:$0xff]
        %v637 = vld [vmem:[%s356 + $0x580] sm:$0xff]
        %v638 = vld [vmem:[%s356 + $0x588] sm:$0xff]
        %v639 = vld [vmem:[%s356 + $0x590] sm:$0xff]
        %v640 = vld [vmem:[%s356 + $0x598] sm:$0xff]
        %v641 = vld [vmem:[%s356 + $0x5a0] sm:$0xff]
        %v642 = vld [vmem:[%s356 + $0x5a8] sm:$0xff]
        %v643 = vld [vmem:[%s356 + $0x5b0] sm:$0xff]
        %v644 = vld [vmem:[%s356 + $0x5b8] sm:$0xff]
        %v645 = vld [vmem:[%s356 + $0x5c0] sm:$0xff]
        %v646 = vld [vmem:[%s356 + $0x5c8] sm:$0xff]
        %v647 = vld [vmem:[%s356 + $0x5d0] sm:$0xff]
        %v648 = vld [vmem:[%s356 + $0x5d8] sm:$0xff]
        %v649 = vld [vmem:[%s356 + $0x5e0] sm:$0xff]
        %v650 = vld [vmem:[%s356 + $0x5e8] sm:$0xff]
        %v651 = vld [vmem:[%s356 + $0x5f0] sm:$0xff]
        %v652 = vld [vmem:[%s356 + $0x5f8] sm:$0xff]
        %v653 = vld [vmem:[%s356 + $0x600] sm:$0xff]
        %v654 = vld [vmem:[%s356 + $0x608] sm:$0xff]
        %v655 = vld [vmem:[%s356 + $0x610] sm:$0xff]
        %v656 = vld [vmem:[%s356 + $0x618] sm:$0xff]
        %v657 = vld [vmem:[%s356 + $0x620] sm:$0xff]
        %v658 = vld [vmem:[%s356 + $0x628] sm:$0xff]
        %v659 = vld [vmem:[%s356 + $0x630] sm:$0xff]
        %v660 = vld [vmem:[%s356 + $0x638] sm:$0xff]
        %v661 = vld [vmem:[%s356 + $0x640] sm:$0xff]
        %v662 = vld [vmem:[%s356 + $0x648] sm:$0xff]
        %v663 = vld [vmem:[%s356 + $0x650] sm:$0xff]
        %v664 = vld [vmem:[%s356 + $0x658] sm:$0xff]
        %v665 = vld [vmem:[%s356 + $0x660] sm:$0xff]
        %v666 = vld [vmem:[%s356 + $0x668] sm:$0xff]
        %v667 = vld [vmem:[%s356 + $0x670] sm:$0xff]
        %v668 = vld [vmem:[%s356 + $0x678] sm:$0xff]
        %v669 = vld [vmem:[%s356 + $0x680] sm:$0xff]
        %v670 = vld [vmem:[%s356 + $0x688] sm:$0xff]
        %v671 = vld [vmem:[%s356 + $0x690] sm:$0xff]
        %v672 = vld [vmem:[%s356 + $0x698] sm:$0xff]
        %v673 = vld [vmem:[%s356 + $0x6a0] sm:$0xff]
        %v674 = vld [vmem:[%s356 + $0x6a8] sm:$0xff]
        %v675 = vld [vmem:[%s356 + $0x6b0] sm:$0xff]
        %v676 = vld [vmem:[%s356 + $0x6b8] sm:$0xff]
        %v677 = vld [vmem:[%s356 + $0x6c0] sm:$0xff]
        %v678 = vld [vmem:[%s356 + $0x6c8] sm:$0xff]
        %v679 = vld [vmem:[%s356 + $0x6d0] sm:$0xff]
        %v680 = vld [vmem:[%s356 + $0x6d8] sm:$0xff]
        %v681 = vld [vmem:[%s356 + $0x6e0] sm:$0xff]
        %v682 = vld [vmem:[%s356 + $0x6e8] sm:$0xff]
        %v683 = vld [vmem:[%s356 + $0x6f0] sm:$0xff]
        %v684 = vld [vmem:[%s356 + $0x6f8] sm:$0xff]
        %v685 = vld [vmem:[%s356 + $0x700] sm:$0xff]
        %v686 = vld [vmem:[%s356 + $0x708] sm:$0xff]
        %v687 = vld [vmem:[%s356 + $0x710] sm:$0xff]
        %v688 = vld [vmem:[%s356 + $0x718] sm:$0xff]
        %v689 = vld [vmem:[%s356 + $0x720] sm:$0xff]
        %v690 = vld [vmem:[%s356 + $0x728] sm:$0xff]
        %v691 = vld [vmem:[%s356 + $0x730] sm:$0xff]
        %v692 = vld [vmem:[%s356 + $0x738] sm:$0xff]
        %v693 = vld [vmem:[%s356 + $0x740] sm:$0xff]
        %v694 = vld [vmem:[%s356 + $0x748] sm:$0xff]
        %v695 = vld [vmem:[%s356 + $0x750] sm:$0xff]
        %v696 = vld [vmem:[%s356 + $0x758] sm:$0xff]
        %v697 = vld [vmem:[%s356 + $0x760] sm:$0xff]
        %v698 = vld [vmem:[%s356 + $0x768] sm:$0xff]
        %v699 = vld [vmem:[%s356 + $0x770] sm:$0xff]
        %v700 = vld [vmem:[%s356 + $0x778] sm:$0xff]
        %v701 = vld [vmem:[%s356 + $0x780] sm:$0xff]
        %v702 = vld [vmem:[%s356 + $0x788] sm:$0xff]
        %v703 = vld [vmem:[%s356 + $0x790] sm:$0xff]
        %v704 = vld [vmem:[%s356 + $0x798] sm:$0xff]
        %v705 = vld [vmem:[%s356 + $0x7a0] sm:$0xff]
        %v706 = vld [vmem:[%s356 + $0x7a8] sm:$0xff]
        %v707 = vld [vmem:[%s356 + $0x7b0] sm:$0xff]
        %v708 = vld [vmem:[%s356 + $0x7b8] sm:$0xff]
        %v709 = vld [vmem:[%s356 + $0x7c0] sm:$0xff]
        %v710 = vld [vmem:[%s356 + $0x7c8] sm:$0xff]
        %v711 = vld [vmem:[%s356 + $0x7d0] sm:$0xff]
        %v712 = vld [vmem:[%s356 + $0x7d8] sm:$0xff]
        %v713 = vld [vmem:[%s356 + $0x7e0] sm:$0xff]
        %v714 = vld [vmem:[%s356 + $0x7e8] sm:$0xff]
        %v715 = vld [vmem:[%s356 + $0x7f0] sm:$0xff]
        %v716 = vld [vmem:[%s356 + $0x7f8] sm:$0xff]
        %v717 = vld [vmem:[%s356 + $0x800] sm:$0xff]
        %v718 = vld [vmem:[%s356 + $0x808] sm:$0xff]
        %v719 = vld [vmem:[%s356 + $0x810] sm:$0xff]
        %v720 = vld [vmem:[%s356 + $0x818] sm:$0xff]
        %v721 = vld [vmem:[%s356 + $0x820] sm:$0xff]
        %v722 = vld [vmem:[%s356 + $0x828] sm:$0xff]
        %v723 = vld [vmem:[%s356 + $0x830] sm:$0xff]
        %v724 = vld [vmem:[%s356 + $0x838] sm:$0xff]
        %v725 = vld [vmem:[%s356 + $0x840] sm:$0xff]
        %v726 = vld [vmem:[%s356 + $0x848] sm:$0xff]
        %v727 = vld [vmem:[%s356 + $0x850] sm:$0xff]
        %v728 = vld [vmem:[%s356 + $0x858] sm:$0xff]
        %v729 = vld [vmem:[%s356 + $0x860] sm:$0xff]
        %v730 = vld [vmem:[%s356 + $0x868] sm:$0xff]
        %v731 = vld [vmem:[%s356 + $0x870] sm:$0xff]
        %v732 = vld [vmem:[%s356 + $0x878] sm:$0xff]
        %v733 = vld [vmem:[%s356 + $0x880] sm:$0xff]
        %v734 = vld [vmem:[%s356 + $0x888] sm:$0xff]
        %v735 = vld [vmem:[%s356 + $0x890] sm:$0xff]
        %v736 = vld [vmem:[%s356 + $0x898] sm:$0xff]
        %v737 = vld [vmem:[%s356 + $0x8a0] sm:$0xff]
        %v738 = vld [vmem:[%s356 + $0x8a8] sm:$0xff]
        %v739 = vld [vmem:[%s356 + $0x8b0] sm:$0xff]
        %v740 = vld [vmem:[%s356 + $0x8b8] sm:$0xff]
        %v741 = vld [vmem:[%s356 + $0x8c0] sm:$0xff]
        %v742 = vld [vmem:[%s356 + $0x8c8] sm:$0xff]
        %v743 = vld [vmem:[%s356 + $0x8d0] sm:$0xff]
        %v744 = vld [vmem:[%s356 + $0x8d8] sm:$0xff]
        %v745 = vld [vmem:[%s356 + $0x8e0] sm:$0xff]
        %v746 = vld [vmem:[%s356 + $0x8e8] sm:$0xff]
        %v747 = vld [vmem:[%s356 + $0x8f0] sm:$0xff]
        %v748 = vld [vmem:[%s356 + $0x8f8] sm:$0xff]
        %v749 = vld [vmem:[%s356 + $0x900] sm:$0xff]
        %v750 = vld [vmem:[%s356 + $0x908] sm:$0xff]
        %v751 = vld [vmem:[%s356 + $0x910] sm:$0xff]
        %v752 = vld [vmem:[%s356 + $0x918] sm:$0xff]
        %v753 = vld [vmem:[%s356 + $0x920] sm:$0xff]
        %v754 = vld [vmem:[%s356 + $0x928] sm:$0xff]
        %v755 = vld [vmem:[%s356 + $0x930] sm:$0xff]
        %v756 = vld [vmem:[%s356 + $0x938] sm:$0xff]
        %v757 = vld [vmem:[%s356 + $0x940] sm:$0xff]
        %v758 = vld [vmem:[%s356 + $0x948] sm:$0xff]
        %v759 = vld [vmem:[%s356 + $0x950] sm:$0xff]
        %v760 = vld [vmem:[%s356 + $0x958] sm:$0xff]
        %v761 = vld [vmem:[%s356 + $0x960] sm:$0xff]
        %v762 = vld [vmem:[%s356 + $0x968] sm:$0xff]
        %v763 = vld [vmem:[%s356 + $0x970] sm:$0xff]
        %v764 = vld [vmem:[%s356 + $0x978] sm:$0xff]
        %v765 = vld [vmem:[%s356 + $0x980] sm:$0xff]
        %v766 = vld [vmem:[%s356 + $0x988] sm:$0xff]
        %v767 = vld [vmem:[%s356 + $0x990] sm:$0xff]
        %v768 = vld [vmem:[%s356 + $0x998] sm:$0xff]
        %v769 = vld [vmem:[%s356 + $0x9a0] sm:$0xff]
        %v770 = vld [vmem:[%s356 + $0x9a8] sm:$0xff]
        %v771 = vld [vmem:[%s356 + $0x9b0] sm:$0xff]
        %v772 = vld [vmem:[%s356 + $0x9b8] sm:$0xff]
        %v773 = vld [vmem:[%s356 + $0x9c0] sm:$0xff]
        %v774 = vld [vmem:[%s356 + $0x9c8] sm:$0xff]
        %v775 = vld [vmem:[%s356 + $0x9d0] sm:$0xff]
        %v776 = vld [vmem:[%s356 + $0x9d8] sm:$0xff]
        %v777 = vld [vmem:[%s356 + $0x9e0] sm:$0xff]
        %v778 = vld [vmem:[%s356 + $0x9e8] sm:$0xff]
        %v779 = vld [vmem:[%s356 + $0x9f0] sm:$0xff]
        %v780 = vld [vmem:[%s356 + $0x9f8] sm:$0xff]
        %v781 = vld [vmem:[%s356 + $0xa00] sm:$0xff]
        %v782 = vld [vmem:[%s356 + $0xa08] sm:$0xff]
        %v783 = vld [vmem:[%s356 + $0xa10] sm:$0xff]
        %v784 = vld [vmem:[%s356 + $0xa18] sm:$0xff]
        %v785 = vld [vmem:[%s356 + $0xa20] sm:$0xff]
        %v786 = vld [vmem:[%s356 + $0xa28] sm:$0xff]
        %v787 = vld [vmem:[%s356 + $0xa30] sm:$0xff]
        %v788 = vld [vmem:[%s356 + $0xa38] sm:$0xff]
        %v789 = vld [vmem:[%s356 + $0xa40] sm:$0xff]
        %v790 = vld [vmem:[%s356 + $0xa48] sm:$0xff]
        %v791 = vld [vmem:[%s356 + $0xa50] sm:$0xff]
        %v792 = vld [vmem:[%s356 + $0xa58] sm:$0xff]
        %v793 = vld [vmem:[%s356 + $0xa60] sm:$0xff]
        %v794 = vld [vmem:[%s356 + $0xa68] sm:$0xff]
        %v795 = vld [vmem:[%s356 + $0xa70] sm:$0xff]
        %v796 = vld [vmem:[%s356 + $0xa78] sm:$0xff]
        %v797 = vld [vmem:[%s356 + $0xa80] sm:$0xff]
        %v798 = vld [vmem:[%s356 + $0xa88] sm:$0xff]
        %v799 = vld [vmem:[%s356 + $0xa90] sm:$0xff]
        %v800 = vld [vmem:[%s356 + $0xa98] sm:$0xff]
        %v801 = vld [vmem:[%s356 + $0xaa0] sm:$0xff]
        %v802 = vld [vmem:[%s356 + $0xaa8] sm:$0xff]
        %v803 = vld [vmem:[%s356 + $0xab0] sm:$0xff]
        %v804 = vld [vmem:[%s356 + $0xab8] sm:$0xff]
        %v805 = vld [vmem:[%s356 + $0xac0] sm:$0xff]
        %v806 = vld [vmem:[%s356 + $0xac8] sm:$0xff]
        %v807 = vld [vmem:[%s356 + $0xad0] sm:$0xff]
        %v808 = vld [vmem:[%s356 + $0xad8] sm:$0xff]
        %v809 = vld [vmem:[%s356 + $0xae0] sm:$0xff]
        %v810 = vld [vmem:[%s356 + $0xae8] sm:$0xff]
        %v811 = vld [vmem:[%s356 + $0xaf0] sm:$0xff]
        %v812 = vld [vmem:[%s356 + $0xaf8] sm:$0xff]
        %v813 = vld [vmem:[%s356 + $0xb00] sm:$0xff]
        %v814 = vld [vmem:[%s356 + $0xb08] sm:$0xff]
        %v815 = vld [vmem:[%s356 + $0xb10] sm:$0xff]
        %v816 = vld [vmem:[%s356 + $0xb18] sm:$0xff]
        %v817 = vld [vmem:[%s356 + $0xb20] sm:$0xff]
        %v818 = vld [vmem:[%s356 + $0xb28] sm:$0xff]
        %v819 = vld [vmem:[%s356 + $0xb30] sm:$0xff]
        %v820 = vld [vmem:[%s356 + $0xb38] sm:$0xff]
        %v821 = vld [vmem:[%s356 + $0xb40] sm:$0xff]
        %v822 = vld [vmem:[%s356 + $0xb48] sm:$0xff]
        %v823 = vld [vmem:[%s356 + $0xb50] sm:$0xff]
        %v824 = vld [vmem:[%s356 + $0xb58] sm:$0xff]
        %v825 = vld [vmem:[%s356 + $0xb60] sm:$0xff]
        %v826 = vld [vmem:[%s356 + $0xb68] sm:$0xff]
        %v827 = vld [vmem:[%s356 + $0xb70] sm:$0xff]
        %v828 = vld [vmem:[%s356 + $0xb78] sm:$0xff]
        %v829 = vld [vmem:[%s356 + $0xb80] sm:$0xff]
        %v830 = vld [vmem:[%s356 + $0xb88] sm:$0xff]
        %v831 = vld [vmem:[%s356 + $0xb90] sm:$0xff]
        %v832 = vld [vmem:[%s356 + $0xb98] sm:$0xff]
        %v833 = vld [vmem:[%s356 + $0xba0] sm:$0xff]
        %v834 = vld [vmem:[%s356 + $0xba8] sm:$0xff]
        %v835 = vld [vmem:[%s356 + $0xbb0] sm:$0xff]
        %v836 = vld [vmem:[%s356 + $0xbb8] sm:$0xff]
        %v837 = vld [vmem:[%s356 + $0xbc0] sm:$0xff]
        %v838 = vld [vmem:[%s356 + $0xbc8] sm:$0xff]
        %v839 = vld [vmem:[%s356 + $0xbd0] sm:$0xff]
        %v840 = vld [vmem:[%s356 + $0xbd8] sm:$0xff]
        %v841 = vld [vmem:[%s356 + $0xbe0] sm:$0xff]
        %v842 = vld [vmem:[%s356 + $0xbe8] sm:$0xff]
        %v843 = vld [vmem:[%s356 + $0xbf0] sm:$0xff]
        %v844 = vld [vmem:[%s356 + $0xbf8] sm:$0xff]
        %v845 = vld [vmem:[%s356 + $0xc00] sm:$0xff]
        %v846 = vld [vmem:[%s356 + $0xc08] sm:$0xff]
        %v847 = vld [vmem:[%s356 + $0xc10] sm:$0xff]
        %v848 = vld [vmem:[%s356 + $0xc18] sm:$0xff]
        %v849 = vld [vmem:[%s356 + $0xc20] sm:$0xff]
        %v850 = vld [vmem:[%s356 + $0xc28] sm:$0xff]
        %v851 = vld [vmem:[%s356 + $0xc30] sm:$0xff]
        %v852 = vld [vmem:[%s356 + $0xc38] sm:$0xff]
        %v853 = vld [vmem:[%s356 + $0xc40] sm:$0xff]
        %v854 = vld [vmem:[%s356 + $0xc48] sm:$0xff]
        %v855 = vld [vmem:[%s356 + $0xc50] sm:$0xff]
        %v856 = vld [vmem:[%s356 + $0xc58] sm:$0xff]
        %v857 = vld [vmem:[%s356 + $0xc60] sm:$0xff]
        %v858 = vld [vmem:[%s356 + $0xc68] sm:$0xff]
        %v859 = vld [vmem:[%s356 + $0xc70] sm:$0xff]
        %v860 = vld [vmem:[%s356 + $0xc78] sm:$0xff]
        %v861 = vld [vmem:[%s356 + $0xc80] sm:$0xff]
        %v862 = vld [vmem:[%s356 + $0xc88] sm:$0xff]
        %v863 = vld [vmem:[%s356 + $0xc90] sm:$0xff]
        %v864 = vld [vmem:[%s356 + $0xc98] sm:$0xff]
        %v865 = vld [vmem:[%s356 + $0xca0] sm:$0xff]
        %v866 = vld [vmem:[%s356 + $0xca8] sm:$0xff]
        %v867 = vld [vmem:[%s356 + $0xcb0] sm:$0xff]
        %v868 = vld [vmem:[%s356 + $0xcb8] sm:$0xff]
        %v869 = vld [vmem:[%s356 + $0xcc0] sm:$0xff]
        %v870 = vld [vmem:[%s356 + $0xcc8] sm:$0xff]
        %v871 = vld [vmem:[%s356 + $0xcd0] sm:$0xff]
        %v872 = vld [vmem:[%s356 + $0xcd8] sm:$0xff]
        %v873 = vld [vmem:[%s356 + $0xce0] sm:$0xff]
        %v874 = vld [vmem:[%s356 + $0xce8] sm:$0xff]
        %v875 = vld [vmem:[%s356 + $0xcf0] sm:$0xff]
        %v876 = vld [vmem:[%s356 + $0xcf8] sm:$0xff]
        %v877 = vld [vmem:[%s356 + $0xd00] sm:$0xff]
        %v878 = vld [vmem:[%s356 + $0xd08] sm:$0xff]
        %v879 = vld [vmem:[%s356 + $0xd10] sm:$0xff]
        %v880 = vld [vmem:[%s356 + $0xd18] sm:$0xff]
        %v881 = vld [vmem:[%s356 + $0xd20] sm:$0xff]
        %v882 = vld [vmem:[%s356 + $0xd28] sm:$0xff]
        %v883 = vld [vmem:[%s356 + $0xd30] sm:$0xff]
        %v884 = vld [vmem:[%s356 + $0xd38] sm:$0xff]
        %v885 = vld [vmem:[%s356 + $0xd40] sm:$0xff]
        %v886 = vld [vmem:[%s356 + $0xd48] sm:$0xff]
        %v887 = vld [vmem:[%s356 + $0xd50] sm:$0xff]
        %v888 = vld [vmem:[%s356 + $0xd58] sm:$0xff]
        %v889 = vld [vmem:[%s356 + $0xd60] sm:$0xff]
        %v890 = vld [vmem:[%s356 + $0xd68] sm:$0xff]
        %v891 = vld [vmem:[%s356 + $0xd70] sm:$0xff]
        %v892 = vld [vmem:[%s356 + $0xd78] sm:$0xff]
        %v893 = vld [vmem:[%s356 + $0xd80] sm:$0xff]
        %v894 = vld [vmem:[%s356 + $0xd88] sm:$0xff]
        %v895 = vld [vmem:[%s356 + $0xd90] sm:$0xff]
        %v896 = vld [vmem:[%s356 + $0xd98] sm:$0xff]
        %v897 = vld [vmem:[%s356 + $0xda0] sm:$0xff]
        %v898 = vld [vmem:[%s356 + $0xda8] sm:$0xff]
        %v899 = vld [vmem:[%s356 + $0xdb0] sm:$0xff]
        %v900 = vld [vmem:[%s356 + $0xdb8] sm:$0xff]
        %v901 = vld [vmem:[%s356 + $0xdc0] sm:$0xff]
        %v902 = vld [vmem:[%s356 + $0xdc8] sm:$0xff]
        %v903 = vld [vmem:[%s356 + $0xdd0] sm:$0xff]
        %v904 = vld [vmem:[%s356 + $0xdd8] sm:$0xff]
        %v905 = vld [vmem:[%s356 + $0xde0] sm:$0xff]
        %v906 = vld [vmem:[%s356 + $0xde8] sm:$0xff]
        %v907 = vld [vmem:[%s356 + $0xdf0] sm:$0xff]
        %v908 = vld [vmem:[%s356 + $0xdf8] sm:$0xff]
        %v909 = vld [vmem:[%s356 + $0xe00] sm:$0xff]
        %v910 = vld [vmem:[%s356 + $0xe08] sm:$0xff]
        %v911 = vld [vmem:[%s356 + $0xe10] sm:$0xff]
        %v912 = vld [vmem:[%s356 + $0xe18] sm:$0xff]
        %v913 = vld [vmem:[%s356 + $0xe20] sm:$0xff]
        %v914 = vld [vmem:[%s356 + $0xe28] sm:$0xff]
        %v915 = vld [vmem:[%s356 + $0xe30] sm:$0xff]
        %v916 = vld [vmem:[%s356 + $0xe38] sm:$0xff]
        %v917 = vld [vmem:[%s356 + $0xe40] sm:$0xff]
        %v918 = vld [vmem:[%s356 + $0xe48] sm:$0xff]
        %v919 = vld [vmem:[%s356 + $0xe50] sm:$0xff]
        %v920 = vld [vmem:[%s356 + $0xe58] sm:$0xff]
        %v921 = vld [vmem:[%s356 + $0xe60] sm:$0xff]
        %v922 = vld [vmem:[%s356 + $0xe68] sm:$0xff]
        %v923 = vld [vmem:[%s356 + $0xe70] sm:$0xff]
        %v924 = vld [vmem:[%s356 + $0xe78] sm:$0xff]
        %v925 = vld [vmem:[%s356 + $0xe80] sm:$0xff]
        %v926 = vld [vmem:[%s356 + $0xe88] sm:$0xff]
        %v927 = vld [vmem:[%s356 + $0xe90] sm:$0xff]
        %v928 = vld [vmem:[%s356 + $0xe98] sm:$0xff]
        %v929 = vld [vmem:[%s356 + $0xea0] sm:$0xff]
        %v930 = vld [vmem:[%s356 + $0xea8] sm:$0xff]
        %v931 = vld [vmem:[%s356 + $0xeb0] sm:$0xff]
        %v932 = vld [vmem:[%s356 + $0xeb8] sm:$0xff]
        %v933 = vld [vmem:[%s356 + $0xec0] sm:$0xff]
        %v934 = vld [vmem:[%s356 + $0xec8] sm:$0xff]
        %v935 = vld [vmem:[%s356 + $0xed0] sm:$0xff]
        %v936 = vld [vmem:[%s356 + $0xed8] sm:$0xff]
        %v937 = vld [vmem:[%s356 + $0xee0] sm:$0xff]
        %v938 = vld [vmem:[%s356 + $0xee8] sm:$0xff]
        %v939 = vld [vmem:[%s356 + $0xef0] sm:$0xff]
        %v940 = vld [vmem:[%s356 + $0xef8] sm:$0xff]
        %v941 = vld [vmem:[%s356 + $0xf00] sm:$0xff]
        %v942 = vld [vmem:[%s356 + $0xf08] sm:$0xff]
        %v943 = vld [vmem:[%s356 + $0xf10] sm:$0xff]
        %v944 = vld [vmem:[%s356 + $0xf18] sm:$0xff]
        %v945 = vld [vmem:[%s356 + $0xf20] sm:$0xff]
        %v946 = vld [vmem:[%s356 + $0xf28] sm:$0xff]
        %v947 = vld [vmem:[%s356 + $0xf30] sm:$0xff]
        %v948 = vld [vmem:[%s356 + $0xf38] sm:$0xff]
        %v949 = vld [vmem:[%s356 + $0xf40] sm:$0xff]
        %v950 = vld [vmem:[%s356 + $0xf48] sm:$0xff]
        %v951 = vld [vmem:[%s356 + $0xf50] sm:$0xff]
        %v952 = vld [vmem:[%s356 + $0xf58] sm:$0xff]
        %v953 = vld [vmem:[%s356 + $0xf60] sm:$0xff]
        %v954 = vld [vmem:[%s356 + $0xf68] sm:$0xff]
        %v955 = vld [vmem:[%s356 + $0xf70] sm:$0xff]
        %v956 = vld [vmem:[%s356 + $0xf78] sm:$0xff]
        %v957 = vld [vmem:[%s356 + $0xf80] sm:$0xff]
        %v958 = vld [vmem:[%s356 + $0xf88] sm:$0xff]
        %v959 = vld [vmem:[%s356 + $0xf90] sm:$0xff]
        %v960 = vld [vmem:[%s356 + $0xf98] sm:$0xff]
        %v961 = vld [vmem:[%s356 + $0xfa0] sm:$0xff]
        %v962 = vld [vmem:[%s356 + $0xfa8] sm:$0xff]
        %v963 = vld [vmem:[%s356 + $0xfb0] sm:$0xff]
        %v964 = vld [vmem:[%s356 + $0xfb8] sm:$0xff]
        %v965 = vld [vmem:[%s356 + $0xfc0] sm:$0xff]
        %v966 = vld [vmem:[%s356 + $0xfc8] sm:$0xff]
        %v967 = vld [vmem:[%s356 + $0xfd0] sm:$0xff]
        %v968 = vld [vmem:[%s356 + $0xfd8] sm:$0xff]
        %v969 = vld [vmem:[%s356 + $0xfe0] sm:$0xff]
        %v970 = vld [vmem:[%s356 + $0xfe8] sm:$0xff]
        %v971 = vld [vmem:[%s356 + $0xff0] sm:$0xff]
        %v972 = vld [vmem:[%s356 + $0xff8] sm:$0xff]
        %v973 = vld [vmem:[%s356 + $0x1000] sm:$0xff]
        %v974 = vld [vmem:[%s356 + $0x1008] sm:$0xff]
        %v975 = vld [vmem:[%s356 + $0x1010] sm:$0xff]
        %v976 = vld [vmem:[%s356 + $0x1018] sm:$0xff]
        %v977 = vld [vmem:[%s356 + $0x1020] sm:$0xff]
        %v978 = vld [vmem:[%s356 + $0x1028] sm:$0xff]
        %v979 = vld [vmem:[%s356 + $0x1030] sm:$0xff]
        %v980 = vld [vmem:[%s356 + $0x1038] sm:$0xff]
        %v981 = vld [vmem:[%s356 + $0x1040] sm:$0xff]
        %v982 = vld [vmem:[%s356 + $0x1048] sm:$0xff]
        %v983 = vld [vmem:[%s356 + $0x1050] sm:$0xff]
        %v984 = vld [vmem:[%s356 + $0x1058] sm:$0xff]
        %v985 = vld [vmem:[%s356 + $0x1060] sm:$0xff]
        %v986 = vld [vmem:[%s356 + $0x1068] sm:$0xff]
        %v987 = vld [vmem:[%s356 + $0x1070] sm:$0xff]
        %v988 = vld [vmem:[%s356 + $0x1078] sm:$0xff]
        %v989 = vld [vmem:[%s356 + $0x1080] sm:$0xff]
        %v990 = vld [vmem:[%s356 + $0x1088] sm:$0xff]
        %v991 = vld [vmem:[%s356 + $0x1090] sm:$0xff]
        %v992 = vld [vmem:[%s356 + $0x1098] sm:$0xff]
        %v993 = vld [vmem:[%s356 + $0x10a0] sm:$0xff]
        %v994 = vld [vmem:[%s356 + $0x10a8] sm:$0xff]
        %v995 = vld [vmem:[%s356 + $0x10b0] sm:$0xff]
        %v996 = vld [vmem:[%s356 + $0x10b8] sm:$0xff]
        %v997 = vld [vmem:[%s356 + $0x10c0] sm:$0xff]
        %v998 = vld [vmem:[%s356 + $0x10c8] sm:$0xff]
        %v999 = vld [vmem:[%s356 + $0x10d0] sm:$0xff]
        %v1000 = vld [vmem:[%s356 + $0x10d8] sm:$0xff]
        %v1001 = vld [vmem:[%s356 + $0x10e0] sm:$0xff]
        %v1002 = vld [vmem:[%s356 + $0x10e8] sm:$0xff]
        %v1003 = vld [vmem:[%s356 + $0x10f0] sm:$0xff]
        %v1004 = vld [vmem:[%s356 + $0x10f8] sm:$0xff]
        %v1005 = vld [vmem:[%s356 + $0x1100] sm:$0xff]
        %v1006 = vld [vmem:[%s356 + $0x1108] sm:$0xff]
        %v1007 = vld [vmem:[%s356 + $0x1110] sm:$0xff]
        %v1008 = vld [vmem:[%s356 + $0x1118] sm:$0xff]
        %v1009 = vld [vmem:[%s356 + $0x1120] sm:$0xff]
        %v1010 = vld [vmem:[%s356 + $0x1128] sm:$0xff]
        %v1011 = vld [vmem:[%s356 + $0x1130] sm:$0xff]
        %v1012 = vld [vmem:[%s356 + $0x1138] sm:$0xff]
        %v1013 = vld [vmem:[%s356 + $0x1140] sm:$0xff]
        %v1014 = vld [vmem:[%s356 + $0x1148] sm:$0xff]
        %v1015 = vld [vmem:[%s356 + $0x1150] sm:$0xff]
        %v1016 = vld [vmem:[%s356 + $0x1158] sm:$0xff]
        %v1017 = vld [vmem:[%s356 + $0x1160] sm:$0xff]
        %v1018 = vld [vmem:[%s356 + $0x1168] sm:$0xff]
        %v1019 = vld [vmem:[%s356 + $0x1170] sm:$0xff]
        %v1020 = vld [vmem:[%s356 + $0x1178] sm:$0xff]
        %v1021 = vld [vmem:[%s356 + $0x1180] sm:$0xff]
        %v1022 = vld [vmem:[%s356 + $0x1188] sm:$0xff]
        %v1023 = vld [vmem:[%s356 + $0x1190] sm:$0xff]
        %v1024 = vld [vmem:[%s356 + $0x1198] sm:$0xff]
        %v1025 = vld [vmem:[%s356 + $0x11a0] sm:$0xff]
        %v1026 = vld [vmem:[%s356 + $0x11a8] sm:$0xff]
        %v1027 = vld [vmem:[%s356 + $0x11b0] sm:$0xff]
        %v1028 = vld [vmem:[%s356 + $0x11b8] sm:$0xff]
        %v1029 = vld [vmem:[%s356 + $0x11c0] sm:$0xff]
        %v1030 = vld [vmem:[%s356 + $0x11c8] sm:$0xff]
        %v1031 = vld [vmem:[%s356 + $0x11d0] sm:$0xff]
        %v1032 = vld [vmem:[%s356 + $0x11d8] sm:$0xff]
        %v1033 = vld [vmem:[%s356 + $0x11e0] sm:$0xff]
        %v1034 = vld [vmem:[%s356 + $0x11e8] sm:$0xff]
        %v1035 = vld [vmem:[%s356 + $0x11f0] sm:$0xff]
        %v1036 = vld [vmem:[%s356 + $0x11f8] sm:$0xff]
        %v1037 = vld [vmem:[%s356 + $0x1200] sm:$0xff]
        %v1038 = vld [vmem:[%s356 + $0x1208] sm:$0xff]
        %v1039 = vld [vmem:[%s356 + $0x1210] sm:$0xff]
        %v1040 = vld [vmem:[%s356 + $0x1218] sm:$0xff]
        %v1041 = vld [vmem:[%s356 + $0x1220] sm:$0xff]
        %v1042 = vld [vmem:[%s356 + $0x1228] sm:$0xff]
        %v1043 = vld [vmem:[%s356 + $0x1230] sm:$0xff]
        %v1044 = vld [vmem:[%s356 + $0x1238] sm:$0xff]
        %v1045 = vld [vmem:[%s356 + $0x1240] sm:$0xff]
        %v1046 = vld [vmem:[%s356 + $0x1248] sm:$0xff]
        %v1047 = vld [vmem:[%s356 + $0x1250] sm:$0xff]
        %v1048 = vld [vmem:[%s356 + $0x1258] sm:$0xff]
        %v1049 = vld [vmem:[%s356 + $0x1260] sm:$0xff]
        %v1050 = vld [vmem:[%s356 + $0x1268] sm:$0xff]
        %v1051 = vld [vmem:[%s356 + $0x1270] sm:$0xff]
        %v1052 = vld [vmem:[%s356 + $0x1278] sm:$0xff]
        %v1053 = vld [vmem:[%s356 + $0x1280] sm:$0xff]
        %v1054 = vld [vmem:[%s356 + $0x1288] sm:$0xff]
        %v1055 = vld [vmem:[%s356 + $0x1290] sm:$0xff]
        %v1056 = vld [vmem:[%s356 + $0x1298] sm:$0xff]
        %v1057 = vld [vmem:[%s356 + $0x12a0] sm:$0xff]
        %v1058 = vld [vmem:[%s356 + $0x12a8] sm:$0xff]
        %v1059 = vld [vmem:[%s356 + $0x12b0] sm:$0xff]
        %v1060 = vld [vmem:[%s356 + $0x12b8] sm:$0xff]
        %v1061 = vld [vmem:[%s356 + $0x12c0] sm:$0xff]
        %v1062 = vld [vmem:[%s356 + $0x12c8] sm:$0xff]
        %v1063 = vld [vmem:[%s356 + $0x12d0] sm:$0xff]
        %v1064 = vld [vmem:[%s356 + $0x12d8] sm:$0xff]
        %v1065 = vld [vmem:[%s356 + $0x12e0] sm:$0xff]
        %v1066 = vld [vmem:[%s356 + $0x12e8] sm:$0xff]
        %v1067 = vld [vmem:[%s356 + $0x12f0] sm:$0xff]
        %v1068 = vld [vmem:[%s356 + $0x12f8] sm:$0xff]
        %v1069 = vld [vmem:[%s356 + $0x1300] sm:$0xff]
        %v1070 = vld [vmem:[%s356 + $0x1308] sm:$0xff]
        %v1071 = vld [vmem:[%s356 + $0x1310] sm:$0xff]
        %v1072 = vld [vmem:[%s356 + $0x1318] sm:$0xff]
        %v1073 = vld [vmem:[%s356 + $0x1320] sm:$0xff]
        %v1074 = vld [vmem:[%s356 + $0x1328] sm:$0xff]
        %v1075 = vld [vmem:[%s356 + $0x1330] sm:$0xff]
        %v1076 = vld [vmem:[%s356 + $0x1338] sm:$0xff]
        %v1077 = vld [vmem:[%s356 + $0x1340] sm:$0xff]
        %v1078 = vld [vmem:[%s356 + $0x1348] sm:$0xff]
        %v1079 = vld [vmem:[%s356 + $0x1350] sm:$0xff]
        %v1080 = vld [vmem:[%s356 + $0x1358] sm:$0xff]
        %v1081 = vld [vmem:[%s356 + $0x1360] sm:$0xff]
        %v1082 = vld [vmem:[%s356 + $0x1368] sm:$0xff]
        %v1083 = vld [vmem:[%s356 + $0x1370] sm:$0xff]
        %v1084 = vld [vmem:[%s356 + $0x1378] sm:$0xff]
        %v1085 = vld [vmem:[%s356 + $0x1380] sm:$0xff]
        %v1086 = vld [vmem:[%s356 + $0x1388] sm:$0xff]
        %v1087 = vld [vmem:[%s356 + $0x1390] sm:$0xff]
        %v1088 = vld [vmem:[%s356 + $0x1398] sm:$0xff]
        %v1089 = vld [vmem:[%s356 + $0x13a0] sm:$0xff]
        %v1090 = vld [vmem:[%s356 + $0x13a8] sm:$0xff]
        %v1091 = vld [vmem:[%s356 + $0x13b0] sm:$0xff]
        %v1092 = vld [vmem:[%s356 + $0x13b8] sm:$0xff]
        %v1093 = vld [vmem:[%s356 + $0x13c0] sm:$0xff]
        %v1094 = vld [vmem:[%s356 + $0x13c8] sm:$0xff]
        %v1095 = vld [vmem:[%s356 + $0x13d0] sm:$0xff]
        %v1096 = vld [vmem:[%s356 + $0x13d8] sm:$0xff]
        %v1097 = vld [vmem:[%s356 + $0x13e0] sm:$0xff]
        %v1098 = vld [vmem:[%s356 + $0x13e8] sm:$0xff]
        %v1099 = vld [vmem:[%s356 + $0x13f0] sm:$0xff]
        %v1100 = vld [vmem:[%s356 + $0x13f8] sm:$0xff]
        %v1109 = vunpack.c.l.b16 %v453
        %v1110 = vunpack.c.h.b16 %v453
        %v1111 = vunpack.c.l.b16 %v454
        %v1112 = vunpack.c.h.b16 %v454
        %v1113 = vunpack.c.l.b16 %v455
        %v1114 = vunpack.c.h.b16 %v455
        %v1115 = vunpack.c.l.b16 %v456
        %v1116 = vunpack.c.h.b16 %v456
        %v1117 = vunpack.c.l.b16 %v457
        %v1118 = vunpack.c.h.b16 %v457
        %v1119 = vunpack.c.l.b16 %v458
        %v1120 = vunpack.c.h.b16 %v458
        %v1121 = vunpack.c.l.b16 %v459
        %v1122 = vunpack.c.h.b16 %v459
        %v1123 = vunpack.c.l.b16 %v460
        %v1124 = vunpack.c.h.b16 %v460
        %v1125 = vpack.c.b16 %v1117, %v1109
        %v1126 = vpack.c.b16 %v1118, %v1110
        %v1127 = vpack.c.b16 %v1119, %v1111
        %v1128 = vpack.c.b16 %v1120, %v1112
        %v1129 = vpack.c.b16 %v1121, %v1113
        %v1130 = vpack.c.b16 %v1122, %v1114
        %v1131 = vpack.c.b16 %v1123, %v1115
        %v1132 = vpack.c.b16 %v1124, %v1116
        %v1781 = vunpack.c.l.b16 %v461
        %v1782 = vunpack.c.h.b16 %v461
        %v1783 = vunpack.c.l.b16 %v462
        %v1784 = vunpack.c.h.b16 %v462
        %v1785 = vunpack.c.l.b16 %v463
        %v1786 = vunpack.c.h.b16 %v463
        %v1787 = vunpack.c.l.b16 %v464
        %v1788 = vunpack.c.h.b16 %v464
        %v1789 = vunpack.c.l.b16 %v465
        %v1790 = vunpack.c.h.b16 %v465
        %v1791 = vunpack.c.l.b16 %v466
        %v1792 = vunpack.c.h.b16 %v466
        %v1793 = vunpack.c.l.b16 %v467
        %v1794 = vunpack.c.h.b16 %v467
        %v1795 = vunpack.c.l.b16 %v468
        %v1796 = vunpack.c.h.b16 %v468
        %v1797 = vunpack.c.l.b16 %v469
        %v1798 = vunpack.c.h.b16 %v469
        %v1799 = vunpack.c.l.b16 %v470
        %v1800 = vunpack.c.h.b16 %v470
        %v1801 = vunpack.c.l.b16 %v471
        %v1802 = vunpack.c.h.b16 %v471
        %v1803 = vunpack.c.l.b16 %v472
        %v1804 = vunpack.c.h.b16 %v472
        %v1805 = vunpack.c.l.b16 %v473
        %v1806 = vunpack.c.h.b16 %v473
        %v1807 = vunpack.c.l.b16 %v474
        %v1808 = vunpack.c.h.b16 %v474
        %v1809 = vunpack.c.l.b16 %v475
        %v1810 = vunpack.c.h.b16 %v475
        %v1811 = vunpack.c.l.b16 %v476
        %v1812 = vunpack.c.h.b16 %v476
        %v1813 = vunpack.c.l.b16 %v477
        %v1814 = vunpack.c.h.b16 %v477
        %v1815 = vunpack.c.l.b16 %v478
        %v1816 = vunpack.c.h.b16 %v478
        %v1817 = vunpack.c.l.b16 %v479
        %v1818 = vunpack.c.h.b16 %v479
        %v1819 = vunpack.c.l.b16 %v480
        %v1820 = vunpack.c.h.b16 %v480
        %v1821 = vunpack.c.l.b16 %v481
        %v1822 = vunpack.c.h.b16 %v481
        %v1823 = vunpack.c.l.b16 %v482
        %v1824 = vunpack.c.h.b16 %v482
        %v1825 = vunpack.c.l.b16 %v483
        %v1826 = vunpack.c.h.b16 %v483
        %v1827 = vunpack.c.l.b16 %v484
        %v1828 = vunpack.c.h.b16 %v484
        %v1829 = vunpack.c.l.b16 %v485
        %v1830 = vunpack.c.h.b16 %v485
        %v1831 = vunpack.c.l.b16 %v486
        %v1832 = vunpack.c.h.b16 %v486
        %v1833 = vunpack.c.l.b16 %v487
        %v1834 = vunpack.c.h.b16 %v487
        %v1835 = vunpack.c.l.b16 %v488
        %v1836 = vunpack.c.h.b16 %v488
        %v1837 = vunpack.c.l.b16 %v489
        %v1838 = vunpack.c.h.b16 %v489
        %v1839 = vunpack.c.l.b16 %v490
        %v1840 = vunpack.c.h.b16 %v490
        %v1841 = vunpack.c.l.b16 %v491
        %v1842 = vunpack.c.h.b16 %v491
        %v1843 = vunpack.c.l.b16 %v492
        %v1844 = vunpack.c.h.b16 %v492
        %v1845 = vunpack.c.l.b16 %v493
        %v1846 = vunpack.c.h.b16 %v493
        %v1847 = vunpack.c.l.b16 %v494
        %v1848 = vunpack.c.h.b16 %v494
        %v1849 = vunpack.c.l.b16 %v495
        %v1850 = vunpack.c.h.b16 %v495
        %v1851 = vunpack.c.l.b16 %v496
        %v1852 = vunpack.c.h.b16 %v496
        %v1853 = vunpack.c.l.b16 %v497
        %v1854 = vunpack.c.h.b16 %v497
        %v1855 = vunpack.c.l.b16 %v498
        %v1856 = vunpack.c.h.b16 %v498
        %v1857 = vunpack.c.l.b16 %v499
        %v1858 = vunpack.c.h.b16 %v499
        %v1859 = vunpack.c.l.b16 %v500
        %v1860 = vunpack.c.h.b16 %v500
        %v1861 = vunpack.c.l.b16 %v501
        %v1862 = vunpack.c.h.b16 %v501
        %v1863 = vunpack.c.l.b16 %v502
        %v1864 = vunpack.c.h.b16 %v502
        %v1865 = vunpack.c.l.b16 %v503
        %v1866 = vunpack.c.h.b16 %v503
        %v1867 = vunpack.c.l.b16 %v504
        %v1868 = vunpack.c.h.b16 %v504
        %v1869 = vunpack.c.l.b16 %v505
        %v1870 = vunpack.c.h.b16 %v505
        %v1871 = vunpack.c.l.b16 %v506
        %v1872 = vunpack.c.h.b16 %v506
        %v1873 = vunpack.c.l.b16 %v507
        %v1874 = vunpack.c.h.b16 %v507
        %v1875 = vunpack.c.l.b16 %v508
        %v1876 = vunpack.c.h.b16 %v508
        %v1877 = vunpack.c.l.b16 %v509
        %v1878 = vunpack.c.h.b16 %v509
        %v1879 = vunpack.c.l.b16 %v510
        %v1880 = vunpack.c.h.b16 %v510
        %v1881 = vunpack.c.l.b16 %v511
        %v1882 = vunpack.c.h.b16 %v511
        %v1883 = vunpack.c.l.b16 %v512
        %v1884 = vunpack.c.h.b16 %v512
        %v1885 = vunpack.c.l.b16 %v513
        %v1886 = vunpack.c.h.b16 %v513
        %v1887 = vunpack.c.l.b16 %v514
        %v1888 = vunpack.c.h.b16 %v514
        %v1889 = vunpack.c.l.b16 %v515
        %v1890 = vunpack.c.h.b16 %v515
        %v1891 = vunpack.c.l.b16 %v516
        %v1892 = vunpack.c.h.b16 %v516
        %v1893 = vunpack.c.l.b16 %v517
        %v1894 = vunpack.c.h.b16 %v517
        %v1895 = vunpack.c.l.b16 %v518
        %v1896 = vunpack.c.h.b16 %v518
        %v1897 = vunpack.c.l.b16 %v519
        %v1898 = vunpack.c.h.b16 %v519
        %v1899 = vunpack.c.l.b16 %v520
        %v1900 = vunpack.c.h.b16 %v520
        %v1901 = vunpack.c.l.b16 %v521
        %v1902 = vunpack.c.h.b16 %v521
        %v1903 = vunpack.c.l.b16 %v522
        %v1904 = vunpack.c.h.b16 %v522
        %v1905 = vunpack.c.l.b16 %v523
        %v1906 = vunpack.c.h.b16 %v523
        %v1907 = vunpack.c.l.b16 %v524
        %v1908 = vunpack.c.h.b16 %v524
        %v1909 = vunpack.c.l.b16 %v525
        %v1910 = vunpack.c.h.b16 %v525
        %v1911 = vunpack.c.l.b16 %v526
        %v1912 = vunpack.c.h.b16 %v526
        %v1913 = vunpack.c.l.b16 %v527
        %v1914 = vunpack.c.h.b16 %v527
        %v1915 = vunpack.c.l.b16 %v528
        %v1916 = vunpack.c.h.b16 %v528
        %v1917 = vunpack.c.l.b16 %v529
        %v1918 = vunpack.c.h.b16 %v529
        %v1919 = vunpack.c.l.b16 %v530
        %v1920 = vunpack.c.h.b16 %v530
        %v1921 = vunpack.c.l.b16 %v531
        %v1922 = vunpack.c.h.b16 %v531
        %v1923 = vunpack.c.l.b16 %v532
        %v1924 = vunpack.c.h.b16 %v532
        %v1925 = vunpack.c.l.b16 %v533
        %v1926 = vunpack.c.h.b16 %v533
        %v1927 = vunpack.c.l.b16 %v534
        %v1928 = vunpack.c.h.b16 %v534
        %v1929 = vunpack.c.l.b16 %v535
        %v1930 = vunpack.c.h.b16 %v535
        %v1931 = vunpack.c.l.b16 %v536
        %v1932 = vunpack.c.h.b16 %v536
        %v1933 = vunpack.c.l.b16 %v537
        %v1934 = vunpack.c.h.b16 %v537
        %v1935 = vunpack.c.l.b16 %v538
        %v1936 = vunpack.c.h.b16 %v538
        %v1937 = vunpack.c.l.b16 %v539
        %v1938 = vunpack.c.h.b16 %v539
        %v1939 = vunpack.c.l.b16 %v540
        %v1940 = vunpack.c.h.b16 %v540
        %v1941 = vunpack.c.l.b16 %v541
        %v1942 = vunpack.c.h.b16 %v541
        %v1943 = vunpack.c.l.b16 %v542
        %v1944 = vunpack.c.h.b16 %v542
        %v1945 = vunpack.c.l.b16 %v543
        %v1946 = vunpack.c.h.b16 %v543
        %v1947 = vunpack.c.l.b16 %v544
        %v1948 = vunpack.c.h.b16 %v544
        %v1949 = vunpack.c.l.b16 %v545
        %v1950 = vunpack.c.h.b16 %v545
        %v1951 = vunpack.c.l.b16 %v546
        %v1952 = vunpack.c.h.b16 %v546
        %v1953 = vunpack.c.l.b16 %v547
        %v1954 = vunpack.c.h.b16 %v547
        %v1955 = vunpack.c.l.b16 %v548
        %v1956 = vunpack.c.h.b16 %v548
        %v1957 = vunpack.c.l.b16 %v549
        %v1958 = vunpack.c.h.b16 %v549
        %v1959 = vunpack.c.l.b16 %v550
        %v1960 = vunpack.c.h.b16 %v550
        %v1961 = vunpack.c.l.b16 %v551
        %v1962 = vunpack.c.h.b16 %v551
        %v1963 = vunpack.c.l.b16 %v552
        %v1964 = vunpack.c.h.b16 %v552
        %v1965 = vunpack.c.l.b16 %v553
        %v1966 = vunpack.c.h.b16 %v553
        %v1967 = vunpack.c.l.b16 %v554
        %v1968 = vunpack.c.h.b16 %v554
        %v1969 = vunpack.c.l.b16 %v555
        %v1970 = vunpack.c.h.b16 %v555
        %v1971 = vunpack.c.l.b16 %v556
        %v1972 = vunpack.c.h.b16 %v556
        %v1973 = vunpack.c.l.b16 %v557
        %v1974 = vunpack.c.h.b16 %v557
        %v1975 = vunpack.c.l.b16 %v558
        %v1976 = vunpack.c.h.b16 %v558
        %v1977 = vunpack.c.l.b16 %v559
        %v1978 = vunpack.c.h.b16 %v559
        %v1979 = vunpack.c.l.b16 %v560
        %v1980 = vunpack.c.h.b16 %v560
        %v1981 = vunpack.c.l.b16 %v561
        %v1982 = vunpack.c.h.b16 %v561
        %v1983 = vunpack.c.l.b16 %v562
        %v1984 = vunpack.c.h.b16 %v562
        %v1985 = vunpack.c.l.b16 %v563
        %v1986 = vunpack.c.h.b16 %v563
        %v1987 = vunpack.c.l.b16 %v564
        %v1988 = vunpack.c.h.b16 %v564
        %v1989 = vunpack.c.l.b16 %v565
        %v1990 = vunpack.c.h.b16 %v565
        %v1991 = vunpack.c.l.b16 %v566
        %v1992 = vunpack.c.h.b16 %v566
        %v1993 = vunpack.c.l.b16 %v567
        %v1994 = vunpack.c.h.b16 %v567
        %v1995 = vunpack.c.l.b16 %v568
        %v1996 = vunpack.c.h.b16 %v568
        %v1997 = vunpack.c.l.b16 %v569
        %v1998 = vunpack.c.h.b16 %v569
        %v1999 = vunpack.c.l.b16 %v570
        %v2000 = vunpack.c.h.b16 %v570
        %v2001 = vunpack.c.l.b16 %v571
        %v2002 = vunpack.c.h.b16 %v571
        %v2003 = vunpack.c.l.b16 %v572
        %v2004 = vunpack.c.h.b16 %v572
        %v2005 = vunpack.c.l.b16 %v573
        %v2006 = vunpack.c.h.b16 %v573
        %v2007 = vunpack.c.l.b16 %v574
        %v2008 = vunpack.c.h.b16 %v574
        %v2009 = vunpack.c.l.b16 %v575
        %v2010 = vunpack.c.h.b16 %v575
        %v2011 = vunpack.c.l.b16 %v576
        %v2012 = vunpack.c.h.b16 %v576
        %v2013 = vunpack.c.l.b16 %v577
        %v2014 = vunpack.c.h.b16 %v577
        %v2015 = vunpack.c.l.b16 %v578
        %v2016 = vunpack.c.h.b16 %v578
        %v2017 = vunpack.c.l.b16 %v579
        %v2018 = vunpack.c.h.b16 %v579
        %v2019 = vunpack.c.l.b16 %v580
        %v2020 = vunpack.c.h.b16 %v580
        %v2021 = vunpack.c.l.b16 %v581
        %v2022 = vunpack.c.h.b16 %v581
        %v2023 = vunpack.c.l.b16 %v582
        %v2024 = vunpack.c.h.b16 %v582
        %v2025 = vunpack.c.l.b16 %v583
        %v2026 = vunpack.c.h.b16 %v583
        %v2027 = vunpack.c.l.b16 %v584
        %v2028 = vunpack.c.h.b16 %v584
        %v2029 = vunpack.c.l.b16 %v585
        %v2030 = vunpack.c.h.b16 %v585
        %v2031 = vunpack.c.l.b16 %v586
        %v2032 = vunpack.c.h.b16 %v586
        %v2033 = vunpack.c.l.b16 %v587
        %v2034 = vunpack.c.h.b16 %v587
        %v2035 = vunpack.c.l.b16 %v588
        %v2036 = vunpack.c.h.b16 %v588
        %v2037 = vunpack.c.l.b16 %v589
        %v2038 = vunpack.c.h.b16 %v589
        %v2039 = vunpack.c.l.b16 %v590
        %v2040 = vunpack.c.h.b16 %v590
        %v2041 = vunpack.c.l.b16 %v591
        %v2042 = vunpack.c.h.b16 %v591
        %v2043 = vunpack.c.l.b16 %v592
        %v2044 = vunpack.c.h.b16 %v592
        %v2045 = vunpack.c.l.b16 %v593
        %v2046 = vunpack.c.h.b16 %v593
        %v2047 = vunpack.c.l.b16 %v594
        %v2048 = vunpack.c.h.b16 %v594
        %v2049 = vunpack.c.l.b16 %v595
        %v2050 = vunpack.c.h.b16 %v595
        %v2051 = vunpack.c.l.b16 %v596
        %v2052 = vunpack.c.h.b16 %v596
        %v2053 = vunpack.c.l.b16 %v597
        %v2054 = vunpack.c.h.b16 %v597
        %v2055 = vunpack.c.l.b16 %v598
        %v2056 = vunpack.c.h.b16 %v598
        %v2057 = vunpack.c.l.b16 %v599
        %v2058 = vunpack.c.h.b16 %v599
        %v2059 = vunpack.c.l.b16 %v600
        %v2060 = vunpack.c.h.b16 %v600
        %v2061 = vunpack.c.l.b16 %v601
        %v2062 = vunpack.c.h.b16 %v601
        %v2063 = vunpack.c.l.b16 %v602
        %v2064 = vunpack.c.h.b16 %v602
        %v2065 = vunpack.c.l.b16 %v603
        %v2066 = vunpack.c.h.b16 %v603
        %v2067 = vunpack.c.l.b16 %v604
        %v2068 = vunpack.c.h.b16 %v604
        %v2069 = vunpack.c.l.b16 %v605
        %v2070 = vunpack.c.h.b16 %v605
        %v2071 = vunpack.c.l.b16 %v606
        %v2072 = vunpack.c.h.b16 %v606
        %v2073 = vunpack.c.l.b16 %v607
        %v2074 = vunpack.c.h.b16 %v607
        %v2075 = vunpack.c.l.b16 %v608
        %v2076 = vunpack.c.h.b16 %v608
        %v2077 = vunpack.c.l.b16 %v609
        %v2078 = vunpack.c.h.b16 %v609
        %v2079 = vunpack.c.l.b16 %v610
        %v2080 = vunpack.c.h.b16 %v610
        %v2081 = vunpack.c.l.b16 %v611
        %v2082 = vunpack.c.h.b16 %v611
        %v2083 = vunpack.c.l.b16 %v612
        %v2084 = vunpack.c.h.b16 %v612
        %v2085 = vunpack.c.l.b16 %v613
        %v2086 = vunpack.c.h.b16 %v613
        %v2087 = vunpack.c.l.b16 %v614
        %v2088 = vunpack.c.h.b16 %v614
        %v2089 = vunpack.c.l.b16 %v615
        %v2090 = vunpack.c.h.b16 %v615
        %v2091 = vunpack.c.l.b16 %v616
        %v2092 = vunpack.c.h.b16 %v616
        %v2093 = vunpack.c.l.b16 %v617
        %v2094 = vunpack.c.h.b16 %v617
        %v2095 = vunpack.c.l.b16 %v618
        %v2096 = vunpack.c.h.b16 %v618
        %v2097 = vunpack.c.l.b16 %v619
        %v2098 = vunpack.c.h.b16 %v619
        %v2099 = vunpack.c.l.b16 %v620
        %v2100 = vunpack.c.h.b16 %v620
        %v2101 = vunpack.c.l.b16 %v621
        %v2102 = vunpack.c.h.b16 %v621
        %v2103 = vunpack.c.l.b16 %v622
        %v2104 = vunpack.c.h.b16 %v622
        %v2105 = vunpack.c.l.b16 %v623
        %v2106 = vunpack.c.h.b16 %v623
        %v2107 = vunpack.c.l.b16 %v624
        %v2108 = vunpack.c.h.b16 %v624
        %v2109 = vunpack.c.l.b16 %v625
        %v2110 = vunpack.c.h.b16 %v625
        %v2111 = vunpack.c.l.b16 %v626
        %v2112 = vunpack.c.h.b16 %v626
        %v2113 = vunpack.c.l.b16 %v627
        %v2114 = vunpack.c.h.b16 %v627
        %v2115 = vunpack.c.l.b16 %v628
        %v2116 = vunpack.c.h.b16 %v628
        %v2117 = vunpack.c.l.b16 %v629
        %v2118 = vunpack.c.h.b16 %v629
        %v2119 = vunpack.c.l.b16 %v630
        %v2120 = vunpack.c.h.b16 %v630
        %v2121 = vunpack.c.l.b16 %v631
        %v2122 = vunpack.c.h.b16 %v631
        %v2123 = vunpack.c.l.b16 %v632
        %v2124 = vunpack.c.h.b16 %v632
        %v2125 = vunpack.c.l.b16 %v633
        %v2126 = vunpack.c.h.b16 %v633
        %v2127 = vunpack.c.l.b16 %v634
        %v2128 = vunpack.c.h.b16 %v634
        %v2129 = vunpack.c.l.b16 %v635
        %v2130 = vunpack.c.h.b16 %v635
        %v2131 = vunpack.c.l.b16 %v636
        %v2132 = vunpack.c.h.b16 %v636
        %v2133 = vunpack.c.l.b16 %v637
        %v2134 = vunpack.c.h.b16 %v637
        %v2135 = vunpack.c.l.b16 %v638
        %v2136 = vunpack.c.h.b16 %v638
        %v2137 = vunpack.c.l.b16 %v639
        %v2138 = vunpack.c.h.b16 %v639
        %v2139 = vunpack.c.l.b16 %v640
        %v2140 = vunpack.c.h.b16 %v640
        %v2141 = vunpack.c.l.b16 %v641
        %v2142 = vunpack.c.h.b16 %v641
        %v2143 = vunpack.c.l.b16 %v642
        %v2144 = vunpack.c.h.b16 %v642
        %v2145 = vunpack.c.l.b16 %v643
        %v2146 = vunpack.c.h.b16 %v643
        %v2147 = vunpack.c.l.b16 %v644
        %v2148 = vunpack.c.h.b16 %v644
        %v2149 = vunpack.c.l.b16 %v645
        %v2150 = vunpack.c.h.b16 %v645
        %v2151 = vunpack.c.l.b16 %v646
        %v2152 = vunpack.c.h.b16 %v646
        %v2153 = vunpack.c.l.b16 %v647
        %v2154 = vunpack.c.h.b16 %v647
        %v2155 = vunpack.c.l.b16 %v648
        %v2156 = vunpack.c.h.b16 %v648
        %v2157 = vunpack.c.l.b16 %v649
        %v2158 = vunpack.c.h.b16 %v649
        %v2159 = vunpack.c.l.b16 %v650
        %v2160 = vunpack.c.h.b16 %v650
        %v2161 = vunpack.c.l.b16 %v651
        %v2162 = vunpack.c.h.b16 %v651
        %v2163 = vunpack.c.l.b16 %v652
        %v2164 = vunpack.c.h.b16 %v652
        %v2165 = vunpack.c.l.b16 %v653
        %v2166 = vunpack.c.h.b16 %v653
        %v2167 = vunpack.c.l.b16 %v654
        %v2168 = vunpack.c.h.b16 %v654
        %v2169 = vunpack.c.l.b16 %v655
        %v2170 = vunpack.c.h.b16 %v655
        %v2171 = vunpack.c.l.b16 %v656
        %v2172 = vunpack.c.h.b16 %v656
        %v2173 = vunpack.c.l.b16 %v657
        %v2174 = vunpack.c.h.b16 %v657
        %v2175 = vunpack.c.l.b16 %v658
        %v2176 = vunpack.c.h.b16 %v658
        %v2177 = vunpack.c.l.b16 %v659
        %v2178 = vunpack.c.h.b16 %v659
        %v2179 = vunpack.c.l.b16 %v660
        %v2180 = vunpack.c.h.b16 %v660
        %v2181 = vunpack.c.l.b16 %v661
        %v2182 = vunpack.c.h.b16 %v661
        %v2183 = vunpack.c.l.b16 %v662
        %v2184 = vunpack.c.h.b16 %v662
        %v2185 = vunpack.c.l.b16 %v663
        %v2186 = vunpack.c.h.b16 %v663
        %v2187 = vunpack.c.l.b16 %v664
        %v2188 = vunpack.c.h.b16 %v664
        %v2189 = vunpack.c.l.b16 %v665
        %v2190 = vunpack.c.h.b16 %v665
        %v2191 = vunpack.c.l.b16 %v666
        %v2192 = vunpack.c.h.b16 %v666
        %v2193 = vunpack.c.l.b16 %v667
        %v2194 = vunpack.c.h.b16 %v667
        %v2195 = vunpack.c.l.b16 %v668
        %v2196 = vunpack.c.h.b16 %v668
        %v2197 = vunpack.c.l.b16 %v669
        %v2198 = vunpack.c.h.b16 %v669
        %v2199 = vunpack.c.l.b16 %v670
        %v2200 = vunpack.c.h.b16 %v670
        %v2201 = vunpack.c.l.b16 %v671
        %v2202 = vunpack.c.h.b16 %v671
        %v2203 = vunpack.c.l.b16 %v672
        %v2204 = vunpack.c.h.b16 %v672
        %v2205 = vunpack.c.l.b16 %v673
        %v2206 = vunpack.c.h.b16 %v673
        %v2207 = vunpack.c.l.b16 %v674
        %v2208 = vunpack.c.h.b16 %v674
        %v2209 = vunpack.c.l.b16 %v675
        %v2210 = vunpack.c.h.b16 %v675
        %v2211 = vunpack.c.l.b16 %v676
        %v2212 = vunpack.c.h.b16 %v676
        %v2213 = vunpack.c.l.b16 %v677
        %v2214 = vunpack.c.h.b16 %v677
        %v2215 = vunpack.c.l.b16 %v678
        %v2216 = vunpack.c.h.b16 %v678
        %v2217 = vunpack.c.l.b16 %v679
        %v2218 = vunpack.c.h.b16 %v679
        %v2219 = vunpack.c.l.b16 %v680
        %v2220 = vunpack.c.h.b16 %v680
        %v2221 = vunpack.c.l.b16 %v681
        %v2222 = vunpack.c.h.b16 %v681
        %v2223 = vunpack.c.l.b16 %v682
        %v2224 = vunpack.c.h.b16 %v682
        %v2225 = vunpack.c.l.b16 %v683
        %v2226 = vunpack.c.h.b16 %v683
        %v2227 = vunpack.c.l.b16 %v684
        %v2228 = vunpack.c.h.b16 %v684
        %v2229 = vunpack.c.l.b16 %v685
        %v2230 = vunpack.c.h.b16 %v685
        %v2231 = vunpack.c.l.b16 %v686
        %v2232 = vunpack.c.h.b16 %v686
        %v2233 = vunpack.c.l.b16 %v687
        %v2234 = vunpack.c.h.b16 %v687
        %v2235 = vunpack.c.l.b16 %v688
        %v2236 = vunpack.c.h.b16 %v688
        %v2237 = vunpack.c.l.b16 %v689
        %v2238 = vunpack.c.h.b16 %v689
        %v2239 = vunpack.c.l.b16 %v690
        %v2240 = vunpack.c.h.b16 %v690
        %v2241 = vunpack.c.l.b16 %v691
        %v2242 = vunpack.c.h.b16 %v691
        %v2243 = vunpack.c.l.b16 %v692
        %v2244 = vunpack.c.h.b16 %v692
        %v2245 = vunpack.c.l.b16 %v693
        %v2246 = vunpack.c.h.b16 %v693
        %v2247 = vunpack.c.l.b16 %v694
        %v2248 = vunpack.c.h.b16 %v694
        %v2249 = vunpack.c.l.b16 %v695
        %v2250 = vunpack.c.h.b16 %v695
        %v2251 = vunpack.c.l.b16 %v696
        %v2252 = vunpack.c.h.b16 %v696
        %v2253 = vunpack.c.l.b16 %v697
        %v2254 = vunpack.c.h.b16 %v697
        %v2255 = vunpack.c.l.b16 %v698
        %v2256 = vunpack.c.h.b16 %v698
        %v2257 = vunpack.c.l.b16 %v699
        %v2258 = vunpack.c.h.b16 %v699
        %v2259 = vunpack.c.l.b16 %v700
        %v2260 = vunpack.c.h.b16 %v700
        %v2261 = vunpack.c.l.b16 %v701
        %v2262 = vunpack.c.h.b16 %v701
        %v2263 = vunpack.c.l.b16 %v702
        %v2264 = vunpack.c.h.b16 %v702
        %v2265 = vunpack.c.l.b16 %v703
        %v2266 = vunpack.c.h.b16 %v703
        %v2267 = vunpack.c.l.b16 %v704
        %v2268 = vunpack.c.h.b16 %v704
        %v2269 = vunpack.c.l.b16 %v705
        %v2270 = vunpack.c.h.b16 %v705
        %v2271 = vunpack.c.l.b16 %v706
        %v2272 = vunpack.c.h.b16 %v706
        %v2273 = vunpack.c.l.b16 %v707
        %v2274 = vunpack.c.h.b16 %v707
        %v2275 = vunpack.c.l.b16 %v708
        %v2276 = vunpack.c.h.b16 %v708
        %v2277 = vunpack.c.l.b16 %v709
        %v2278 = vunpack.c.h.b16 %v709
        %v2279 = vunpack.c.l.b16 %v710
        %v2280 = vunpack.c.h.b16 %v710
        %v2281 = vunpack.c.l.b16 %v711
        %v2282 = vunpack.c.h.b16 %v711
        %v2283 = vunpack.c.l.b16 %v712
        %v2284 = vunpack.c.h.b16 %v712
        %v2285 = vunpack.c.l.b16 %v713
        %v2286 = vunpack.c.h.b16 %v713
        %v2287 = vunpack.c.l.b16 %v714
        %v2288 = vunpack.c.h.b16 %v714
        %v2289 = vunpack.c.l.b16 %v715
        %v2290 = vunpack.c.h.b16 %v715
        %v2291 = vunpack.c.l.b16 %v716
        %v2292 = vunpack.c.h.b16 %v716
        %v2293 = vunpack.c.l.b16 %v717
        %v2294 = vunpack.c.h.b16 %v717
        %v2295 = vunpack.c.l.b16 %v718
        %v2296 = vunpack.c.h.b16 %v718
        %v2297 = vunpack.c.l.b16 %v719
        %v2298 = vunpack.c.h.b16 %v719
        %v2299 = vunpack.c.l.b16 %v720
        %v2300 = vunpack.c.h.b16 %v720
        %v2301 = vunpack.c.l.b16 %v721
        %v2302 = vunpack.c.h.b16 %v721
        %v2303 = vunpack.c.l.b16 %v722
        %v2304 = vunpack.c.h.b16 %v722
        %v2305 = vunpack.c.l.b16 %v723
        %v2306 = vunpack.c.h.b16 %v723
        %v2307 = vunpack.c.l.b16 %v724
        %v2308 = vunpack.c.h.b16 %v724
        %v2309 = vunpack.c.l.b16 %v725
        %v2310 = vunpack.c.h.b16 %v725
        %v2311 = vunpack.c.l.b16 %v726
        %v2312 = vunpack.c.h.b16 %v726
        %v2313 = vunpack.c.l.b16 %v727
        %v2314 = vunpack.c.h.b16 %v727
        %v2315 = vunpack.c.l.b16 %v728
        %v2316 = vunpack.c.h.b16 %v728
        %v2317 = vunpack.c.l.b16 %v729
        %v2318 = vunpack.c.h.b16 %v729
        %v2319 = vunpack.c.l.b16 %v730
        %v2320 = vunpack.c.h.b16 %v730
        %v2321 = vunpack.c.l.b16 %v731
        %v2322 = vunpack.c.h.b16 %v731
        %v2323 = vunpack.c.l.b16 %v732
        %v2324 = vunpack.c.h.b16 %v732
        %v2325 = vunpack.c.l.b16 %v733
        %v2326 = vunpack.c.h.b16 %v733
        %v2327 = vunpack.c.l.b16 %v734
        %v2328 = vunpack.c.h.b16 %v734
        %v2329 = vunpack.c.l.b16 %v735
        %v2330 = vunpack.c.h.b16 %v735
        %v2331 = vunpack.c.l.b16 %v736
        %v2332 = vunpack.c.h.b16 %v736
        %v2333 = vunpack.c.l.b16 %v737
        %v2334 = vunpack.c.h.b16 %v737
        %v2335 = vunpack.c.l.b16 %v738
        %v2336 = vunpack.c.h.b16 %v738
        %v2337 = vunpack.c.l.b16 %v739
        %v2338 = vunpack.c.h.b16 %v739
        %v2339 = vunpack.c.l.b16 %v740
        %v2340 = vunpack.c.h.b16 %v740
        %v2341 = vunpack.c.l.b16 %v741
        %v2342 = vunpack.c.h.b16 %v741
        %v2343 = vunpack.c.l.b16 %v742
        %v2344 = vunpack.c.h.b16 %v742
        %v2345 = vunpack.c.l.b16 %v743
        %v2346 = vunpack.c.h.b16 %v743
        %v2347 = vunpack.c.l.b16 %v744
        %v2348 = vunpack.c.h.b16 %v744
        %v2349 = vunpack.c.l.b16 %v745
        %v2350 = vunpack.c.h.b16 %v745
        %v2351 = vunpack.c.l.b16 %v746
        %v2352 = vunpack.c.h.b16 %v746
        %v2353 = vunpack.c.l.b16 %v747
        %v2354 = vunpack.c.h.b16 %v747
        %v2355 = vunpack.c.l.b16 %v748
        %v2356 = vunpack.c.h.b16 %v748
        %v2357 = vunpack.c.l.b16 %v749
        %v2358 = vunpack.c.h.b16 %v749
        %v2359 = vunpack.c.l.b16 %v750
        %v2360 = vunpack.c.h.b16 %v750
        %v2361 = vunpack.c.l.b16 %v751
        %v2362 = vunpack.c.h.b16 %v751
        %v2363 = vunpack.c.l.b16 %v752
        %v2364 = vunpack.c.h.b16 %v752
        %v2365 = vunpack.c.l.b16 %v753
        %v2366 = vunpack.c.h.b16 %v753
        %v2367 = vunpack.c.l.b16 %v754
        %v2368 = vunpack.c.h.b16 %v754
        %v2369 = vunpack.c.l.b16 %v755
        %v2370 = vunpack.c.h.b16 %v755
        %v2371 = vunpack.c.l.b16 %v756
        %v2372 = vunpack.c.h.b16 %v756
        %v2373 = vunpack.c.l.b16 %v757
        %v2374 = vunpack.c.h.b16 %v757
        %v2375 = vunpack.c.l.b16 %v758
        %v2376 = vunpack.c.h.b16 %v758
        %v2377 = vunpack.c.l.b16 %v759
        %v2378 = vunpack.c.h.b16 %v759
        %v2379 = vunpack.c.l.b16 %v760
        %v2380 = vunpack.c.h.b16 %v760
        %v2381 = vunpack.c.l.b16 %v761
        %v2382 = vunpack.c.h.b16 %v761
        %v2383 = vunpack.c.l.b16 %v762
        %v2384 = vunpack.c.h.b16 %v762
        %v2385 = vunpack.c.l.b16 %v763
        %v2386 = vunpack.c.h.b16 %v763
        %v2387 = vunpack.c.l.b16 %v764
        %v2388 = vunpack.c.h.b16 %v764
        %v2389 = vunpack.c.l.b16 %v765
        %v2390 = vunpack.c.h.b16 %v765
        %v2391 = vunpack.c.l.b16 %v766
        %v2392 = vunpack.c.h.b16 %v766
        %v2393 = vunpack.c.l.b16 %v767
        %v2394 = vunpack.c.h.b16 %v767
        %v2395 = vunpack.c.l.b16 %v768
        %v2396 = vunpack.c.h.b16 %v768
        %v2397 = vunpack.c.l.b16 %v769
        %v2398 = vunpack.c.h.b16 %v769
        %v2399 = vunpack.c.l.b16 %v770
        %v2400 = vunpack.c.h.b16 %v770
        %v2401 = vunpack.c.l.b16 %v771
        %v2402 = vunpack.c.h.b16 %v771
        %v2403 = vunpack.c.l.b16 %v772
        %v2404 = vunpack.c.h.b16 %v772
        %v2405 = vunpack.c.l.b16 %v773
        %v2406 = vunpack.c.h.b16 %v773
        %v2407 = vunpack.c.l.b16 %v774
        %v2408 = vunpack.c.h.b16 %v774
        %v2409 = vunpack.c.l.b16 %v775
        %v2410 = vunpack.c.h.b16 %v775
        %v2411 = vunpack.c.l.b16 %v776
        %v2412 = vunpack.c.h.b16 %v776
        %v2413 = vunpack.c.l.b16 %v777
        %v2414 = vunpack.c.h.b16 %v777
        %v2415 = vunpack.c.l.b16 %v778
        %v2416 = vunpack.c.h.b16 %v778
        %v2417 = vunpack.c.l.b16 %v779
        %v2418 = vunpack.c.h.b16 %v779
        %v2419 = vunpack.c.l.b16 %v780
        %v2420 = vunpack.c.h.b16 %v780
        %v2421 = vunpack.c.l.b16 %v781
        %v2422 = vunpack.c.h.b16 %v781
        %v2423 = vunpack.c.l.b16 %v782
        %v2424 = vunpack.c.h.b16 %v782
        %v2425 = vunpack.c.l.b16 %v783
        %v2426 = vunpack.c.h.b16 %v783
        %v2427 = vunpack.c.l.b16 %v784
        %v2428 = vunpack.c.h.b16 %v784
        %v2429 = vunpack.c.l.b16 %v785
        %v2430 = vunpack.c.h.b16 %v785
        %v2431 = vunpack.c.l.b16 %v786
        %v2432 = vunpack.c.h.b16 %v786
        %v2433 = vunpack.c.l.b16 %v787
        %v2434 = vunpack.c.h.b16 %v787
        %v2435 = vunpack.c.l.b16 %v788
        %v2436 = vunpack.c.h.b16 %v788
        %v2437 = vunpack.c.l.b16 %v789
        %v2438 = vunpack.c.h.b16 %v789
        %v2439 = vunpack.c.l.b16 %v790
        %v2440 = vunpack.c.h.b16 %v790
        %v2441 = vunpack.c.l.b16 %v791
        %v2442 = vunpack.c.h.b16 %v791
        %v2443 = vunpack.c.l.b16 %v792
        %v2444 = vunpack.c.h.b16 %v792
        %v2445 = vunpack.c.l.b16 %v793
        %v2446 = vunpack.c.h.b16 %v793
        %v2447 = vunpack.c.l.b16 %v794
        %v2448 = vunpack.c.h.b16 %v794
        %v2449 = vunpack.c.l.b16 %v795
        %v2450 = vunpack.c.h.b16 %v795
        %v2451 = vunpack.c.l.b16 %v796
        %v2452 = vunpack.c.h.b16 %v796
        %v2453 = vunpack.c.l.b16 %v797
        %v2454 = vunpack.c.h.b16 %v797
        %v2455 = vunpack.c.l.b16 %v798
        %v2456 = vunpack.c.h.b16 %v798
        %v2457 = vunpack.c.l.b16 %v799
        %v2458 = vunpack.c.h.b16 %v799
        %v2459 = vunpack.c.l.b16 %v800
        %v2460 = vunpack.c.h.b16 %v800
        %v2461 = vunpack.c.l.b16 %v801
        %v2462 = vunpack.c.h.b16 %v801
        %v2463 = vunpack.c.l.b16 %v802
        %v2464 = vunpack.c.h.b16 %v802
        %v2465 = vunpack.c.l.b16 %v803
        %v2466 = vunpack.c.h.b16 %v803
        %v2467 = vunpack.c.l.b16 %v804
        %v2468 = vunpack.c.h.b16 %v804
        %v2469 = vunpack.c.l.b16 %v805
        %v2470 = vunpack.c.h.b16 %v805
        %v2471 = vunpack.c.l.b16 %v806
        %v2472 = vunpack.c.h.b16 %v806
        %v2473 = vunpack.c.l.b16 %v807
        %v2474 = vunpack.c.h.b16 %v807
        %v2475 = vunpack.c.l.b16 %v808
        %v2476 = vunpack.c.h.b16 %v808
        %v2477 = vunpack.c.l.b16 %v809
        %v2478 = vunpack.c.h.b16 %v809
        %v2479 = vunpack.c.l.b16 %v810
        %v2480 = vunpack.c.h.b16 %v810
        %v2481 = vunpack.c.l.b16 %v811
        %v2482 = vunpack.c.h.b16 %v811
        %v2483 = vunpack.c.l.b16 %v812
        %v2484 = vunpack.c.h.b16 %v812
        %v2485 = vunpack.c.l.b16 %v813
        %v2486 = vunpack.c.h.b16 %v813
        %v2487 = vunpack.c.l.b16 %v814
        %v2488 = vunpack.c.h.b16 %v814
        %v2489 = vunpack.c.l.b16 %v815
        %v2490 = vunpack.c.h.b16 %v815
        %v2491 = vunpack.c.l.b16 %v816
        %v2492 = vunpack.c.h.b16 %v816
        %v2493 = vunpack.c.l.b16 %v817
        %v2494 = vunpack.c.h.b16 %v817
        %v2495 = vunpack.c.l.b16 %v818
        %v2496 = vunpack.c.h.b16 %v818
        %v2497 = vunpack.c.l.b16 %v819
        %v2498 = vunpack.c.h.b16 %v819
        %v2499 = vunpack.c.l.b16 %v820
        %v2500 = vunpack.c.h.b16 %v820
        %v2501 = vunpack.c.l.b16 %v821
        %v2502 = vunpack.c.h.b16 %v821
        %v2503 = vunpack.c.l.b16 %v822
        %v2504 = vunpack.c.h.b16 %v822
        %v2505 = vunpack.c.l.b16 %v823
        %v2506 = vunpack.c.h.b16 %v823
        %v2507 = vunpack.c.l.b16 %v824
        %v2508 = vunpack.c.h.b16 %v824
        %v2509 = vunpack.c.l.b16 %v825
        %v2510 = vunpack.c.h.b16 %v825
        %v2511 = vunpack.c.l.b16 %v826
        %v2512 = vunpack.c.h.b16 %v826
        %v2513 = vunpack.c.l.b16 %v827
        %v2514 = vunpack.c.h.b16 %v827
        %v2515 = vunpack.c.l.b16 %v828
        %v2516 = vunpack.c.h.b16 %v828
        %v2517 = vunpack.c.l.b16 %v829
        %v2518 = vunpack.c.h.b16 %v829
        %v2519 = vunpack.c.l.b16 %v830
        %v2520 = vunpack.c.h.b16 %v830
        %v2521 = vunpack.c.l.b16 %v831
        %v2522 = vunpack.c.h.b16 %v831
        %v2523 = vunpack.c.l.b16 %v832
        %v2524 = vunpack.c.h.b16 %v832
        %v2525 = vunpack.c.l.b16 %v833
        %v2526 = vunpack.c.h.b16 %v833
        %v2527 = vunpack.c.l.b16 %v834
        %v2528 = vunpack.c.h.b16 %v834
        %v2529 = vunpack.c.l.b16 %v835
        %v2530 = vunpack.c.h.b16 %v835
        %v2531 = vunpack.c.l.b16 %v836
        %v2532 = vunpack.c.h.b16 %v836
        %v2533 = vunpack.c.l.b16 %v837
        %v2534 = vunpack.c.h.b16 %v837
        %v2535 = vunpack.c.l.b16 %v838
        %v2536 = vunpack.c.h.b16 %v838
        %v2537 = vunpack.c.l.b16 %v839
        %v2538 = vunpack.c.h.b16 %v839
        %v2539 = vunpack.c.l.b16 %v840
        %v2540 = vunpack.c.h.b16 %v840
        %v2541 = vunpack.c.l.b16 %v841
        %v2542 = vunpack.c.h.b16 %v841
        %v2543 = vunpack.c.l.b16 %v842
        %v2544 = vunpack.c.h.b16 %v842
        %v2545 = vunpack.c.l.b16 %v843
        %v2546 = vunpack.c.h.b16 %v843
        %v2547 = vunpack.c.l.b16 %v844
        %v2548 = vunpack.c.h.b16 %v844
        %v2549 = vunpack.c.l.b16 %v845
        %v2550 = vunpack.c.h.b16 %v845
        %v2551 = vunpack.c.l.b16 %v846
        %v2552 = vunpack.c.h.b16 %v846
        %v2553 = vunpack.c.l.b16 %v847
        %v2554 = vunpack.c.h.b16 %v847
        %v2555 = vunpack.c.l.b16 %v848
        %v2556 = vunpack.c.h.b16 %v848
        %v2557 = vunpack.c.l.b16 %v849
        %v2558 = vunpack.c.h.b16 %v849
        %v2559 = vunpack.c.l.b16 %v850
        %v2560 = vunpack.c.h.b16 %v850
        %v2561 = vunpack.c.l.b16 %v851
        %v2562 = vunpack.c.h.b16 %v851
        %v2563 = vunpack.c.l.b16 %v852
        %v2564 = vunpack.c.h.b16 %v852
        %v2565 = vunpack.c.l.b16 %v853
        %v2566 = vunpack.c.h.b16 %v853
        %v2567 = vunpack.c.l.b16 %v854
        %v2568 = vunpack.c.h.b16 %v854
        %v2569 = vunpack.c.l.b16 %v855
        %v2570 = vunpack.c.h.b16 %v855
        %v2571 = vunpack.c.l.b16 %v856
        %v2572 = vunpack.c.h.b16 %v856
        %v2573 = vunpack.c.l.b16 %v857
        %v2574 = vunpack.c.h.b16 %v857
        %v2575 = vunpack.c.l.b16 %v858
        %v2576 = vunpack.c.h.b16 %v858
        %v2577 = vunpack.c.l.b16 %v859
        %v2578 = vunpack.c.h.b16 %v859
        %v2579 = vunpack.c.l.b16 %v860
        %v2580 = vunpack.c.h.b16 %v860
        %v2581 = vunpack.c.l.b16 %v861
        %v2582 = vunpack.c.h.b16 %v861
        %v2583 = vunpack.c.l.b16 %v862
        %v2584 = vunpack.c.h.b16 %v862
        %v2585 = vunpack.c.l.b16 %v863
        %v2586 = vunpack.c.h.b16 %v863
        %v2587 = vunpack.c.l.b16 %v864
        %v2588 = vunpack.c.h.b16 %v864
        %v2589 = vunpack.c.l.b16 %v865
        %v2590 = vunpack.c.h.b16 %v865
        %v2591 = vunpack.c.l.b16 %v866
        %v2592 = vunpack.c.h.b16 %v866
        %v2593 = vunpack.c.l.b16 %v867
        %v2594 = vunpack.c.h.b16 %v867
        %v2595 = vunpack.c.l.b16 %v868
        %v2596 = vunpack.c.h.b16 %v868
        %v2597 = vunpack.c.l.b16 %v869
        %v2598 = vunpack.c.h.b16 %v869
        %v2599 = vunpack.c.l.b16 %v870
        %v2600 = vunpack.c.h.b16 %v870
        %v2601 = vunpack.c.l.b16 %v871
        %v2602 = vunpack.c.h.b16 %v871
        %v2603 = vunpack.c.l.b16 %v872
        %v2604 = vunpack.c.h.b16 %v872
        %v2605 = vunpack.c.l.b16 %v873
        %v2606 = vunpack.c.h.b16 %v873
        %v2607 = vunpack.c.l.b16 %v874
        %v2608 = vunpack.c.h.b16 %v874
        %v2609 = vunpack.c.l.b16 %v875
        %v2610 = vunpack.c.h.b16 %v875
        %v2611 = vunpack.c.l.b16 %v876
        %v2612 = vunpack.c.h.b16 %v876
        %v2613 = vunpack.c.l.b16 %v877
        %v2614 = vunpack.c.h.b16 %v877
        %v2615 = vunpack.c.l.b16 %v878
        %v2616 = vunpack.c.h.b16 %v878
        %v2617 = vunpack.c.l.b16 %v879
        %v2618 = vunpack.c.h.b16 %v879
        %v2619 = vunpack.c.l.b16 %v880
        %v2620 = vunpack.c.h.b16 %v880
        %v2621 = vunpack.c.l.b16 %v881
        %v2622 = vunpack.c.h.b16 %v881
        %v2623 = vunpack.c.l.b16 %v882
        %v2624 = vunpack.c.h.b16 %v882
        %v2625 = vunpack.c.l.b16 %v883
        %v2626 = vunpack.c.h.b16 %v883
        %v2627 = vunpack.c.l.b16 %v884
        %v2628 = vunpack.c.h.b16 %v884
        %v2629 = vunpack.c.l.b16 %v885
        %v2630 = vunpack.c.h.b16 %v885
        %v2631 = vunpack.c.l.b16 %v886
        %v2632 = vunpack.c.h.b16 %v886
        %v2633 = vunpack.c.l.b16 %v887
        %v2634 = vunpack.c.h.b16 %v887
        %v2635 = vunpack.c.l.b16 %v888
        %v2636 = vunpack.c.h.b16 %v888
        %v2637 = vunpack.c.l.b16 %v889
        %v2638 = vunpack.c.h.b16 %v889
        %v2639 = vunpack.c.l.b16 %v890
        %v2640 = vunpack.c.h.b16 %v890
        %v2641 = vunpack.c.l.b16 %v891
        %v2642 = vunpack.c.h.b16 %v891
        %v2643 = vunpack.c.l.b16 %v892
        %v2644 = vunpack.c.h.b16 %v892
        %v2645 = vunpack.c.l.b16 %v893
        %v2646 = vunpack.c.h.b16 %v893
        %v2647 = vunpack.c.l.b16 %v894
        %v2648 = vunpack.c.h.b16 %v894
        %v2649 = vunpack.c.l.b16 %v895
        %v2650 = vunpack.c.h.b16 %v895
        %v2651 = vunpack.c.l.b16 %v896
        %v2652 = vunpack.c.h.b16 %v896
        %v2653 = vunpack.c.l.b16 %v897
        %v2654 = vunpack.c.h.b16 %v897
        %v2655 = vunpack.c.l.b16 %v898
        %v2656 = vunpack.c.h.b16 %v898
        %v2657 = vunpack.c.l.b16 %v899
        %v2658 = vunpack.c.h.b16 %v899
        %v2659 = vunpack.c.l.b16 %v900
        %v2660 = vunpack.c.h.b16 %v900
        %v2661 = vunpack.c.l.b16 %v901
        %v2662 = vunpack.c.h.b16 %v901
        %v2663 = vunpack.c.l.b16 %v902
        %v2664 = vunpack.c.h.b16 %v902
        %v2665 = vunpack.c.l.b16 %v903
        %v2666 = vunpack.c.h.b16 %v903
        %v2667 = vunpack.c.l.b16 %v904
        %v2668 = vunpack.c.h.b16 %v904
        %v2669 = vunpack.c.l.b16 %v905
        %v2670 = vunpack.c.h.b16 %v905
        %v2671 = vunpack.c.l.b16 %v906
        %v2672 = vunpack.c.h.b16 %v906
        %v2673 = vunpack.c.l.b16 %v907
        %v2674 = vunpack.c.h.b16 %v907
        %v2675 = vunpack.c.l.b16 %v908
        %v2676 = vunpack.c.h.b16 %v908
        %v2677 = vunpack.c.l.b16 %v909
        %v2678 = vunpack.c.h.b16 %v909
        %v2679 = vunpack.c.l.b16 %v910
        %v2680 = vunpack.c.h.b16 %v910
        %v2681 = vunpack.c.l.b16 %v911
        %v2682 = vunpack.c.h.b16 %v911
        %v2683 = vunpack.c.l.b16 %v912
        %v2684 = vunpack.c.h.b16 %v912
        %v2685 = vunpack.c.l.b16 %v913
        %v2686 = vunpack.c.h.b16 %v913
        %v2687 = vunpack.c.l.b16 %v914
        %v2688 = vunpack.c.h.b16 %v914
        %v2689 = vunpack.c.l.b16 %v915
        %v2690 = vunpack.c.h.b16 %v915
        %v2691 = vunpack.c.l.b16 %v916
        %v2692 = vunpack.c.h.b16 %v916
        %v2693 = vunpack.c.l.b16 %v917
        %v2694 = vunpack.c.h.b16 %v917
        %v2695 = vunpack.c.l.b16 %v918
        %v2696 = vunpack.c.h.b16 %v918
        %v2697 = vunpack.c.l.b16 %v919
        %v2698 = vunpack.c.h.b16 %v919
        %v2699 = vunpack.c.l.b16 %v920
        %v2700 = vunpack.c.h.b16 %v920
        %v2701 = vunpack.c.l.b16 %v921
        %v2702 = vunpack.c.h.b16 %v921
        %v2703 = vunpack.c.l.b16 %v922
        %v2704 = vunpack.c.h.b16 %v922
        %v2705 = vunpack.c.l.b16 %v923
        %v2706 = vunpack.c.h.b16 %v923
        %v2707 = vunpack.c.l.b16 %v924
        %v2708 = vunpack.c.h.b16 %v924
        %v2709 = vunpack.c.l.b16 %v925
        %v2710 = vunpack.c.h.b16 %v925
        %v2711 = vunpack.c.l.b16 %v926
        %v2712 = vunpack.c.h.b16 %v926
        %v2713 = vunpack.c.l.b16 %v927
        %v2714 = vunpack.c.h.b16 %v927
        %v2715 = vunpack.c.l.b16 %v928
        %v2716 = vunpack.c.h.b16 %v928
        %v2717 = vunpack.c.l.b16 %v929
        %v2718 = vunpack.c.h.b16 %v929
        %v2719 = vunpack.c.l.b16 %v930
        %v2720 = vunpack.c.h.b16 %v930
        %v2721 = vunpack.c.l.b16 %v931
        %v2722 = vunpack.c.h.b16 %v931
        %v2723 = vunpack.c.l.b16 %v932
        %v2724 = vunpack.c.h.b16 %v932
        %v2725 = vunpack.c.l.b16 %v933
        %v2726 = vunpack.c.h.b16 %v933
        %v2727 = vunpack.c.l.b16 %v934
        %v2728 = vunpack.c.h.b16 %v934
        %v2729 = vunpack.c.l.b16 %v935
        %v2730 = vunpack.c.h.b16 %v935
        %v2731 = vunpack.c.l.b16 %v936
        %v2732 = vunpack.c.h.b16 %v936
        %v2733 = vunpack.c.l.b16 %v937
        %v2734 = vunpack.c.h.b16 %v937
        %v2735 = vunpack.c.l.b16 %v938
        %v2736 = vunpack.c.h.b16 %v938
        %v2737 = vunpack.c.l.b16 %v939
        %v2738 = vunpack.c.h.b16 %v939
        %v2739 = vunpack.c.l.b16 %v940
        %v2740 = vunpack.c.h.b16 %v940
        %v2741 = vunpack.c.l.b16 %v941
        %v2742 = vunpack.c.h.b16 %v941
        %v2743 = vunpack.c.l.b16 %v942
        %v2744 = vunpack.c.h.b16 %v942
        %v2745 = vunpack.c.l.b16 %v943
        %v2746 = vunpack.c.h.b16 %v943
        %v2747 = vunpack.c.l.b16 %v944
        %v2748 = vunpack.c.h.b16 %v944
        %v2749 = vunpack.c.l.b16 %v945
        %v2750 = vunpack.c.h.b16 %v945
        %v2751 = vunpack.c.l.b16 %v946
        %v2752 = vunpack.c.h.b16 %v946
        %v2753 = vunpack.c.l.b16 %v947
        %v2754 = vunpack.c.h.b16 %v947
        %v2755 = vunpack.c.l.b16 %v948
        %v2756 = vunpack.c.h.b16 %v948
        %v2757 = vunpack.c.l.b16 %v949
        %v2758 = vunpack.c.h.b16 %v949
        %v2759 = vunpack.c.l.b16 %v950
        %v2760 = vunpack.c.h.b16 %v950
        %v2761 = vunpack.c.l.b16 %v951
        %v2762 = vunpack.c.h.b16 %v951
        %v2763 = vunpack.c.l.b16 %v952
        %v2764 = vunpack.c.h.b16 %v952
        %v2765 = vunpack.c.l.b16 %v953
        %v2766 = vunpack.c.h.b16 %v953
        %v2767 = vunpack.c.l.b16 %v954
        %v2768 = vunpack.c.h.b16 %v954
        %v2769 = vunpack.c.l.b16 %v955
        %v2770 = vunpack.c.h.b16 %v955
        %v2771 = vunpack.c.l.b16 %v956
        %v2772 = vunpack.c.h.b16 %v956
        %v2773 = vunpack.c.l.b16 %v957
        %v2774 = vunpack.c.h.b16 %v957
        %v2775 = vunpack.c.l.b16 %v958
        %v2776 = vunpack.c.h.b16 %v958
        %v2777 = vunpack.c.l.b16 %v959
        %v2778 = vunpack.c.h.b16 %v959
        %v2779 = vunpack.c.l.b16 %v960
        %v2780 = vunpack.c.h.b16 %v960
        %v2781 = vunpack.c.l.b16 %v961
        %v2782 = vunpack.c.h.b16 %v961
        %v2783 = vunpack.c.l.b16 %v962
        %v2784 = vunpack.c.h.b16 %v962
        %v2785 = vunpack.c.l.b16 %v963
        %v2786 = vunpack.c.h.b16 %v963
        %v2787 = vunpack.c.l.b16 %v964
        %v2788 = vunpack.c.h.b16 %v964
        %v2789 = vunpack.c.l.b16 %v965
        %v2790 = vunpack.c.h.b16 %v965
        %v2791 = vunpack.c.l.b16 %v966
        %v2792 = vunpack.c.h.b16 %v966
        %v2793 = vunpack.c.l.b16 %v967
        %v2794 = vunpack.c.h.b16 %v967
        %v2795 = vunpack.c.l.b16 %v968
        %v2796 = vunpack.c.h.b16 %v968
        %v2797 = vunpack.c.l.b16 %v969
        %v2798 = vunpack.c.h.b16 %v969
        %v2799 = vunpack.c.l.b16 %v970
        %v2800 = vunpack.c.h.b16 %v970
        %v2801 = vunpack.c.l.b16 %v971
        %v2802 = vunpack.c.h.b16 %v971
        %v2803 = vunpack.c.l.b16 %v972
        %v2804 = vunpack.c.h.b16 %v972
        %v2805 = vunpack.c.l.b16 %v973
        %v2806 = vunpack.c.h.b16 %v973
        %v2807 = vunpack.c.l.b16 %v974
        %v2808 = vunpack.c.h.b16 %v974
        %v2809 = vunpack.c.l.b16 %v975
        %v2810 = vunpack.c.h.b16 %v975
        %v2811 = vunpack.c.l.b16 %v976
        %v2812 = vunpack.c.h.b16 %v976
        %v2813 = vunpack.c.l.b16 %v977
        %v2814 = vunpack.c.h.b16 %v977
        %v2815 = vunpack.c.l.b16 %v978
        %v2816 = vunpack.c.h.b16 %v978
        %v2817 = vunpack.c.l.b16 %v979
        %v2818 = vunpack.c.h.b16 %v979
        %v2819 = vunpack.c.l.b16 %v980
        %v2820 = vunpack.c.h.b16 %v980
        %v2821 = vunpack.c.l.b16 %v981
        %v2822 = vunpack.c.h.b16 %v981
        %v2823 = vunpack.c.l.b16 %v982
        %v2824 = vunpack.c.h.b16 %v982
        %v2825 = vunpack.c.l.b16 %v983
        %v2826 = vunpack.c.h.b16 %v983
        %v2827 = vunpack.c.l.b16 %v984
        %v2828 = vunpack.c.h.b16 %v984
        %v2829 = vunpack.c.l.b16 %v985
        %v2830 = vunpack.c.h.b16 %v985
        %v2831 = vunpack.c.l.b16 %v986
        %v2832 = vunpack.c.h.b16 %v986
        %v2833 = vunpack.c.l.b16 %v987
        %v2834 = vunpack.c.h.b16 %v987
        %v2835 = vunpack.c.l.b16 %v988
        %v2836 = vunpack.c.h.b16 %v988
        %v2837 = vunpack.c.l.b16 %v989
        %v2838 = vunpack.c.h.b16 %v989
        %v2839 = vunpack.c.l.b16 %v990
        %v2840 = vunpack.c.h.b16 %v990
        %v2841 = vunpack.c.l.b16 %v991
        %v2842 = vunpack.c.h.b16 %v991
        %v2843 = vunpack.c.l.b16 %v992
        %v2844 = vunpack.c.h.b16 %v992
        %v2845 = vunpack.c.l.b16 %v993
        %v2846 = vunpack.c.h.b16 %v993
        %v2847 = vunpack.c.l.b16 %v994
        %v2848 = vunpack.c.h.b16 %v994
        %v2849 = vunpack.c.l.b16 %v995
        %v2850 = vunpack.c.h.b16 %v995
        %v2851 = vunpack.c.l.b16 %v996
        %v2852 = vunpack.c.h.b16 %v996
        %v2853 = vunpack.c.l.b16 %v997
        %v2854 = vunpack.c.h.b16 %v997
        %v2855 = vunpack.c.l.b16 %v998
        %v2856 = vunpack.c.h.b16 %v998
        %v2857 = vunpack.c.l.b16 %v999
        %v2858 = vunpack.c.h.b16 %v999
        %v2859 = vunpack.c.l.b16 %v1000
        %v2860 = vunpack.c.h.b16 %v1000
        %v2861 = vunpack.c.l.b16 %v1001
        %v2862 = vunpack.c.h.b16 %v1001
        %v2863 = vunpack.c.l.b16 %v1002
        %v2864 = vunpack.c.h.b16 %v1002
        %v2865 = vunpack.c.l.b16 %v1003
        %v2866 = vunpack.c.h.b16 %v1003
        %v2867 = vunpack.c.l.b16 %v1004
        %v2868 = vunpack.c.h.b16 %v1004
        %v2869 = vunpack.c.l.b16 %v1005
        %v2870 = vunpack.c.h.b16 %v1005
        %v2871 = vunpack.c.l.b16 %v1006
        %v2872 = vunpack.c.h.b16 %v1006
        %v2873 = vunpack.c.l.b16 %v1007
        %v2874 = vunpack.c.h.b16 %v1007
        %v2875 = vunpack.c.l.b16 %v1008
        %v2876 = vunpack.c.h.b16 %v1008
        %v2877 = vunpack.c.l.b16 %v1009
        %v2878 = vunpack.c.h.b16 %v1009
        %v2879 = vunpack.c.l.b16 %v1010
        %v2880 = vunpack.c.h.b16 %v1010
        %v2881 = vunpack.c.l.b16 %v1011
        %v2882 = vunpack.c.h.b16 %v1011
        %v2883 = vunpack.c.l.b16 %v1012
        %v2884 = vunpack.c.h.b16 %v1012
        %v2885 = vunpack.c.l.b16 %v1013
        %v2886 = vunpack.c.h.b16 %v1013
        %v2887 = vunpack.c.l.b16 %v1014
        %v2888 = vunpack.c.h.b16 %v1014
        %v2889 = vunpack.c.l.b16 %v1015
        %v2890 = vunpack.c.h.b16 %v1015
        %v2891 = vunpack.c.l.b16 %v1016
        %v2892 = vunpack.c.h.b16 %v1016
        %v2893 = vunpack.c.l.b16 %v1017
        %v2894 = vunpack.c.h.b16 %v1017
        %v2895 = vunpack.c.l.b16 %v1018
        %v2896 = vunpack.c.h.b16 %v1018
        %v2897 = vunpack.c.l.b16 %v1019
        %v2898 = vunpack.c.h.b16 %v1019
        %v2899 = vunpack.c.l.b16 %v1020
        %v2900 = vunpack.c.h.b16 %v1020
        %v2901 = vunpack.c.l.b16 %v1021
        %v2902 = vunpack.c.h.b16 %v1021
        %v2903 = vunpack.c.l.b16 %v1022
        %v2904 = vunpack.c.h.b16 %v1022
        %v2905 = vunpack.c.l.b16 %v1023
        %v2906 = vunpack.c.h.b16 %v1023
        %v2907 = vunpack.c.l.b16 %v1024
        %v2908 = vunpack.c.h.b16 %v1024
        %v2909 = vunpack.c.l.b16 %v1025
        %v2910 = vunpack.c.h.b16 %v1025
        %v2911 = vunpack.c.l.b16 %v1026
        %v2912 = vunpack.c.h.b16 %v1026
        %v2913 = vunpack.c.l.b16 %v1027
        %v2914 = vunpack.c.h.b16 %v1027
        %v2915 = vunpack.c.l.b16 %v1028
        %v2916 = vunpack.c.h.b16 %v1028
        %v2917 = vunpack.c.l.b16 %v1029
        %v2918 = vunpack.c.h.b16 %v1029
        %v2919 = vunpack.c.l.b16 %v1030
        %v2920 = vunpack.c.h.b16 %v1030
        %v2921 = vunpack.c.l.b16 %v1031
        %v2922 = vunpack.c.h.b16 %v1031
        %v2923 = vunpack.c.l.b16 %v1032
        %v2924 = vunpack.c.h.b16 %v1032
        %v2925 = vunpack.c.l.b16 %v1033
        %v2926 = vunpack.c.h.b16 %v1033
        %v2927 = vunpack.c.l.b16 %v1034
        %v2928 = vunpack.c.h.b16 %v1034
        %v2929 = vunpack.c.l.b16 %v1035
        %v2930 = vunpack.c.h.b16 %v1035
        %v2931 = vunpack.c.l.b16 %v1036
        %v2932 = vunpack.c.h.b16 %v1036
        %v2933 = vunpack.c.l.b16 %v1037
        %v2934 = vunpack.c.h.b16 %v1037
        %v2935 = vunpack.c.l.b16 %v1038
        %v2936 = vunpack.c.h.b16 %v1038
        %v2937 = vunpack.c.l.b16 %v1039
        %v2938 = vunpack.c.h.b16 %v1039
        %v2939 = vunpack.c.l.b16 %v1040
        %v2940 = vunpack.c.h.b16 %v1040
        %v2941 = vunpack.c.l.b16 %v1041
        %v2942 = vunpack.c.h.b16 %v1041
        %v2943 = vunpack.c.l.b16 %v1042
        %v2944 = vunpack.c.h.b16 %v1042
        %v2945 = vunpack.c.l.b16 %v1043
        %v2946 = vunpack.c.h.b16 %v1043
        %v2947 = vunpack.c.l.b16 %v1044
        %v2948 = vunpack.c.h.b16 %v1044
        %v2949 = vunpack.c.l.b16 %v1045
        %v2950 = vunpack.c.h.b16 %v1045
        %v2951 = vunpack.c.l.b16 %v1046
        %v2952 = vunpack.c.h.b16 %v1046
        %v2953 = vunpack.c.l.b16 %v1047
        %v2954 = vunpack.c.h.b16 %v1047
        %v2955 = vunpack.c.l.b16 %v1048
        %v2956 = vunpack.c.h.b16 %v1048
        %v2957 = vunpack.c.l.b16 %v1049
        %v2958 = vunpack.c.h.b16 %v1049
        %v2959 = vunpack.c.l.b16 %v1050
        %v2960 = vunpack.c.h.b16 %v1050
        %v2961 = vunpack.c.l.b16 %v1051
        %v2962 = vunpack.c.h.b16 %v1051
        %v2963 = vunpack.c.l.b16 %v1052
        %v2964 = vunpack.c.h.b16 %v1052
        %v2965 = vunpack.c.l.b16 %v1053
        %v2966 = vunpack.c.h.b16 %v1053
        %v2967 = vunpack.c.l.b16 %v1054
        %v2968 = vunpack.c.h.b16 %v1054
        %v2969 = vunpack.c.l.b16 %v1055
        %v2970 = vunpack.c.h.b16 %v1055
        %v2971 = vunpack.c.l.b16 %v1056
        %v2972 = vunpack.c.h.b16 %v1056
        %v2973 = vunpack.c.l.b16 %v1057
        %v2974 = vunpack.c.h.b16 %v1057
        %v2975 = vunpack.c.l.b16 %v1058
        %v2976 = vunpack.c.h.b16 %v1058
        %v2977 = vunpack.c.l.b16 %v1059
        %v2978 = vunpack.c.h.b16 %v1059
        %v2979 = vunpack.c.l.b16 %v1060
        %v2980 = vunpack.c.h.b16 %v1060
        %v2981 = vunpack.c.l.b16 %v1061
        %v2982 = vunpack.c.h.b16 %v1061
        %v2983 = vunpack.c.l.b16 %v1062
        %v2984 = vunpack.c.h.b16 %v1062
        %v2985 = vunpack.c.l.b16 %v1063
        %v2986 = vunpack.c.h.b16 %v1063
        %v2987 = vunpack.c.l.b16 %v1064
        %v2988 = vunpack.c.h.b16 %v1064
        %v2989 = vunpack.c.l.b16 %v1065
        %v2990 = vunpack.c.h.b16 %v1065
        %v2991 = vunpack.c.l.b16 %v1066
        %v2992 = vunpack.c.h.b16 %v1066
        %v2993 = vunpack.c.l.b16 %v1067
        %v2994 = vunpack.c.h.b16 %v1067
        %v2995 = vunpack.c.l.b16 %v1068
        %v2996 = vunpack.c.h.b16 %v1068
        %v2997 = vunpack.c.l.b16 %v1069
        %v2998 = vunpack.c.h.b16 %v1069
        %v2999 = vunpack.c.l.b16 %v1070
        %v3000 = vunpack.c.h.b16 %v1070
        %v3001 = vunpack.c.l.b16 %v1071
        %v3002 = vunpack.c.h.b16 %v1071
        %v3003 = vunpack.c.l.b16 %v1072
        %v3004 = vunpack.c.h.b16 %v1072
        %v3005 = vunpack.c.l.b16 %v1073
        %v3006 = vunpack.c.h.b16 %v1073
        %v3007 = vunpack.c.l.b16 %v1074
        %v3008 = vunpack.c.h.b16 %v1074
        %v3009 = vunpack.c.l.b16 %v1075
        %v3010 = vunpack.c.h.b16 %v1075
        %v3011 = vunpack.c.l.b16 %v1076
        %v3012 = vunpack.c.h.b16 %v1076
        %v3013 = vunpack.c.l.b16 %v1077
        %v3014 = vunpack.c.h.b16 %v1077
        %v3015 = vunpack.c.l.b16 %v1078
        %v3016 = vunpack.c.h.b16 %v1078
        %v3017 = vunpack.c.l.b16 %v1079
        %v3018 = vunpack.c.h.b16 %v1079
        %v3019 = vunpack.c.l.b16 %v1080
        %v3020 = vunpack.c.h.b16 %v1080
        %v3021 = vunpack.c.l.b16 %v1081
        %v3022 = vunpack.c.h.b16 %v1081
        %v3023 = vunpack.c.l.b16 %v1082
        %v3024 = vunpack.c.h.b16 %v1082
        %v3025 = vunpack.c.l.b16 %v1083
        %v3026 = vunpack.c.h.b16 %v1083
        %v3027 = vunpack.c.l.b16 %v1084
        %v3028 = vunpack.c.h.b16 %v1084
        %v3029 = vunpack.c.l.b16 %v1085
        %v3030 = vunpack.c.h.b16 %v1085
        %v3031 = vunpack.c.l.b16 %v1086
        %v3032 = vunpack.c.h.b16 %v1086
        %v3033 = vunpack.c.l.b16 %v1087
        %v3034 = vunpack.c.h.b16 %v1087
        %v3035 = vunpack.c.l.b16 %v1088
        %v3036 = vunpack.c.h.b16 %v1088
        %v3037 = vunpack.c.l.b16 %v1089
        %v3038 = vunpack.c.h.b16 %v1089
        %v3039 = vunpack.c.l.b16 %v1090
        %v3040 = vunpack.c.h.b16 %v1090
        %v3041 = vunpack.c.l.b16 %v1091
        %v3042 = vunpack.c.h.b16 %v1091
        %v3043 = vunpack.c.l.b16 %v1092
        %v3044 = vunpack.c.h.b16 %v1092
        %v3045 = vunpack.c.l.b16 %v1093
        %v3046 = vunpack.c.h.b16 %v1093
        %v3047 = vunpack.c.l.b16 %v1094
        %v3048 = vunpack.c.h.b16 %v1094
        %v3049 = vunpack.c.l.b16 %v1095
        %v3050 = vunpack.c.h.b16 %v1095
        %v3051 = vunpack.c.l.b16 %v1096
        %v3052 = vunpack.c.h.b16 %v1096
        %v3053 = vunpack.c.l.b16 %v1097
        %v3054 = vunpack.c.h.b16 %v1097
        %v3055 = vunpack.c.l.b16 %v1098
        %v3056 = vunpack.c.h.b16 %v1098
        %v3057 = vunpack.c.l.b16 %v1099
        %v3058 = vunpack.c.h.b16 %v1099
        %v3059 = vunpack.c.l.b16 %v1100
        %v3060 = vunpack.c.h.b16 %v1100
        %v3061 = vpack.c.b16 %v1791, %v1781
        %v3062 = vpack.c.b16 %v1792, %v1782
        %v3063 = vpack.c.b16 %v1793, %v1783
        %v3064 = vpack.c.b16 %v1794, %v1784
        %v3065 = vpack.c.b16 %v1795, %v1785
        %v3066 = vpack.c.b16 %v1796, %v1786
        %v3067 = vpack.c.b16 %v1797, %v1787
        %v3068 = vpack.c.b16 %v1798, %v1788
        %v3069 = vpack.c.b16 %v1799, %v1789
        %v3070 = vpack.c.b16 %v1800, %v1790
        %v3071 = vpack.c.b16 %v1811, %v1801
        %v3072 = vpack.c.b16 %v1812, %v1802
        %v3073 = vpack.c.b16 %v1813, %v1803
        %v3074 = vpack.c.b16 %v1814, %v1804
        %v3075 = vpack.c.b16 %v1815, %v1805
        %v3076 = vpack.c.b16 %v1816, %v1806
        %v3077 = vpack.c.b16 %v1817, %v1807
        %v3078 = vpack.c.b16 %v1818, %v1808
        %v3079 = vpack.c.b16 %v1819, %v1809
        %v3080 = vpack.c.b16 %v1820, %v1810
        %v3081 = vpack.c.b16 %v1831, %v1821
        %v3082 = vpack.c.b16 %v1832, %v1822
        %v3083 = vpack.c.b16 %v1833, %v1823
        %v3084 = vpack.c.b16 %v1834, %v1824
        %v3085 = vpack.c.b16 %v1835, %v1825
        %v3086 = vpack.c.b16 %v1836, %v1826
        %v3087 = vpack.c.b16 %v1837, %v1827
        %v3088 = vpack.c.b16 %v1838, %v1828
        %v3089 = vpack.c.b16 %v1839, %v1829
        %v3090 = vpack.c.b16 %v1840, %v1830
        %v3091 = vpack.c.b16 %v1851, %v1841
        %v3092 = vpack.c.b16 %v1852, %v1842
        %v3093 = vpack.c.b16 %v1853, %v1843
        %v3094 = vpack.c.b16 %v1854, %v1844
        %v3095 = vpack.c.b16 %v1855, %v1845
        %v3096 = vpack.c.b16 %v1856, %v1846
        %v3097 = vpack.c.b16 %v1857, %v1847
        %v3098 = vpack.c.b16 %v1858, %v1848
        %v3099 = vpack.c.b16 %v1859, %v1849
        %v3100 = vpack.c.b16 %v1860, %v1850
        %v3101 = vpack.c.b16 %v1871, %v1861
        %v3102 = vpack.c.b16 %v1872, %v1862
        %v3103 = vpack.c.b16 %v1873, %v1863
        %v3104 = vpack.c.b16 %v1874, %v1864
        %v3105 = vpack.c.b16 %v1875, %v1865
        %v3106 = vpack.c.b16 %v1876, %v1866
        %v3107 = vpack.c.b16 %v1877, %v1867
        %v3108 = vpack.c.b16 %v1878, %v1868
        %v3109 = vpack.c.b16 %v1879, %v1869
        %v3110 = vpack.c.b16 %v1880, %v1870
        %v3111 = vpack.c.b16 %v1891, %v1881
        %v3112 = vpack.c.b16 %v1892, %v1882
        %v3113 = vpack.c.b16 %v1893, %v1883
        %v3114 = vpack.c.b16 %v1894, %v1884
        %v3115 = vpack.c.b16 %v1895, %v1885
        %v3116 = vpack.c.b16 %v1896, %v1886
        %v3117 = vpack.c.b16 %v1897, %v1887
        %v3118 = vpack.c.b16 %v1898, %v1888
        %v3119 = vpack.c.b16 %v1899, %v1889
        %v3120 = vpack.c.b16 %v1900, %v1890
        %v3121 = vpack.c.b16 %v1911, %v1901
        %v3122 = vpack.c.b16 %v1912, %v1902
        %v3123 = vpack.c.b16 %v1913, %v1903
        %v3124 = vpack.c.b16 %v1914, %v1904
        %v3125 = vpack.c.b16 %v1915, %v1905
        %v3126 = vpack.c.b16 %v1916, %v1906
        %v3127 = vpack.c.b16 %v1917, %v1907
        %v3128 = vpack.c.b16 %v1918, %v1908
        %v3129 = vpack.c.b16 %v1919, %v1909
        %v3130 = vpack.c.b16 %v1920, %v1910
        %v3131 = vpack.c.b16 %v1931, %v1921
        %v3132 = vpack.c.b16 %v1932, %v1922
        %v3133 = vpack.c.b16 %v1933, %v1923
        %v3134 = vpack.c.b16 %v1934, %v1924
        %v3135 = vpack.c.b16 %v1935, %v1925
        %v3136 = vpack.c.b16 %v1936, %v1926
        %v3137 = vpack.c.b16 %v1937, %v1927
        %v3138 = vpack.c.b16 %v1938, %v1928
        %v3139 = vpack.c.b16 %v1939, %v1929
        %v3140 = vpack.c.b16 %v1940, %v1930
        %v3141 = vpack.c.b16 %v1951, %v1941
        %v3142 = vpack.c.b16 %v1952, %v1942
        %v3143 = vpack.c.b16 %v1953, %v1943
        %v3144 = vpack.c.b16 %v1954, %v1944
        %v3145 = vpack.c.b16 %v1955, %v1945
        %v3146 = vpack.c.b16 %v1956, %v1946
        %v3147 = vpack.c.b16 %v1957, %v1947
        %v3148 = vpack.c.b16 %v1958, %v1948
        %v3149 = vpack.c.b16 %v1959, %v1949
        %v3150 = vpack.c.b16 %v1960, %v1950
        %v3151 = vpack.c.b16 %v1971, %v1961
        %v3152 = vpack.c.b16 %v1972, %v1962
        %v3153 = vpack.c.b16 %v1973, %v1963
        %v3154 = vpack.c.b16 %v1974, %v1964
        %v3155 = vpack.c.b16 %v1975, %v1965
        %v3156 = vpack.c.b16 %v1976, %v1966
        %v3157 = vpack.c.b16 %v1977, %v1967
        %v3158 = vpack.c.b16 %v1978, %v1968
        %v3159 = vpack.c.b16 %v1979, %v1969
        %v3160 = vpack.c.b16 %v1980, %v1970
        %v3161 = vpack.c.b16 %v1991, %v1981
        %v3162 = vpack.c.b16 %v1992, %v1982
        %v3163 = vpack.c.b16 %v1993, %v1983
        %v3164 = vpack.c.b16 %v1994, %v1984
        %v3165 = vpack.c.b16 %v1995, %v1985
        %v3166 = vpack.c.b16 %v1996, %v1986
        %v3167 = vpack.c.b16 %v1997, %v1987
        %v3168 = vpack.c.b16 %v1998, %v1988
        %v3169 = vpack.c.b16 %v1999, %v1989
        %v3170 = vpack.c.b16 %v2000, %v1990
        %v3171 = vpack.c.b16 %v2011, %v2001
        %v3172 = vpack.c.b16 %v2012, %v2002
        %v3173 = vpack.c.b16 %v2013, %v2003
        %v3174 = vpack.c.b16 %v2014, %v2004
        %v3175 = vpack.c.b16 %v2015, %v2005
        %v3176 = vpack.c.b16 %v2016, %v2006
        %v3177 = vpack.c.b16 %v2017, %v2007
        %v3178 = vpack.c.b16 %v2018, %v2008
        %v3179 = vpack.c.b16 %v2019, %v2009
        %v3180 = vpack.c.b16 %v2020, %v2010
        %v3181 = vpack.c.b16 %v2031, %v2021
        %v3182 = vpack.c.b16 %v2032, %v2022
        %v3183 = vpack.c.b16 %v2033, %v2023
        %v3184 = vpack.c.b16 %v2034, %v2024
        %v3185 = vpack.c.b16 %v2035, %v2025
        %v3186 = vpack.c.b16 %v2036, %v2026
        %v3187 = vpack.c.b16 %v2037, %v2027
        %v3188 = vpack.c.b16 %v2038, %v2028
        %v3189 = vpack.c.b16 %v2039, %v2029
        %v3190 = vpack.c.b16 %v2040, %v2030
        %v3191 = vpack.c.b16 %v2051, %v2041
        %v3192 = vpack.c.b16 %v2052, %v2042
        %v3193 = vpack.c.b16 %v2053, %v2043
        %v3194 = vpack.c.b16 %v2054, %v2044
        %v3195 = vpack.c.b16 %v2055, %v2045
        %v3196 = vpack.c.b16 %v2056, %v2046
        %v3197 = vpack.c.b16 %v2057, %v2047
        %v3198 = vpack.c.b16 %v2058, %v2048
        %v3199 = vpack.c.b16 %v2059, %v2049
        %v3200 = vpack.c.b16 %v2060, %v2050
        %v3201 = vpack.c.b16 %v2071, %v2061
        %v3202 = vpack.c.b16 %v2072, %v2062
        %v3203 = vpack.c.b16 %v2073, %v2063
        %v3204 = vpack.c.b16 %v2074, %v2064
        %v3205 = vpack.c.b16 %v2075, %v2065
        %v3206 = vpack.c.b16 %v2076, %v2066
        %v3207 = vpack.c.b16 %v2077, %v2067
        %v3208 = vpack.c.b16 %v2078, %v2068
        %v3209 = vpack.c.b16 %v2079, %v2069
        %v3210 = vpack.c.b16 %v2080, %v2070
        %v3211 = vpack.c.b16 %v2091, %v2081
        %v3212 = vpack.c.b16 %v2092, %v2082
        %v3213 = vpack.c.b16 %v2093, %v2083
        %v3214 = vpack.c.b16 %v2094, %v2084
        %v3215 = vpack.c.b16 %v2095, %v2085
        %v3216 = vpack.c.b16 %v2096, %v2086
        %v3217 = vpack.c.b16 %v2097, %v2087
        %v3218 = vpack.c.b16 %v2098, %v2088
        %v3219 = vpack.c.b16 %v2099, %v2089
        %v3220 = vpack.c.b16 %v2100, %v2090
        %v3221 = vpack.c.b16 %v2111, %v2101
        %v3222 = vpack.c.b16 %v2112, %v2102
        %v3223 = vpack.c.b16 %v2113, %v2103
        %v3224 = vpack.c.b16 %v2114, %v2104
        %v3225 = vpack.c.b16 %v2115, %v2105
        %v3226 = vpack.c.b16 %v2116, %v2106
        %v3227 = vpack.c.b16 %v2117, %v2107
        %v3228 = vpack.c.b16 %v2118, %v2108
        %v3229 = vpack.c.b16 %v2119, %v2109
        %v3230 = vpack.c.b16 %v2120, %v2110
        %v3231 = vpack.c.b16 %v2131, %v2121
        %v3232 = vpack.c.b16 %v2132, %v2122
        %v3233 = vpack.c.b16 %v2133, %v2123
        %v3234 = vpack.c.b16 %v2134, %v2124
        %v3235 = vpack.c.b16 %v2135, %v2125
        %v3236 = vpack.c.b16 %v2136, %v2126
        %v3237 = vpack.c.b16 %v2137, %v2127
        %v3238 = vpack.c.b16 %v2138, %v2128
        %v3239 = vpack.c.b16 %v2139, %v2129
        %v3240 = vpack.c.b16 %v2140, %v2130
        %v3241 = vpack.c.b16 %v2151, %v2141
        %v3242 = vpack.c.b16 %v2152, %v2142
        %v3243 = vpack.c.b16 %v2153, %v2143
        %v3244 = vpack.c.b16 %v2154, %v2144
        %v3245 = vpack.c.b16 %v2155, %v2145
        %v3246 = vpack.c.b16 %v2156, %v2146
        %v3247 = vpack.c.b16 %v2157, %v2147
        %v3248 = vpack.c.b16 %v2158, %v2148
        %v3249 = vpack.c.b16 %v2159, %v2149
        %v3250 = vpack.c.b16 %v2160, %v2150
        %v3251 = vpack.c.b16 %v2171, %v2161
        %v3252 = vpack.c.b16 %v2172, %v2162
        %v3253 = vpack.c.b16 %v2173, %v2163
        %v3254 = vpack.c.b16 %v2174, %v2164
        %v3255 = vpack.c.b16 %v2175, %v2165
        %v3256 = vpack.c.b16 %v2176, %v2166
        %v3257 = vpack.c.b16 %v2177, %v2167
        %v3258 = vpack.c.b16 %v2178, %v2168
        %v3259 = vpack.c.b16 %v2179, %v2169
        %v3260 = vpack.c.b16 %v2180, %v2170
        %v3261 = vpack.c.b16 %v2191, %v2181
        %v3262 = vpack.c.b16 %v2192, %v2182
        %v3263 = vpack.c.b16 %v2193, %v2183
        %v3264 = vpack.c.b16 %v2194, %v2184
        %v3265 = vpack.c.b16 %v2195, %v2185
        %v3266 = vpack.c.b16 %v2196, %v2186
        %v3267 = vpack.c.b16 %v2197, %v2187
        %v3268 = vpack.c.b16 %v2198, %v2188
        %v3269 = vpack.c.b16 %v2199, %v2189
        %v3270 = vpack.c.b16 %v2200, %v2190
        %v3271 = vpack.c.b16 %v2211, %v2201
        %v3272 = vpack.c.b16 %v2212, %v2202
        %v3273 = vpack.c.b16 %v2213, %v2203
        %v3274 = vpack.c.b16 %v2214, %v2204
        %v3275 = vpack.c.b16 %v2215, %v2205
        %v3276 = vpack.c.b16 %v2216, %v2206
        %v3277 = vpack.c.b16 %v2217, %v2207
        %v3278 = vpack.c.b16 %v2218, %v2208
        %v3279 = vpack.c.b16 %v2219, %v2209
        %v3280 = vpack.c.b16 %v2220, %v2210
        %v3281 = vpack.c.b16 %v2231, %v2221
        %v3282 = vpack.c.b16 %v2232, %v2222
        %v3283 = vpack.c.b16 %v2233, %v2223
        %v3284 = vpack.c.b16 %v2234, %v2224
        %v3285 = vpack.c.b16 %v2235, %v2225
        %v3286 = vpack.c.b16 %v2236, %v2226
        %v3287 = vpack.c.b16 %v2237, %v2227
        %v3288 = vpack.c.b16 %v2238, %v2228
        %v3289 = vpack.c.b16 %v2239, %v2229
        %v3290 = vpack.c.b16 %v2240, %v2230
        %v3291 = vpack.c.b16 %v2251, %v2241
        %v3292 = vpack.c.b16 %v2252, %v2242
        %v3293 = vpack.c.b16 %v2253, %v2243
        %v3294 = vpack.c.b16 %v2254, %v2244
        %v3295 = vpack.c.b16 %v2255, %v2245
        %v3296 = vpack.c.b16 %v2256, %v2246
        %v3297 = vpack.c.b16 %v2257, %v2247
        %v3298 = vpack.c.b16 %v2258, %v2248
        %v3299 = vpack.c.b16 %v2259, %v2249
        %v3300 = vpack.c.b16 %v2260, %v2250
        %v3301 = vpack.c.b16 %v2271, %v2261
        %v3302 = vpack.c.b16 %v2272, %v2262
        %v3303 = vpack.c.b16 %v2273, %v2263
        %v3304 = vpack.c.b16 %v2274, %v2264
        %v3305 = vpack.c.b16 %v2275, %v2265
        %v3306 = vpack.c.b16 %v2276, %v2266
        %v3307 = vpack.c.b16 %v2277, %v2267
        %v3308 = vpack.c.b16 %v2278, %v2268
        %v3309 = vpack.c.b16 %v2279, %v2269
        %v3310 = vpack.c.b16 %v2280, %v2270
        %v3311 = vpack.c.b16 %v2291, %v2281
        %v3312 = vpack.c.b16 %v2292, %v2282
        %v3313 = vpack.c.b16 %v2293, %v2283
        %v3314 = vpack.c.b16 %v2294, %v2284
        %v3315 = vpack.c.b16 %v2295, %v2285
        %v3316 = vpack.c.b16 %v2296, %v2286
        %v3317 = vpack.c.b16 %v2297, %v2287
        %v3318 = vpack.c.b16 %v2298, %v2288
        %v3319 = vpack.c.b16 %v2299, %v2289
        %v3320 = vpack.c.b16 %v2300, %v2290
        %v3321 = vpack.c.b16 %v2311, %v2301
        %v3322 = vpack.c.b16 %v2312, %v2302
        %v3323 = vpack.c.b16 %v2313, %v2303
        %v3324 = vpack.c.b16 %v2314, %v2304
        %v3325 = vpack.c.b16 %v2315, %v2305
        %v3326 = vpack.c.b16 %v2316, %v2306
        %v3327 = vpack.c.b16 %v2317, %v2307
        %v3328 = vpack.c.b16 %v2318, %v2308
        %v3329 = vpack.c.b16 %v2319, %v2309
        %v3330 = vpack.c.b16 %v2320, %v2310
        %v3331 = vpack.c.b16 %v2331, %v2321
        %v3332 = vpack.c.b16 %v2332, %v2322
        %v3333 = vpack.c.b16 %v2333, %v2323
        %v3334 = vpack.c.b16 %v2334, %v2324
        %v3335 = vpack.c.b16 %v2335, %v2325
        %v3336 = vpack.c.b16 %v2336, %v2326
        %v3337 = vpack.c.b16 %v2337, %v2327
        %v3338 = vpack.c.b16 %v2338, %v2328
        %v3339 = vpack.c.b16 %v2339, %v2329
        %v3340 = vpack.c.b16 %v2340, %v2330
        %v3341 = vpack.c.b16 %v2351, %v2341
        %v3342 = vpack.c.b16 %v2352, %v2342
        %v3343 = vpack.c.b16 %v2353, %v2343
        %v3344 = vpack.c.b16 %v2354, %v2344
        %v3345 = vpack.c.b16 %v2355, %v2345
        %v3346 = vpack.c.b16 %v2356, %v2346
        %v3347 = vpack.c.b16 %v2357, %v2347
        %v3348 = vpack.c.b16 %v2358, %v2348
        %v3349 = vpack.c.b16 %v2359, %v2349
        %v3350 = vpack.c.b16 %v2360, %v2350
        %v3351 = vpack.c.b16 %v2371, %v2361
        %v3352 = vpack.c.b16 %v2372, %v2362
        %v3353 = vpack.c.b16 %v2373, %v2363
        %v3354 = vpack.c.b16 %v2374, %v2364
        %v3355 = vpack.c.b16 %v2375, %v2365
        %v3356 = vpack.c.b16 %v2376, %v2366
        %v3357 = vpack.c.b16 %v2377, %v2367
        %v3358 = vpack.c.b16 %v2378, %v2368
        %v3359 = vpack.c.b16 %v2379, %v2369
        %v3360 = vpack.c.b16 %v2380, %v2370
        %v3361 = vpack.c.b16 %v2391, %v2381
        %v3362 = vpack.c.b16 %v2392, %v2382
        %v3363 = vpack.c.b16 %v2393, %v2383
        %v3364 = vpack.c.b16 %v2394, %v2384
        %v3365 = vpack.c.b16 %v2395, %v2385
        %v3366 = vpack.c.b16 %v2396, %v2386
        %v3367 = vpack.c.b16 %v2397, %v2387
        %v3368 = vpack.c.b16 %v2398, %v2388
        %v3369 = vpack.c.b16 %v2399, %v2389
        %v3370 = vpack.c.b16 %v2400, %v2390
        %v3371 = vpack.c.b16 %v2411, %v2401
        %v3372 = vpack.c.b16 %v2412, %v2402
        %v3373 = vpack.c.b16 %v2413, %v2403
        %v3374 = vpack.c.b16 %v2414, %v2404
        %v3375 = vpack.c.b16 %v2415, %v2405
        %v3376 = vpack.c.b16 %v2416, %v2406
        %v3377 = vpack.c.b16 %v2417, %v2407
        %v3378 = vpack.c.b16 %v2418, %v2408
        %v3379 = vpack.c.b16 %v2419, %v2409
        %v3380 = vpack.c.b16 %v2420, %v2410
        %v3381 = vpack.c.b16 %v2431, %v2421
        %v3382 = vpack.c.b16 %v2432, %v2422
        %v3383 = vpack.c.b16 %v2433, %v2423
        %v3384 = vpack.c.b16 %v2434, %v2424
        %v3385 = vpack.c.b16 %v2435, %v2425
        %v3386 = vpack.c.b16 %v2436, %v2426
        %v3387 = vpack.c.b16 %v2437, %v2427
        %v3388 = vpack.c.b16 %v2438, %v2428
        %v3389 = vpack.c.b16 %v2439, %v2429
        %v3390 = vpack.c.b16 %v2440, %v2430
        %v3391 = vpack.c.b16 %v2451, %v2441
        %v3392 = vpack.c.b16 %v2452, %v2442
        %v3393 = vpack.c.b16 %v2453, %v2443
        %v3394 = vpack.c.b16 %v2454, %v2444
        %v3395 = vpack.c.b16 %v2455, %v2445
        %v3396 = vpack.c.b16 %v2456, %v2446
        %v3397 = vpack.c.b16 %v2457, %v2447
        %v3398 = vpack.c.b16 %v2458, %v2448
        %v3399 = vpack.c.b16 %v2459, %v2449
        %v3400 = vpack.c.b16 %v2460, %v2450
        %v3401 = vpack.c.b16 %v2471, %v2461
        %v3402 = vpack.c.b16 %v2472, %v2462
        %v3403 = vpack.c.b16 %v2473, %v2463
        %v3404 = vpack.c.b16 %v2474, %v2464
        %v3405 = vpack.c.b16 %v2475, %v2465
        %v3406 = vpack.c.b16 %v2476, %v2466
        %v3407 = vpack.c.b16 %v2477, %v2467
        %v3408 = vpack.c.b16 %v2478, %v2468
        %v3409 = vpack.c.b16 %v2479, %v2469
        %v3410 = vpack.c.b16 %v2480, %v2470
        %v3411 = vpack.c.b16 %v2491, %v2481
        %v3412 = vpack.c.b16 %v2492, %v2482
        %v3413 = vpack.c.b16 %v2493, %v2483
        %v3414 = vpack.c.b16 %v2494, %v2484
        %v3415 = vpack.c.b16 %v2495, %v2485
        %v3416 = vpack.c.b16 %v2496, %v2486
        %v3417 = vpack.c.b16 %v2497, %v2487
        %v3418 = vpack.c.b16 %v2498, %v2488
        %v3419 = vpack.c.b16 %v2499, %v2489
        %v3420 = vpack.c.b16 %v2500, %v2490
        %v3421 = vpack.c.b16 %v2511, %v2501
        %v3422 = vpack.c.b16 %v2512, %v2502
        %v3423 = vpack.c.b16 %v2513, %v2503
        %v3424 = vpack.c.b16 %v2514, %v2504
        %v3425 = vpack.c.b16 %v2515, %v2505
        %v3426 = vpack.c.b16 %v2516, %v2506
        %v3427 = vpack.c.b16 %v2517, %v2507
        %v3428 = vpack.c.b16 %v2518, %v2508
        %v3429 = vpack.c.b16 %v2519, %v2509
        %v3430 = vpack.c.b16 %v2520, %v2510
        %v3431 = vpack.c.b16 %v2531, %v2521
        %v3432 = vpack.c.b16 %v2532, %v2522
        %v3433 = vpack.c.b16 %v2533, %v2523
        %v3434 = vpack.c.b16 %v2534, %v2524
        %v3435 = vpack.c.b16 %v2535, %v2525
        %v3436 = vpack.c.b16 %v2536, %v2526
        %v3437 = vpack.c.b16 %v2537, %v2527
        %v3438 = vpack.c.b16 %v2538, %v2528
        %v3439 = vpack.c.b16 %v2539, %v2529
        %v3440 = vpack.c.b16 %v2540, %v2530
        %v3441 = vpack.c.b16 %v2551, %v2541
        %v3442 = vpack.c.b16 %v2552, %v2542
        %v3443 = vpack.c.b16 %v2553, %v2543
        %v3444 = vpack.c.b16 %v2554, %v2544
        %v3445 = vpack.c.b16 %v2555, %v2545
        %v3446 = vpack.c.b16 %v2556, %v2546
        %v3447 = vpack.c.b16 %v2557, %v2547
        %v3448 = vpack.c.b16 %v2558, %v2548
        %v3449 = vpack.c.b16 %v2559, %v2549
        %v3450 = vpack.c.b16 %v2560, %v2550
        %v3451 = vpack.c.b16 %v2571, %v2561
        %v3452 = vpack.c.b16 %v2572, %v2562
        %v3453 = vpack.c.b16 %v2573, %v2563
        %v3454 = vpack.c.b16 %v2574, %v2564
        %v3455 = vpack.c.b16 %v2575, %v2565
        %v3456 = vpack.c.b16 %v2576, %v2566
        %v3457 = vpack.c.b16 %v2577, %v2567
        %v3458 = vpack.c.b16 %v2578, %v2568
        %v3459 = vpack.c.b16 %v2579, %v2569
        %v3460 = vpack.c.b16 %v2580, %v2570
        %v3461 = vpack.c.b16 %v2591, %v2581
        %v3462 = vpack.c.b16 %v2592, %v2582
        %v3463 = vpack.c.b16 %v2593, %v2583
        %v3464 = vpack.c.b16 %v2594, %v2584
        %v3465 = vpack.c.b16 %v2595, %v2585
        %v3466 = vpack.c.b16 %v2596, %v2586
        %v3467 = vpack.c.b16 %v2597, %v2587
        %v3468 = vpack.c.b16 %v2598, %v2588
        %v3469 = vpack.c.b16 %v2599, %v2589
        %v3470 = vpack.c.b16 %v2600, %v2590
        %v3471 = vpack.c.b16 %v2611, %v2601
        %v3472 = vpack.c.b16 %v2612, %v2602
        %v3473 = vpack.c.b16 %v2613, %v2603
        %v3474 = vpack.c.b16 %v2614, %v2604
        %v3475 = vpack.c.b16 %v2615, %v2605
        %v3476 = vpack.c.b16 %v2616, %v2606
        %v3477 = vpack.c.b16 %v2617, %v2607
        %v3478 = vpack.c.b16 %v2618, %v2608
        %v3479 = vpack.c.b16 %v2619, %v2609
        %v3480 = vpack.c.b16 %v2620, %v2610
        %v3481 = vpack.c.b16 %v2631, %v2621
        %v3482 = vpack.c.b16 %v2632, %v2622
        %v3483 = vpack.c.b16 %v2633, %v2623
        %v3484 = vpack.c.b16 %v2634, %v2624
        %v3485 = vpack.c.b16 %v2635, %v2625
        %v3486 = vpack.c.b16 %v2636, %v2626
        %v3487 = vpack.c.b16 %v2637, %v2627
        %v3488 = vpack.c.b16 %v2638, %v2628
        %v3489 = vpack.c.b16 %v2639, %v2629
        %v3490 = vpack.c.b16 %v2640, %v2630
        %v3491 = vpack.c.b16 %v2651, %v2641
        %v3492 = vpack.c.b16 %v2652, %v2642
        %v3493 = vpack.c.b16 %v2653, %v2643
        %v3494 = vpack.c.b16 %v2654, %v2644
        %v3495 = vpack.c.b16 %v2655, %v2645
        %v3496 = vpack.c.b16 %v2656, %v2646
        %v3497 = vpack.c.b16 %v2657, %v2647
        %v3498 = vpack.c.b16 %v2658, %v2648
        %v3499 = vpack.c.b16 %v2659, %v2649
        %v3500 = vpack.c.b16 %v2660, %v2650
        %v3501 = vpack.c.b16 %v2671, %v2661
        %v3502 = vpack.c.b16 %v2672, %v2662
        %v3503 = vpack.c.b16 %v2673, %v2663
        %v3504 = vpack.c.b16 %v2674, %v2664
        %v3505 = vpack.c.b16 %v2675, %v2665
        %v3506 = vpack.c.b16 %v2676, %v2666
        %v3507 = vpack.c.b16 %v2677, %v2667
        %v3508 = vpack.c.b16 %v2678, %v2668
        %v3509 = vpack.c.b16 %v2679, %v2669
        %v3510 = vpack.c.b16 %v2680, %v2670
        %v3511 = vpack.c.b16 %v2691, %v2681
        %v3512 = vpack.c.b16 %v2692, %v2682
        %v3513 = vpack.c.b16 %v2693, %v2683
        %v3514 = vpack.c.b16 %v2694, %v2684
        %v3515 = vpack.c.b16 %v2695, %v2685
        %v3516 = vpack.c.b16 %v2696, %v2686
        %v3517 = vpack.c.b16 %v2697, %v2687
        %v3518 = vpack.c.b16 %v2698, %v2688
        %v3519 = vpack.c.b16 %v2699, %v2689
        %v3520 = vpack.c.b16 %v2700, %v2690
        %v3521 = vpack.c.b16 %v2711, %v2701
        %v3522 = vpack.c.b16 %v2712, %v2702
        %v3523 = vpack.c.b16 %v2713, %v2703
        %v3524 = vpack.c.b16 %v2714, %v2704
        %v3525 = vpack.c.b16 %v2715, %v2705
        %v3526 = vpack.c.b16 %v2716, %v2706
        %v3527 = vpack.c.b16 %v2717, %v2707
        %v3528 = vpack.c.b16 %v2718, %v2708
        %v3529 = vpack.c.b16 %v2719, %v2709
        %v3530 = vpack.c.b16 %v2720, %v2710
        %v3531 = vpack.c.b16 %v2731, %v2721
        %v3532 = vpack.c.b16 %v2732, %v2722
        %v3533 = vpack.c.b16 %v2733, %v2723
        %v3534 = vpack.c.b16 %v2734, %v2724
        %v3535 = vpack.c.b16 %v2735, %v2725
        %v3536 = vpack.c.b16 %v2736, %v2726
        %v3537 = vpack.c.b16 %v2737, %v2727
        %v3538 = vpack.c.b16 %v2738, %v2728
        %v3539 = vpack.c.b16 %v2739, %v2729
        %v3540 = vpack.c.b16 %v2740, %v2730
        %v3541 = vpack.c.b16 %v2751, %v2741
        %v3542 = vpack.c.b16 %v2752, %v2742
        %v3543 = vpack.c.b16 %v2753, %v2743
        %v3544 = vpack.c.b16 %v2754, %v2744
        %v3545 = vpack.c.b16 %v2755, %v2745
        %v3546 = vpack.c.b16 %v2756, %v2746
        %v3547 = vpack.c.b16 %v2757, %v2747
        %v3548 = vpack.c.b16 %v2758, %v2748
        %v3549 = vpack.c.b16 %v2759, %v2749
        %v3550 = vpack.c.b16 %v2760, %v2750
        %v3551 = vpack.c.b16 %v2771, %v2761
        %v3552 = vpack.c.b16 %v2772, %v2762
        %v3553 = vpack.c.b16 %v2773, %v2763
        %v3554 = vpack.c.b16 %v2774, %v2764
        %v3555 = vpack.c.b16 %v2775, %v2765
        %v3556 = vpack.c.b16 %v2776, %v2766
        %v3557 = vpack.c.b16 %v2777, %v2767
        %v3558 = vpack.c.b16 %v2778, %v2768
        %v3559 = vpack.c.b16 %v2779, %v2769
        %v3560 = vpack.c.b16 %v2780, %v2770
        %v3561 = vpack.c.b16 %v2791, %v2781
        %v3562 = vpack.c.b16 %v2792, %v2782
        %v3563 = vpack.c.b16 %v2793, %v2783
        %v3564 = vpack.c.b16 %v2794, %v2784
        %v3565 = vpack.c.b16 %v2795, %v2785
        %v3566 = vpack.c.b16 %v2796, %v2786
        %v3567 = vpack.c.b16 %v2797, %v2787
        %v3568 = vpack.c.b16 %v2798, %v2788
        %v3569 = vpack.c.b16 %v2799, %v2789
        %v3570 = vpack.c.b16 %v2800, %v2790
        %v3571 = vpack.c.b16 %v2811, %v2801
        %v3572 = vpack.c.b16 %v2812, %v2802
        %v3573 = vpack.c.b16 %v2813, %v2803
        %v3574 = vpack.c.b16 %v2814, %v2804
        %v3575 = vpack.c.b16 %v2815, %v2805
        %v3576 = vpack.c.b16 %v2816, %v2806
        %v3577 = vpack.c.b16 %v2817, %v2807
        %v3578 = vpack.c.b16 %v2818, %v2808
        %v3579 = vpack.c.b16 %v2819, %v2809
        %v3580 = vpack.c.b16 %v2820, %v2810
        %v3581 = vpack.c.b16 %v2831, %v2821
        %v3582 = vpack.c.b16 %v2832, %v2822
        %v3583 = vpack.c.b16 %v2833, %v2823
        %v3584 = vpack.c.b16 %v2834, %v2824
        %v3585 = vpack.c.b16 %v2835, %v2825
        %v3586 = vpack.c.b16 %v2836, %v2826
        %v3587 = vpack.c.b16 %v2837, %v2827
        %v3588 = vpack.c.b16 %v2838, %v2828
        %v3589 = vpack.c.b16 %v2839, %v2829
        %v3590 = vpack.c.b16 %v2840, %v2830
        %v3591 = vpack.c.b16 %v2851, %v2841
        %v3592 = vpack.c.b16 %v2852, %v2842
        %v3593 = vpack.c.b16 %v2853, %v2843
        %v3594 = vpack.c.b16 %v2854, %v2844
        %v3595 = vpack.c.b16 %v2855, %v2845
        %v3596 = vpack.c.b16 %v2856, %v2846
        %v3597 = vpack.c.b16 %v2857, %v2847
        %v3598 = vpack.c.b16 %v2858, %v2848
        %v3599 = vpack.c.b16 %v2859, %v2849
        %v3600 = vpack.c.b16 %v2860, %v2850
        %v3601 = vpack.c.b16 %v2871, %v2861
        %v3602 = vpack.c.b16 %v2872, %v2862
        %v3603 = vpack.c.b16 %v2873, %v2863
        %v3604 = vpack.c.b16 %v2874, %v2864
        %v3605 = vpack.c.b16 %v2875, %v2865
        %v3606 = vpack.c.b16 %v2876, %v2866
        %v3607 = vpack.c.b16 %v2877, %v2867
        %v3608 = vpack.c.b16 %v2878, %v2868
        %v3609 = vpack.c.b16 %v2879, %v2869
        %v3610 = vpack.c.b16 %v2880, %v2870
        %v3611 = vpack.c.b16 %v2891, %v2881
        %v3612 = vpack.c.b16 %v2892, %v2882
        %v3613 = vpack.c.b16 %v2893, %v2883
        %v3614 = vpack.c.b16 %v2894, %v2884
        %v3615 = vpack.c.b16 %v2895, %v2885
        %v3616 = vpack.c.b16 %v2896, %v2886
        %v3617 = vpack.c.b16 %v2897, %v2887
        %v3618 = vpack.c.b16 %v2898, %v2888
        %v3619 = vpack.c.b16 %v2899, %v2889
        %v3620 = vpack.c.b16 %v2900, %v2890
        %v3621 = vpack.c.b16 %v2911, %v2901
        %v3622 = vpack.c.b16 %v2912, %v2902
        %v3623 = vpack.c.b16 %v2913, %v2903
        %v3624 = vpack.c.b16 %v2914, %v2904
        %v3625 = vpack.c.b16 %v2915, %v2905
        %v3626 = vpack.c.b16 %v2916, %v2906
        %v3627 = vpack.c.b16 %v2917, %v2907
        %v3628 = vpack.c.b16 %v2918, %v2908
        %v3629 = vpack.c.b16 %v2919, %v2909
        %v3630 = vpack.c.b16 %v2920, %v2910
        %v3631 = vpack.c.b16 %v2931, %v2921
        %v3632 = vpack.c.b16 %v2932, %v2922
        %v3633 = vpack.c.b16 %v2933, %v2923
        %v3634 = vpack.c.b16 %v2934, %v2924
        %v3635 = vpack.c.b16 %v2935, %v2925
        %v3636 = vpack.c.b16 %v2936, %v2926
        %v3637 = vpack.c.b16 %v2937, %v2927
        %v3638 = vpack.c.b16 %v2938, %v2928
        %v3639 = vpack.c.b16 %v2939, %v2929
        %v3640 = vpack.c.b16 %v2940, %v2930
        %v3641 = vpack.c.b16 %v2951, %v2941
        %v3642 = vpack.c.b16 %v2952, %v2942
        %v3643 = vpack.c.b16 %v2953, %v2943
        %v3644 = vpack.c.b16 %v2954, %v2944
        %v3645 = vpack.c.b16 %v2955, %v2945
        %v3646 = vpack.c.b16 %v2956, %v2946
        %v3647 = vpack.c.b16 %v2957, %v2947
        %v3648 = vpack.c.b16 %v2958, %v2948
        %v3649 = vpack.c.b16 %v2959, %v2949
        %v3650 = vpack.c.b16 %v2960, %v2950
        %v3651 = vpack.c.b16 %v2971, %v2961
        %v3652 = vpack.c.b16 %v2972, %v2962
        %v3653 = vpack.c.b16 %v2973, %v2963
        %v3654 = vpack.c.b16 %v2974, %v2964
        %v3655 = vpack.c.b16 %v2975, %v2965
        %v3656 = vpack.c.b16 %v2976, %v2966
        %v3657 = vpack.c.b16 %v2977, %v2967
        %v3658 = vpack.c.b16 %v2978, %v2968
        %v3659 = vpack.c.b16 %v2979, %v2969
        %v3660 = vpack.c.b16 %v2980, %v2970
        %v3661 = vpack.c.b16 %v2991, %v2981
        %v3662 = vpack.c.b16 %v2992, %v2982
        %v3663 = vpack.c.b16 %v2993, %v2983
        %v3664 = vpack.c.b16 %v2994, %v2984
        %v3665 = vpack.c.b16 %v2995, %v2985
        %v3666 = vpack.c.b16 %v2996, %v2986
        %v3667 = vpack.c.b16 %v2997, %v2987
        %v3668 = vpack.c.b16 %v2998, %v2988
        %v3669 = vpack.c.b16 %v2999, %v2989
        %v3670 = vpack.c.b16 %v3000, %v2990
        %v3671 = vpack.c.b16 %v3011, %v3001
        %v3672 = vpack.c.b16 %v3012, %v3002
        %v3673 = vpack.c.b16 %v3013, %v3003
        %v3674 = vpack.c.b16 %v3014, %v3004
        %v3675 = vpack.c.b16 %v3015, %v3005
        %v3676 = vpack.c.b16 %v3016, %v3006
        %v3677 = vpack.c.b16 %v3017, %v3007
        %v3678 = vpack.c.b16 %v3018, %v3008
        %v3679 = vpack.c.b16 %v3019, %v3009
        %v3680 = vpack.c.b16 %v3020, %v3010
        %v3681 = vpack.c.b16 %v3031, %v3021
        %v3682 = vpack.c.b16 %v3032, %v3022
        %v3683 = vpack.c.b16 %v3033, %v3023
        %v3684 = vpack.c.b16 %v3034, %v3024
        %v3685 = vpack.c.b16 %v3035, %v3025
        %v3686 = vpack.c.b16 %v3036, %v3026
        %v3687 = vpack.c.b16 %v3037, %v3027
        %v3688 = vpack.c.b16 %v3038, %v3028
        %v3689 = vpack.c.b16 %v3039, %v3029
        %v3690 = vpack.c.b16 %v3040, %v3030
        %v3691 = vpack.c.b16 %v3051, %v3041
        %v3692 = vpack.c.b16 %v3052, %v3042
        %v3693 = vpack.c.b16 %v3053, %v3043
        %v3694 = vpack.c.b16 %v3054, %v3044
        %v3695 = vpack.c.b16 %v3055, %v3045
        %v3696 = vpack.c.b16 %v3056, %v3046
        %v3697 = vpack.c.b16 %v3057, %v3047
        %v3698 = vpack.c.b16 %v3058, %v3048
        %v3699 = vpack.c.b16 %v3059, %v3049
        %v3700 = vpack.c.b16 %v3060, %v3050
        %4341 = vmatprep.subr.bf16.mxu0 %v3062
        %4342 = vmatpush1.bf16.msra.mxu0 %v3061
        %4343 = vmatprep.subr.bf16.mxu0 %v3072
        %4344 = vmatpush1.bf16.msra.mxu0 %v3071
        %4345 = vmatprep.subr.bf16.mxu0 %v3082
        %4346 = vmatpush1.bf16.msra.mxu0 %v3081
        %4347 = vmatprep.subr.bf16.mxu0 %v3092
        %4348 = vmatpush1.bf16.msra.mxu0 %v3091
        %4349 = vmatprep.subr.bf16.mxu0 %v3102
        %4350 = vmatpush1.bf16.msra.mxu0 %v3101
        %4351 = vmatprep.subr.bf16.mxu0 %v3112
        %4352 = vmatpush1.bf16.msra.mxu0 %v3111
        %4353 = vmatprep.subr.bf16.mxu0 %v3122
        %4354 = vmatpush1.bf16.msra.mxu0 %v3121
        %4355 = vmatprep.subr.bf16.mxu0 %v3132
        %4356 = vmatpush1.bf16.msra.mxu0 %v3131
        %4357 = vmatprep.subr.bf16.mxu0 %v3142
        %4358 = vmatpush1.bf16.msra.mxu0 %v3141
        %4359 = vmatprep.subr.bf16.mxu0 %v3152
        %4360 = vmatpush1.bf16.msra.mxu0 %v3151
        %4361 = vmatprep.subr.bf16.mxu0 %v3162
        %4362 = vmatpush1.bf16.msra.mxu0 %v3161
        %4363 = vmatprep.subr.bf16.mxu0 %v3172
        %4364 = vmatpush1.bf16.msra.mxu0 %v3171
        %4365 = vmatprep.subr.bf16.mxu0 %v3182
        %4366 = vmatpush1.bf16.msra.mxu0 %v3181
        %4367 = vmatprep.subr.bf16.mxu0 %v3192
        %4368 = vmatpush1.bf16.msra.mxu0 %v3191
        %4369 = vmatprep.subr.bf16.mxu0 %v3202
        %4370 = vmatpush1.bf16.msra.mxu0 %v3201
        %4371 = vmatprep.subr.bf16.mxu0 %v3212
        %4372 = vmatpush1.bf16.msra.mxu0 %v3211
        %4373 = vmatprep.mubr.bf16.mxu0 %v1126
        %4374 = vmatmul.mubr.bf16.gmra.mrb[0].mxu0 %v1125
        %v4375 = vpop.f32.mrb[0].mxu0
        %v4376 = vadd.f32 0.0, %v4375
        %v4377 = vpop.f32.mrb[0].mxu0
        %v4378 = vadd.f32 0.0, %v4377
        %v4379 = vpop.f32.mrb[0].mxu0
        %v4380 = vadd.f32 0.0, %v4379
        %v4381 = vpop.f32.mrb[0].mxu0
        %v4382 = vadd.f32 0.0, %v4381
        %4383 = vdwg.mxu0
        %4384 = vmatprep.subr.bf16.mxu0 %v3222
        %4385 = vmatpush1.bf16.msra.mxu0 %v3221
        %4386 = vmatprep.subr.bf16.mxu0 %v3232
        %4387 = vmatpush1.bf16.msra.mxu0 %v3231
        %4388 = vmatprep.subr.bf16.mxu0 %v3242
        %4389 = vmatpush1.bf16.msra.mxu0 %v3241
        %4390 = vmatprep.subr.bf16.mxu0 %v3252
        %4391 = vmatpush1.bf16.msra.mxu0 %v3251
        %4392 = vmatprep.subr.bf16.mxu0 %v3262
        %4393 = vmatpush1.bf16.msra.mxu0 %v3261
        %4394 = vmatprep.subr.bf16.mxu0 %v3272
        %4395 = vmatpush1.bf16.msra.mxu0 %v3271
        %4396 = vmatprep.subr.bf16.mxu0 %v3282
        %4397 = vmatpush1.bf16.msra.mxu0 %v3281
        %4398 = vmatprep.subr.bf16.mxu0 %v3292
        %4399 = vmatpush1.bf16.msra.mxu0 %v3291
        %4400 = vmatprep.subr.bf16.mxu0 %v3302
        %4401 = vmatpush1.bf16.msra.mxu0 %v3301
        %4402 = vmatprep.subr.bf16.mxu0 %v3312
        %4403 = vmatpush1.bf16.msra.mxu0 %v3311
        %4404 = vmatprep.subr.bf16.mxu0 %v3322
        %4405 = vmatpush1.bf16.msra.mxu0 %v3321
        %4406 = vmatprep.subr.bf16.mxu0 %v3332
        %4407 = vmatpush1.bf16.msra.mxu0 %v3331
        %4408 = vmatprep.subr.bf16.mxu0 %v3342
        %4409 = vmatpush1.bf16.msra.mxu0 %v3341
        %4410 = vmatprep.subr.bf16.mxu0 %v3352
        %4411 = vmatpush1.bf16.msra.mxu0 %v3351
        %4412 = vmatprep.subr.bf16.mxu0 %v3362
        %4413 = vmatpush1.bf16.msra.mxu0 %v3361
        %4414 = vmatprep.subr.bf16.mxu0 %v3372
        %4415 = vmatpush1.bf16.msra.mxu0 %v3371
        %4416 = vmatprep.mubr.bf16.mxu0 %v1128
        %4417 = vmatmul.mubr.bf16.gmra.mrb[0].mxu0 %v1127
        %v4418 = vpop.f32.mrb[0].mxu0
        %v4419 = vadd.f32 %v4376, %v4418
        %v4420 = vpop.f32.mrb[0].mxu0
        %v4421 = vadd.f32 %v4378, %v4420
        %v4422 = vpop.f32.mrb[0].mxu0
        %v4423 = vadd.f32 %v4380, %v4422
        %v4424 = vpop.f32.mrb[0].mxu0
        %v4425 = vadd.f32 %v4382, %v4424
        %4426 = vdwg.mxu0
        %4427 = vmatprep.subr.bf16.mxu0 %v3382
        %4428 = vmatpush1.bf16.msra.mxu0 %v3381
        %4429 = vmatprep.subr.bf16.mxu0 %v3392
        %4430 = vmatpush1.bf16.msra.mxu0 %v3391
        %4431 = vmatprep.subr.bf16.mxu0 %v3402
        %4432 = vmatpush1.bf16.msra.mxu0 %v3401
        %4433 = vmatprep.subr.bf16.mxu0 %v3412
        %4434 = vmatpush1.bf16.msra.mxu0 %v3411
        %4435 = vmatprep.subr.bf16.mxu0 %v3422
        %4436 = vmatpush1.bf16.msra.mxu0 %v3421
        %4437 = vmatprep.subr.bf16.mxu0 %v3432
        %4438 = vmatpush1.bf16.msra.mxu0 %v3431
        %4439 = vmatprep.subr.bf16.mxu0 %v3442
        %4440 = vmatpush1.bf16.msra.mxu0 %v3441
        %4441 = vmatprep.subr.bf16.mxu0 %v3452
        %4442 = vmatpush1.bf16.msra.mxu0 %v3451
        %4443 = vmatprep.subr.bf16.mxu0 %v3462
        %4444 = vmatpush1.bf16.msra.mxu0 %v3461
        %4445 = vmatprep.subr.bf16.mxu0 %v3472
        %4446 = vmatpush1.bf16.msra.mxu0 %v3471
        %4447 = vmatprep.subr.bf16.mxu0 %v3482
        %4448 = vmatpush1.bf16.msra.mxu0 %v3481
        %4449 = vmatprep.subr.bf16.mxu0 %v3492
        %4450 = vmatpush1.bf16.msra.mxu0 %v3491
        %4451 = vmatprep.subr.bf16.mxu0 %v3502
        %4452 = vmatpush1.bf16.msra.mxu0 %v3501
        %4453 = vmatprep.subr.bf16.mxu0 %v3512
        %4454 = vmatpush1.bf16.msra.mxu0 %v3511
        %4455 = vmatprep.subr.bf16.mxu0 %v3522
        %4456 = vmatpush1.bf16.msra.mxu0 %v3521
        %4457 = vmatprep.subr.bf16.mxu0 %v3532
        %4458 = vmatpush1.bf16.msra.mxu0 %v3531
        %4459 = vmatprep.mubr.bf16.mxu0 %v1130
        %4460 = vmatmul.mubr.bf16.gmra.mrb[0].mxu0 %v1129
        %v4461 = vpop.f32.mrb[0].mxu0
        %v4462 = vadd.f32 %v4419, %v4461
        %v4463 = vpop.f32.mrb[0].mxu0
        %v4464 = vadd.f32 %v4421, %v4463
        %v4465 = vpop.f32.mrb[0].mxu0
        %v4466 = vadd.f32 %v4423, %v4465
        %v4467 = vpop.f32.mrb[0].mxu0
        %v4468 = vadd.f32 %v4425, %v4467
        %4469 = vdwg.mxu0
        %4470 = vmatprep.subr.bf16.mxu0 %v3542
        %4471 = vmatpush1.bf16.msra.mxu0 %v3541
        %4472 = vmatprep.subr.bf16.mxu0 %v3552
        %4473 = vmatpush1.bf16.msra.mxu0 %v3551
        %4474 = vmatprep.subr.bf16.mxu0 %v3562
        %4475 = vmatpush1.bf16.msra.mxu0 %v3561
        %4476 = vmatprep.subr.bf16.mxu0 %v3572
        %4477 = vmatpush1.bf16.msra.mxu0 %v3571
        %4478 = vmatprep.subr.bf16.mxu0 %v3582
        %4479 = vmatpush1.bf16.msra.mxu0 %v3581
        %4480 = vmatprep.subr.bf16.mxu0 %v3592
        %4481 = vmatpush1.bf16.msra.mxu0 %v3591
        %4482 = vmatprep.subr.bf16.mxu0 %v3602
        %4483 = vmatpush1.bf16.msra.mxu0 %v3601
        %4484 = vmatprep.subr.bf16.mxu0 %v3612
        %4485 = vmatpush1.bf16.msra.mxu0 %v3611
        %4486 = vmatprep.subr.bf16.mxu0 %v3622
        %4487 = vmatpush1.bf16.msra.mxu0 %v3621
        %4488 = vmatprep.subr.bf16.mxu0 %v3632
        %4489 = vmatpush1.bf16.msra.mxu0 %v3631
        %4490 = vmatprep.subr.bf16.mxu0 %v3642
        %4491 = vmatpush1.bf16.msra.mxu0 %v3641
        %4492 = vmatprep.subr.bf16.mxu0 %v3652
        %4493 = vmatpush1.bf16.msra.mxu0 %v3651
        %4494 = vmatprep.subr.bf16.mxu0 %v3662
        %4495 = vmatpush1.bf16.msra.mxu0 %v3661
        %4496 = vmatprep.subr.bf16.mxu0 %v3672
        %4497 = vmatpush1.bf16.msra.mxu0 %v3671
        %4498 = vmatprep.subr.bf16.mxu0 %v3682
        %4499 = vmatpush1.bf16.msra.mxu0 %v3681
        %4500 = vmatprep.subr.bf16.mxu0 %v3692
        %4501 = vmatpush1.bf16.msra.mxu0 %v3691
        %4502 = vmatprep.mubr.bf16.mxu0 %v1132
        %4503 = vmatmul.mubr.bf16.gmra.mrb[0].mxu0 %v1131
        %v4504 = vpop.f32.mrb[0].mxu0
        %v4505 = vadd.f32 %v4462, %v4504
        %v4506 = vpop.f32.mrb[0].mxu0
        %v4507 = vadd.f32 %v4464, %v4506
        %v4508 = vpop.f32.mrb[0].mxu0
        %v4509 = vadd.f32 %v4466, %v4508
        %v4510 = vpop.f32.mrb[0].mxu0
        %v4511 = vadd.f32 %v4468, %v4510
        %4512 = vdwg.mxu0
        %4513 = vmatprep.subr.bf16.mxu0 %v3064
        %4514 = vmatpush1.bf16.msra.mxu0 %v3063
        %4515 = vmatprep.subr.bf16.mxu0 %v3074
        %4516 = vmatpush1.bf16.msra.mxu0 %v3073
        %4517 = vmatprep.subr.bf16.mxu0 %v3084
        %4518 = vmatpush1.bf16.msra.mxu0 %v3083
        %4519 = vmatprep.subr.bf16.mxu0 %v3094
        %4520 = vmatpush1.bf16.msra.mxu0 %v3093
        %4521 = vmatprep.subr.bf16.mxu0 %v3104
        %4522 = vmatpush1.bf16.msra.mxu0 %v3103
        %4523 = vmatprep.subr.bf16.mxu0 %v3114
        %4524 = vmatpush1.bf16.msra.mxu0 %v3113
        %4525 = vmatprep.subr.bf16.mxu0 %v3124
        %4526 = vmatpush1.bf16.msra.mxu0 %v3123
        %4527 = vmatprep.subr.bf16.mxu0 %v3134
        %4528 = vmatpush1.bf16.msra.mxu0 %v3133
        %4529 = vmatprep.subr.bf16.mxu0 %v3144
        %4530 = vmatpush1.bf16.msra.mxu0 %v3143
        %4531 = vmatprep.subr.bf16.mxu0 %v3154
        %4532 = vmatpush1.bf16.msra.mxu0 %v3153
        %4533 = vmatprep.subr.bf16.mxu0 %v3164
        %4534 = vmatpush1.bf16.msra.mxu0 %v3163
        %4535 = vmatprep.subr.bf16.mxu0 %v3174
        %4536 = vmatpush1.bf16.msra.mxu0 %v3173
        %4537 = vmatprep.subr.bf16.mxu0 %v3184
        %4538 = vmatpush1.bf16.msra.mxu0 %v3183
        %4539 = vmatprep.subr.bf16.mxu0 %v3194
        %4540 = vmatpush1.bf16.msra.mxu0 %v3193
        %4541 = vmatprep.subr.bf16.mxu0 %v3204
        %4542 = vmatpush1.bf16.msra.mxu0 %v3203
        %4543 = vmatprep.subr.bf16.mxu0 %v3214
        %4544 = vmatpush1.bf16.msra.mxu0 %v3213
        %4545 = vmatprep.mubr.bf16.mxu0 %v1126
        %4546 = vmatmul.mubr.bf16.gmra.mrb[0].mxu0 %v1125
        %v4547 = vpop.f32.mrb[0].mxu0
        %v4548 = vadd.f32 0.0, %v4547
        %v4549 = vpop.f32.mrb[0].mxu0
        %v4550 = vadd.f32 0.0, %v4549
        %v4551 = vpop.f32.mrb[0].mxu0
        %v4552 = vadd.f32 0.0, %v4551
        %v4553 = vpop.f32.mrb[0].mxu0
        %v4554 = vadd.f32 0.0, %v4553
        %4555 = vdwg.mxu0
        %4556 = vmatprep.subr.bf16.mxu0 %v3224
        %4557 = vmatpush1.bf16.msra.mxu0 %v3223
        %4558 = vmatprep.subr.bf16.mxu0 %v3234
        %4559 = vmatpush1.bf16.msra.mxu0 %v3233
        %4560 = vmatprep.subr.bf16.mxu0 %v3244
        %4561 = vmatpush1.bf16.msra.mxu0 %v3243
        %4562 = vmatprep.subr.bf16.mxu0 %v3254
        %4563 = vmatpush1.bf16.msra.mxu0 %v3253
        %4564 = vmatprep.subr.bf16.mxu0 %v3264
        %4565 = vmatpush1.bf16.msra.mxu0 %v3263
        %4566 = vmatprep.subr.bf16.mxu0 %v3274
        %4567 = vmatpush1.bf16.msra.mxu0 %v3273
        %4568 = vmatprep.subr.bf16.mxu0 %v3284
        %4569 = vmatpush1.bf16.msra.mxu0 %v3283
        %4570 = vmatprep.subr.bf16.mxu0 %v3294
        %4571 = vmatpush1.bf16.msra.mxu0 %v3293
        %4572 = vmatprep.subr.bf16.mxu0 %v3304
        %4573 = vmatpush1.bf16.msra.mxu0 %v3303
        %4574 = vmatprep.subr.bf16.mxu0 %v3314
        %4575 = vmatpush1.bf16.msra.mxu0 %v3313
        %4576 = vmatprep.subr.bf16.mxu0 %v3324
        %4577 = vmatpush1.bf16.msra.mxu0 %v3323
        %4578 = vmatprep.subr.bf16.mxu0 %v3334
        %4579 = vmatpush1.bf16.msra.mxu0 %v3333
        %4580 = vmatprep.subr.bf16.mxu0 %v3344
        %4581 = vmatpush1.bf16.msra.mxu0 %v3343
        %4582 = vmatprep.subr.bf16.mxu0 %v3354
        %4583 = vmatpush1.bf16.msra.mxu0 %v3353
        %4584 = vmatprep.subr.bf16.mxu0 %v3364
        %4585 = vmatpush1.bf16.msra.mxu0 %v3363
        %4586 = vmatprep.subr.bf16.mxu0 %v3374
        %4587 = vmatpush1.bf16.msra.mxu0 %v3373
        %4588 = vmatprep.mubr.bf16.mxu0 %v1128
        %4589 = vmatmul.mubr.bf16.gmra.mrb[0].mxu0 %v1127
        %v4590 = vpop.f32.mrb[0].mxu0
        %v4591 = vadd.f32 %v4548, %v4590
        %v4592 = vpop.f32.mrb[0].mxu0
        %v4593 = vadd.f32 %v4550, %v4592
        %v4594 = vpop.f32.mrb[0].mxu0
        %v4595 = vadd.f32 %v4552, %v4594
        %v4596 = vpop.f32.mrb[0].mxu0
        %v4597 = vadd.f32 %v4554, %v4596
        %4598 = vdwg.mxu0
        %4599 = vmatprep.subr.bf16.mxu0 %v3384
        %4600 = vmatpush1.bf16.msra.mxu0 %v3383
        %4601 = vmatprep.subr.bf16.mxu0 %v3394
        %4602 = vmatpush1.bf16.msra.mxu0 %v3393
        %4603 = vmatprep.subr.bf16.mxu0 %v3404
        %4604 = vmatpush1.bf16.msra.mxu0 %v3403
        %4605 = vmatprep.subr.bf16.mxu0 %v3414
        %4606 = vmatpush1.bf16.msra.mxu0 %v3413
        %4607 = vmatprep.subr.bf16.mxu0 %v3424
        %4608 = vmatpush1.bf16.msra.mxu0 %v3423
        %4609 = vmatprep.subr.bf16.mxu0 %v3434
        %4610 = vmatpush1.bf16.msra.mxu0 %v3433
        %4611 = vmatprep.subr.bf16.mxu0 %v3444
        %4612 = vmatpush1.bf16.msra.mxu0 %v3443
        %4613 = vmatprep.subr.bf16.mxu0 %v3454
        %4614 = vmatpush1.bf16.msra.mxu0 %v3453
        %4615 = vmatprep.subr.bf16.mxu0 %v3464
        %4616 = vmatpush1.bf16.msra.mxu0 %v3463
        %4617 = vmatprep.subr.bf16.mxu0 %v3474
        %4618 = vmatpush1.bf16.msra.mxu0 %v3473
        %4619 = vmatprep.subr.bf16.mxu0 %v3484
        %4620 = vmatpush1.bf16.msra.mxu0 %v3483
        %4621 = vmatprep.subr.bf16.mxu0 %v3494
        %4622 = vmatpush1.bf16.msra.mxu0 %v3493
        %4623 = vmatprep.subr.bf16.mxu0 %v3504
        %4624 = vmatpush1.bf16.msra.mxu0 %v3503
        %4625 = vmatprep.subr.bf16.mxu0 %v3514
        %4626 = vmatpush1.bf16.msra.mxu0 %v3513
        %4627 = vmatprep.subr.bf16.mxu0 %v3524
        %4628 = vmatpush1.bf16.msra.mxu0 %v3523
        %4629 = vmatprep.subr.bf16.mxu0 %v3534
        %4630 = vmatpush1.bf16.msra.mxu0 %v3533
        %4631 = vmatprep.mubr.bf16.mxu0 %v1130
        %4632 = vmatmul.mubr.bf16.gmra.mrb[0].mxu0 %v1129
        %v4633 = vpop.f32.mrb[0].mxu0
        %v4634 = vadd.f32 %v4591, %v4633
        %v4635 = vpop.f32.mrb[0].mxu0
        %v4636 = vadd.f32 %v4593, %v4635
        %v4637 = vpop.f32.mrb[0].mxu0
        %v4638 = vadd.f32 %v4595, %v4637
        %v4639 = vpop.f32.mrb[0].mxu0
        %v4640 = vadd.f32 %v4597, %v4639
        %4641 = vdwg.mxu0
        %4642 = vmatprep.subr.bf16.mxu0 %v3544
        %4643 = vmatpush1.bf16.msra.mxu0 %v3543
        %4644 = vmatprep.subr.bf16.mxu0 %v3554
        %4645 = vmatpush1.bf16.msra.mxu0 %v3553
        %4646 = vmatprep.subr.bf16.mxu0 %v3564
        %4647 = vmatpush1.bf16.msra.mxu0 %v3563
        %4648 = vmatprep.subr.bf16.mxu0 %v3574
        %4649 = vmatpush1.bf16.msra.mxu0 %v3573
        %4650 = vmatprep.subr.bf16.mxu0 %v3584
        %4651 = vmatpush1.bf16.msra.mxu0 %v3583
        %4652 = vmatprep.subr.bf16.mxu0 %v3594
        %4653 = vmatpush1.bf16.msra.mxu0 %v3593
        %4654 = vmatprep.subr.bf16.mxu0 %v3604
        %4655 = vmatpush1.bf16.msra.mxu0 %v3603
        %4656 = vmatprep.subr.bf16.mxu0 %v3614
        %4657 = vmatpush1.bf16.msra.mxu0 %v3613
        %4658 = vmatprep.subr.bf16.mxu0 %v3624
        %4659 = vmatpush1.bf16.msra.mxu0 %v3623
        %4660 = vmatprep.subr.bf16.mxu0 %v3634
        %4661 = vmatpush1.bf16.msra.mxu0 %v3633
        %4662 = vmatprep.subr.bf16.mxu0 %v3644
        %4663 = vmatpush1.bf16.msra.mxu0 %v3643
        %4664 = vmatprep.subr.bf16.mxu0 %v3654
        %4665 = vmatpush1.bf16.msra.mxu0 %v3653
        %4666 = vmatprep.subr.bf16.mxu0 %v3664
        %4667 = vmatpush1.bf16.msra.mxu0 %v3663
        %4668 = vmatprep.subr.bf16.mxu0 %v3674
        %4669 = vmatpush1.bf16.msra.mxu0 %v3673
        %4670 = vmatprep.subr.bf16.mxu0 %v3684
        %4671 = vmatpush1.bf16.msra.mxu0 %v3683
        %4672 = vmatprep.subr.bf16.mxu0 %v3694
        %4673 = vmatpush1.bf16.msra.mxu0 %v3693
        %4674 = vmatprep.mubr.bf16.mxu0 %v1132
        %4675 = vmatmul.mubr.bf16.gmra.mrb[0].mxu0 %v1131
        %v4676 = vpop.f32.mrb[0].mxu0
        %v4677 = vadd.f32 %v4634, %v4676
        %v4678 = vpop.f32.mrb[0].mxu0
        %v4679 = vadd.f32 %v4636, %v4678
        %v4680 = vpop.f32.mrb[0].mxu0
        %v4681 = vadd.f32 %v4638, %v4680
        %v4682 = vpop.f32.mrb[0].mxu0
        %v4683 = vadd.f32 %v4640, %v4682
        %4684 = vdwg.mxu0
        %4685 = vmatprep.subr.bf16.mxu0 %v3066
        %4686 = vmatpush1.bf16.msra.mxu0 %v3065
        %4687 = vmatprep.subr.bf16.mxu0 %v3076
        %4688 = vmatpush1.bf16.msra.mxu0 %v3075
        %4689 = vmatprep.subr.bf16.mxu0 %v3086
        %4690 = vmatpush1.bf16.msra.mxu0 %v3085
        %4691 = vmatprep.subr.bf16.mxu0 %v3096
        %4692 = vmatpush1.bf16.msra.mxu0 %v3095
        %4693 = vmatprep.subr.bf16.mxu0 %v3106
        %4694 = vmatpush1.bf16.msra.mxu0 %v3105
        %4695 = vmatprep.subr.bf16.mxu0 %v3116
        %4696 = vmatpush1.bf16.msra.mxu0 %v3115
        %4697 = vmatprep.subr.bf16.mxu0 %v3126
        %4698 = vmatpush1.bf16.msra.mxu0 %v3125
        %4699 = vmatprep.subr.bf16.mxu0 %v3136
        %4700 = vmatpush1.bf16.msra.mxu0 %v3135
        %4701 = vmatprep.subr.bf16.mxu0 %v3146
        %4702 = vmatpush1.bf16.msra.mxu0 %v3145
        %4703 = vmatprep.subr.bf16.mxu0 %v3156
        %4704 = vmatpush1.bf16.msra.mxu0 %v3155
        %4705 = vmatprep.subr.bf16.mxu0 %v3166
        %4706 = vmatpush1.bf16.msra.mxu0 %v3165
        %4707 = vmatprep.subr.bf16.mxu0 %v3176
        %4708 = vmatpush1.bf16.msra.mxu0 %v3175
        %4709 = vmatprep.subr.bf16.mxu0 %v3186
        %4710 = vmatpush1.bf16.msra.mxu0 %v3185
        %4711 = vmatprep.subr.bf16.mxu0 %v3196
        %4712 = vmatpush1.bf16.msra.mxu0 %v3195
        %4713 = vmatprep.subr.bf16.mxu0 %v3206
        %4714 = vmatpush1.bf16.msra.mxu0 %v3205
        %4715 = vmatprep.subr.bf16.mxu0 %v3216
        %4716 = vmatpush1.bf16.msra.mxu0 %v3215
        %4717 = vmatprep.mubr.bf16.mxu0 %v1126
        %4718 = vmatmul.mubr.bf16.gmra.mrb[0].mxu0 %v1125
        %v4719 = vpop.f32.mrb[0].mxu0
        %v4720 = vadd.f32 0.0, %v4719
        %v4721 = vpop.f32.mrb[0].mxu0
        %v4722 = vadd.f32 0.0, %v4721
        %v4723 = vpop.f32.mrb[0].mxu0
        %v4724 = vadd.f32 0.0, %v4723
        %v4725 = vpop.f32.mrb[0].mxu0
        %v4726 = vadd.f32 0.0, %v4725
        %4727 = vdwg.mxu0
        %4728 = vmatprep.subr.bf16.mxu0 %v3226
        %4729 = vmatpush1.bf16.msra.mxu0 %v3225
        %4730 = vmatprep.subr.bf16.mxu0 %v3236
        %4731 = vmatpush1.bf16.msra.mxu0 %v3235
        %4732 = vmatprep.subr.bf16.mxu0 %v3246
        %4733 = vmatpush1.bf16.msra.mxu0 %v3245
        %4734 = vmatprep.subr.bf16.mxu0 %v3256
        %4735 = vmatpush1.bf16.msra.mxu0 %v3255
        %4736 = vmatprep.subr.bf16.mxu0 %v3266
        %4737 = vmatpush1.bf16.msra.mxu0 %v3265
        %4738 = vmatprep.subr.bf16.mxu0 %v3276
        %4739 = vmatpush1.bf16.msra.mxu0 %v3275
        %4740 = vmatprep.subr.bf16.mxu0 %v3286
        %4741 = vmatpush1.bf16.msra.mxu0 %v3285
        %4742 = vmatprep.subr.bf16.mxu0 %v3296
        %4743 = vmatpush1.bf16.msra.mxu0 %v3295
        %4744 = vmatprep.subr.bf16.mxu0 %v3306
        %4745 = vmatpush1.bf16.msra.mxu0 %v3305
        %4746 = vmatprep.subr.bf16.mxu0 %v3316
        %4747 = vmatpush1.bf16.msra.mxu0 %v3315
        %4748 = vmatprep.subr.bf16.mxu0 %v3326
        %4749 = vmatpush1.bf16.msra.mxu0 %v3325
        %4750 = vmatprep.subr.bf16.mxu0 %v3336
        %4751 = vmatpush1.bf16.msra.mxu0 %v3335
        %4752 = vmatprep.subr.bf16.mxu0 %v3346
        %4753 = vmatpush1.bf16.msra.mxu0 %v3345
        %4754 = vmatprep.subr.bf16.mxu0 %v3356
        %4755 = vmatpush1.bf16.msra.mxu0 %v3355
        %4756 = vmatprep.subr.bf16.mxu0 %v3366
        %4757 = vmatpush1.bf16.msra.mxu0 %v3365
        %4758 = vmatprep.subr.bf16.mxu0 %v3376
        %4759 = vmatpush1.bf16.msra.mxu0 %v3375
        %4760 = vmatprep.mubr.bf16.mxu0 %v1128
        %4761 = vmatmul.mubr.bf16.gmra.mrb[0].mxu0 %v1127
        %v4762 = vpop.f32.mrb[0].mxu0
        %v4763 = vadd.f32 %v4720, %v4762
        %v4764 = vpop.f32.mrb[0].mxu0
        %v4765 = vadd.f32 %v4722, %v4764
        %v4766 = vpop.f32.mrb[0].mxu0
        %v4767 = vadd.f32 %v4724, %v4766
        %v4768 = vpop.f32.mrb[0].mxu0
        %v4769 = vadd.f32 %v4726, %v4768
        %4770 = vdwg.mxu0
        %4771 = vmatprep.subr.bf16.mxu0 %v3386
        %4772 = vmatpush1.bf16.msra.mxu0 %v3385
        %4773 = vmatprep.subr.bf16.mxu0 %v3396
        %4774 = vmatpush1.bf16.msra.mxu0 %v3395
        %4775 = vmatprep.subr.bf16.mxu0 %v3406
        %4776 = vmatpush1.bf16.msra.mxu0 %v3405
        %4777 = vmatprep.subr.bf16.mxu0 %v3416
        %4778 = vmatpush1.bf16.msra.mxu0 %v3415
        %4779 = vmatprep.subr.bf16.mxu0 %v3426
        %4780 = vmatpush1.bf16.msra.mxu0 %v3425
        %4781 = vmatprep.subr.bf16.mxu0 %v3436
        %4782 = vmatpush1.bf16.msra.mxu0 %v3435
        %4783 = vmatprep.subr.bf16.mxu0 %v3446
        %4784 = vmatpush1.bf16.msra.mxu0 %v3445
        %4785 = vmatprep.subr.bf16.mxu0 %v3456
        %4786 = vmatpush1.bf16.msra.mxu0 %v3455
        %4787 = vmatprep.subr.bf16.mxu0 %v3466
        %4788 = vmatpush1.bf16.msra.mxu0 %v3465
        %4789 = vmatprep.subr.bf16.mxu0 %v3476
        %4790 = vmatpush1.bf16.msra.mxu0 %v3475
        %4791 = vmatprep.subr.bf16.mxu0 %v3486
        %4792 = vmatpush1.bf16.msra.mxu0 %v3485
        %4793 = vmatprep.subr.bf16.mxu0 %v3496
        %4794 = vmatpush1.bf16.msra.mxu0 %v3495
        %4795 = vmatprep.subr.bf16.mxu0 %v3506
        %4796 = vmatpush1.bf16.msra.mxu0 %v3505
        %4797 = vmatprep.subr.bf16.mxu0 %v3516
        %4798 = vmatpush1.bf16.msra.mxu0 %v3515
        %4799 = vmatprep.subr.bf16.mxu0 %v3526
        %4800 = vmatpush1.bf16.msra.mxu0 %v3525
        %4801 = vmatprep.subr.bf16.mxu0 %v3536
        %4802 = vmatpush1.bf16.msra.mxu0 %v3535
        %4803 = vmatprep.mubr.bf16.mxu0 %v1130
        %4804 = vmatmul.mubr.bf16.gmra.mrb[0].mxu0 %v1129
        %v4805 = vpop.f32.mrb[0].mxu0
        %v4806 = vadd.f32 %v4763, %v4805
        %v4807 = vpop.f32.mrb[0].mxu0
        %v4808 = vadd.f32 %v4765, %v4807
        %v4809 = vpop.f32.mrb[0].mxu0
        %v4810 = vadd.f32 %v4767, %v4809
        %v4811 = vpop.f32.mrb[0].mxu0
        %v4812 = vadd.f32 %v4769, %v4811
        %4813 = vdwg.mxu0
        %4814 = vmatprep.subr.bf16.mxu0 %v3546
        %4815 = vmatpush1.bf16.msra.mxu0 %v3545
        %4816 = vmatprep.subr.bf16.mxu0 %v3556
        %4817 = vmatpush1.bf16.msra.mxu0 %v3555
        %4818 = vmatprep.subr.bf16.mxu0 %v3566
        %4819 = vmatpush1.bf16.msra.mxu0 %v3565
        %4820 = vmatprep.subr.bf16.mxu0 %v3576
        %4821 = vmatpush1.bf16.msra.mxu0 %v3575
        %4822 = vmatprep.subr.bf16.mxu0 %v3586
        %4823 = vmatpush1.bf16.msra.mxu0 %v3585
        %4824 = vmatprep.subr.bf16.mxu0 %v3596
        %4825 = vmatpush1.bf16.msra.mxu0 %v3595
        %4826 = vmatprep.subr.bf16.mxu0 %v3606
        %4827 = vmatpush1.bf16.msra.mxu0 %v3605
        %4828 = vmatprep.subr.bf16.mxu0 %v3616
        %4829 = vmatpush1.bf16.msra.mxu0 %v3615
        %4830 = vmatprep.subr.bf16.mxu0 %v3626
        %4831 = vmatpush1.bf16.msra.mxu0 %v3625
        %4832 = vmatprep.subr.bf16.mxu0 %v3636
        %4833 = vmatpush1.bf16.msra.mxu0 %v3635
        %4834 = vmatprep.subr.bf16.mxu0 %v3646
        %4835 = vmatpush1.bf16.msra.mxu0 %v3645
        %4836 = vmatprep.subr.bf16.mxu0 %v3656
        %4837 = vmatpush1.bf16.msra.mxu0 %v3655
        %4838 = vmatprep.subr.bf16.mxu0 %v3666
        %4839 = vmatpush1.bf16.msra.mxu0 %v3665
        %4840 = vmatprep.subr.bf16.mxu0 %v3676
        %4841 = vmatpush1.bf16.msra.mxu0 %v3675
        %4842 = vmatprep.subr.bf16.mxu0 %v3686
        %4843 = vmatpush1.bf16.msra.mxu0 %v3685
        %4844 = vmatprep.subr.bf16.mxu0 %v3696
        %4845 = vmatpush1.bf16.msra.mxu0 %v3695
        %4846 = vmatprep.mubr.bf16.mxu0 %v1132
        %4847 = vmatmul.mubr.bf16.gmra.mrb[0].mxu0 %v1131
        %v4848 = vpop.f32.mrb[0].mxu0
        %v4849 = vadd.f32 %v4806, %v4848
        %v4850 = vpop.f32.mrb[0].mxu0
        %v4851 = vadd.f32 %v4808, %v4850
        %v4852 = vpop.f32.mrb[0].mxu0
        %v4853 = vadd.f32 %v4810, %v4852
        %v4854 = vpop.f32.mrb[0].mxu0
        %v4855 = vadd.f32 %v4812, %v4854
        %4856 = vdwg.mxu0
        %4857 = vmatprep.subr.bf16.mxu0 %v3068
        %4858 = vmatpush1.bf16.msra.mxu0 %v3067
        %4859 = vmatprep.subr.bf16.mxu0 %v3078
        %4860 = vmatpush1.bf16.msra.mxu0 %v3077
        %4861 = vmatprep.subr.bf16.mxu0 %v3088
        %4862 = vmatpush1.bf16.msra.mxu0 %v3087
        %4863 = vmatprep.subr.bf16.mxu0 %v3098
        %4864 = vmatpush1.bf16.msra.mxu0 %v3097
        %4865 = vmatprep.subr.bf16.mxu0 %v3108
        %4866 = vmatpush1.bf16.msra.mxu0 %v3107
        %4867 = vmatprep.subr.bf16.mxu0 %v3118
        %4868 = vmatpush1.bf16.msra.mxu0 %v3117
        %4869 = vmatprep.subr.bf16.mxu0 %v3128
        %4870 = vmatpush1.bf16.msra.mxu0 %v3127
        %4871 = vmatprep.subr.bf16.mxu0 %v3138
        %4872 = vmatpush1.bf16.msra.mxu0 %v3137
        %4873 = vmatprep.subr.bf16.mxu0 %v3148
        %4874 = vmatpush1.bf16.msra.mxu0 %v3147
        %4875 = vmatprep.subr.bf16.mxu0 %v3158
        %4876 = vmatpush1.bf16.msra.mxu0 %v3157
        %4877 = vmatprep.subr.bf16.mxu0 %v3168
        %4878 = vmatpush1.bf16.msra.mxu0 %v3167
        %4879 = vmatprep.subr.bf16.mxu0 %v3178
        %4880 = vmatpush1.bf16.msra.mxu0 %v3177
        %4881 = vmatprep.subr.bf16.mxu0 %v3188
        %4882 = vmatpush1.bf16.msra.mxu0 %v3187
        %4883 = vmatprep.subr.bf16.mxu0 %v3198
        %4884 = vmatpush1.bf16.msra.mxu0 %v3197
        %4885 = vmatprep.subr.bf16.mxu0 %v3208
        %4886 = vmatpush1.bf16.msra.mxu0 %v3207
        %4887 = vmatprep.subr.bf16.mxu0 %v3218
        %4888 = vmatpush1.bf16.msra.mxu0 %v3217
        %4889 = vmatprep.mubr.bf16.mxu0 %v1126
        %4890 = vmatmul.mubr.bf16.gmra.mrb[0].mxu0 %v1125
        %v4891 = vpop.f32.mrb[0].mxu0
        %v4892 = vadd.f32 0.0, %v4891
        %v4893 = vpop.f32.mrb[0].mxu0
        %v4894 = vadd.f32 0.0, %v4893
        %v4895 = vpop.f32.mrb[0].mxu0
        %v4896 = vadd.f32 0.0, %v4895
        %v4897 = vpop.f32.mrb[0].mxu0
        %v4898 = vadd.f32 0.0, %v4897
        %4899 = vdwg.mxu0
        %4900 = vmatprep.subr.bf16.mxu0 %v3228
        %4901 = vmatpush1.bf16.msra.mxu0 %v3227
        %4902 = vmatprep.subr.bf16.mxu0 %v3238
        %4903 = vmatpush1.bf16.msra.mxu0 %v3237
        %4904 = vmatprep.subr.bf16.mxu0 %v3248
        %4905 = vmatpush1.bf16.msra.mxu0 %v3247
        %4906 = vmatprep.subr.bf16.mxu0 %v3258
        %4907 = vmatpush1.bf16.msra.mxu0 %v3257
        %4908 = vmatprep.subr.bf16.mxu0 %v3268
        %4909 = vmatpush1.bf16.msra.mxu0 %v3267
        %4910 = vmatprep.subr.bf16.mxu0 %v3278
        %4911 = vmatpush1.bf16.msra.mxu0 %v3277
        %4912 = vmatprep.subr.bf16.mxu0 %v3288
        %4913 = vmatpush1.bf16.msra.mxu0 %v3287
        %4914 = vmatprep.subr.bf16.mxu0 %v3298
        %4915 = vmatpush1.bf16.msra.mxu0 %v3297
        %4916 = vmatprep.subr.bf16.mxu0 %v3308
        %4917 = vmatpush1.bf16.msra.mxu0 %v3307
        %4918 = vmatprep.subr.bf16.mxu0 %v3318
        %4919 = vmatpush1.bf16.msra.mxu0 %v3317
        %4920 = vmatprep.subr.bf16.mxu0 %v3328
        %4921 = vmatpush1.bf16.msra.mxu0 %v3327
        %4922 = vmatprep.subr.bf16.mxu0 %v3338
        %4923 = vmatpush1.bf16.msra.mxu0 %v3337
        %4924 = vmatprep.subr.bf16.mxu0 %v3348
        %4925 = vmatpush1.bf16.msra.mxu0 %v3347
        %4926 = vmatprep.subr.bf16.mxu0 %v3358
        %4927 = vmatpush1.bf16.msra.mxu0 %v3357
        %4928 = vmatprep.subr.bf16.mxu0 %v3368
        %4929 = vmatpush1.bf16.msra.mxu0 %v3367
        %4930 = vmatprep.subr.bf16.mxu0 %v3378
        %4931 = vmatpush1.bf16.msra.mxu0 %v3377
        %4932 = vmatprep.mubr.bf16.mxu0 %v1128
        %4933 = vmatmul.mubr.bf16.gmra.mrb[0].mxu0 %v1127
        %v4934 = vpop.f32.mrb[0].mxu0
        %v4935 = vadd.f32 %v4892, %v4934
        %v4936 = vpop.f32.mrb[0].mxu0
        %v4937 = vadd.f32 %v4894, %v4936
        %v4938 = vpop.f32.mrb[0].mxu0
        %v4939 = vadd.f32 %v4896, %v4938
        %v4940 = vpop.f32.mrb[0].mxu0
        %v4941 = vadd.f32 %v4898, %v4940
        %4942 = vdwg.mxu0
        %4943 = vmatprep.subr.bf16.mxu0 %v3388
        %4944 = vmatpush1.bf16.msra.mxu0 %v3387
        %4945 = vmatprep.subr.bf16.mxu0 %v3398
        %4946 = vmatpush1.bf16.msra.mxu0 %v3397
        %4947 = vmatprep.subr.bf16.mxu0 %v3408
        %4948 = vmatpush1.bf16.msra.mxu0 %v3407
        %4949 = vmatprep.subr.bf16.mxu0 %v3418
        %4950 = vmatpush1.bf16.msra.mxu0 %v3417
        %4951 = vmatprep.subr.bf16.mxu0 %v3428
        %4952 = vmatpush1.bf16.msra.mxu0 %v3427
        %4953 = vmatprep.subr.bf16.mxu0 %v3438
        %4954 = vmatpush1.bf16.msra.mxu0 %v3437
        %4955 = vmatprep.subr.bf16.mxu0 %v3448
        %4956 = vmatpush1.bf16.msra.mxu0 %v3447
        %4957 = vmatprep.subr.bf16.mxu0 %v3458
        %4958 = vmatpush1.bf16.msra.mxu0 %v3457
        %4959 = vmatprep.subr.bf16.mxu0 %v3468
        %4960 = vmatpush1.bf16.msra.mxu0 %v3467
        %4961 = vmatprep.subr.bf16.mxu0 %v3478
        %4962 = vmatpush1.bf16.msra.mxu0 %v3477
        %4963 = vmatprep.subr.bf16.mxu0 %v3488
        %4964 = vmatpush1.bf16.msra.mxu0 %v3487
        %4965 = vmatprep.subr.bf16.mxu0 %v3498
        %4966 = vmatpush1.bf16.msra.mxu0 %v3497
        %4967 = vmatprep.subr.bf16.mxu0 %v3508
        %4968 = vmatpush1.bf16.msra.mxu0 %v3507
        %4969 = vmatprep.subr.bf16.mxu0 %v3518
        %4970 = vmatpush1.bf16.msra.mxu0 %v3517
        %4971 = vmatprep.subr.bf16.mxu0 %v3528
        %4972 = vmatpush1.bf16.msra.mxu0 %v3527
        %4973 = vmatprep.subr.bf16.mxu0 %v3538
        %4974 = vmatpush1.bf16.msra.mxu0 %v3537
        %4975 = vmatprep.mubr.bf16.mxu0 %v1130
        %4976 = vmatmul.mubr.bf16.gmra.mrb[0].mxu0 %v1129
        %v4977 = vpop.f32.mrb[0].mxu0
        %v4978 = vadd.f32 %v4935, %v4977
        %v4979 = vpop.f32.mrb[0].mxu0
        %v4980 = vadd.f32 %v4937, %v4979
        %v4981 = vpop.f32.mrb[0].mxu0
        %v4982 = vadd.f32 %v4939, %v4981
        %v4983 = vpop.f32.mrb[0].mxu0
        %v4984 = vadd.f32 %v4941, %v4983
        %4985 = vdwg.mxu0
        %4986 = vmatprep.subr.bf16.mxu0 %v3548
        %4987 = vmatpush1.bf16.msra.mxu0 %v3547
        %4988 = vmatprep.subr.bf16.mxu0 %v3558
        %4989 = vmatpush1.bf16.msra.mxu0 %v3557
        %4990 = vmatprep.subr.bf16.mxu0 %v3568
        %4991 = vmatpush1.bf16.msra.mxu0 %v3567
        %4992 = vmatprep.subr.bf16.mxu0 %v3578
        %4993 = vmatpush1.bf16.msra.mxu0 %v3577
        %4994 = vmatprep.subr.bf16.mxu0 %v3588
        %4995 = vmatpush1.bf16.msra.mxu0 %v3587
        %4996 = vmatprep.subr.bf16.mxu0 %v3598
        %4997 = vmatpush1.bf16.msra.mxu0 %v3597
        %4998 = vmatprep.subr.bf16.mxu0 %v3608
        %4999 = vmatpush1.bf16.msra.mxu0 %v3607
        %5000 = vmatprep.subr.bf16.mxu0 %v3618
        %5001 = vmatpush1.bf16.msra.mxu0 %v3617
        %5002 = vmatprep.subr.bf16.mxu0 %v3628
        %5003 = vmatpush1.bf16.msra.mxu0 %v3627
        %5004 = vmatprep.subr.bf16.mxu0 %v3638
        %5005 = vmatpush1.bf16.msra.mxu0 %v3637
        %5006 = vmatprep.subr.bf16.mxu0 %v3648
        %5007 = vmatpush1.bf16.msra.mxu0 %v3647
        %5008 = vmatprep.subr.bf16.mxu0 %v3658
        %5009 = vmatpush1.bf16.msra.mxu0 %v3657
        %5010 = vmatprep.subr.bf16.mxu0 %v3668
        %5011 = vmatpush1.bf16.msra.mxu0 %v3667
        %5012 = vmatprep.subr.bf16.mxu0 %v3678
        %5013 = vmatpush1.bf16.msra.mxu0 %v3677
        %5014 = vmatprep.subr.bf16.mxu0 %v3688
        %5015 = vmatpush1.bf16.msra.mxu0 %v3687
        %5016 = vmatprep.subr.bf16.mxu0 %v3698
        %5017 = vmatpush1.bf16.msra.mxu0 %v3697
        %5018 = vmatprep.mubr.bf16.mxu0 %v1132
        %5019 = vmatmul.mubr.bf16.gmra.mrb[0].mxu0 %v1131
        %v5020 = vpop.f32.mrb[0].mxu0
        %v5021 = vadd.f32 %v4978, %v5020
        %v5022 = vpop.f32.mrb[0].mxu0
        %v5023 = vadd.f32 %v4980, %v5022
        %v5024 = vpop.f32.mrb[0].mxu0
        %v5025 = vadd.f32 %v4982, %v5024
        %v5026 = vpop.f32.mrb[0].mxu0
        %v5027 = vadd.f32 %v4984, %v5026
        %5028 = vdwg.mxu0
        %5029 = vmatprep.subr.bf16.mxu0 %v3070
        %5030 = vmatpush1.bf16.msra.mxu0 %v3069
        %5031 = vmatprep.subr.bf16.mxu0 %v3080
        %5032 = vmatpush1.bf16.msra.mxu0 %v3079
        %5033 = vmatprep.subr.bf16.mxu0 %v3090
        %5034 = vmatpush1.bf16.msra.mxu0 %v3089
        %5035 = vmatprep.subr.bf16.mxu0 %v3100
        %5036 = vmatpush1.bf16.msra.mxu0 %v3099
        %5037 = vmatprep.subr.bf16.mxu0 %v3110
        %5038 = vmatpush1.bf16.msra.mxu0 %v3109
        %5039 = vmatprep.subr.bf16.mxu0 %v3120
        %5040 = vmatpush1.bf16.msra.mxu0 %v3119
        %5041 = vmatprep.subr.bf16.mxu0 %v3130
        %5042 = vmatpush1.bf16.msra.mxu0 %v3129
        %5043 = vmatprep.subr.bf16.mxu0 %v3140
        %5044 = vmatpush1.bf16.msra.mxu0 %v3139
        %5045 = vmatprep.subr.bf16.mxu0 %v3150
        %5046 = vmatpush1.bf16.msra.mxu0 %v3149
        %5047 = vmatprep.subr.bf16.mxu0 %v3160
        %5048 = vmatpush1.bf16.msra.mxu0 %v3159
        %5049 = vmatprep.subr.bf16.mxu0 %v3170
        %5050 = vmatpush1.bf16.msra.mxu0 %v3169
        %5051 = vmatprep.subr.bf16.mxu0 %v3180
        %5052 = vmatpush1.bf16.msra.mxu0 %v3179
        %5053 = vmatprep.subr.bf16.mxu0 %v3190
        %5054 = vmatpush1.bf16.msra.mxu0 %v3189
        %5055 = vmatprep.subr.bf16.mxu0 %v3200
        %5056 = vmatpush1.bf16.msra.mxu0 %v3199
        %5057 = vmatprep.subr.bf16.mxu0 %v3210
        %5058 = vmatpush1.bf16.msra.mxu0 %v3209
        %5059 = vmatprep.subr.bf16.mxu0 %v3220
        %5060 = vmatpush1.bf16.msra.mxu0 %v3219
        %5061 = vmatprep.mubr.bf16.mxu0 %v1126
        %5062 = vmatmul.mubr.bf16.gmra.mrb[0].mxu0 %v1125
        %v5063 = vpop.f32.mrb[0].mxu0
        %v5064 = vadd.f32 0.0, %v5063
        %v5065 = vpop.f32.mrb[0].mxu0
        %v5066 = vadd.f32 0.0, %v5065
        %v5067 = vpop.f32.mrb[0].mxu0
        %v5068 = vadd.f32 0.0, %v5067
        %v5069 = vpop.f32.mrb[0].mxu0
        %v5070 = vadd.f32 0.0, %v5069
        %5071 = vdwg.mxu0
        %5072 = vmatprep.subr.bf16.mxu0 %v3230
        %5073 = vmatpush1.bf16.msra.mxu0 %v3229
        %5074 = vmatprep.subr.bf16.mxu0 %v3240
        %5075 = vmatpush1.bf16.msra.mxu0 %v3239
        %5076 = vmatprep.subr.bf16.mxu0 %v3250
        %5077 = vmatpush1.bf16.msra.mxu0 %v3249
        %5078 = vmatprep.subr.bf16.mxu0 %v3260
        %5079 = vmatpush1.bf16.msra.mxu0 %v3259
        %5080 = vmatprep.subr.bf16.mxu0 %v3270
        %5081 = vmatpush1.bf16.msra.mxu0 %v3269
        %5082 = vmatprep.subr.bf16.mxu0 %v3280
        %5083 = vmatpush1.bf16.msra.mxu0 %v3279
        %5084 = vmatprep.subr.bf16.mxu0 %v3290
        %5085 = vmatpush1.bf16.msra.mxu0 %v3289
        %5086 = vmatprep.subr.bf16.mxu0 %v3300
        %5087 = vmatpush1.bf16.msra.mxu0 %v3299
        %5088 = vmatprep.subr.bf16.mxu0 %v3310
        %5089 = vmatpush1.bf16.msra.mxu0 %v3309
        %5090 = vmatprep.subr.bf16.mxu0 %v3320
        %5091 = vmatpush1.bf16.msra.mxu0 %v3319
        %5092 = vmatprep.subr.bf16.mxu0 %v3330
        %5093 = vmatpush1.bf16.msra.mxu0 %v3329
        %5094 = vmatprep.subr.bf16.mxu0 %v3340
        %5095 = vmatpush1.bf16.msra.mxu0 %v3339
        %5096 = vmatprep.subr.bf16.mxu0 %v3350
        %5097 = vmatpush1.bf16.msra.mxu0 %v3349
        %5098 = vmatprep.subr.bf16.mxu0 %v3360
        %5099 = vmatpush1.bf16.msra.mxu0 %v3359
        %5100 = vmatprep.subr.bf16.mxu0 %v3370
        %5101 = vmatpush1.bf16.msra.mxu0 %v3369
        %5102 = vmatprep.subr.bf16.mxu0 %v3380
        %5103 = vmatpush1.bf16.msra.mxu0 %v3379
        %5104 = vmatprep.mubr.bf16.mxu0 %v1128
        %5105 = vmatmul.mubr.bf16.gmra.mrb[0].mxu0 %v1127
        %v5106 = vpop.f32.mrb[0].mxu0
        %v5107 = vadd.f32 %v5064, %v5106
        %v5108 = vpop.f32.mrb[0].mxu0
        %v5109 = vadd.f32 %v5066, %v5108
        %v5110 = vpop.f32.mrb[0].mxu0
        %v5111 = vadd.f32 %v5068, %v5110
        %v5112 = vpop.f32.mrb[0].mxu0
        %v5113 = vadd.f32 %v5070, %v5112
        %5114 = vdwg.mxu0
        %5115 = vmatprep.subr.bf16.mxu0 %v3390
        %5116 = vmatpush1.bf16.msra.mxu0 %v3389
        %5117 = vmatprep.subr.bf16.mxu0 %v3400
        %5118 = vmatpush1.bf16.msra.mxu0 %v3399
        %5119 = vmatprep.subr.bf16.mxu0 %v3410
        %5120 = vmatpush1.bf16.msra.mxu0 %v3409
        %5121 = vmatprep.subr.bf16.mxu0 %v3420
        %5122 = vmatpush1.bf16.msra.mxu0 %v3419
        %5123 = vmatprep.subr.bf16.mxu0 %v3430
        %5124 = vmatpush1.bf16.msra.mxu0 %v3429
        %5125 = vmatprep.subr.bf16.mxu0 %v3440
        %5126 = vmatpush1.bf16.msra.mxu0 %v3439
        %5127 = vmatprep.subr.bf16.mxu0 %v3450
        %5128 = vmatpush1.bf16.msra.mxu0 %v3449
        %5129 = vmatprep.subr.bf16.mxu0 %v3460
        %5130 = vmatpush1.bf16.msra.mxu0 %v3459
        %5131 = vmatprep.subr.bf16.mxu0 %v3470
        %5132 = vmatpush1.bf16.msra.mxu0 %v3469
        %5133 = vmatprep.subr.bf16.mxu0 %v3480
        %5134 = vmatpush1.bf16.msra.mxu0 %v3479
        %5135 = vmatprep.subr.bf16.mxu0 %v3490
        %5136 = vmatpush1.bf16.msra.mxu0 %v3489
        %5137 = vmatprep.subr.bf16.mxu0 %v3500
        %5138 = vmatpush1.bf16.msra.mxu0 %v3499
        %5139 = vmatprep.subr.bf16.mxu0 %v3510
        %5140 = vmatpush1.bf16.msra.mxu0 %v3509
        %5141 = vmatprep.subr.bf16.mxu0 %v3520
        %5142 = vmatpush1.bf16.msra.mxu0 %v3519
        %5143 = vmatprep.subr.bf16.mxu0 %v3530
        %5144 = vmatpush1.bf16.msra.mxu0 %v3529
        %5145 = vmatprep.subr.bf16.mxu0 %v3540
        %5146 = vmatpush1.bf16.msra.mxu0 %v3539
        %5147 = vmatprep.mubr.bf16.mxu0 %v1130
        %5148 = vmatmul.mubr.bf16.gmra.mrb[0].mxu0 %v1129
        %v5149 = vpop.f32.mrb[0].mxu0
        %v5150 = vadd.f32 %v5107, %v5149
        %v5151 = vpop.f32.mrb[0].mxu0
        %v5152 = vadd.f32 %v5109, %v5151
        %v5153 = vpop.f32.mrb[0].mxu0
        %v5154 = vadd.f32 %v5111, %v5153
        %v5155 = vpop.f32.mrb[0].mxu0
        %v5156 = vadd.f32 %v5113, %v5155
        %5157 = vdwg.mxu0
        %5158 = vmatprep.subr.bf16.mxu0 %v3550
        %5159 = vmatpush1.bf16.msra.mxu0 %v3549
        %5160 = vmatprep.subr.bf16.mxu0 %v3560
        %5161 = vmatpush1.bf16.msra.mxu0 %v3559
        %5162 = vmatprep.subr.bf16.mxu0 %v3570
        %5163 = vmatpush1.bf16.msra.mxu0 %v3569
        %5164 = vmatprep.subr.bf16.mxu0 %v3580
        %5165 = vmatpush1.bf16.msra.mxu0 %v3579
        %5166 = vmatprep.subr.bf16.mxu0 %v3590
        %5167 = vmatpush1.bf16.msra.mxu0 %v3589
        %5168 = vmatprep.subr.bf16.mxu0 %v3600
        %5169 = vmatpush1.bf16.msra.mxu0 %v3599
        %5170 = vmatprep.subr.bf16.mxu0 %v3610
        %5171 = vmatpush1.bf16.msra.mxu0 %v3609
        %5172 = vmatprep.subr.bf16.mxu0 %v3620
        %5173 = vmatpush1.bf16.msra.mxu0 %v3619
        %5174 = vmatprep.subr.bf16.mxu0 %v3630
        %5175 = vmatpush1.bf16.msra.mxu0 %v3629
        %5176 = vmatprep.subr.bf16.mxu0 %v3640
        %5177 = vmatpush1.bf16.msra.mxu0 %v3639
        %5178 = vmatprep.subr.bf16.mxu0 %v3650
        %5179 = vmatpush1.bf16.msra.mxu0 %v3649
        %5180 = vmatprep.subr.bf16.mxu0 %v3660
        %5181 = vmatpush1.bf16.msra.mxu0 %v3659
        %5182 = vmatprep.subr.bf16.mxu0 %v3670
        %5183 = vmatpush1.bf16.msra.mxu0 %v3669
        %5184 = vmatprep.subr.bf16.mxu0 %v3680
        %5185 = vmatpush1.bf16.msra.mxu0 %v3679
        %5186 = vmatprep.subr.bf16.mxu0 %v3690
        %5187 = vmatpush1.bf16.msra.mxu0 %v3689
        %5188 = vmatprep.subr.bf16.mxu0 %v3700
        %5189 = vmatpush1.bf16.msra.mxu0 %v3699
        %5190 = vmatprep.mubr.bf16.mxu0 %v1132
        %5191 = vmatmul.mubr.bf16.gmra.mrb[0].mxu0 %v1131
        %v5192 = vpop.f32.mrb[0].mxu0
        %v5193 = vadd.f32 %v5150, %v5192
        %v5194 = vpop.f32.mrb[0].mxu0
        %v5195 = vadd.f32 %v5152, %v5194
        %v5196 = vpop.f32.mrb[0].mxu0
        %v5197 = vadd.f32 %v5154, %v5196
        %v5198 = vpop.f32.mrb[0].mxu0
        %v5199 = vadd.f32 %v5156, %v5198
        %5200 = vdwg.mxu0
        %v5201 = vadd.f32 %v433, %v4505
        %v5202 = vadd.f32 %v434, %v4507
        %v5203 = vadd.f32 %v435, %v4677
        %v5204 = vadd.f32 %v436, %v4679
        %v5205 = vadd.f32 %v437, %v4849
        %v5206 = vadd.f32 %v438, %v4851
        %v5207 = vadd.f32 %v439, %v5021
        %v5208 = vadd.f32 %v440, %v5023
        %v5209 = vadd.f32 %v441, %v5193
        %v5210 = vadd.f32 %v442, %v5195
        %v5211 = vadd.f32 %v443, %v4509
        %v5212 = vadd.f32 %v444, %v4511
        %v5213 = vadd.f32 %v445, %v4681
        %v5214 = vadd.f32 %v446, %v4683
        %v5215 = vadd.f32 %v447, %v4853
        %v5216 = vadd.f32 %v448, %v4855
        %v5217 = vadd.f32 %v449, %v5025
        %v5218 = vadd.f32 %v450, %v5027
        %v5219 = vadd.f32 %v451, %v5197
        %v5220 = vadd.f32 %v452, %v5199
        %5221 = vst [vmem:[#allocation2] sm:$0xff] %v5201
        %5222 = vst [vmem:[#allocation2 + $0x8] sm:$0xff] %v5202
        %5223 = vst [vmem:[#allocation2 + $0x10] sm:$0xff] %v5203
        %5224 = vst [vmem:[#allocation2 + $0x18] sm:$0xff] %v5204
        %5225 = vst [vmem:[#allocation2 + $0x20] sm:$0xff] %v5205
        %5226 = vst [vmem:[#allocation2 + $0x28] sm:$0xff] %v5206
        %5227 = vst [vmem:[#allocation2 + $0x30] sm:$0xff] %v5207
        %5228 = vst [vmem:[#allocation2 + $0x38] sm:$0xff] %v5208
        %5229 = vst [vmem:[#allocation2 + $0x40] sm:$0xff] %v5209
        %5230 = vst [vmem:[#allocation2 + $0x48] sm:$0xff] %v5210
        %5231 = vst [vmem:[#allocation2 + $0x50] sm:$0xff] %v5211
        %5232 = vst [vmem:[#allocation2 + $0x58] sm:$0xff] %v5212
        %5233 = vst [vmem:[#allocation2 + $0x60] sm:$0xff] %v5213
        %5234 = vst [vmem:[#allocation2 + $0x68] sm:$0xff] %v5214
        %5235 = vst [vmem:[#allocation2 + $0x70] sm:$0xff] %v5215
        %5236 = vst [vmem:[#allocation2 + $0x78] sm:$0xff] %v5216
        %5237 = vst [vmem:[#allocation2 + $0x80] sm:$0xff] %v5217
        %5238 = vst [vmem:[#allocation2 + $0x88] sm:$0xff] %v5218
        %5239 = vst [vmem:[#allocation2 + $0x90] sm:$0xff] %v5219
        %5240 = vst [vmem:[#allocation2 + $0x98] sm:$0xff] %v5220
        %p5241 = scmp.eq.s32.totalorder %s24, 3
        // Predicated region
        $region100: #{mlp_encoder_forward.1} parent=66 // pred_check
          %p5242 = pneg %p5241
        $region101: #{mlp_encoder_forward.1} parent=66 // pred_check_branch
          %5244 = sbr.rel (%p5242) target = $region103
        $region102: #{mlp_encoder_forward.1} parent=66 // pred_region
          %v5245 = vld [vmem:[#allocation2] sm:$0xff]
          %v5246 = vld [vmem:[#allocation2 + $0x8] sm:$0xff]
          %v5247 = vld [vmem:[#allocation2 + $0x10] sm:$0xff]
          %v5248 = vld [vmem:[#allocation2 + $0x18] sm:$0xff]
          %v5249 = vld [vmem:[#allocation2 + $0x20] sm:$0xff]
          %v5250 = vld [vmem:[#allocation2 + $0x28] sm:$0xff]
          %v5251 = vld [vmem:[#allocation2 + $0x30] sm:$0xff]
          %v5252 = vld [vmem:[#allocation2 + $0x38] sm:$0xff]
          %v5253 = vld [vmem:[#allocation2 + $0x40] sm:$0xff]
          %v5254 = vld [vmem:[#allocation2 + $0x48] sm:$0xff]
          %v5255 = vld [vmem:[#allocation2 + $0x50] sm:$0xff]
          %v5256 = vld [vmem:[#allocation2 + $0x58] sm:$0xff]
          %v5257 = vld [vmem:[#allocation2 + $0x60] sm:$0xff]
          %v5258 = vld [vmem:[#allocation2 + $0x68] sm:$0xff]
          %v5259 = vld [vmem:[#allocation2 + $0x70] sm:$0xff]
          %v5260 = vld [vmem:[#allocation2 + $0x78] sm:$0xff]
          %v5261 = vld [vmem:[#allocation2 + $0x80] sm:$0xff]
          %v5262 = vld [vmem:[#allocation2 + $0x88] sm:$0xff]
          %v5263 = vld [vmem:[#allocation2 + $0x90] sm:$0xff]
          %v5264 = vld [vmem:[#allocation2 + $0x98] sm:$0xff]
          %v5265 = vld [vmem:[#allocation6] sm:$0xff]
          %v5266 = vld [vmem:[#allocation6 + $0x8] sm:$0x3]
          %v5269 = vlaneseq
          %v5270 = vshrl.u32 %v5269, 7
          %v5271 = vsub.s32 0, %v5270
          %v5272 = vrot.slane %v5265, %v5271
          %v5273 = vlaneseq
          %v5274 = vshrl.u32 %v5273, 7
          %v5275 = vsub.s32 1, %v5274
          %v5276 = vrot.slane %v5265, %v5275
          %v5277 = vlaneseq
          %v5278 = vshrl.u32 %v5277, 7
          %v5279 = vsub.s32 2, %v5278
          %v5280 = vrot.slane %v5265, %v5279
          %v5281 = vlaneseq
          %v5282 = vshrl.u32 %v5281, 7
          %v5283 = vsub.s32 3, %v5282
          %v5284 = vrot.slane %v5265, %v5283
          %v5285 = vlaneseq
          %v5286 = vshrl.u32 %v5285, 7
          %v5287 = vsub.s32 4, %v5286
          %v5288 = vrot.slane %v5265, %v5287
          %v5289 = vlaneseq
          %v5290 = vshrl.u32 %v5289, 7
          %v5291 = vsub.s32 5, %v5290
          %v5292 = vrot.slane %v5265, %v5291
          %v5293 = vlaneseq
          %v5294 = vshrl.u32 %v5293, 7
          %v5295 = vsub.s32 6, %v5294
          %v5296 = vrot.slane %v5265, %v5295
          %v5297 = vlaneseq
          %v5298 = vshrl.u32 %v5297, 7
          %v5299 = vsub.s32 7, %v5298
          %v5300 = vrot.slane %v5265, %v5299
          %v5301 = vlaneseq
          %v5302 = vshrl.u32 %v5301, 7
          %v5303 = vsub.s32 0, %v5302
          %v5304 = vrot.slane %v5266, %v5303
          %v5305 = vlaneseq
          %v5306 = vshrl.u32 %v5305, 7
          %v5307 = vsub.s32 1, %v5306
          %v5308 = vrot.slane %v5266, %v5307
          %v5319 = vadd.f32 %v5245, %v5272
          %v5320 = vadd.f32 %v5246, %v5276
          %v5321 = vadd.f32 %v5247, %v5280
          %v5322 = vadd.f32 %v5248, %v5284
          %v5323 = vadd.f32 %v5249, %v5288
          %v5324 = vadd.f32 %v5250, %v5292
          %v5325 = vadd.f32 %v5251, %v5296
          %v5326 = vadd.f32 %v5252, %v5300
          %v5327 = vadd.f32 %v5253, %v5304
          %v5328 = vadd.f32 %v5254, %v5308
          %v5329 = vadd.f32 %v5255, %v5272
          %v5330 = vadd.f32 %v5256, %v5276
          %v5331 = vadd.f32 %v5257, %v5280
          %v5332 = vadd.f32 %v5258, %v5284
          %v5333 = vadd.f32 %v5259, %v5288
          %v5334 = vadd.f32 %v5260, %v5292
          %v5335 = vadd.f32 %v5261, %v5296
          %v5336 = vadd.f32 %v5262, %v5300
          %v5337 = vadd.f32 %v5263, %v5304
          %v5338 = vadd.f32 %v5264, %v5308
          %v5339 = vmax.f32 %v5319, 0.0
          %v5340 = vmax.f32 %v5320, 0.0
          %v5341 = vmax.f32 %v5321, 0.0
          %v5342 = vmax.f32 %v5322, 0.0
          %v5343 = vmax.f32 %v5323, 0.0
          %v5344 = vmax.f32 %v5324, 0.0
          %v5345 = vmax.f32 %v5325, 0.0
          %v5346 = vmax.f32 %v5326, 0.0
          %v5347 = vmax.f32 %v5327, 0.0
          %v5348 = vmax.f32 %v5328, 0.0
          %v5349 = vmax.f32 %v5329, 0.0
          %v5350 = vmax.f32 %v5330, 0.0
          %v5351 = vmax.f32 %v5331, 0.0
          %v5352 = vmax.f32 %v5332, 0.0
          %v5353 = vmax.f32 %v5333, 0.0
          %v5354 = vmax.f32 %v5334, 0.0
          %v5355 = vmax.f32 %v5335, 0.0
          %v5356 = vmax.f32 %v5336, 0.0
          %v5357 = vmax.f32 %v5337, 0.0
          %v5358 = vmax.f32 %v5338, 0.0
          %v5359 = vpack.c.bf16 %v5349, %v5339
          %v5360 = vpack.c.bf16 %v5350, %v5340
          %v5361 = vpack.c.bf16 %v5351, %v5341
          %v5362 = vpack.c.bf16 %v5352, %v5342
          %v5363 = vpack.c.bf16 %v5353, %v5343
          %v5364 = vpack.c.bf16 %v5354, %v5344
          %v5365 = vpack.c.bf16 %v5355, %v5345
          %v5366 = vpack.c.bf16 %v5356, %v5346
          %v5367 = vpack.c.bf16 %v5357, %v5347
          %v5368 = vpack.c.bf16 %v5358, %v5348
          %v5369 = vld [vmem:[#allocation8] sm:$0xff]
          %v5370 = vld [vmem:[#allocation8 + $0x8] sm:$0xff]
          %v5371 = vld [vmem:[#allocation8 + $0x10] sm:$0xff]
          %v5372 = vld [vmem:[#allocation8 + $0x18] sm:$0xff]
          %v5373 = vld [vmem:[#allocation8 + $0x20] sm:$0xff]
          %v5374 = vld [vmem:[#allocation8 + $0x28] sm:$0xff]
          %v5375 = vld [vmem:[#allocation8 + $0x30] sm:$0xff]
          %v5376 = vld [vmem:[#allocation8 + $0x38] sm:$0xff]
          %v5377 = vld [vmem:[#allocation8 + $0x40] sm:$0xff]
          %v5378 = vld [vmem:[#allocation8 + $0x48] sm:$0xff]
          %v5379 = vld [vmem:[#allocation8 + $0x50] sm:$0xff]
          %v5380 = vld [vmem:[#allocation8 + $0x58] sm:$0xff]
          %v5381 = vld [vmem:[#allocation8 + $0x60] sm:$0xff]
          %v5382 = vld [vmem:[#allocation8 + $0x68] sm:$0xff]
          %v5383 = vld [vmem:[#allocation8 + $0x70] sm:$0xff]
          %v5384 = vld [vmem:[#allocation8 + $0x78] sm:$0xff]
          %v5385 = vld [vmem:[#allocation8 + $0x80] sm:$0xff]
          %v5386 = vld [vmem:[#allocation8 + $0x88] sm:$0xff]
          %v5387 = vld [vmem:[#allocation8 + $0x90] sm:$0xff]
          %v5388 = vld [vmem:[#allocation8 + $0x98] sm:$0xff]
          %v5389 = vld [vmem:[#allocation8 + $0xa0] sm:$0xff]
          %v5390 = vld [vmem:[#allocation8 + $0xa8] sm:$0xff]
          %v5391 = vld [vmem:[#allocation8 + $0xb0] sm:$0xff]
          %v5392 = vld [vmem:[#allocation8 + $0xb8] sm:$0xff]
          %v5393 = vld [vmem:[#allocation8 + $0xc0] sm:$0xff]
          %v5394 = vld [vmem:[#allocation8 + $0xc8] sm:$0xff]
          %v5395 = vld [vmem:[#allocation8 + $0xd0] sm:$0xff]
          %v5396 = vld [vmem:[#allocation8 + $0xd8] sm:$0xff]
          %v5397 = vld [vmem:[#allocation8 + $0xe0] sm:$0xff]
          %v5398 = vld [vmem:[#allocation8 + $0xe8] sm:$0xff]
          %v5399 = vld [vmem:[#allocation8 + $0xf0] sm:$0xff]
          %v5400 = vld [vmem:[#allocation8 + $0xf8] sm:$0xff]
          %v5401 = vld [vmem:[#allocation8 + $0x100] sm:$0xff]
          %v5402 = vld [vmem:[#allocation8 + $0x108] sm:$0xff]
          %v5403 = vld [vmem:[#allocation8 + $0x110] sm:$0xff]
          %v5404 = vld [vmem:[#allocation8 + $0x118] sm:$0xff]
          %v5405 = vld [vmem:[#allocation8 + $0x120] sm:$0xff]
          %v5406 = vld [vmem:[#allocation8 + $0x128] sm:$0xff]
          %v5407 = vld [vmem:[#allocation8 + $0x130] sm:$0xff]
          %v5408 = vld [vmem:[#allocation8 + $0x138] sm:$0xff]
          %v5409 = vld [vmem:[#allocation8 + $0x140] sm:$0xff]
          %v5410 = vld [vmem:[#allocation8 + $0x148] sm:$0xff]
          %v5411 = vld [vmem:[#allocation8 + $0x150] sm:$0xff]
          %v5412 = vld [vmem:[#allocation8 + $0x158] sm:$0xff]
          %v5413 = vld [vmem:[#allocation8 + $0x160] sm:$0xff]
          %v5414 = vld [vmem:[#allocation8 + $0x168] sm:$0xff]
          %v5415 = vld [vmem:[#allocation8 + $0x170] sm:$0xff]
          %v5416 = vld [vmem:[#allocation8 + $0x178] sm:$0xff]
          %v5417 = vld [vmem:[#allocation8 + $0x180] sm:$0xff]
          %v5418 = vld [vmem:[#allocation8 + $0x188] sm:$0xff]
          %v5419 = vld [vmem:[#allocation8 + $0x190] sm:$0xff]
          %v5420 = vld [vmem:[#allocation8 + $0x198] sm:$0xff]
          %v5421 = vld [vmem:[#allocation8 + $0x1a0] sm:$0xff]
          %v5422 = vld [vmem:[#allocation8 + $0x1a8] sm:$0xff]
          %v5423 = vld [vmem:[#allocation8 + $0x1b0] sm:$0xff]
          %v5424 = vld [vmem:[#allocation8 + $0x1b8] sm:$0xff]
          %v5425 = vld [vmem:[#allocation8 + $0x1c0] sm:$0xff]
          %v5426 = vld [vmem:[#allocation8 + $0x1c8] sm:$0xff]
          %v5427 = vld [vmem:[#allocation8 + $0x1d0] sm:$0xff]
          %v5428 = vld [vmem:[#allocation8 + $0x1d8] sm:$0xff]
          %v5429 = vld [vmem:[#allocation8 + $0x1e0] sm:$0xff]
          %v5430 = vld [vmem:[#allocation8 + $0x1e8] sm:$0xff]
          %v5431 = vld [vmem:[#allocation8 + $0x1f0] sm:$0xff]
          %v5432 = vld [vmem:[#allocation8 + $0x1f8] sm:$0xff]
          %v5433 = vld [vmem:[#allocation8 + $0x200] sm:$0xff]
          %v5434 = vld [vmem:[#allocation8 + $0x208] sm:$0xff]
          %v5435 = vld [vmem:[#allocation8 + $0x210] sm:$0xff]
          %v5436 = vld [vmem:[#allocation8 + $0x218] sm:$0xff]
          %v5437 = vld [vmem:[#allocation8 + $0x220] sm:$0xff]
          %v5438 = vld [vmem:[#allocation8 + $0x228] sm:$0xff]
          %v5439 = vld [vmem:[#allocation8 + $0x230] sm:$0xff]
          %v5440 = vld [vmem:[#allocation8 + $0x238] sm:$0xff]
          %v5441 = vld [vmem:[#allocation8 + $0x240] sm:$0xff]
          %v5442 = vld [vmem:[#allocation8 + $0x248] sm:$0xff]
          %v5443 = vld [vmem:[#allocation8 + $0x250] sm:$0xff]
          %v5444 = vld [vmem:[#allocation8 + $0x258] sm:$0xff]
          %v5445 = vld [vmem:[#allocation8 + $0x260] sm:$0xff]
          %v5446 = vld [vmem:[#allocation8 + $0x268] sm:$0xff]
          %v5447 = vld [vmem:[#allocation8 + $0x270] sm:$0xff]
          %v5448 = vld [vmem:[#allocation8 + $0x278] sm:$0xff]
          %v5449 = vld [vmem:[#allocation8 + $0x280] sm:$0xff]
          %v5450 = vld [vmem:[#allocation8 + $0x288] sm:$0xff]
          %v5451 = vld [vmem:[#allocation8 + $0x290] sm:$0xff]
          %v5452 = vld [vmem:[#allocation8 + $0x298] sm:$0xff]
          %v5453 = vld [vmem:[#allocation8 + $0x2a0] sm:$0xff]
          %v5454 = vld [vmem:[#allocation8 + $0x2a8] sm:$0xff]
          %v5455 = vld [vmem:[#allocation8 + $0x2b0] sm:$0xff]
          %v5456 = vld [vmem:[#allocation8 + $0x2b8] sm:$0xff]
          %v5457 = vld [vmem:[#allocation8 + $0x2c0] sm:$0xff]
          %v5458 = vld [vmem:[#allocation8 + $0x2c8] sm:$0xff]
          %v5459 = vld [vmem:[#allocation8 + $0x2d0] sm:$0xff]
          %v5460 = vld [vmem:[#allocation8 + $0x2d8] sm:$0xff]
          %v5461 = vld [vmem:[#allocation8 + $0x2e0] sm:$0xff]
          %v5462 = vld [vmem:[#allocation8 + $0x2e8] sm:$0xff]
          %v5463 = vld [vmem:[#allocation8 + $0x2f0] sm:$0xff]
          %v5464 = vld [vmem:[#allocation8 + $0x2f8] sm:$0xff]
          %v5465 = vld [vmem:[#allocation8 + $0x300] sm:$0xff]
          %v5466 = vld [vmem:[#allocation8 + $0x308] sm:$0xff]
          %v5467 = vld [vmem:[#allocation8 + $0x310] sm:$0xff]
          %v5468 = vld [vmem:[#allocation8 + $0x318] sm:$0xff]
          %v5469 = vld [vmem:[#allocation8 + $0x320] sm:$0xff]
          %v5470 = vld [vmem:[#allocation8 + $0x328] sm:$0xff]
          %v5471 = vld [vmem:[#allocation8 + $0x330] sm:$0xff]
          %v5472 = vld [vmem:[#allocation8 + $0x338] sm:$0xff]
          %v5473 = vld [vmem:[#allocation8 + $0x340] sm:$0xff]
          %v5474 = vld [vmem:[#allocation8 + $0x348] sm:$0xff]
          %v5475 = vld [vmem:[#allocation8 + $0x350] sm:$0xff]
          %v5476 = vld [vmem:[#allocation8 + $0x358] sm:$0xff]
          %v5477 = vld [vmem:[#allocation8 + $0x360] sm:$0xff]
          %v5478 = vld [vmem:[#allocation8 + $0x368] sm:$0xff]
          %v5479 = vld [vmem:[#allocation8 + $0x370] sm:$0xff]
          %v5480 = vld [vmem:[#allocation8 + $0x378] sm:$0xff]
          %v5481 = vld [vmem:[#allocation8 + $0x380] sm:$0xff]
          %v5482 = vld [vmem:[#allocation8 + $0x388] sm:$0xff]
          %v5483 = vld [vmem:[#allocation8 + $0x390] sm:$0xff]
          %v5484 = vld [vmem:[#allocation8 + $0x398] sm:$0xff]
          %v5485 = vld [vmem:[#allocation8 + $0x3a0] sm:$0xff]
          %v5486 = vld [vmem:[#allocation8 + $0x3a8] sm:$0xff]
          %v5487 = vld [vmem:[#allocation8 + $0x3b0] sm:$0xff]
          %v5488 = vld [vmem:[#allocation8 + $0x3b8] sm:$0xff]
          %v5489 = vld [vmem:[#allocation8 + $0x3c0] sm:$0xff]
          %v5490 = vld [vmem:[#allocation8 + $0x3c8] sm:$0xff]
          %v5491 = vld [vmem:[#allocation8 + $0x3d0] sm:$0xff]
          %v5492 = vld [vmem:[#allocation8 + $0x3d8] sm:$0xff]
          %v5493 = vld [vmem:[#allocation8 + $0x3e0] sm:$0xff]
          %v5494 = vld [vmem:[#allocation8 + $0x3e8] sm:$0xff]
          %v5495 = vld [vmem:[#allocation8 + $0x3f0] sm:$0xff]
          %v5496 = vld [vmem:[#allocation8 + $0x3f8] sm:$0xff]
          %v5497 = vld [vmem:[#allocation8 + $0x400] sm:$0xff]
          %v5498 = vld [vmem:[#allocation8 + $0x408] sm:$0xff]
          %v5499 = vld [vmem:[#allocation8 + $0x410] sm:$0xff]
          %v5500 = vld [vmem:[#allocation8 + $0x418] sm:$0xff]
          %v5501 = vld [vmem:[#allocation8 + $0x420] sm:$0xff]
          %v5502 = vld [vmem:[#allocation8 + $0x428] sm:$0xff]
          %v5503 = vld [vmem:[#allocation8 + $0x430] sm:$0xff]
          %v5504 = vld [vmem:[#allocation8 + $0x438] sm:$0xff]
          %v5505 = vld [vmem:[#allocation8 + $0x440] sm:$0xff]
          %v5506 = vld [vmem:[#allocation8 + $0x448] sm:$0xff]
          %v5507 = vld [vmem:[#allocation8 + $0x450] sm:$0xff]
          %v5508 = vld [vmem:[#allocation8 + $0x458] sm:$0xff]
          %v5509 = vld [vmem:[#allocation8 + $0x460] sm:$0xff]
          %v5510 = vld [vmem:[#allocation8 + $0x468] sm:$0xff]
          %v5511 = vld [vmem:[#allocation8 + $0x470] sm:$0xff]
          %v5512 = vld [vmem:[#allocation8 + $0x478] sm:$0xff]
          %v5513 = vld [vmem:[#allocation8 + $0x480] sm:$0xff]
          %v5514 = vld [vmem:[#allocation8 + $0x488] sm:$0xff]
          %v5515 = vld [vmem:[#allocation8 + $0x490] sm:$0xff]
          %v5516 = vld [vmem:[#allocation8 + $0x498] sm:$0xff]
          %v5517 = vld [vmem:[#allocation8 + $0x4a0] sm:$0xff]
          %v5518 = vld [vmem:[#allocation8 + $0x4a8] sm:$0xff]
          %v5519 = vld [vmem:[#allocation8 + $0x4b0] sm:$0xff]
          %v5520 = vld [vmem:[#allocation8 + $0x4b8] sm:$0xff]
          %v5521 = vld [vmem:[#allocation8 + $0x4c0] sm:$0xff]
          %v5522 = vld [vmem:[#allocation8 + $0x4c8] sm:$0xff]
          %v5523 = vld [vmem:[#allocation8 + $0x4d0] sm:$0xff]
          %v5524 = vld [vmem:[#allocation8 + $0x4d8] sm:$0xff]
          %v5525 = vld [vmem:[#allocation8 + $0x4e0] sm:$0xff]
          %v5526 = vld [vmem:[#allocation8 + $0x4e8] sm:$0xff]
          %v5527 = vld [vmem:[#allocation8 + $0x4f0] sm:$0xff]
          %v5528 = vld [vmem:[#allocation8 + $0x4f8] sm:$0xff]
          %v5529 = vld [vmem:[#allocation8 + $0x500] sm:$0xff]
          %v5530 = vld [vmem:[#allocation8 + $0x508] sm:$0xff]
          %v5531 = vld [vmem:[#allocation8 + $0x510] sm:$0xff]
          %v5532 = vld [vmem:[#allocation8 + $0x518] sm:$0xff]
          %v5533 = vld [vmem:[#allocation8 + $0x520] sm:$0xff]
          %v5534 = vld [vmem:[#allocation8 + $0x528] sm:$0xff]
          %v5535 = vld [vmem:[#allocation8 + $0x530] sm:$0xff]
          %v5536 = vld [vmem:[#allocation8 + $0x538] sm:$0xff]
          %v5537 = vld [vmem:[#allocation8 + $0x540] sm:$0xff]
          %v5538 = vld [vmem:[#allocation8 + $0x548] sm:$0xff]
          %v5539 = vld [vmem:[#allocation8 + $0x550] sm:$0xff]
          %v5540 = vld [vmem:[#allocation8 + $0x558] sm:$0xff]
          %v5541 = vld [vmem:[#allocation8 + $0x560] sm:$0xff]
          %v5542 = vld [vmem:[#allocation8 + $0x568] sm:$0xff]
          %v5543 = vld [vmem:[#allocation8 + $0x570] sm:$0xff]
          %v5544 = vld [vmem:[#allocation8 + $0x578] sm:$0xff]
          %v5545 = vld [vmem:[#allocation8 + $0x580] sm:$0xff]
          %v5546 = vld [vmem:[#allocation8 + $0x588] sm:$0xff]
          %v5547 = vld [vmem:[#allocation8 + $0x590] sm:$0xff]
          %v5548 = vld [vmem:[#allocation8 + $0x598] sm:$0xff]
          %v5549 = vld [vmem:[#allocation8 + $0x5a0] sm:$0xff]
          %v5550 = vld [vmem:[#allocation8 + $0x5a8] sm:$0xff]
          %v5551 = vld [vmem:[#allocation8 + $0x5b0] sm:$0xff]
          %v5552 = vld [vmem:[#allocation8 + $0x5b8] sm:$0xff]
          %v5553 = vld [vmem:[#allocation8 + $0x5c0] sm:$0xff]
          %v5554 = vld [vmem:[#allocation8 + $0x5c8] sm:$0xff]
          %v5555 = vld [vmem:[#allocation8 + $0x5d0] sm:$0xff]
          %v5556 = vld [vmem:[#allocation8 + $0x5d8] sm:$0xff]
          %v5557 = vld [vmem:[#allocation8 + $0x5e0] sm:$0xff]
          %v5558 = vld [vmem:[#allocation8 + $0x5e8] sm:$0xff]
          %v5559 = vld [vmem:[#allocation8 + $0x5f0] sm:$0xff]
          %v5560 = vld [vmem:[#allocation8 + $0x5f8] sm:$0xff]
          %v5561 = vld [vmem:[#allocation8 + $0x600] sm:$0xff]
          %v5562 = vld [vmem:[#allocation8 + $0x608] sm:$0xff]
          %v5563 = vld [vmem:[#allocation8 + $0x610] sm:$0xff]
          %v5564 = vld [vmem:[#allocation8 + $0x618] sm:$0xff]
          %v5565 = vld [vmem:[#allocation8 + $0x620] sm:$0xff]
          %v5566 = vld [vmem:[#allocation8 + $0x628] sm:$0xff]
          %v5567 = vld [vmem:[#allocation8 + $0x630] sm:$0xff]
          %v5568 = vld [vmem:[#allocation8 + $0x638] sm:$0xff]
          %v5569 = vld [vmem:[#allocation8 + $0x640] sm:$0xff]
          %v5570 = vld [vmem:[#allocation8 + $0x648] sm:$0xff]
          %v5571 = vld [vmem:[#allocation8 + $0x650] sm:$0xff]
          %v5572 = vld [vmem:[#allocation8 + $0x658] sm:$0xff]
          %v5573 = vld [vmem:[#allocation8 + $0x660] sm:$0xff]
          %v5574 = vld [vmem:[#allocation8 + $0x668] sm:$0xff]
          %v5575 = vld [vmem:[#allocation8 + $0x670] sm:$0xff]
          %v5576 = vld [vmem:[#allocation8 + $0x678] sm:$0xff]
          %v5577 = vld [vmem:[#allocation8 + $0x680] sm:$0xff]
          %v5578 = vld [vmem:[#allocation8 + $0x688] sm:$0xff]
          %v5579 = vld [vmem:[#allocation8 + $0x690] sm:$0xff]
          %v5580 = vld [vmem:[#allocation8 + $0x698] sm:$0xff]
          %v5581 = vld [vmem:[#allocation8 + $0x6a0] sm:$0xff]
          %v5582 = vld [vmem:[#allocation8 + $0x6a8] sm:$0xff]
          %v5583 = vld [vmem:[#allocation8 + $0x6b0] sm:$0xff]
          %v5584 = vld [vmem:[#allocation8 + $0x6b8] sm:$0xff]
          %v5585 = vld [vmem:[#allocation8 + $0x6c0] sm:$0xff]
          %v5586 = vld [vmem:[#allocation8 + $0x6c8] sm:$0xff]
          %v5587 = vld [vmem:[#allocation8 + $0x6d0] sm:$0xff]
          %v5588 = vld [vmem:[#allocation8 + $0x6d8] sm:$0xff]
          %v5589 = vld [vmem:[#allocation8 + $0x6e0] sm:$0xff]
          %v5590 = vld [vmem:[#allocation8 + $0x6e8] sm:$0xff]
          %v5591 = vld [vmem:[#allocation8 + $0x6f0] sm:$0xff]
          %v5592 = vld [vmem:[#allocation8 + $0x6f8] sm:$0xff]
          %v5593 = vld [vmem:[#allocation8 + $0x700] sm:$0xff]
          %v5594 = vld [vmem:[#allocation8 + $0x708] sm:$0xff]
          %v5595 = vld [vmem:[#allocation8 + $0x710] sm:$0xff]
          %v5596 = vld [vmem:[#allocation8 + $0x718] sm:$0xff]
          %v5597 = vld [vmem:[#allocation8 + $0x720] sm:$0xff]
          %v5598 = vld [vmem:[#allocation8 + $0x728] sm:$0xff]
          %v5599 = vld [vmem:[#allocation8 + $0x730] sm:$0xff]
          %v5600 = vld [vmem:[#allocation8 + $0x738] sm:$0xff]
          %v5601 = vld [vmem:[#allocation8 + $0x740] sm:$0xff]
          %v5602 = vld [vmem:[#allocation8 + $0x748] sm:$0xff]
          %v5603 = vld [vmem:[#allocation8 + $0x750] sm:$0xff]
          %v5604 = vld [vmem:[#allocation8 + $0x758] sm:$0xff]
          %v5605 = vld [vmem:[#allocation8 + $0x760] sm:$0xff]
          %v5606 = vld [vmem:[#allocation8 + $0x768] sm:$0xff]
          %v5607 = vld [vmem:[#allocation8 + $0x770] sm:$0xff]
          %v5608 = vld [vmem:[#allocation8 + $0x778] sm:$0xff]
          %v5609 = vld [vmem:[#allocation8 + $0x780] sm:$0xff]
          %v5610 = vld [vmem:[#allocation8 + $0x788] sm:$0xff]
          %v5611 = vld [vmem:[#allocation8 + $0x790] sm:$0xff]
          %v5612 = vld [vmem:[#allocation8 + $0x798] sm:$0xff]
          %v5613 = vld [vmem:[#allocation8 + $0x7a0] sm:$0xff]
          %v5614 = vld [vmem:[#allocation8 + $0x7a8] sm:$0xff]
          %v5615 = vld [vmem:[#allocation8 + $0x7b0] sm:$0xff]
          %v5616 = vld [vmem:[#allocation8 + $0x7b8] sm:$0xff]
          %v5617 = vld [vmem:[#allocation8 + $0x7c0] sm:$0xff]
          %v5618 = vld [vmem:[#allocation8 + $0x7c8] sm:$0xff]
          %v5619 = vld [vmem:[#allocation8 + $0x7d0] sm:$0xff]
          %v5620 = vld [vmem:[#allocation8 + $0x7d8] sm:$0xff]
          %v5621 = vld [vmem:[#allocation8 + $0x7e0] sm:$0xff]
          %v5622 = vld [vmem:[#allocation8 + $0x7e8] sm:$0xff]
          %v5623 = vld [vmem:[#allocation8 + $0x7f0] sm:$0xff]
          %v5624 = vld [vmem:[#allocation8 + $0x7f8] sm:$0xff]
          %v5625 = vld [vmem:[#allocation8 + $0x800] sm:$0xff]
          %v5626 = vld [vmem:[#allocation8 + $0x808] sm:$0xff]
          %v5627 = vld [vmem:[#allocation8 + $0x810] sm:$0xff]
          %v5628 = vld [vmem:[#allocation8 + $0x818] sm:$0xff]
          %v5629 = vld [vmem:[#allocation8 + $0x820] sm:$0xff]
          %v5630 = vld [vmem:[#allocation8 + $0x828] sm:$0xff]
          %v5631 = vld [vmem:[#allocation8 + $0x830] sm:$0xff]
          %v5632 = vld [vmem:[#allocation8 + $0x838] sm:$0xff]
          %v5633 = vld [vmem:[#allocation8 + $0x840] sm:$0xff]
          %v5634 = vld [vmem:[#allocation8 + $0x848] sm:$0xff]
          %v5635 = vld [vmem:[#allocation8 + $0x850] sm:$0xff]
          %v5636 = vld [vmem:[#allocation8 + $0x858] sm:$0xff]
          %v5637 = vld [vmem:[#allocation8 + $0x860] sm:$0xff]
          %v5638 = vld [vmem:[#allocation8 + $0x868] sm:$0xff]
          %v5639 = vld [vmem:[#allocation8 + $0x870] sm:$0xff]
          %v5640 = vld [vmem:[#allocation8 + $0x878] sm:$0xff]
          %v5641 = vld [vmem:[#allocation8 + $0x880] sm:$0xff]
          %v5642 = vld [vmem:[#allocation8 + $0x888] sm:$0xff]
          %v5643 = vld [vmem:[#allocation8 + $0x890] sm:$0xff]
          %v5644 = vld [vmem:[#allocation8 + $0x898] sm:$0xff]
          %v5645 = vld [vmem:[#allocation8 + $0x8a0] sm:$0xff]
          %v5646 = vld [vmem:[#allocation8 + $0x8a8] sm:$0xff]
          %v5647 = vld [vmem:[#allocation8 + $0x8b0] sm:$0xff]
          %v5648 = vld [vmem:[#allocation8 + $0x8b8] sm:$0xff]
          %v5649 = vld [vmem:[#allocation8 + $0x8c0] sm:$0xff]
          %v5650 = vld [vmem:[#allocation8 + $0x8c8] sm:$0xff]
          %v5651 = vld [vmem:[#allocation8 + $0x8d0] sm:$0xff]
          %v5652 = vld [vmem:[#allocation8 + $0x8d8] sm:$0xff]
          %v5653 = vld [vmem:[#allocation8 + $0x8e0] sm:$0xff]
          %v5654 = vld [vmem:[#allocation8 + $0x8e8] sm:$0xff]
          %v5655 = vld [vmem:[#allocation8 + $0x8f0] sm:$0xff]
          %v5656 = vld [vmem:[#allocation8 + $0x8f8] sm:$0xff]
          %v5657 = vld [vmem:[#allocation8 + $0x900] sm:$0xff]
          %v5658 = vld [vmem:[#allocation8 + $0x908] sm:$0xff]
          %v5659 = vld [vmem:[#allocation8 + $0x910] sm:$0xff]
          %v5660 = vld [vmem:[#allocation8 + $0x918] sm:$0xff]
          %v5661 = vld [vmem:[#allocation8 + $0x920] sm:$0xff]
          %v5662 = vld [vmem:[#allocation8 + $0x928] sm:$0xff]
          %v5663 = vld [vmem:[#allocation8 + $0x930] sm:$0xff]
          %v5664 = vld [vmem:[#allocation8 + $0x938] sm:$0xff]
          %v5665 = vld [vmem:[#allocation8 + $0x940] sm:$0xff]
          %v5666 = vld [vmem:[#allocation8 + $0x948] sm:$0xff]
          %v5667 = vld [vmem:[#allocation8 + $0x950] sm:$0xff]
          %v5668 = vld [vmem:[#allocation8 + $0x958] sm:$0xff]
          %v5669 = vld [vmem:[#allocation8 + $0x960] sm:$0xff]
          %v5670 = vld [vmem:[#allocation8 + $0x968] sm:$0xff]
          %v5671 = vld [vmem:[#allocation8 + $0x970] sm:$0xff]
          %v5672 = vld [vmem:[#allocation8 + $0x978] sm:$0xff]
          %v5673 = vld [vmem:[#allocation8 + $0x980] sm:$0xff]
          %v5674 = vld [vmem:[#allocation8 + $0x988] sm:$0xff]
          %v5675 = vld [vmem:[#allocation8 + $0x990] sm:$0xff]
          %v5676 = vld [vmem:[#allocation8 + $0x998] sm:$0xff]
          %v5677 = vld [vmem:[#allocation8 + $0x9a0] sm:$0xff]
          %v5678 = vld [vmem:[#allocation8 + $0x9a8] sm:$0xff]
          %v5679 = vld [vmem:[#allocation8 + $0x9b0] sm:$0xff]
          %v5680 = vld [vmem:[#allocation8 + $0x9b8] sm:$0xff]
          %v5681 = vld [vmem:[#allocation8 + $0x9c0] sm:$0xff]
          %v5682 = vld [vmem:[#allocation8 + $0x9c8] sm:$0xff]
          %v5683 = vld [vmem:[#allocation8 + $0x9d0] sm:$0xff]
          %v5684 = vld [vmem:[#allocation8 + $0x9d8] sm:$0xff]
          %v5685 = vld [vmem:[#allocation8 + $0x9e0] sm:$0xff]
          %v5686 = vld [vmem:[#allocation8 + $0x9e8] sm:$0xff]
          %v5687 = vld [vmem:[#allocation8 + $0x9f0] sm:$0xff]
          %v5688 = vld [vmem:[#allocation8 + $0x9f8] sm:$0xff]
          %v5689 = vld [vmem:[#allocation8 + $0xa00] sm:$0xff]
          %v5690 = vld [vmem:[#allocation8 + $0xa08] sm:$0xff]
          %v5691 = vld [vmem:[#allocation8 + $0xa10] sm:$0xff]
          %v5692 = vld [vmem:[#allocation8 + $0xa18] sm:$0xff]
          %v5693 = vld [vmem:[#allocation8 + $0xa20] sm:$0xff]
          %v5694 = vld [vmem:[#allocation8 + $0xa28] sm:$0xff]
          %v5695 = vld [vmem:[#allocation8 + $0xa30] sm:$0xff]
          %v5696 = vld [vmem:[#allocation8 + $0xa38] sm:$0xff]
          %v5697 = vld [vmem:[#allocation8 + $0xa40] sm:$0xff]
          %v5698 = vld [vmem:[#allocation8 + $0xa48] sm:$0xff]
          %v5699 = vld [vmem:[#allocation8 + $0xa50] sm:$0xff]
          %v5700 = vld [vmem:[#allocation8 + $0xa58] sm:$0xff]
          %v5701 = vld [vmem:[#allocation8 + $0xa60] sm:$0xff]
          %v5702 = vld [vmem:[#allocation8 + $0xa68] sm:$0xff]
          %v5703 = vld [vmem:[#allocation8 + $0xa70] sm:$0xff]
          %v5704 = vld [vmem:[#allocation8 + $0xa78] sm:$0xff]
          %v5705 = vld [vmem:[#allocation8 + $0xa80] sm:$0xff]
          %v5706 = vld [vmem:[#allocation8 + $0xa88] sm:$0xff]
          %v5707 = vld [vmem:[#allocation8 + $0xa90] sm:$0xff]
          %v5708 = vld [vmem:[#allocation8 + $0xa98] sm:$0xff]
          %v5709 = vld [vmem:[#allocation8 + $0xaa0] sm:$0xff]
          %v5710 = vld [vmem:[#allocation8 + $0xaa8] sm:$0xff]
          %v5711 = vld [vmem:[#allocation8 + $0xab0] sm:$0xff]
          %v5712 = vld [vmem:[#allocation8 + $0xab8] sm:$0xff]
          %v5713 = vld [vmem:[#allocation8 + $0xac0] sm:$0xff]
          %v5714 = vld [vmem:[#allocation8 + $0xac8] sm:$0xff]
          %v5715 = vld [vmem:[#allocation8 + $0xad0] sm:$0xff]
          %v5716 = vld [vmem:[#allocation8 + $0xad8] sm:$0xff]
          %v5717 = vld [vmem:[#allocation8 + $0xae0] sm:$0xff]
          %v5718 = vld [vmem:[#allocation8 + $0xae8] sm:$0xff]
          %v5719 = vld [vmem:[#allocation8 + $0xaf0] sm:$0xff]
          %v5720 = vld [vmem:[#allocation8 + $0xaf8] sm:$0xff]
          %v5721 = vld [vmem:[#allocation8 + $0xb00] sm:$0xff]
          %v5722 = vld [vmem:[#allocation8 + $0xb08] sm:$0xff]
          %v5723 = vld [vmem:[#allocation8 + $0xb10] sm:$0xff]
          %v5724 = vld [vmem:[#allocation8 + $0xb18] sm:$0xff]
          %v5725 = vld [vmem:[#allocation8 + $0xb20] sm:$0xff]
          %v5726 = vld [vmem:[#allocation8 + $0xb28] sm:$0xff]
          %v5727 = vld [vmem:[#allocation8 + $0xb30] sm:$0xff]
          %v5728 = vld [vmem:[#allocation8 + $0xb38] sm:$0xff]
          %v5729 = vld [vmem:[#allocation8 + $0xb40] sm:$0xff]
          %v5730 = vld [vmem:[#allocation8 + $0xb48] sm:$0xff]
          %v5731 = vld [vmem:[#allocation8 + $0xb50] sm:$0xff]
          %v5732 = vld [vmem:[#allocation8 + $0xb58] sm:$0xff]
          %v5733 = vld [vmem:[#allocation8 + $0xb60] sm:$0xff]
          %v5734 = vld [vmem:[#allocation8 + $0xb68] sm:$0xff]
          %v5735 = vld [vmem:[#allocation8 + $0xb70] sm:$0xff]
          %v5736 = vld [vmem:[#allocation8 + $0xb78] sm:$0xff]
          %v5737 = vld [vmem:[#allocation8 + $0xb80] sm:$0xff]
          %v5738 = vld [vmem:[#allocation8 + $0xb88] sm:$0xff]
          %v5739 = vld [vmem:[#allocation8 + $0xb90] sm:$0xff]
          %v5740 = vld [vmem:[#allocation8 + $0xb98] sm:$0xff]
          %v5741 = vld [vmem:[#allocation8 + $0xba0] sm:$0xff]
          %v5742 = vld [vmem:[#allocation8 + $0xba8] sm:$0xff]
          %v5743 = vld [vmem:[#allocation8 + $0xbb0] sm:$0xff]
          %v5744 = vld [vmem:[#allocation8 + $0xbb8] sm:$0xff]
          %v5745 = vld [vmem:[#allocation8 + $0xbc0] sm:$0xff]
          %v5746 = vld [vmem:[#allocation8 + $0xbc8] sm:$0xff]
          %v5747 = vld [vmem:[#allocation8 + $0xbd0] sm:$0xff]
          %v5748 = vld [vmem:[#allocation8 + $0xbd8] sm:$0xff]
          %v5749 = vld [vmem:[#allocation8 + $0xbe0] sm:$0xff]
          %v5750 = vld [vmem:[#allocation8 + $0xbe8] sm:$0xff]
          %v5751 = vld [vmem:[#allocation8 + $0xbf0] sm:$0xff]
          %v5752 = vld [vmem:[#allocation8 + $0xbf8] sm:$0xff]
          %v5753 = vld [vmem:[#allocation8 + $0xc00] sm:$0xff]
          %v5754 = vld [vmem:[#allocation8 + $0xc08] sm:$0xff]
          %v5755 = vld [vmem:[#allocation8 + $0xc10] sm:$0xff]
          %v5756 = vld [vmem:[#allocation8 + $0xc18] sm:$0xff]
          %v5757 = vld [vmem:[#allocation8 + $0xc20] sm:$0xff]
          %v5758 = vld [vmem:[#allocation8 + $0xc28] sm:$0xff]
          %v5759 = vld [vmem:[#allocation8 + $0xc30] sm:$0xff]
          %v5760 = vld [vmem:[#allocation8 + $0xc38] sm:$0xff]
          %v5761 = vld [vmem:[#allocation8 + $0xc40] sm:$0xff]
          %v5762 = vld [vmem:[#allocation8 + $0xc48] sm:$0xff]
          %v5763 = vld [vmem:[#allocation8 + $0xc50] sm:$0xff]
          %v5764 = vld [vmem:[#allocation8 + $0xc58] sm:$0xff]
          %v5765 = vld [vmem:[#allocation8 + $0xc60] sm:$0xff]
          %v5766 = vld [vmem:[#allocation8 + $0xc68] sm:$0xff]
          %v5767 = vld [vmem:[#allocation8 + $0xc70] sm:$0xff]
          %v5768 = vld [vmem:[#allocation8 + $0xc78] sm:$0xff]
          %v5769 = vld [vmem:[#allocation8 + $0xc80] sm:$0xff]
          %v5770 = vld [vmem:[#allocation8 + $0xc88] sm:$0xff]
          %v5771 = vld [vmem:[#allocation8 + $0xc90] sm:$0xff]
          %v5772 = vld [vmem:[#allocation8 + $0xc98] sm:$0xff]
          %v5773 = vld [vmem:[#allocation8 + $0xca0] sm:$0xff]
          %v5774 = vld [vmem:[#allocation8 + $0xca8] sm:$0xff]
          %v5775 = vld [vmem:[#allocation8 + $0xcb0] sm:$0xff]
          %v5776 = vld [vmem:[#allocation8 + $0xcb8] sm:$0xff]
          %v5777 = vld [vmem:[#allocation8 + $0xcc0] sm:$0xff]
          %v5778 = vld [vmem:[#allocation8 + $0xcc8] sm:$0xff]
          %v5779 = vld [vmem:[#allocation8 + $0xcd0] sm:$0xff]
          %v5780 = vld [vmem:[#allocation8 + $0xcd8] sm:$0xff]
          %v5781 = vld [vmem:[#allocation8 + $0xce0] sm:$0xff]
          %v5782 = vld [vmem:[#allocation8 + $0xce8] sm:$0xff]
          %v5783 = vld [vmem:[#allocation8 + $0xcf0] sm:$0xff]
          %v5784 = vld [vmem:[#allocation8 + $0xcf8] sm:$0xff]
          %v5785 = vld [vmem:[#allocation8 + $0xd00] sm:$0xff]
          %v5786 = vld [vmem:[#allocation8 + $0xd08] sm:$0xff]
          %v5787 = vld [vmem:[#allocation8 + $0xd10] sm:$0xff]
          %v5788 = vld [vmem:[#allocation8 + $0xd18] sm:$0xff]
          %v5789 = vld [vmem:[#allocation8 + $0xd20] sm:$0xff]
          %v5790 = vld [vmem:[#allocation8 + $0xd28] sm:$0xff]
          %v5791 = vld [vmem:[#allocation8 + $0xd30] sm:$0xff]
          %v5792 = vld [vmem:[#allocation8 + $0xd38] sm:$0xff]
          %v5793 = vld [vmem:[#allocation8 + $0xd40] sm:$0xff]
          %v5794 = vld [vmem:[#allocation8 + $0xd48] sm:$0xff]
          %v5795 = vld [vmem:[#allocation8 + $0xd50] sm:$0xff]
          %v5796 = vld [vmem:[#allocation8 + $0xd58] sm:$0xff]
          %v5797 = vld [vmem:[#allocation8 + $0xd60] sm:$0xff]
          %v5798 = vld [vmem:[#allocation8 + $0xd68] sm:$0xff]
          %v5799 = vld [vmem:[#allocation8 + $0xd70] sm:$0xff]
          %v5800 = vld [vmem:[#allocation8 + $0xd78] sm:$0xff]
          %v5801 = vld [vmem:[#allocation8 + $0xd80] sm:$0xff]
          %v5802 = vld [vmem:[#allocation8 + $0xd88] sm:$0xff]
          %v5803 = vld [vmem:[#allocation8 + $0xd90] sm:$0xff]
          %v5804 = vld [vmem:[#allocation8 + $0xd98] sm:$0xff]
          %v5805 = vld [vmem:[#allocation8 + $0xda0] sm:$0xff]
          %v5806 = vld [vmem:[#allocation8 + $0xda8] sm:$0xff]
          %v5807 = vld [vmem:[#allocation8 + $0xdb0] sm:$0xff]
          %v5808 = vld [vmem:[#allocation8 + $0xdb8] sm:$0xff]
          %v5809 = vld [vmem:[#allocation8 + $0xdc0] sm:$0xff]
          %v5810 = vld [vmem:[#allocation8 + $0xdc8] sm:$0xff]
          %v5811 = vld [vmem:[#allocation8 + $0xdd0] sm:$0xff]
          %v5812 = vld [vmem:[#allocation8 + $0xdd8] sm:$0xff]
          %v5813 = vld [vmem:[#allocation8 + $0xde0] sm:$0xff]
          %v5814 = vld [vmem:[#allocation8 + $0xde8] sm:$0xff]
          %v5815 = vld [vmem:[#allocation8 + $0xdf0] sm:$0xff]
          %v5816 = vld [vmem:[#allocation8 + $0xdf8] sm:$0xff]
          %v5817 = vld [vmem:[#allocation8 + $0xe00] sm:$0xff]
          %v5818 = vld [vmem:[#allocation8 + $0xe08] sm:$0xff]
          %v5819 = vld [vmem:[#allocation8 + $0xe10] sm:$0xff]
          %v5820 = vld [vmem:[#allocation8 + $0xe18] sm:$0xff]
          %v5821 = vld [vmem:[#allocation8 + $0xe20] sm:$0xff]
          %v5822 = vld [vmem:[#allocation8 + $0xe28] sm:$0xff]
          %v5823 = vld [vmem:[#allocation8 + $0xe30] sm:$0xff]
          %v5824 = vld [vmem:[#allocation8 + $0xe38] sm:$0xff]
          %v5825 = vld [vmem:[#allocation8 + $0xe40] sm:$0xff]
          %v5826 = vld [vmem:[#allocation8 + $0xe48] sm:$0xff]
          %v5827 = vld [vmem:[#allocation8 + $0xe50] sm:$0xff]
          %v5828 = vld [vmem:[#allocation8 + $0xe58] sm:$0xff]
          %v5829 = vld [vmem:[#allocation8 + $0xe60] sm:$0xff]
          %v5830 = vld [vmem:[#allocation8 + $0xe68] sm:$0xff]
          %v5831 = vld [vmem:[#allocation8 + $0xe70] sm:$0xff]
          %v5832 = vld [vmem:[#allocation8 + $0xe78] sm:$0xff]
          %v5833 = vld [vmem:[#allocation8 + $0xe80] sm:$0xff]
          %v5834 = vld [vmem:[#allocation8 + $0xe88] sm:$0xff]
          %v5835 = vld [vmem:[#allocation8 + $0xe90] sm:$0xff]
          %v5836 = vld [vmem:[#allocation8 + $0xe98] sm:$0xff]
          %v5837 = vld [vmem:[#allocation8 + $0xea0] sm:$0xff]
          %v5838 = vld [vmem:[#allocation8 + $0xea8] sm:$0xff]
          %v5839 = vld [vmem:[#allocation8 + $0xeb0] sm:$0xff]
          %v5840 = vld [vmem:[#allocation8 + $0xeb8] sm:$0xff]
          %v5841 = vld [vmem:[#allocation8 + $0xec0] sm:$0xff]
          %v5842 = vld [vmem:[#allocation8 + $0xec8] sm:$0xff]
          %v5843 = vld [vmem:[#allocation8 + $0xed0] sm:$0xff]
          %v5844 = vld [vmem:[#allocation8 + $0xed8] sm:$0xff]
          %v5845 = vld [vmem:[#allocation8 + $0xee0] sm:$0xff]
          %v5846 = vld [vmem:[#allocation8 + $0xee8] sm:$0xff]
          %v5847 = vld [vmem:[#allocation8 + $0xef0] sm:$0xff]
          %v5848 = vld [vmem:[#allocation8 + $0xef8] sm:$0xff]
          %v5849 = vld [vmem:[#allocation8 + $0xf00] sm:$0xff]
          %v5850 = vld [vmem:[#allocation8 + $0xf08] sm:$0xff]
          %v5851 = vld [vmem:[#allocation8 + $0xf10] sm:$0xff]
          %v5852 = vld [vmem:[#allocation8 + $0xf18] sm:$0xff]
          %v5853 = vld [vmem:[#allocation8 + $0xf20] sm:$0xff]
          %v5854 = vld [vmem:[#allocation8 + $0xf28] sm:$0xff]
          %v5855 = vld [vmem:[#allocation8 + $0xf30] sm:$0xff]
          %v5856 = vld [vmem:[#allocation8 + $0xf38] sm:$0xff]
          %v5857 = vld [vmem:[#allocation8 + $0xf40] sm:$0xff]
          %v5858 = vld [vmem:[#allocation8 + $0xf48] sm:$0xff]
          %v5859 = vld [vmem:[#allocation8 + $0xf50] sm:$0xff]
          %v5860 = vld [vmem:[#allocation8 + $0xf58] sm:$0xff]
          %v5861 = vld [vmem:[#allocation8 + $0xf60] sm:$0xff]
          %v5862 = vld [vmem:[#allocation8 + $0xf68] sm:$0xff]
          %v5863 = vld [vmem:[#allocation8 + $0xf70] sm:$0xff]
          %v5864 = vld [vmem:[#allocation8 + $0xf78] sm:$0xff]
          %v5865 = vld [vmem:[#allocation8 + $0xf80] sm:$0xff]
          %v5866 = vld [vmem:[#allocation8 + $0xf88] sm:$0xff]
          %v5867 = vld [vmem:[#allocation8 + $0xf90] sm:$0xff]
          %v5868 = vld [vmem:[#allocation8 + $0xf98] sm:$0xff]
          %v5869 = vld [vmem:[#allocation8 + $0xfa0] sm:$0xff]
          %v5870 = vld [vmem:[#allocation8 + $0xfa8] sm:$0xff]
          %v5871 = vld [vmem:[#allocation8 + $0xfb0] sm:$0xff]
          %v5872 = vld [vmem:[#allocation8 + $0xfb8] sm:$0xff]
          %v5873 = vld [vmem:[#allocation8 + $0xfc0] sm:$0xff]
          %v5874 = vld [vmem:[#allocation8 + $0xfc8] sm:$0xff]
          %v5875 = vld [vmem:[#allocation8 + $0xfd0] sm:$0xff]
          %v5876 = vld [vmem:[#allocation8 + $0xfd8] sm:$0xff]
          %v5877 = vld [vmem:[#allocation8 + $0xfe0] sm:$0xff]
          %v5878 = vld [vmem:[#allocation8 + $0xfe8] sm:$0xff]
          %v5879 = vld [vmem:[#allocation8 + $0xff0] sm:$0xff]
          %v5880 = vld [vmem:[#allocation8 + $0xff8] sm:$0xff]
          %v5881 = vld [vmem:[#allocation8 + $0x1000] sm:$0xff]
          %v5882 = vld [vmem:[#allocation8 + $0x1008] sm:$0xff]
          %v5883 = vld [vmem:[#allocation8 + $0x1010] sm:$0xff]
          %v5884 = vld [vmem:[#allocation8 + $0x1018] sm:$0xff]
          %v5885 = vld [vmem:[#allocation8 + $0x1020] sm:$0xff]
          %v5886 = vld [vmem:[#allocation8 + $0x1028] sm:$0xff]
          %v5887 = vld [vmem:[#allocation8 + $0x1030] sm:$0xff]
          %v5888 = vld [vmem:[#allocation8 + $0x1038] sm:$0xff]
          %v5889 = vld [vmem:[#allocation8 + $0x1040] sm:$0xff]
          %v5890 = vld [vmem:[#allocation8 + $0x1048] sm:$0xff]
          %v5891 = vld [vmem:[#allocation8 + $0x1050] sm:$0xff]
          %v5892 = vld [vmem:[#allocation8 + $0x1058] sm:$0xff]
          %v5893 = vld [vmem:[#allocation8 + $0x1060] sm:$0xff]
          %v5894 = vld [vmem:[#allocation8 + $0x1068] sm:$0xff]
          %v5895 = vld [vmem:[#allocation8 + $0x1070] sm:$0xff]
          %v5896 = vld [vmem:[#allocation8 + $0x1078] sm:$0xff]
          %v5897 = vld [vmem:[#allocation8 + $0x1080] sm:$0xff]
          %v5898 = vld [vmem:[#allocation8 + $0x1088] sm:$0xff]
          %v5899 = vld [vmem:[#allocation8 + $0x1090] sm:$0xff]
          %v5900 = vld [vmem:[#allocation8 + $0x1098] sm:$0xff]
          %v5901 = vld [vmem:[#allocation8 + $0x10a0] sm:$0xff]
          %v5902 = vld [vmem:[#allocation8 + $0x10a8] sm:$0xff]
          %v5903 = vld [vmem:[#allocation8 + $0x10b0] sm:$0xff]
          %v5904 = vld [vmem:[#allocation8 + $0x10b8] sm:$0xff]
          %v5905 = vld [vmem:[#allocation8 + $0x10c0] sm:$0xff]
          %v5906 = vld [vmem:[#allocation8 + $0x10c8] sm:$0xff]
          %v5907 = vld [vmem:[#allocation8 + $0x10d0] sm:$0xff]
          %v5908 = vld [vmem:[#allocation8 + $0x10d8] sm:$0xff]
          %v5909 = vld [vmem:[#allocation8 + $0x10e0] sm:$0xff]
          %v5910 = vld [vmem:[#allocation8 + $0x10e8] sm:$0xff]
          %v5911 = vld [vmem:[#allocation8 + $0x10f0] sm:$0xff]
          %v5912 = vld [vmem:[#allocation8 + $0x10f8] sm:$0xff]
          %v5913 = vld [vmem:[#allocation8 + $0x1100] sm:$0xff]
          %v5914 = vld [vmem:[#allocation8 + $0x1108] sm:$0xff]
          %v5915 = vld [vmem:[#allocation8 + $0x1110] sm:$0xff]
          %v5916 = vld [vmem:[#allocation8 + $0x1118] sm:$0xff]
          %v5917 = vld [vmem:[#allocation8 + $0x1120] sm:$0xff]
          %v5918 = vld [vmem:[#allocation8 + $0x1128] sm:$0xff]
          %v5919 = vld [vmem:[#allocation8 + $0x1130] sm:$0xff]
          %v5920 = vld [vmem:[#allocation8 + $0x1138] sm:$0xff]
          %v5921 = vld [vmem:[#allocation8 + $0x1140] sm:$0xff]
          %v5922 = vld [vmem:[#allocation8 + $0x1148] sm:$0xff]
          %v5923 = vld [vmem:[#allocation8 + $0x1150] sm:$0xff]
          %v5924 = vld [vmem:[#allocation8 + $0x1158] sm:$0xff]
          %v5925 = vld [vmem:[#allocation8 + $0x1160] sm:$0xff]
          %v5926 = vld [vmem:[#allocation8 + $0x1168] sm:$0xff]
          %v5927 = vld [vmem:[#allocation8 + $0x1170] sm:$0xff]
          %v5928 = vld [vmem:[#allocation8 + $0x1178] sm:$0xff]
          %v5929 = vld [vmem:[#allocation8 + $0x1180] sm:$0xff]
          %v5930 = vld [vmem:[#allocation8 + $0x1188] sm:$0xff]
          %v5931 = vld [vmem:[#allocation8 + $0x1190] sm:$0xff]
          %v5932 = vld [vmem:[#allocation8 + $0x1198] sm:$0xff]
          %v5933 = vld [vmem:[#allocation8 + $0x11a0] sm:$0xff]
          %v5934 = vld [vmem:[#allocation8 + $0x11a8] sm:$0xff]
          %v5935 = vld [vmem:[#allocation8 + $0x11b0] sm:$0xff]
          %v5936 = vld [vmem:[#allocation8 + $0x11b8] sm:$0xff]
          %v5937 = vld [vmem:[#allocation8 + $0x11c0] sm:$0xff]
          %v5938 = vld [vmem:[#allocation8 + $0x11c8] sm:$0xff]
          %v5939 = vld [vmem:[#allocation8 + $0x11d0] sm:$0xff]
          %v5940 = vld [vmem:[#allocation8 + $0x11d8] sm:$0xff]
          %v5941 = vld [vmem:[#allocation8 + $0x11e0] sm:$0xff]
          %v5942 = vld [vmem:[#allocation8 + $0x11e8] sm:$0xff]
          %v5943 = vld [vmem:[#allocation8 + $0x11f0] sm:$0xff]
          %v5944 = vld [vmem:[#allocation8 + $0x11f8] sm:$0xff]
          %v5945 = vld [vmem:[#allocation8 + $0x1200] sm:$0xff]
          %v5946 = vld [vmem:[#allocation8 + $0x1208] sm:$0xff]
          %v5947 = vld [vmem:[#allocation8 + $0x1210] sm:$0xff]
          %v5948 = vld [vmem:[#allocation8 + $0x1218] sm:$0xff]
          %v5949 = vld [vmem:[#allocation8 + $0x1220] sm:$0xff]
          %v5950 = vld [vmem:[#allocation8 + $0x1228] sm:$0xff]
          %v5951 = vld [vmem:[#allocation8 + $0x1230] sm:$0xff]
          %v5952 = vld [vmem:[#allocation8 + $0x1238] sm:$0xff]
          %v5953 = vld [vmem:[#allocation8 + $0x1240] sm:$0xff]
          %v5954 = vld [vmem:[#allocation8 + $0x1248] sm:$0xff]
          %v5955 = vld [vmem:[#allocation8 + $0x1250] sm:$0xff]
          %v5956 = vld [vmem:[#allocation8 + $0x1258] sm:$0xff]
          %v5957 = vld [vmem:[#allocation8 + $0x1260] sm:$0xff]
          %v5958 = vld [vmem:[#allocation8 + $0x1268] sm:$0xff]
          %v5959 = vld [vmem:[#allocation8 + $0x1270] sm:$0xff]
          %v5960 = vld [vmem:[#allocation8 + $0x1278] sm:$0xff]
          %v5961 = vld [vmem:[#allocation8 + $0x1280] sm:$0xff]
          %v5962 = vld [vmem:[#allocation8 + $0x1288] sm:$0xff]
          %v5963 = vld [vmem:[#allocation8 + $0x1290] sm:$0xff]
          %v5964 = vld [vmem:[#allocation8 + $0x1298] sm:$0xff]
          %v5965 = vld [vmem:[#allocation8 + $0x12a0] sm:$0xff]
          %v5966 = vld [vmem:[#allocation8 + $0x12a8] sm:$0xff]
          %v5967 = vld [vmem:[#allocation8 + $0x12b0] sm:$0xff]
          %v5968 = vld [vmem:[#allocation8 + $0x12b8] sm:$0xff]
          %v5969 = vld [vmem:[#allocation8 + $0x12c0] sm:$0xff]
          %v5970 = vld [vmem:[#allocation8 + $0x12c8] sm:$0xff]
          %v5971 = vld [vmem:[#allocation8 + $0x12d0] sm:$0xff]
          %v5972 = vld [vmem:[#allocation8 + $0x12d8] sm:$0xff]
          %v5973 = vld [vmem:[#allocation8 + $0x12e0] sm:$0xff]
          %v5974 = vld [vmem:[#allocation8 + $0x12e8] sm:$0xff]
          %v5975 = vld [vmem:[#allocation8 + $0x12f0] sm:$0xff]
          %v5976 = vld [vmem:[#allocation8 + $0x12f8] sm:$0xff]
          %v5977 = vld [vmem:[#allocation8 + $0x1300] sm:$0xff]
          %v5978 = vld [vmem:[#allocation8 + $0x1308] sm:$0xff]
          %v5979 = vld [vmem:[#allocation8 + $0x1310] sm:$0xff]
          %v5980 = vld [vmem:[#allocation8 + $0x1318] sm:$0xff]
          %v5981 = vld [vmem:[#allocation8 + $0x1320] sm:$0xff]
          %v5982 = vld [vmem:[#allocation8 + $0x1328] sm:$0xff]
          %v5983 = vld [vmem:[#allocation8 + $0x1330] sm:$0xff]
          %v5984 = vld [vmem:[#allocation8 + $0x1338] sm:$0xff]
          %v5985 = vld [vmem:[#allocation8 + $0x1340] sm:$0xff]
          %v5986 = vld [vmem:[#allocation8 + $0x1348] sm:$0xff]
          %v5987 = vld [vmem:[#allocation8 + $0x1350] sm:$0xff]
          %v5988 = vld [vmem:[#allocation8 + $0x1358] sm:$0xff]
          %v5989 = vld [vmem:[#allocation8 + $0x1360] sm:$0xff]
          %v5990 = vld [vmem:[#allocation8 + $0x1368] sm:$0xff]
          %v5991 = vld [vmem:[#allocation8 + $0x1370] sm:$0xff]
          %v5992 = vld [vmem:[#allocation8 + $0x1378] sm:$0xff]
          %v5993 = vld [vmem:[#allocation8 + $0x1380] sm:$0xff]
          %v5994 = vld [vmem:[#allocation8 + $0x1388] sm:$0xff]
          %v5995 = vld [vmem:[#allocation8 + $0x1390] sm:$0xff]
          %v5996 = vld [vmem:[#allocation8 + $0x1398] sm:$0xff]
          %v5997 = vld [vmem:[#allocation8 + $0x13a0] sm:$0xff]
          %v5998 = vld [vmem:[#allocation8 + $0x13a8] sm:$0xff]
          %v5999 = vld [vmem:[#allocation8 + $0x13b0] sm:$0xff]
          %v6000 = vld [vmem:[#allocation8 + $0x13b8] sm:$0xff]
          %v6001 = vld [vmem:[#allocation8 + $0x13c0] sm:$0xff]
          %v6002 = vld [vmem:[#allocation8 + $0x13c8] sm:$0xff]
          %v6003 = vld [vmem:[#allocation8 + $0x13d0] sm:$0xff]
          %v6004 = vld [vmem:[#allocation8 + $0x13d8] sm:$0xff]
          %v6005 = vld [vmem:[#allocation8 + $0x13e0] sm:$0xff]
          %v6006 = vld [vmem:[#allocation8 + $0x13e8] sm:$0xff]
          %v6007 = vld [vmem:[#allocation8 + $0x13f0] sm:$0xff]
          %v6008 = vld [vmem:[#allocation8 + $0x13f8] sm:$0xff]
          %v6009 = vld [vmem:[#allocation8 + $0x1400] sm:$0xff]
          %v6010 = vld [vmem:[#allocation8 + $0x1408] sm:$0xff]
          %v6011 = vld [vmem:[#allocation8 + $0x1410] sm:$0xff]
          %v6012 = vld [vmem:[#allocation8 + $0x1418] sm:$0xff]
          %v6013 = vld [vmem:[#allocation8 + $0x1420] sm:$0xff]
          %v6014 = vld [vmem:[#allocation8 + $0x1428] sm:$0xff]
          %v6015 = vld [vmem:[#allocation8 + $0x1430] sm:$0xff]
          %v6016 = vld [vmem:[#allocation8 + $0x1438] sm:$0xff]
          %v6017 = vld [vmem:[#allocation8 + $0x1440] sm:$0xff]
          %v6018 = vld [vmem:[#allocation8 + $0x1448] sm:$0xff]
          %v6019 = vld [vmem:[#allocation8 + $0x1450] sm:$0xff]
          %v6020 = vld [vmem:[#allocation8 + $0x1458] sm:$0xff]
          %v6021 = vld [vmem:[#allocation8 + $0x1460] sm:$0xff]
          %v6022 = vld [vmem:[#allocation8 + $0x1468] sm:$0xff]
          %v6023 = vld [vmem:[#allocation8 + $0x1470] sm:$0xff]
          %v6024 = vld [vmem:[#allocation8 + $0x1478] sm:$0xff]
          %v6025 = vld [vmem:[#allocation8 + $0x1480] sm:$0xff]
          %v6026 = vld [vmem:[#allocation8 + $0x1488] sm:$0xff]
          %v6027 = vld [vmem:[#allocation8 + $0x1490] sm:$0xff]
          %v6028 = vld [vmem:[#allocation8 + $0x1498] sm:$0xff]
          %v6029 = vld [vmem:[#allocation8 + $0x14a0] sm:$0xff]
          %v6030 = vld [vmem:[#allocation8 + $0x14a8] sm:$0xff]
          %v6031 = vld [vmem:[#allocation8 + $0x14b0] sm:$0xff]
          %v6032 = vld [vmem:[#allocation8 + $0x14b8] sm:$0xff]
          %v6033 = vld [vmem:[#allocation8 + $0x14c0] sm:$0xff]
          %v6034 = vld [vmem:[#allocation8 + $0x14c8] sm:$0xff]
          %v6035 = vld [vmem:[#allocation8 + $0x14d0] sm:$0xff]
          %v6036 = vld [vmem:[#allocation8 + $0x14d8] sm:$0xff]
          %v6037 = vld [vmem:[#allocation8 + $0x14e0] sm:$0xff]
          %v6038 = vld [vmem:[#allocation8 + $0x14e8] sm:$0xff]
          %v6039 = vld [vmem:[#allocation8 + $0x14f0] sm:$0xff]
          %v6040 = vld [vmem:[#allocation8 + $0x14f8] sm:$0xff]
          %v6041 = vld [vmem:[#allocation8 + $0x1500] sm:$0xff]
          %v6042 = vld [vmem:[#allocation8 + $0x1508] sm:$0xff]
          %v6043 = vld [vmem:[#allocation8 + $0x1510] sm:$0xff]
          %v6044 = vld [vmem:[#allocation8 + $0x1518] sm:$0xff]
          %v6045 = vld [vmem:[#allocation8 + $0x1520] sm:$0xff]
          %v6046 = vld [vmem:[#allocation8 + $0x1528] sm:$0xff]
          %v6047 = vld [vmem:[#allocation8 + $0x1530] sm:$0xff]
          %v6048 = vld [vmem:[#allocation8 + $0x1538] sm:$0xff]
          %v6049 = vld [vmem:[#allocation8 + $0x1540] sm:$0xff]
          %v6050 = vld [vmem:[#allocation8 + $0x1548] sm:$0xff]
          %v6051 = vld [vmem:[#allocation8 + $0x1550] sm:$0xff]
          %v6052 = vld [vmem:[#allocation8 + $0x1558] sm:$0xff]
          %v6053 = vld [vmem:[#allocation8 + $0x1560] sm:$0xff]
          %v6054 = vld [vmem:[#allocation8 + $0x1568] sm:$0xff]
          %v6055 = vld [vmem:[#allocation8 + $0x1570] sm:$0xff]
          %v6056 = vld [vmem:[#allocation8 + $0x1578] sm:$0xff]
          %v6057 = vld [vmem:[#allocation8 + $0x1580] sm:$0xff]
          %v6058 = vld [vmem:[#allocation8 + $0x1588] sm:$0xff]
          %v6059 = vld [vmem:[#allocation8 + $0x1590] sm:$0xff]
          %v6060 = vld [vmem:[#allocation8 + $0x1598] sm:$0xff]
          %v6061 = vld [vmem:[#allocation8 + $0x15a0] sm:$0xff]
          %v6062 = vld [vmem:[#allocation8 + $0x15a8] sm:$0xff]
          %v6063 = vld [vmem:[#allocation8 + $0x15b0] sm:$0xff]
          %v6064 = vld [vmem:[#allocation8 + $0x15b8] sm:$0xff]
          %v6065 = vld [vmem:[#allocation8 + $0x15c0] sm:$0xff]
          %v6066 = vld [vmem:[#allocation8 + $0x15c8] sm:$0xff]
          %v6067 = vld [vmem:[#allocation8 + $0x15d0] sm:$0xff]
          %v6068 = vld [vmem:[#allocation8 + $0x15d8] sm:$0xff]
          %v6069 = vld [vmem:[#allocation8 + $0x15e0] sm:$0xff]
          %v6070 = vld [vmem:[#allocation8 + $0x15e8] sm:$0xff]
          %v6071 = vld [vmem:[#allocation8 + $0x15f0] sm:$0xff]
          %v6072 = vld [vmem:[#allocation8 + $0x15f8] sm:$0xff]
          %v6073 = vld [vmem:[#allocation8 + $0x1600] sm:$0xff]
          %v6074 = vld [vmem:[#allocation8 + $0x1608] sm:$0xff]
          %v6075 = vld [vmem:[#allocation8 + $0x1610] sm:$0xff]
          %v6076 = vld [vmem:[#allocation8 + $0x1618] sm:$0xff]
          %v6077 = vld [vmem:[#allocation8 + $0x1620] sm:$0xff]
          %v6078 = vld [vmem:[#allocation8 + $0x1628] sm:$0xff]
          %v6079 = vld [vmem:[#allocation8 + $0x1630] sm:$0xff]
          %v6080 = vld [vmem:[#allocation8 + $0x1638] sm:$0xff]
          %v6081 = vld [vmem:[#allocation8 + $0x1640] sm:$0xff]
          %v6082 = vld [vmem:[#allocation8 + $0x1648] sm:$0xff]
          %v6083 = vld [vmem:[#allocation8 + $0x1650] sm:$0xff]
          %v6084 = vld [vmem:[#allocation8 + $0x1658] sm:$0xff]
          %v6085 = vld [vmem:[#allocation8 + $0x1660] sm:$0xff]
          %v6086 = vld [vmem:[#allocation8 + $0x1668] sm:$0xff]
          %v6087 = vld [vmem:[#allocation8 + $0x1670] sm:$0xff]
          %v6088 = vld [vmem:[#allocation8 + $0x1678] sm:$0xff]
          %v6089 = vld [vmem:[#allocation8 + $0x1680] sm:$0xff]
          %v6090 = vld [vmem:[#allocation8 + $0x1688] sm:$0xff]
          %v6091 = vld [vmem:[#allocation8 + $0x1690] sm:$0xff]
          %v6092 = vld [vmem:[#allocation8 + $0x1698] sm:$0xff]
          %v6093 = vld [vmem:[#allocation8 + $0x16a0] sm:$0xff]
          %v6094 = vld [vmem:[#allocation8 + $0x16a8] sm:$0xff]
          %v6095 = vld [vmem:[#allocation8 + $0x16b0] sm:$0xff]
          %v6096 = vld [vmem:[#allocation8 + $0x16b8] sm:$0xff]
          %v6097 = vld [vmem:[#allocation8 + $0x16c0] sm:$0xff]
          %v6098 = vld [vmem:[#allocation8 + $0x16c8] sm:$0xff]
          %v6099 = vld [vmem:[#allocation8 + $0x16d0] sm:$0xff]
          %v6100 = vld [vmem:[#allocation8 + $0x16d8] sm:$0xff]
          %v6101 = vld [vmem:[#allocation8 + $0x16e0] sm:$0xff]
          %v6102 = vld [vmem:[#allocation8 + $0x16e8] sm:$0xff]
          %v6103 = vld [vmem:[#allocation8 + $0x16f0] sm:$0xff]
          %v6104 = vld [vmem:[#allocation8 + $0x16f8] sm:$0xff]
          %v6105 = vld [vmem:[#allocation8 + $0x1700] sm:$0xff]
          %v6106 = vld [vmem:[#allocation8 + $0x1708] sm:$0xff]
          %v6107 = vld [vmem:[#allocation8 + $0x1710] sm:$0xff]
          %v6108 = vld [vmem:[#allocation8 + $0x1718] sm:$0xff]
          %v6109 = vld [vmem:[#allocation8 + $0x1720] sm:$0xff]
          %v6110 = vld [vmem:[#allocation8 + $0x1728] sm:$0xff]
          %v6111 = vld [vmem:[#allocation8 + $0x1730] sm:$0xff]
          %v6112 = vld [vmem:[#allocation8 + $0x1738] sm:$0xff]
          %v6113 = vld [vmem:[#allocation8 + $0x1740] sm:$0xff]
          %v6114 = vld [vmem:[#allocation8 + $0x1748] sm:$0xff]
          %v6115 = vld [vmem:[#allocation8 + $0x1750] sm:$0xff]
          %v6116 = vld [vmem:[#allocation8 + $0x1758] sm:$0xff]
          %v6117 = vld [vmem:[#allocation8 + $0x1760] sm:$0xff]
          %v6118 = vld [vmem:[#allocation8 + $0x1768] sm:$0xff]
          %v6119 = vld [vmem:[#allocation8 + $0x1770] sm:$0xff]
          %v6120 = vld [vmem:[#allocation8 + $0x1778] sm:$0xff]
          %v6121 = vld [vmem:[#allocation8 + $0x1780] sm:$0xff]
          %v6122 = vld [vmem:[#allocation8 + $0x1788] sm:$0xff]
          %v6123 = vld [vmem:[#allocation8 + $0x1790] sm:$0xff]
          %v6124 = vld [vmem:[#allocation8 + $0x1798] sm:$0xff]
          %v6125 = vld [vmem:[#allocation8 + $0x17a0] sm:$0xff]
          %v6126 = vld [vmem:[#allocation8 + $0x17a8] sm:$0xff]
          %v6127 = vld [vmem:[#allocation8 + $0x17b0] sm:$0xff]
          %v6128 = vld [vmem:[#allocation8 + $0x17b8] sm:$0xff]
          %v6129 = vld [vmem:[#allocation8 + $0x17c0] sm:$0xff]
          %v6130 = vld [vmem:[#allocation8 + $0x17c8] sm:$0xff]
          %v6131 = vld [vmem:[#allocation8 + $0x17d0] sm:$0xff]
          %v6132 = vld [vmem:[#allocation8 + $0x17d8] sm:$0xff]
          %v6133 = vld [vmem:[#allocation8 + $0x17e0] sm:$0xff]
          %v6134 = vld [vmem:[#allocation8 + $0x17e8] sm:$0xff]
          %v6135 = vld [vmem:[#allocation8 + $0x17f0] sm:$0xff]
          %v6136 = vld [vmem:[#allocation8 + $0x17f8] sm:$0xff]
          %v6137 = vld [vmem:[#allocation8 + $0x1800] sm:$0xff]
          %v6138 = vld [vmem:[#allocation8 + $0x1808] sm:$0xff]
          %v6139 = vld [vmem:[#allocation8 + $0x1810] sm:$0xff]
          %v6140 = vld [vmem:[#allocation8 + $0x1818] sm:$0xff]
          %v6141 = vld [vmem:[#allocation8 + $0x1820] sm:$0xff]
          %v6142 = vld [vmem:[#allocation8 + $0x1828] sm:$0xff]
          %v6143 = vld [vmem:[#allocation8 + $0x1830] sm:$0xff]
          %v6144 = vld [vmem:[#allocation8 + $0x1838] sm:$0xff]
          %v6145 = vld [vmem:[#allocation8 + $0x1840] sm:$0xff]
          %v6146 = vld [vmem:[#allocation8 + $0x1848] sm:$0xff]
          %v6147 = vld [vmem:[#allocation8 + $0x1850] sm:$0xff]
          %v6148 = vld [vmem:[#allocation8 + $0x1858] sm:$0xff]
          %v6149 = vld [vmem:[#allocation8 + $0x1860] sm:$0xff]
          %v6150 = vld [vmem:[#allocation8 + $0x1868] sm:$0xff]
          %v6151 = vld [vmem:[#allocation8 + $0x1870] sm:$0xff]
          %v6152 = vld [vmem:[#allocation8 + $0x1878] sm:$0xff]
          %v6153 = vld [vmem:[#allocation8 + $0x1880] sm:$0xff]
          %v6154 = vld [vmem:[#allocation8 + $0x1888] sm:$0xff]
          %v6155 = vld [vmem:[#allocation8 + $0x1890] sm:$0xff]
          %v6156 = vld [vmem:[#allocation8 + $0x1898] sm:$0xff]
          %v6157 = vld [vmem:[#allocation8 + $0x18a0] sm:$0xff]
          %v6158 = vld [vmem:[#allocation8 + $0x18a8] sm:$0xff]
          %v6159 = vld [vmem:[#allocation8 + $0x18b0] sm:$0xff]
          %v6160 = vld [vmem:[#allocation8 + $0x18b8] sm:$0xff]
          %v6161 = vld [vmem:[#allocation8 + $0x18c0] sm:$0xff]
          %v6162 = vld [vmem:[#allocation8 + $0x18c8] sm:$0xff]
          %v6163 = vld [vmem:[#allocation8 + $0x18d0] sm:$0xff]
          %v6164 = vld [vmem:[#allocation8 + $0x18d8] sm:$0xff]
          %v6165 = vld [vmem:[#allocation8 + $0x18e0] sm:$0xff]
          %v6166 = vld [vmem:[#allocation8 + $0x18e8] sm:$0xff]
          %v6167 = vld [vmem:[#allocation8 + $0x18f0] sm:$0xff]
          %v6168 = vld [vmem:[#allocation8 + $0x18f8] sm:$0xff]
          %v6169 = vld [vmem:[#allocation9] sm:$0xff]
          %v6170 = vld [vmem:[#allocation9 + $0x8] sm:$0x3]
          %v6173 = vlaneseq
          %v6174 = vshrl.u32 %v6173, 7
          %v6175 = vsub.s32 0, %v6174
          %v6176 = vrot.slane %v6169, %v6175
          %v6177 = vlaneseq
          %v6178 = vshrl.u32 %v6177, 7
          %v6179 = vsub.s32 1, %v6178
          %v6180 = vrot.slane %v6169, %v6179
          %v6181 = vlaneseq
          %v6182 = vshrl.u32 %v6181, 7
          %v6183 = vsub.s32 2, %v6182
          %v6184 = vrot.slane %v6169, %v6183
          %v6185 = vlaneseq
          %v6186 = vshrl.u32 %v6185, 7
          %v6187 = vsub.s32 3, %v6186
          %v6188 = vrot.slane %v6169, %v6187
          %v6189 = vlaneseq
          %v6190 = vshrl.u32 %v6189, 7
          %v6191 = vsub.s32 4, %v6190
          %v6192 = vrot.slane %v6169, %v6191
          %v6193 = vlaneseq
          %v6194 = vshrl.u32 %v6193, 7
          %v6195 = vsub.s32 5, %v6194
          %v6196 = vrot.slane %v6169, %v6195
          %v6197 = vlaneseq
          %v6198 = vshrl.u32 %v6197, 7
          %v6199 = vsub.s32 6, %v6198
          %v6200 = vrot.slane %v6169, %v6199
          %v6201 = vlaneseq
          %v6202 = vshrl.u32 %v6201, 7
          %v6203 = vsub.s32 7, %v6202
          %v6204 = vrot.slane %v6169, %v6203
          %v6205 = vlaneseq
          %v6206 = vshrl.u32 %v6205, 7
          %v6207 = vsub.s32 0, %v6206
          %v6208 = vrot.slane %v6170, %v6207
          %v6209 = vlaneseq
          %v6210 = vshrl.u32 %v6209, 7
          %v6211 = vsub.s32 1, %v6210
          %v6212 = vrot.slane %v6170, %v6211
          %v7023 = vunpack.c.l.b16 %v5369
          %v7024 = vunpack.c.h.b16 %v5369
          %v7025 = vunpack.c.l.b16 %v5370
          %v7026 = vunpack.c.h.b16 %v5370
          %v7027 = vunpack.c.l.b16 %v5371
          %v7028 = vunpack.c.h.b16 %v5371
          %v7029 = vunpack.c.l.b16 %v5372
          %v7030 = vunpack.c.h.b16 %v5372
          %v7031 = vunpack.c.l.b16 %v5373
          %v7032 = vunpack.c.h.b16 %v5373
          %v7033 = vunpack.c.l.b16 %v5374
          %v7034 = vunpack.c.h.b16 %v5374
          %v7035 = vunpack.c.l.b16 %v5375
          %v7036 = vunpack.c.h.b16 %v5375
          %v7037 = vunpack.c.l.b16 %v5376
          %v7038 = vunpack.c.h.b16 %v5376
          %v7039 = vunpack.c.l.b16 %v5377
          %v7040 = vunpack.c.h.b16 %v5377
          %v7041 = vunpack.c.l.b16 %v5378
          %v7042 = vunpack.c.h.b16 %v5378
          %v7043 = vunpack.c.l.b16 %v5379
          %v7044 = vunpack.c.h.b16 %v5379
          %v7045 = vunpack.c.l.b16 %v5380
          %v7046 = vunpack.c.h.b16 %v5380
          %v7047 = vunpack.c.l.b16 %v5381
          %v7048 = vunpack.c.h.b16 %v5381
          %v7049 = vunpack.c.l.b16 %v5382
          %v7050 = vunpack.c.h.b16 %v5382
          %v7051 = vunpack.c.l.b16 %v5383
          %v7052 = vunpack.c.h.b16 %v5383
          %v7053 = vunpack.c.l.b16 %v5384
          %v7054 = vunpack.c.h.b16 %v5384
          %v7055 = vunpack.c.l.b16 %v5385
          %v7056 = vunpack.c.h.b16 %v5385
          %v7057 = vunpack.c.l.b16 %v5386
          %v7058 = vunpack.c.h.b16 %v5386
          %v7059 = vunpack.c.l.b16 %v5387
          %v7060 = vunpack.c.h.b16 %v5387
          %v7061 = vunpack.c.l.b16 %v5388
          %v7062 = vunpack.c.h.b16 %v5388
          %v7063 = vunpack.c.l.b16 %v5389
          %v7064 = vunpack.c.h.b16 %v5389
          %v7065 = vunpack.c.l.b16 %v5390
          %v7066 = vunpack.c.h.b16 %v5390
          %v7067 = vunpack.c.l.b16 %v5391
          %v7068 = vunpack.c.h.b16 %v5391
          %v7069 = vunpack.c.l.b16 %v5392
          %v7070 = vunpack.c.h.b16 %v5392
          %v7071 = vunpack.c.l.b16 %v5393
          %v7072 = vunpack.c.h.b16 %v5393
          %v7073 = vunpack.c.l.b16 %v5394
          %v7074 = vunpack.c.h.b16 %v5394
          %v7075 = vunpack.c.l.b16 %v5395
          %v7076 = vunpack.c.h.b16 %v5395
          %v7077 = vunpack.c.l.b16 %v5396
          %v7078 = vunpack.c.h.b16 %v5396
          %v7079 = vunpack.c.l.b16 %v5397
          %v7080 = vunpack.c.h.b16 %v5397
          %v7081 = vunpack.c.l.b16 %v5398
          %v7082 = vunpack.c.h.b16 %v5398
          %v7083 = vunpack.c.l.b16 %v5399
          %v7084 = vunpack.c.h.b16 %v5399
          %v7085 = vunpack.c.l.b16 %v5400
          %v7086 = vunpack.c.h.b16 %v5400
          %v7087 = vunpack.c.l.b16 %v5401
          %v7088 = vunpack.c.h.b16 %v5401
          %v7089 = vunpack.c.l.b16 %v5402
          %v7090 = vunpack.c.h.b16 %v5402
          %v7091 = vunpack.c.l.b16 %v5403
          %v7092 = vunpack.c.h.b16 %v5403
          %v7093 = vunpack.c.l.b16 %v5404
          %v7094 = vunpack.c.h.b16 %v5404
          %v7095 = vunpack.c.l.b16 %v5405
          %v7096 = vunpack.c.h.b16 %v5405
          %v7097 = vunpack.c.l.b16 %v5406
          %v7098 = vunpack.c.h.b16 %v5406
          %v7099 = vunpack.c.l.b16 %v5407
          %v7100 = vunpack.c.h.b16 %v5407
          %v7101 = vunpack.c.l.b16 %v5408
          %v7102 = vunpack.c.h.b16 %v5408
          %v7103 = vunpack.c.l.b16 %v5409
          %v7104 = vunpack.c.h.b16 %v5409
          %v7105 = vunpack.c.l.b16 %v5410
          %v7106 = vunpack.c.h.b16 %v5410
          %v7107 = vunpack.c.l.b16 %v5411
          %v7108 = vunpack.c.h.b16 %v5411
          %v7109 = vunpack.c.l.b16 %v5412
          %v7110 = vunpack.c.h.b16 %v5412
          %v7111 = vunpack.c.l.b16 %v5413
          %v7112 = vunpack.c.h.b16 %v5413
          %v7113 = vunpack.c.l.b16 %v5414
          %v7114 = vunpack.c.h.b16 %v5414
          %v7115 = vunpack.c.l.b16 %v5415
          %v7116 = vunpack.c.h.b16 %v5415
          %v7117 = vunpack.c.l.b16 %v5416
          %v7118 = vunpack.c.h.b16 %v5416
          %v7119 = vunpack.c.l.b16 %v5417
          %v7120 = vunpack.c.h.b16 %v5417
          %v7121 = vunpack.c.l.b16 %v5418
          %v7122 = vunpack.c.h.b16 %v5418
          %v7123 = vunpack.c.l.b16 %v5419
          %v7124 = vunpack.c.h.b16 %v5419
          %v7125 = vunpack.c.l.b16 %v5420
          %v7126 = vunpack.c.h.b16 %v5420
          %v7127 = vunpack.c.l.b16 %v5421
          %v7128 = vunpack.c.h.b16 %v5421
          %v7129 = vunpack.c.l.b16 %v5422
          %v7130 = vunpack.c.h.b16 %v5422
          %v7131 = vunpack.c.l.b16 %v5423
          %v7132 = vunpack.c.h.b16 %v5423
          %v7133 = vunpack.c.l.b16 %v5424
          %v7134 = vunpack.c.h.b16 %v5424
          %v7135 = vunpack.c.l.b16 %v5425
          %v7136 = vunpack.c.h.b16 %v5425
          %v7137 = vunpack.c.l.b16 %v5426
          %v7138 = vunpack.c.h.b16 %v5426
          %v7139 = vunpack.c.l.b16 %v5427
          %v7140 = vunpack.c.h.b16 %v5427
          %v7141 = vunpack.c.l.b16 %v5428
          %v7142 = vunpack.c.h.b16 %v5428
          %v7143 = vunpack.c.l.b16 %v5429
          %v7144 = vunpack.c.h.b16 %v5429
          %v7145 = vunpack.c.l.b16 %v5430
          %v7146 = vunpack.c.h.b16 %v5430
          %v7147 = vunpack.c.l.b16 %v5431
          %v7148 = vunpack.c.h.b16 %v5431
          %v7149 = vunpack.c.l.b16 %v5432
          %v7150 = vunpack.c.h.b16 %v5432
          %v7151 = vunpack.c.l.b16 %v5433
          %v7152 = vunpack.c.h.b16 %v5433
          %v7153 = vunpack.c.l.b16 %v5434
          %v7154 = vunpack.c.h.b16 %v5434
          %v7155 = vunpack.c.l.b16 %v5435
          %v7156 = vunpack.c.h.b16 %v5435
          %v7157 = vunpack.c.l.b16 %v5436
          %v7158 = vunpack.c.h.b16 %v5436
          %v7159 = vunpack.c.l.b16 %v5437
          %v7160 = vunpack.c.h.b16 %v5437
          %v7161 = vunpack.c.l.b16 %v5438
          %v7162 = vunpack.c.h.b16 %v5438
          %v7163 = vunpack.c.l.b16 %v5439
          %v7164 = vunpack.c.h.b16 %v5439
          %v7165 = vunpack.c.l.b16 %v5440
          %v7166 = vunpack.c.h.b16 %v5440
          %v7167 = vunpack.c.l.b16 %v5441
          %v7168 = vunpack.c.h.b16 %v5441
          %v7169 = vunpack.c.l.b16 %v5442
          %v7170 = vunpack.c.h.b16 %v5442
          %v7171 = vunpack.c.l.b16 %v5443
          %v7172 = vunpack.c.h.b16 %v5443
          %v7173 = vunpack.c.l.b16 %v5444
          %v7174 = vunpack.c.h.b16 %v5444
          %v7175 = vunpack.c.l.b16 %v5445
          %v7176 = vunpack.c.h.b16 %v5445
          %v7177 = vunpack.c.l.b16 %v5446
          %v7178 = vunpack.c.h.b16 %v5446
          %v7179 = vunpack.c.l.b16 %v5447
          %v7180 = vunpack.c.h.b16 %v5447
          %v7181 = vunpack.c.l.b16 %v5448
          %v7182 = vunpack.c.h.b16 %v5448
          %v7183 = vunpack.c.l.b16 %v5449
          %v7184 = vunpack.c.h.b16 %v5449
          %v7185 = vunpack.c.l.b16 %v5450
          %v7186 = vunpack.c.h.b16 %v5450
          %v7187 = vunpack.c.l.b16 %v5451
          %v7188 = vunpack.c.h.b16 %v5451
          %v7189 = vunpack.c.l.b16 %v5452
          %v7190 = vunpack.c.h.b16 %v5452
          %v7191 = vunpack.c.l.b16 %v5453
          %v7192 = vunpack.c.h.b16 %v5453
          %v7193 = vunpack.c.l.b16 %v5454
          %v7194 = vunpack.c.h.b16 %v5454
          %v7195 = vunpack.c.l.b16 %v5455
          %v7196 = vunpack.c.h.b16 %v5455
          %v7197 = vunpack.c.l.b16 %v5456
          %v7198 = vunpack.c.h.b16 %v5456
          %v7199 = vunpack.c.l.b16 %v5457
          %v7200 = vunpack.c.h.b16 %v5457
          %v7201 = vunpack.c.l.b16 %v5458
          %v7202 = vunpack.c.h.b16 %v5458
          %v7203 = vunpack.c.l.b16 %v5459
          %v7204 = vunpack.c.h.b16 %v5459
          %v7205 = vunpack.c.l.b16 %v5460
          %v7206 = vunpack.c.h.b16 %v5460
          %v7207 = vunpack.c.l.b16 %v5461
          %v7208 = vunpack.c.h.b16 %v5461
          %v7209 = vunpack.c.l.b16 %v5462
          %v7210 = vunpack.c.h.b16 %v5462
          %v7211 = vunpack.c.l.b16 %v5463
          %v7212 = vunpack.c.h.b16 %v5463
          %v7213 = vunpack.c.l.b16 %v5464
          %v7214 = vunpack.c.h.b16 %v5464
          %v7215 = vunpack.c.l.b16 %v5465
          %v7216 = vunpack.c.h.b16 %v5465
          %v7217 = vunpack.c.l.b16 %v5466
          %v7218 = vunpack.c.h.b16 %v5466
          %v7219 = vunpack.c.l.b16 %v5467
          %v7220 = vunpack.c.h.b16 %v5467
          %v7221 = vunpack.c.l.b16 %v5468
          %v7222 = vunpack.c.h.b16 %v5468
          %v7223 = vunpack.c.l.b16 %v5469
          %v7224 = vunpack.c.h.b16 %v5469
          %v7225 = vunpack.c.l.b16 %v5470
          %v7226 = vunpack.c.h.b16 %v5470
          %v7227 = vunpack.c.l.b16 %v5471
          %v7228 = vunpack.c.h.b16 %v5471
          %v7229 = vunpack.c.l.b16 %v5472
          %v7230 = vunpack.c.h.b16 %v5472
          %v7231 = vunpack.c.l.b16 %v5473
          %v7232 = vunpack.c.h.b16 %v5473
          %v7233 = vunpack.c.l.b16 %v5474
          %v7234 = vunpack.c.h.b16 %v5474
          %v7235 = vunpack.c.l.b16 %v5475
          %v7236 = vunpack.c.h.b16 %v5475
          %v7237 = vunpack.c.l.b16 %v5476
          %v7238 = vunpack.c.h.b16 %v5476
          %v7239 = vunpack.c.l.b16 %v5477
          %v7240 = vunpack.c.h.b16 %v5477
          %v7241 = vunpack.c.l.b16 %v5478
          %v7242 = vunpack.c.h.b16 %v5478
          %v7243 = vunpack.c.l.b16 %v5479
          %v7244 = vunpack.c.h.b16 %v5479
          %v7245 = vunpack.c.l.b16 %v5480
          %v7246 = vunpack.c.h.b16 %v5480
          %v7247 = vunpack.c.l.b16 %v5481
          %v7248 = vunpack.c.h.b16 %v5481
          %v7249 = vunpack.c.l.b16 %v5482
          %v7250 = vunpack.c.h.b16 %v5482
          %v7251 = vunpack.c.l.b16 %v5483
          %v7252 = vunpack.c.h.b16 %v5483
          %v7253 = vunpack.c.l.b16 %v5484
          %v7254 = vunpack.c.h.b16 %v5484
          %v7255 = vunpack.c.l.b16 %v5485
          %v7256 = vunpack.c.h.b16 %v5485
          %v7257 = vunpack.c.l.b16 %v5486
          %v7258 = vunpack.c.h.b16 %v5486
          %v7259 = vunpack.c.l.b16 %v5487
          %v7260 = vunpack.c.h.b16 %v5487
          %v7261 = vunpack.c.l.b16 %v5488
          %v7262 = vunpack.c.h.b16 %v5488
          %v7263 = vunpack.c.l.b16 %v5489
          %v7264 = vunpack.c.h.b16 %v5489
          %v7265 = vunpack.c.l.b16 %v5490
          %v7266 = vunpack.c.h.b16 %v5490
          %v7267 = vunpack.c.l.b16 %v5491
          %v7268 = vunpack.c.h.b16 %v5491
          %v7269 = vunpack.c.l.b16 %v5492
          %v7270 = vunpack.c.h.b16 %v5492
          %v7271 = vunpack.c.l.b16 %v5493
          %v7272 = vunpack.c.h.b16 %v5493
          %v7273 = vunpack.c.l.b16 %v5494
          %v7274 = vunpack.c.h.b16 %v5494
          %v7275 = vunpack.c.l.b16 %v5495
          %v7276 = vunpack.c.h.b16 %v5495
          %v7277 = vunpack.c.l.b16 %v5496
          %v7278 = vunpack.c.h.b16 %v5496
          %v7279 = vunpack.c.l.b16 %v5497
          %v7280 = vunpack.c.h.b16 %v5497
          %v7281 = vunpack.c.l.b16 %v5498
          %v7282 = vunpack.c.h.b16 %v5498
          %v7283 = vunpack.c.l.b16 %v5499
          %v7284 = vunpack.c.h.b16 %v5499
          %v7285 = vunpack.c.l.b16 %v5500
          %v7286 = vunpack.c.h.b16 %v5500
          %v7287 = vunpack.c.l.b16 %v5501
          %v7288 = vunpack.c.h.b16 %v5501
          %v7289 = vunpack.c.l.b16 %v5502
          %v7290 = vunpack.c.h.b16 %v5502
          %v7291 = vunpack.c.l.b16 %v5503
          %v7292 = vunpack.c.h.b16 %v5503
          %v7293 = vunpack.c.l.b16 %v5504
          %v7294 = vunpack.c.h.b16 %v5504
          %v7295 = vunpack.c.l.b16 %v5505
          %v7296 = vunpack.c.h.b16 %v5505
          %v7297 = vunpack.c.l.b16 %v5506
          %v7298 = vunpack.c.h.b16 %v5506
          %v7299 = vunpack.c.l.b16 %v5507
          %v7300 = vunpack.c.h.b16 %v5507
          %v7301 = vunpack.c.l.b16 %v5508
          %v7302 = vunpack.c.h.b16 %v5508
          %v7303 = vunpack.c.l.b16 %v5509
          %v7304 = vunpack.c.h.b16 %v5509
          %v7305 = vunpack.c.l.b16 %v5510
          %v7306 = vunpack.c.h.b16 %v5510
          %v7307 = vunpack.c.l.b16 %v5511
          %v7308 = vunpack.c.h.b16 %v5511
          %v7309 = vunpack.c.l.b16 %v5512
          %v7310 = vunpack.c.h.b16 %v5512
          %v7311 = vunpack.c.l.b16 %v5513
          %v7312 = vunpack.c.h.b16 %v5513
          %v7313 = vunpack.c.l.b16 %v5514
          %v7314 = vunpack.c.h.b16 %v5514
          %v7315 = vunpack.c.l.b16 %v5515
          %v7316 = vunpack.c.h.b16 %v5515
          %v7317 = vunpack.c.l.b16 %v5516
          %v7318 = vunpack.c.h.b16 %v5516
          %v7319 = vunpack.c.l.b16 %v5517
          %v7320 = vunpack.c.h.b16 %v5517
          %v7321 = vunpack.c.l.b16 %v5518
          %v7322 = vunpack.c.h.b16 %v5518
          %v7323 = vunpack.c.l.b16 %v5519
          %v7324 = vunpack.c.h.b16 %v5519
          %v7325 = vunpack.c.l.b16 %v5520
          %v7326 = vunpack.c.h.b16 %v5520
          %v7327 = vunpack.c.l.b16 %v5521
          %v7328 = vunpack.c.h.b16 %v5521
          %v7329 = vunpack.c.l.b16 %v5522
          %v7330 = vunpack.c.h.b16 %v5522
          %v7331 = vunpack.c.l.b16 %v5523
          %v7332 = vunpack.c.h.b16 %v5523
          %v7333 = vunpack.c.l.b16 %v5524
          %v7334 = vunpack.c.h.b16 %v5524
          %v7335 = vunpack.c.l.b16 %v5525
          %v7336 = vunpack.c.h.b16 %v5525
          %v7337 = vunpack.c.l.b16 %v5526
          %v7338 = vunpack.c.h.b16 %v5526
          %v7339 = vunpack.c.l.b16 %v5527
          %v7340 = vunpack.c.h.b16 %v5527
          %v7341 = vunpack.c.l.b16 %v5528
          %v7342 = vunpack.c.h.b16 %v5528
          %v7343 = vunpack.c.l.b16 %v5529
          %v7344 = vunpack.c.h.b16 %v5529
          %v7345 = vunpack.c.l.b16 %v5530
          %v7346 = vunpack.c.h.b16 %v5530
          %v7347 = vunpack.c.l.b16 %v5531
          %v7348 = vunpack.c.h.b16 %v5531
          %v7349 = vunpack.c.l.b16 %v5532
          %v7350 = vunpack.c.h.b16 %v5532
          %v7351 = vunpack.c.l.b16 %v5533
          %v7352 = vunpack.c.h.b16 %v5533
          %v7353 = vunpack.c.l.b16 %v5534
          %v7354 = vunpack.c.h.b16 %v5534
          %v7355 = vunpack.c.l.b16 %v5535
          %v7356 = vunpack.c.h.b16 %v5535
          %v7357 = vunpack.c.l.b16 %v5536
          %v7358 = vunpack.c.h.b16 %v5536
          %v7359 = vunpack.c.l.b16 %v5537
          %v7360 = vunpack.c.h.b16 %v5537
          %v7361 = vunpack.c.l.b16 %v5538
          %v7362 = vunpack.c.h.b16 %v5538
          %v7363 = vunpack.c.l.b16 %v5539
          %v7364 = vunpack.c.h.b16 %v5539
          %v7365 = vunpack.c.l.b16 %v5540
          %v7366 = vunpack.c.h.b16 %v5540
          %v7367 = vunpack.c.l.b16 %v5541
          %v7368 = vunpack.c.h.b16 %v5541
          %v7369 = vunpack.c.l.b16 %v5542
          %v7370 = vunpack.c.h.b16 %v5542
          %v7371 = vunpack.c.l.b16 %v5543
          %v7372 = vunpack.c.h.b16 %v5543
          %v7373 = vunpack.c.l.b16 %v5544
          %v7374 = vunpack.c.h.b16 %v5544
          %v7375 = vunpack.c.l.b16 %v5545
          %v7376 = vunpack.c.h.b16 %v5545
          %v7377 = vunpack.c.l.b16 %v5546
          %v7378 = vunpack.c.h.b16 %v5546
          %v7379 = vunpack.c.l.b16 %v5547
          %v7380 = vunpack.c.h.b16 %v5547
          %v7381 = vunpack.c.l.b16 %v5548
          %v7382 = vunpack.c.h.b16 %v5548
          %v7383 = vunpack.c.l.b16 %v5549
          %v7384 = vunpack.c.h.b16 %v5549
          %v7385 = vunpack.c.l.b16 %v5550
          %v7386 = vunpack.c.h.b16 %v5550
          %v7387 = vunpack.c.l.b16 %v5551
          %v7388 = vunpack.c.h.b16 %v5551
          %v7389 = vunpack.c.l.b16 %v5552
          %v7390 = vunpack.c.h.b16 %v5552
          %v7391 = vunpack.c.l.b16 %v5553
          %v7392 = vunpack.c.h.b16 %v5553
          %v7393 = vunpack.c.l.b16 %v5554
          %v7394 = vunpack.c.h.b16 %v5554
          %v7395 = vunpack.c.l.b16 %v5555
          %v7396 = vunpack.c.h.b16 %v5555
          %v7397 = vunpack.c.l.b16 %v5556
          %v7398 = vunpack.c.h.b16 %v5556
          %v7399 = vunpack.c.l.b16 %v5557
          %v7400 = vunpack.c.h.b16 %v5557
          %v7401 = vunpack.c.l.b16 %v5558
          %v7402 = vunpack.c.h.b16 %v5558
          %v7403 = vunpack.c.l.b16 %v5559
          %v7404 = vunpack.c.h.b16 %v5559
          %v7405 = vunpack.c.l.b16 %v5560
          %v7406 = vunpack.c.h.b16 %v5560
          %v7407 = vunpack.c.l.b16 %v5561
          %v7408 = vunpack.c.h.b16 %v5561
          %v7409 = vunpack.c.l.b16 %v5562
          %v7410 = vunpack.c.h.b16 %v5562
          %v7411 = vunpack.c.l.b16 %v5563
          %v7412 = vunpack.c.h.b16 %v5563
          %v7413 = vunpack.c.l.b16 %v5564
          %v7414 = vunpack.c.h.b16 %v5564
          %v7415 = vunpack.c.l.b16 %v5565
          %v7416 = vunpack.c.h.b16 %v5565
          %v7417 = vunpack.c.l.b16 %v5566
          %v7418 = vunpack.c.h.b16 %v5566
          %v7419 = vunpack.c.l.b16 %v5567
          %v7420 = vunpack.c.h.b16 %v5567
          %v7421 = vunpack.c.l.b16 %v5568
          %v7422 = vunpack.c.h.b16 %v5568
          %v7423 = vunpack.c.l.b16 %v5569
          %v7424 = vunpack.c.h.b16 %v5569
          %v7425 = vunpack.c.l.b16 %v5570
          %v7426 = vunpack.c.h.b16 %v5570
          %v7427 = vunpack.c.l.b16 %v5571
          %v7428 = vunpack.c.h.b16 %v5571
          %v7429 = vunpack.c.l.b16 %v5572
          %v7430 = vunpack.c.h.b16 %v5572
          %v7431 = vunpack.c.l.b16 %v5573
          %v7432 = vunpack.c.h.b16 %v5573
          %v7433 = vunpack.c.l.b16 %v5574
          %v7434 = vunpack.c.h.b16 %v5574
          %v7435 = vunpack.c.l.b16 %v5575
          %v7436 = vunpack.c.h.b16 %v5575
          %v7437 = vunpack.c.l.b16 %v5576
          %v7438 = vunpack.c.h.b16 %v5576
          %v7439 = vunpack.c.l.b16 %v5577
          %v7440 = vunpack.c.h.b16 %v5577
          %v7441 = vunpack.c.l.b16 %v5578
          %v7442 = vunpack.c.h.b16 %v5578
          %v7443 = vunpack.c.l.b16 %v5579
          %v7444 = vunpack.c.h.b16 %v5579
          %v7445 = vunpack.c.l.b16 %v5580
          %v7446 = vunpack.c.h.b16 %v5580
          %v7447 = vunpack.c.l.b16 %v5581
          %v7448 = vunpack.c.h.b16 %v5581
          %v7449 = vunpack.c.l.b16 %v5582
          %v7450 = vunpack.c.h.b16 %v5582
          %v7451 = vunpack.c.l.b16 %v5583
          %v7452 = vunpack.c.h.b16 %v5583
          %v7453 = vunpack.c.l.b16 %v5584
          %v7454 = vunpack.c.h.b16 %v5584
          %v7455 = vunpack.c.l.b16 %v5585
          %v7456 = vunpack.c.h.b16 %v5585
          %v7457 = vunpack.c.l.b16 %v5586
          %v7458 = vunpack.c.h.b16 %v5586
          %v7459 = vunpack.c.l.b16 %v5587
          %v7460 = vunpack.c.h.b16 %v5587
          %v7461 = vunpack.c.l.b16 %v5588
          %v7462 = vunpack.c.h.b16 %v5588
          %v7463 = vunpack.c.l.b16 %v5589
          %v7464 = vunpack.c.h.b16 %v5589
          %v7465 = vunpack.c.l.b16 %v5590
          %v7466 = vunpack.c.h.b16 %v5590
          %v7467 = vunpack.c.l.b16 %v5591
          %v7468 = vunpack.c.h.b16 %v5591
          %v7469 = vunpack.c.l.b16 %v5592
          %v7470 = vunpack.c.h.b16 %v5592
          %v7471 = vunpack.c.l.b16 %v5593
          %v7472 = vunpack.c.h.b16 %v5593
          %v7473 = vunpack.c.l.b16 %v5594
          %v7474 = vunpack.c.h.b16 %v5594
          %v7475 = vunpack.c.l.b16 %v5595
          %v7476 = vunpack.c.h.b16 %v5595
          %v7477 = vunpack.c.l.b16 %v5596
          %v7478 = vunpack.c.h.b16 %v5596
          %v7479 = vunpack.c.l.b16 %v5597
          %v7480 = vunpack.c.h.b16 %v5597
          %v7481 = vunpack.c.l.b16 %v5598
          %v7482 = vunpack.c.h.b16 %v5598
          %v7483 = vunpack.c.l.b16 %v5599
          %v7484 = vunpack.c.h.b16 %v5599
          %v7485 = vunpack.c.l.b16 %v5600
          %v7486 = vunpack.c.h.b16 %v5600
          %v7487 = vunpack.c.l.b16 %v5601
          %v7488 = vunpack.c.h.b16 %v5601
          %v7489 = vunpack.c.l.b16 %v5602
          %v7490 = vunpack.c.h.b16 %v5602
          %v7491 = vunpack.c.l.b16 %v5603
          %v7492 = vunpack.c.h.b16 %v5603
          %v7493 = vunpack.c.l.b16 %v5604
          %v7494 = vunpack.c.h.b16 %v5604
          %v7495 = vunpack.c.l.b16 %v5605
          %v7496 = vunpack.c.h.b16 %v5605
          %v7497 = vunpack.c.l.b16 %v5606
          %v7498 = vunpack.c.h.b16 %v5606
          %v7499 = vunpack.c.l.b16 %v5607
          %v7500 = vunpack.c.h.b16 %v5607
          %v7501 = vunpack.c.l.b16 %v5608
          %v7502 = vunpack.c.h.b16 %v5608
          %v7503 = vunpack.c.l.b16 %v5609
          %v7504 = vunpack.c.h.b16 %v5609
          %v7505 = vunpack.c.l.b16 %v5610
          %v7506 = vunpack.c.h.b16 %v5610
          %v7507 = vunpack.c.l.b16 %v5611
          %v7508 = vunpack.c.h.b16 %v5611
          %v7509 = vunpack.c.l.b16 %v5612
          %v7510 = vunpack.c.h.b16 %v5612
          %v7511 = vunpack.c.l.b16 %v5613
          %v7512 = vunpack.c.h.b16 %v5613
          %v7513 = vunpack.c.l.b16 %v5614
          %v7514 = vunpack.c.h.b16 %v5614
          %v7515 = vunpack.c.l.b16 %v5615
          %v7516 = vunpack.c.h.b16 %v5615
          %v7517 = vunpack.c.l.b16 %v5616
          %v7518 = vunpack.c.h.b16 %v5616
          %v7519 = vunpack.c.l.b16 %v5617
          %v7520 = vunpack.c.h.b16 %v5617
          %v7521 = vunpack.c.l.b16 %v5618
          %v7522 = vunpack.c.h.b16 %v5618
          %v7523 = vunpack.c.l.b16 %v5619
          %v7524 = vunpack.c.h.b16 %v5619
          %v7525 = vunpack.c.l.b16 %v5620
          %v7526 = vunpack.c.h.b16 %v5620
          %v7527 = vunpack.c.l.b16 %v5621
          %v7528 = vunpack.c.h.b16 %v5621
          %v7529 = vunpack.c.l.b16 %v5622
          %v7530 = vunpack.c.h.b16 %v5622
          %v7531 = vunpack.c.l.b16 %v5623
          %v7532 = vunpack.c.h.b16 %v5623
          %v7533 = vunpack.c.l.b16 %v5624
          %v7534 = vunpack.c.h.b16 %v5624
          %v7535 = vunpack.c.l.b16 %v5625
          %v7536 = vunpack.c.h.b16 %v5625
          %v7537 = vunpack.c.l.b16 %v5626
          %v7538 = vunpack.c.h.b16 %v5626
          %v7539 = vunpack.c.l.b16 %v5627
          %v7540 = vunpack.c.h.b16 %v5627
          %v7541 = vunpack.c.l.b16 %v5628
          %v7542 = vunpack.c.h.b16 %v5628
          %v7543 = vunpack.c.l.b16 %v5629
          %v7544 = vunpack.c.h.b16 %v5629
          %v7545 = vunpack.c.l.b16 %v5630
          %v7546 = vunpack.c.h.b16 %v5630
          %v7547 = vunpack.c.l.b16 %v5631
          %v7548 = vunpack.c.h.b16 %v5631
          %v7549 = vunpack.c.l.b16 %v5632
          %v7550 = vunpack.c.h.b16 %v5632
          %v7551 = vunpack.c.l.b16 %v5633
          %v7552 = vunpack.c.h.b16 %v5633
          %v7553 = vunpack.c.l.b16 %v5634
          %v7554 = vunpack.c.h.b16 %v5634
          %v7555 = vunpack.c.l.b16 %v5635
          %v7556 = vunpack.c.h.b16 %v5635
          %v7557 = vunpack.c.l.b16 %v5636
          %v7558 = vunpack.c.h.b16 %v5636
          %v7559 = vunpack.c.l.b16 %v5637
          %v7560 = vunpack.c.h.b16 %v5637
          %v7561 = vunpack.c.l.b16 %v5638
          %v7562 = vunpack.c.h.b16 %v5638
          %v7563 = vunpack.c.l.b16 %v5639
          %v7564 = vunpack.c.h.b16 %v5639
          %v7565 = vunpack.c.l.b16 %v5640
          %v7566 = vunpack.c.h.b16 %v5640
          %v7567 = vunpack.c.l.b16 %v5641
          %v7568 = vunpack.c.h.b16 %v5641
          %v7569 = vunpack.c.l.b16 %v5642
          %v7570 = vunpack.c.h.b16 %v5642
          %v7571 = vunpack.c.l.b16 %v5643
          %v7572 = vunpack.c.h.b16 %v5643
          %v7573 = vunpack.c.l.b16 %v5644
          %v7574 = vunpack.c.h.b16 %v5644
          %v7575 = vunpack.c.l.b16 %v5645
          %v7576 = vunpack.c.h.b16 %v5645
          %v7577 = vunpack.c.l.b16 %v5646
          %v7578 = vunpack.c.h.b16 %v5646
          %v7579 = vunpack.c.l.b16 %v5647
          %v7580 = vunpack.c.h.b16 %v5647
          %v7581 = vunpack.c.l.b16 %v5648
          %v7582 = vunpack.c.h.b16 %v5648
          %v7583 = vunpack.c.l.b16 %v5649
          %v7584 = vunpack.c.h.b16 %v5649
          %v7585 = vunpack.c.l.b16 %v5650
          %v7586 = vunpack.c.h.b16 %v5650
          %v7587 = vunpack.c.l.b16 %v5651
          %v7588 = vunpack.c.h.b16 %v5651
          %v7589 = vunpack.c.l.b16 %v5652
          %v7590 = vunpack.c.h.b16 %v5652
          %v7591 = vunpack.c.l.b16 %v5653
          %v7592 = vunpack.c.h.b16 %v5653
          %v7593 = vunpack.c.l.b16 %v5654
          %v7594 = vunpack.c.h.b16 %v5654
          %v7595 = vunpack.c.l.b16 %v5655
          %v7596 = vunpack.c.h.b16 %v5655
          %v7597 = vunpack.c.l.b16 %v5656
          %v7598 = vunpack.c.h.b16 %v5656
          %v7599 = vunpack.c.l.b16 %v5657
          %v7600 = vunpack.c.h.b16 %v5657
          %v7601 = vunpack.c.l.b16 %v5658
          %v7602 = vunpack.c.h.b16 %v5658
          %v7603 = vunpack.c.l.b16 %v5659
          %v7604 = vunpack.c.h.b16 %v5659
          %v7605 = vunpack.c.l.b16 %v5660
          %v7606 = vunpack.c.h.b16 %v5660
          %v7607 = vunpack.c.l.b16 %v5661
          %v7608 = vunpack.c.h.b16 %v5661
          %v7609 = vunpack.c.l.b16 %v5662
          %v7610 = vunpack.c.h.b16 %v5662
          %v7611 = vunpack.c.l.b16 %v5663
          %v7612 = vunpack.c.h.b16 %v5663
          %v7613 = vunpack.c.l.b16 %v5664
          %v7614 = vunpack.c.h.b16 %v5664
          %v7615 = vunpack.c.l.b16 %v5665
          %v7616 = vunpack.c.h.b16 %v5665
          %v7617 = vunpack.c.l.b16 %v5666
          %v7618 = vunpack.c.h.b16 %v5666
          %v7619 = vunpack.c.l.b16 %v5667
          %v7620 = vunpack.c.h.b16 %v5667
          %v7621 = vunpack.c.l.b16 %v5668
          %v7622 = vunpack.c.h.b16 %v5668
          %v7623 = vunpack.c.l.b16 %v5669
          %v7624 = vunpack.c.h.b16 %v5669
          %v7625 = vunpack.c.l.b16 %v5670
          %v7626 = vunpack.c.h.b16 %v5670
          %v7627 = vunpack.c.l.b16 %v5671
          %v7628 = vunpack.c.h.b16 %v5671
          %v7629 = vunpack.c.l.b16 %v5672
          %v7630 = vunpack.c.h.b16 %v5672
          %v7631 = vunpack.c.l.b16 %v5673
          %v7632 = vunpack.c.h.b16 %v5673
          %v7633 = vunpack.c.l.b16 %v5674
          %v7634 = vunpack.c.h.b16 %v5674
          %v7635 = vunpack.c.l.b16 %v5675
          %v7636 = vunpack.c.h.b16 %v5675
          %v7637 = vunpack.c.l.b16 %v5676
          %v7638 = vunpack.c.h.b16 %v5676
          %v7639 = vunpack.c.l.b16 %v5677
          %v7640 = vunpack.c.h.b16 %v5677
          %v7641 = vunpack.c.l.b16 %v5678
          %v7642 = vunpack.c.h.b16 %v5678
          %v7643 = vunpack.c.l.b16 %v5679
          %v7644 = vunpack.c.h.b16 %v5679
          %v7645 = vunpack.c.l.b16 %v5680
          %v7646 = vunpack.c.h.b16 %v5680
          %v7647 = vunpack.c.l.b16 %v5681
          %v7648 = vunpack.c.h.b16 %v5681
          %v7649 = vunpack.c.l.b16 %v5682
          %v7650 = vunpack.c.h.b16 %v5682
          %v7651 = vunpack.c.l.b16 %v5683
          %v7652 = vunpack.c.h.b16 %v5683
          %v7653 = vunpack.c.l.b16 %v5684
          %v7654 = vunpack.c.h.b16 %v5684
          %v7655 = vunpack.c.l.b16 %v5685
          %v7656 = vunpack.c.h.b16 %v5685
          %v7657 = vunpack.c.l.b16 %v5686
          %v7658 = vunpack.c.h.b16 %v5686
          %v7659 = vunpack.c.l.b16 %v5687
          %v7660 = vunpack.c.h.b16 %v5687
          %v7661 = vunpack.c.l.b16 %v5688
          %v7662 = vunpack.c.h.b16 %v5688
          %v7663 = vunpack.c.l.b16 %v5689
          %v7664 = vunpack.c.h.b16 %v5689
          %v7665 = vunpack.c.l.b16 %v5690
          %v7666 = vunpack.c.h.b16 %v5690
          %v7667 = vunpack.c.l.b16 %v5691
          %v7668 = vunpack.c.h.b16 %v5691
          %v7669 = vunpack.c.l.b16 %v5692
          %v7670 = vunpack.c.h.b16 %v5692
          %v7671 = vunpack.c.l.b16 %v5693
          %v7672 = vunpack.c.h.b16 %v5693
          %v7673 = vunpack.c.l.b16 %v5694
          %v7674 = vunpack.c.h.b16 %v5694
          %v7675 = vunpack.c.l.b16 %v5695
          %v7676 = vunpack.c.h.b16 %v5695
          %v7677 = vunpack.c.l.b16 %v5696
          %v7678 = vunpack.c.h.b16 %v5696
          %v7679 = vunpack.c.l.b16 %v5697
          %v7680 = vunpack.c.h.b16 %v5697
          %v7681 = vunpack.c.l.b16 %v5698
          %v7682 = vunpack.c.h.b16 %v5698
          %v7683 = vunpack.c.l.b16 %v5699
          %v7684 = vunpack.c.h.b16 %v5699
          %v7685 = vunpack.c.l.b16 %v5700
          %v7686 = vunpack.c.h.b16 %v5700
          %v7687 = vunpack.c.l.b16 %v5701
          %v7688 = vunpack.c.h.b16 %v5701
          %v7689 = vunpack.c.l.b16 %v5702
          %v7690 = vunpack.c.h.b16 %v5702
          %v7691 = vunpack.c.l.b16 %v5703
          %v7692 = vunpack.c.h.b16 %v5703
          %v7693 = vunpack.c.l.b16 %v5704
          %v7694 = vunpack.c.h.b16 %v5704
          %v7695 = vunpack.c.l.b16 %v5705
          %v7696 = vunpack.c.h.b16 %v5705
          %v7697 = vunpack.c.l.b16 %v5706
          %v7698 = vunpack.c.h.b16 %v5706
          %v7699 = vunpack.c.l.b16 %v5707
          %v7700 = vunpack.c.h.b16 %v5707
          %v7701 = vunpack.c.l.b16 %v5708
          %v7702 = vunpack.c.h.b16 %v5708
          %v7703 = vunpack.c.l.b16 %v5709
          %v7704 = vunpack.c.h.b16 %v5709
          %v7705 = vunpack.c.l.b16 %v5710
          %v7706 = vunpack.c.h.b16 %v5710
          %v7707 = vunpack.c.l.b16 %v5711
          %v7708 = vunpack.c.h.b16 %v5711
          %v7709 = vunpack.c.l.b16 %v5712
          %v7710 = vunpack.c.h.b16 %v5712
          %v7711 = vunpack.c.l.b16 %v5713
          %v7712 = vunpack.c.h.b16 %v5713
          %v7713 = vunpack.c.l.b16 %v5714
          %v7714 = vunpack.c.h.b16 %v5714
          %v7715 = vunpack.c.l.b16 %v5715
          %v7716 = vunpack.c.h.b16 %v5715
          %v7717 = vunpack.c.l.b16 %v5716
          %v7718 = vunpack.c.h.b16 %v5716
          %v7719 = vunpack.c.l.b16 %v5717
          %v7720 = vunpack.c.h.b16 %v5717
          %v7721 = vunpack.c.l.b16 %v5718
          %v7722 = vunpack.c.h.b16 %v5718
          %v7723 = vunpack.c.l.b16 %v5719
          %v7724 = vunpack.c.h.b16 %v5719
          %v7725 = vunpack.c.l.b16 %v5720
          %v7726 = vunpack.c.h.b16 %v5720
          %v7727 = vunpack.c.l.b16 %v5721
          %v7728 = vunpack.c.h.b16 %v5721
          %v7729 = vunpack.c.l.b16 %v5722
          %v7730 = vunpack.c.h.b16 %v5722
          %v7731 = vunpack.c.l.b16 %v5723
          %v7732 = vunpack.c.h.b16 %v5723
          %v7733 = vunpack.c.l.b16 %v5724
          %v7734 = vunpack.c.h.b16 %v5724
          %v7735 = vunpack.c.l.b16 %v5725
          %v7736 = vunpack.c.h.b16 %v5725
          %v7737 = vunpack.c.l.b16 %v5726
          %v7738 = vunpack.c.h.b16 %v5726
          %v7739 = vunpack.c.l.b16 %v5727
          %v7740 = vunpack.c.h.b16 %v5727
          %v7741 = vunpack.c.l.b16 %v5728
          %v7742 = vunpack.c.h.b16 %v5728
          %v7743 = vunpack.c.l.b16 %v5729
          %v7744 = vunpack.c.h.b16 %v5729
          %v7745 = vunpack.c.l.b16 %v5730
          %v7746 = vunpack.c.h.b16 %v5730
          %v7747 = vunpack.c.l.b16 %v5731
          %v7748 = vunpack.c.h.b16 %v5731
          %v7749 = vunpack.c.l.b16 %v5732
          %v7750 = vunpack.c.h.b16 %v5732
          %v7751 = vunpack.c.l.b16 %v5733
          %v7752 = vunpack.c.h.b16 %v5733
          %v7753 = vunpack.c.l.b16 %v5734
          %v7754 = vunpack.c.h.b16 %v5734
          %v7755 = vunpack.c.l.b16 %v5735
          %v7756 = vunpack.c.h.b16 %v5735
          %v7757 = vunpack.c.l.b16 %v5736
          %v7758 = vunpack.c.h.b16 %v5736
          %v7759 = vunpack.c.l.b16 %v5737
          %v7760 = vunpack.c.h.b16 %v5737
          %v7761 = vunpack.c.l.b16 %v5738
          %v7762 = vunpack.c.h.b16 %v5738
          %v7763 = vunpack.c.l.b16 %v5739
          %v7764 = vunpack.c.h.b16 %v5739
          %v7765 = vunpack.c.l.b16 %v5740
          %v7766 = vunpack.c.h.b16 %v5740
          %v7767 = vunpack.c.l.b16 %v5741
          %v7768 = vunpack.c.h.b16 %v5741
          %v7769 = vunpack.c.l.b16 %v5742
          %v7770 = vunpack.c.h.b16 %v5742
          %v7771 = vunpack.c.l.b16 %v5743
          %v7772 = vunpack.c.h.b16 %v5743
          %v7773 = vunpack.c.l.b16 %v5744
          %v7774 = vunpack.c.h.b16 %v5744
          %v7775 = vunpack.c.l.b16 %v5745
          %v7776 = vunpack.c.h.b16 %v5745
          %v7777 = vunpack.c.l.b16 %v5746
          %v7778 = vunpack.c.h.b16 %v5746
          %v7779 = vunpack.c.l.b16 %v5747
          %v7780 = vunpack.c.h.b16 %v5747
          %v7781 = vunpack.c.l.b16 %v5748
          %v7782 = vunpack.c.h.b16 %v5748
          %v7783 = vunpack.c.l.b16 %v5749
          %v7784 = vunpack.c.h.b16 %v5749
          %v7785 = vunpack.c.l.b16 %v5750
          %v7786 = vunpack.c.h.b16 %v5750
          %v7787 = vunpack.c.l.b16 %v5751
          %v7788 = vunpack.c.h.b16 %v5751
          %v7789 = vunpack.c.l.b16 %v5752
          %v7790 = vunpack.c.h.b16 %v5752
          %v7791 = vunpack.c.l.b16 %v5753
          %v7792 = vunpack.c.h.b16 %v5753
          %v7793 = vunpack.c.l.b16 %v5754
          %v7794 = vunpack.c.h.b16 %v5754
          %v7795 = vunpack.c.l.b16 %v5755
          %v7796 = vunpack.c.h.b16 %v5755
          %v7797 = vunpack.c.l.b16 %v5756
          %v7798 = vunpack.c.h.b16 %v5756
          %v7799 = vunpack.c.l.b16 %v5757
          %v7800 = vunpack.c.h.b16 %v5757
          %v7801 = vunpack.c.l.b16 %v5758
          %v7802 = vunpack.c.h.b16 %v5758
          %v7803 = vunpack.c.l.b16 %v5759
          %v7804 = vunpack.c.h.b16 %v5759
          %v7805 = vunpack.c.l.b16 %v5760
          %v7806 = vunpack.c.h.b16 %v5760
          %v7807 = vunpack.c.l.b16 %v5761
          %v7808 = vunpack.c.h.b16 %v5761
          %v7809 = vunpack.c.l.b16 %v5762
          %v7810 = vunpack.c.h.b16 %v5762
          %v7811 = vunpack.c.l.b16 %v5763
          %v7812 = vunpack.c.h.b16 %v5763
          %v7813 = vunpack.c.l.b16 %v5764
          %v7814 = vunpack.c.h.b16 %v5764
          %v7815 = vunpack.c.l.b16 %v5765
          %v7816 = vunpack.c.h.b16 %v5765
          %v7817 = vunpack.c.l.b16 %v5766
          %v7818 = vunpack.c.h.b16 %v5766
          %v7819 = vunpack.c.l.b16 %v5767
          %v7820 = vunpack.c.h.b16 %v5767
          %v7821 = vunpack.c.l.b16 %v5768
          %v7822 = vunpack.c.h.b16 %v5768
          %v7823 = vunpack.c.l.b16 %v5769
          %v7824 = vunpack.c.h.b16 %v5769
          %v7825 = vunpack.c.l.b16 %v5770
          %v7826 = vunpack.c.h.b16 %v5770
          %v7827 = vunpack.c.l.b16 %v5771
          %v7828 = vunpack.c.h.b16 %v5771
          %v7829 = vunpack.c.l.b16 %v5772
          %v7830 = vunpack.c.h.b16 %v5772
          %v7831 = vunpack.c.l.b16 %v5773
          %v7832 = vunpack.c.h.b16 %v5773
          %v7833 = vunpack.c.l.b16 %v5774
          %v7834 = vunpack.c.h.b16 %v5774
          %v7835 = vunpack.c.l.b16 %v5775
          %v7836 = vunpack.c.h.b16 %v5775
          %v7837 = vunpack.c.l.b16 %v5776
          %v7838 = vunpack.c.h.b16 %v5776
          %v7839 = vunpack.c.l.b16 %v5777
          %v7840 = vunpack.c.h.b16 %v5777
          %v7841 = vunpack.c.l.b16 %v5778
          %v7842 = vunpack.c.h.b16 %v5778
          %v7843 = vunpack.c.l.b16 %v5779
          %v7844 = vunpack.c.h.b16 %v5779
          %v7845 = vunpack.c.l.b16 %v5780
          %v7846 = vunpack.c.h.b16 %v5780
          %v7847 = vunpack.c.l.b16 %v5781
          %v7848 = vunpack.c.h.b16 %v5781
          %v7849 = vunpack.c.l.b16 %v5782
          %v7850 = vunpack.c.h.b16 %v5782
          %v7851 = vunpack.c.l.b16 %v5783
          %v7852 = vunpack.c.h.b16 %v5783
          %v7853 = vunpack.c.l.b16 %v5784
          %v7854 = vunpack.c.h.b16 %v5784
          %v7855 = vunpack.c.l.b16 %v5785
          %v7856 = vunpack.c.h.b16 %v5785
          %v7857 = vunpack.c.l.b16 %v5786
          %v7858 = vunpack.c.h.b16 %v5786
          %v7859 = vunpack.c.l.b16 %v5787
          %v7860 = vunpack.c.h.b16 %v5787
          %v7861 = vunpack.c.l.b16 %v5788
          %v7862 = vunpack.c.h.b16 %v5788
          %v7863 = vunpack.c.l.b16 %v5789
          %v7864 = vunpack.c.h.b16 %v5789
          %v7865 = vunpack.c.l.b16 %v5790
          %v7866 = vunpack.c.h.b16 %v5790
          %v7867 = vunpack.c.l.b16 %v5791
          %v7868 = vunpack.c.h.b16 %v5791
          %v7869 = vunpack.c.l.b16 %v5792
          %v7870 = vunpack.c.h.b16 %v5792
          %v7871 = vunpack.c.l.b16 %v5793
          %v7872 = vunpack.c.h.b16 %v5793
          %v7873 = vunpack.c.l.b16 %v5794
          %v7874 = vunpack.c.h.b16 %v5794
          %v7875 = vunpack.c.l.b16 %v5795
          %v7876 = vunpack.c.h.b16 %v5795
          %v7877 = vunpack.c.l.b16 %v5796
          %v7878 = vunpack.c.h.b16 %v5796
          %v7879 = vunpack.c.l.b16 %v5797
          %v7880 = vunpack.c.h.b16 %v5797
          %v7881 = vunpack.c.l.b16 %v5798
          %v7882 = vunpack.c.h.b16 %v5798
          %v7883 = vunpack.c.l.b16 %v5799
          %v7884 = vunpack.c.h.b16 %v5799
          %v7885 = vunpack.c.l.b16 %v5800
          %v7886 = vunpack.c.h.b16 %v5800
          %v7887 = vunpack.c.l.b16 %v5801
          %v7888 = vunpack.c.h.b16 %v5801
          %v7889 = vunpack.c.l.b16 %v5802
          %v7890 = vunpack.c.h.b16 %v5802
          %v7891 = vunpack.c.l.b16 %v5803
          %v7892 = vunpack.c.h.b16 %v5803
          %v7893 = vunpack.c.l.b16 %v5804
          %v7894 = vunpack.c.h.b16 %v5804
          %v7895 = vunpack.c.l.b16 %v5805
          %v7896 = vunpack.c.h.b16 %v5805
          %v7897 = vunpack.c.l.b16 %v5806
          %v7898 = vunpack.c.h.b16 %v5806
          %v7899 = vunpack.c.l.b16 %v5807
          %v7900 = vunpack.c.h.b16 %v5807
          %v7901 = vunpack.c.l.b16 %v5808
          %v7902 = vunpack.c.h.b16 %v5808
          %v7903 = vunpack.c.l.b16 %v5809
          %v7904 = vunpack.c.h.b16 %v5809
          %v7905 = vunpack.c.l.b16 %v5810
          %v7906 = vunpack.c.h.b16 %v5810
          %v7907 = vunpack.c.l.b16 %v5811
          %v7908 = vunpack.c.h.b16 %v5811
          %v7909 = vunpack.c.l.b16 %v5812
          %v7910 = vunpack.c.h.b16 %v5812
          %v7911 = vunpack.c.l.b16 %v5813
          %v7912 = vunpack.c.h.b16 %v5813
          %v7913 = vunpack.c.l.b16 %v5814
          %v7914 = vunpack.c.h.b16 %v5814
          %v7915 = vunpack.c.l.b16 %v5815
          %v7916 = vunpack.c.h.b16 %v5815
          %v7917 = vunpack.c.l.b16 %v5816
          %v7918 = vunpack.c.h.b16 %v5816
          %v7919 = vunpack.c.l.b16 %v5817
          %v7920 = vunpack.c.h.b16 %v5817
          %v7921 = vunpack.c.l.b16 %v5818
          %v7922 = vunpack.c.h.b16 %v5818
          %v7923 = vunpack.c.l.b16 %v5819
          %v7924 = vunpack.c.h.b16 %v5819
          %v7925 = vunpack.c.l.b16 %v5820
          %v7926 = vunpack.c.h.b16 %v5820
          %v7927 = vunpack.c.l.b16 %v5821
          %v7928 = vunpack.c.h.b16 %v5821
          %v7929 = vunpack.c.l.b16 %v5822
          %v7930 = vunpack.c.h.b16 %v5822
          %v7931 = vunpack.c.l.b16 %v5823
          %v7932 = vunpack.c.h.b16 %v5823
          %v7933 = vunpack.c.l.b16 %v5824
          %v7934 = vunpack.c.h.b16 %v5824
          %v7935 = vunpack.c.l.b16 %v5825
          %v7936 = vunpack.c.h.b16 %v5825
          %v7937 = vunpack.c.l.b16 %v5826
          %v7938 = vunpack.c.h.b16 %v5826
          %v7939 = vunpack.c.l.b16 %v5827
          %v7940 = vunpack.c.h.b16 %v5827
          %v7941 = vunpack.c.l.b16 %v5828
          %v7942 = vunpack.c.h.b16 %v5828
          %v7943 = vunpack.c.l.b16 %v5829
          %v7944 = vunpack.c.h.b16 %v5829
          %v7945 = vunpack.c.l.b16 %v5830
          %v7946 = vunpack.c.h.b16 %v5830
          %v7947 = vunpack.c.l.b16 %v5831
          %v7948 = vunpack.c.h.b16 %v5831
          %v7949 = vunpack.c.l.b16 %v5832
          %v7950 = vunpack.c.h.b16 %v5832
          %v7951 = vunpack.c.l.b16 %v5833
          %v7952 = vunpack.c.h.b16 %v5833
          %v7953 = vunpack.c.l.b16 %v5834
          %v7954 = vunpack.c.h.b16 %v5834
          %v7955 = vunpack.c.l.b16 %v5835
          %v7956 = vunpack.c.h.b16 %v5835
          %v7957 = vunpack.c.l.b16 %v5836
          %v7958 = vunpack.c.h.b16 %v5836
          %v7959 = vunpack.c.l.b16 %v5837
          %v7960 = vunpack.c.h.b16 %v5837
          %v7961 = vunpack.c.l.b16 %v5838
          %v7962 = vunpack.c.h.b16 %v5838
          %v7963 = vunpack.c.l.b16 %v5839
          %v7964 = vunpack.c.h.b16 %v5839
          %v7965 = vunpack.c.l.b16 %v5840
          %v7966 = vunpack.c.h.b16 %v5840
          %v7967 = vunpack.c.l.b16 %v5841
          %v7968 = vunpack.c.h.b16 %v5841
          %v7969 = vunpack.c.l.b16 %v5842
          %v7970 = vunpack.c.h.b16 %v5842
          %v7971 = vunpack.c.l.b16 %v5843
          %v7972 = vunpack.c.h.b16 %v5843
          %v7973 = vunpack.c.l.b16 %v5844
          %v7974 = vunpack.c.h.b16 %v5844
          %v7975 = vunpack.c.l.b16 %v5845
          %v7976 = vunpack.c.h.b16 %v5845
          %v7977 = vunpack.c.l.b16 %v5846
          %v7978 = vunpack.c.h.b16 %v5846
          %v7979 = vunpack.c.l.b16 %v5847
          %v7980 = vunpack.c.h.b16 %v5847
          %v7981 = vunpack.c.l.b16 %v5848
          %v7982 = vunpack.c.h.b16 %v5848
          %v7983 = vunpack.c.l.b16 %v5849
          %v7984 = vunpack.c.h.b16 %v5849
          %v7985 = vunpack.c.l.b16 %v5850
          %v7986 = vunpack.c.h.b16 %v5850
          %v7987 = vunpack.c.l.b16 %v5851
          %v7988 = vunpack.c.h.b16 %v5851
          %v7989 = vunpack.c.l.b16 %v5852
          %v7990 = vunpack.c.h.b16 %v5852
          %v7991 = vunpack.c.l.b16 %v5853
          %v7992 = vunpack.c.h.b16 %v5853
          %v7993 = vunpack.c.l.b16 %v5854
          %v7994 = vunpack.c.h.b16 %v5854
          %v7995 = vunpack.c.l.b16 %v5855
          %v7996 = vunpack.c.h.b16 %v5855
          %v7997 = vunpack.c.l.b16 %v5856
          %v7998 = vunpack.c.h.b16 %v5856
          %v7999 = vunpack.c.l.b16 %v5857
          %v8000 = vunpack.c.h.b16 %v5857
          %v8001 = vunpack.c.l.b16 %v5858
          %v8002 = vunpack.c.h.b16 %v5858
          %v8003 = vunpack.c.l.b16 %v5859
          %v8004 = vunpack.c.h.b16 %v5859
          %v8005 = vunpack.c.l.b16 %v5860
          %v8006 = vunpack.c.h.b16 %v5860
          %v8007 = vunpack.c.l.b16 %v5861
          %v8008 = vunpack.c.h.b16 %v5861
          %v8009 = vunpack.c.l.b16 %v5862
          %v8010 = vunpack.c.h.b16 %v5862
          %v8011 = vunpack.c.l.b16 %v5863
          %v8012 = vunpack.c.h.b16 %v5863
          %v8013 = vunpack.c.l.b16 %v5864
          %v8014 = vunpack.c.h.b16 %v5864
          %v8015 = vunpack.c.l.b16 %v5865
          %v8016 = vunpack.c.h.b16 %v5865
          %v8017 = vunpack.c.l.b16 %v5866
          %v8018 = vunpack.c.h.b16 %v5866
          %v8019 = vunpack.c.l.b16 %v5867
          %v8020 = vunpack.c.h.b16 %v5867
          %v8021 = vunpack.c.l.b16 %v5868
          %v8022 = vunpack.c.h.b16 %v5868
          %v8023 = vunpack.c.l.b16 %v5869
          %v8024 = vunpack.c.h.b16 %v5869
          %v8025 = vunpack.c.l.b16 %v5870
          %v8026 = vunpack.c.h.b16 %v5870
          %v8027 = vunpack.c.l.b16 %v5871
          %v8028 = vunpack.c.h.b16 %v5871
          %v8029 = vunpack.c.l.b16 %v5872
          %v8030 = vunpack.c.h.b16 %v5872
          %v8031 = vunpack.c.l.b16 %v5873
          %v8032 = vunpack.c.h.b16 %v5873
          %v8033 = vunpack.c.l.b16 %v5874
          %v8034 = vunpack.c.h.b16 %v5874
          %v8035 = vunpack.c.l.b16 %v5875
          %v8036 = vunpack.c.h.b16 %v5875
          %v8037 = vunpack.c.l.b16 %v5876
          %v8038 = vunpack.c.h.b16 %v5876
          %v8039 = vunpack.c.l.b16 %v5877
          %v8040 = vunpack.c.h.b16 %v5877
          %v8041 = vunpack.c.l.b16 %v5878
          %v8042 = vunpack.c.h.b16 %v5878
          %v8043 = vunpack.c.l.b16 %v5879
          %v8044 = vunpack.c.h.b16 %v5879
          %v8045 = vunpack.c.l.b16 %v5880
          %v8046 = vunpack.c.h.b16 %v5880
          %v8047 = vunpack.c.l.b16 %v5881
          %v8048 = vunpack.c.h.b16 %v5881
          %v8049 = vunpack.c.l.b16 %v5882
          %v8050 = vunpack.c.h.b16 %v5882
          %v8051 = vunpack.c.l.b16 %v5883
          %v8052 = vunpack.c.h.b16 %v5883
          %v8053 = vunpack.c.l.b16 %v5884
          %v8054 = vunpack.c.h.b16 %v5884
          %v8055 = vunpack.c.l.b16 %v5885
          %v8056 = vunpack.c.h.b16 %v5885
          %v8057 = vunpack.c.l.b16 %v5886
          %v8058 = vunpack.c.h.b16 %v5886
          %v8059 = vunpack.c.l.b16 %v5887
          %v8060 = vunpack.c.h.b16 %v5887
          %v8061 = vunpack.c.l.b16 %v5888
          %v8062 = vunpack.c.h.b16 %v5888
          %v8063 = vunpack.c.l.b16 %v5889
          %v8064 = vunpack.c.h.b16 %v5889
          %v8065 = vunpack.c.l.b16 %v5890
          %v8066 = vunpack.c.h.b16 %v5890
          %v8067 = vunpack.c.l.b16 %v5891
          %v8068 = vunpack.c.h.b16 %v5891
          %v8069 = vunpack.c.l.b16 %v5892
          %v8070 = vunpack.c.h.b16 %v5892
          %v8071 = vunpack.c.l.b16 %v5893
          %v8072 = vunpack.c.h.b16 %v5893
          %v8073 = vunpack.c.l.b16 %v5894
          %v8074 = vunpack.c.h.b16 %v5894
          %v8075 = vunpack.c.l.b16 %v5895
          %v8076 = vunpack.c.h.b16 %v5895
          %v8077 = vunpack.c.l.b16 %v5896
          %v8078 = vunpack.c.h.b16 %v5896
          %v8079 = vunpack.c.l.b16 %v5897
          %v8080 = vunpack.c.h.b16 %v5897
          %v8081 = vunpack.c.l.b16 %v5898
          %v8082 = vunpack.c.h.b16 %v5898
          %v8083 = vunpack.c.l.b16 %v5899
          %v8084 = vunpack.c.h.b16 %v5899
          %v8085 = vunpack.c.l.b16 %v5900
          %v8086 = vunpack.c.h.b16 %v5900
          %v8087 = vunpack.c.l.b16 %v5901
          %v8088 = vunpack.c.h.b16 %v5901
          %v8089 = vunpack.c.l.b16 %v5902
          %v8090 = vunpack.c.h.b16 %v5902
          %v8091 = vunpack.c.l.b16 %v5903
          %v8092 = vunpack.c.h.b16 %v5903
          %v8093 = vunpack.c.l.b16 %v5904
          %v8094 = vunpack.c.h.b16 %v5904
          %v8095 = vunpack.c.l.b16 %v5905
          %v8096 = vunpack.c.h.b16 %v5905
          %v8097 = vunpack.c.l.b16 %v5906
          %v8098 = vunpack.c.h.b16 %v5906
          %v8099 = vunpack.c.l.b16 %v5907
          %v8100 = vunpack.c.h.b16 %v5907
          %v8101 = vunpack.c.l.b16 %v5908
          %v8102 = vunpack.c.h.b16 %v5908
          %v8103 = vunpack.c.l.b16 %v5909
          %v8104 = vunpack.c.h.b16 %v5909
          %v8105 = vunpack.c.l.b16 %v5910
          %v8106 = vunpack.c.h.b16 %v5910
          %v8107 = vunpack.c.l.b16 %v5911
          %v8108 = vunpack.c.h.b16 %v5911
          %v8109 = vunpack.c.l.b16 %v5912
          %v8110 = vunpack.c.h.b16 %v5912
          %v8111 = vunpack.c.l.b16 %v5913
          %v8112 = vunpack.c.h.b16 %v5913
          %v8113 = vunpack.c.l.b16 %v5914
          %v8114 = vunpack.c.h.b16 %v5914
          %v8115 = vunpack.c.l.b16 %v5915
          %v8116 = vunpack.c.h.b16 %v5915
          %v8117 = vunpack.c.l.b16 %v5916
          %v8118 = vunpack.c.h.b16 %v5916
          %v8119 = vunpack.c.l.b16 %v5917
          %v8120 = vunpack.c.h.b16 %v5917
          %v8121 = vunpack.c.l.b16 %v5918
          %v8122 = vunpack.c.h.b16 %v5918
          %v8123 = vunpack.c.l.b16 %v5919
          %v8124 = vunpack.c.h.b16 %v5919
          %v8125 = vunpack.c.l.b16 %v5920
          %v8126 = vunpack.c.h.b16 %v5920
          %v8127 = vunpack.c.l.b16 %v5921
          %v8128 = vunpack.c.h.b16 %v5921
          %v8129 = vunpack.c.l.b16 %v5922
          %v8130 = vunpack.c.h.b16 %v5922
          %v8131 = vunpack.c.l.b16 %v5923
          %v8132 = vunpack.c.h.b16 %v5923
          %v8133 = vunpack.c.l.b16 %v5924
          %v8134 = vunpack.c.h.b16 %v5924
          %v8135 = vunpack.c.l.b16 %v5925
          %v8136 = vunpack.c.h.b16 %v5925
          %v8137 = vunpack.c.l.b16 %v5926
          %v8138 = vunpack.c.h.b16 %v5926
          %v8139 = vunpack.c.l.b16 %v5927
          %v8140 = vunpack.c.h.b16 %v5927
          %v8141 = vunpack.c.l.b16 %v5928
          %v8142 = vunpack.c.h.b16 %v5928
          %v8143 = vunpack.c.l.b16 %v5929
          %v8144 = vunpack.c.h.b16 %v5929
          %v8145 = vunpack.c.l.b16 %v5930
          %v8146 = vunpack.c.h.b16 %v5930
          %v8147 = vunpack.c.l.b16 %v5931
          %v8148 = vunpack.c.h.b16 %v5931
          %v8149 = vunpack.c.l.b16 %v5932
          %v8150 = vunpack.c.h.b16 %v5932
          %v8151 = vunpack.c.l.b16 %v5933
          %v8152 = vunpack.c.h.b16 %v5933
          %v8153 = vunpack.c.l.b16 %v5934
          %v8154 = vunpack.c.h.b16 %v5934
          %v8155 = vunpack.c.l.b16 %v5935
          %v8156 = vunpack.c.h.b16 %v5935
          %v8157 = vunpack.c.l.b16 %v5936
          %v8158 = vunpack.c.h.b16 %v5936
          %v8159 = vunpack.c.l.b16 %v5937
          %v8160 = vunpack.c.h.b16 %v5937
          %v8161 = vunpack.c.l.b16 %v5938
          %v8162 = vunpack.c.h.b16 %v5938
          %v8163 = vunpack.c.l.b16 %v5939
          %v8164 = vunpack.c.h.b16 %v5939
          %v8165 = vunpack.c.l.b16 %v5940
          %v8166 = vunpack.c.h.b16 %v5940
          %v8167 = vunpack.c.l.b16 %v5941
          %v8168 = vunpack.c.h.b16 %v5941
          %v8169 = vunpack.c.l.b16 %v5942
          %v8170 = vunpack.c.h.b16 %v5942
          %v8171 = vunpack.c.l.b16 %v5943
          %v8172 = vunpack.c.h.b16 %v5943
          %v8173 = vunpack.c.l.b16 %v5944
          %v8174 = vunpack.c.h.b16 %v5944
          %v8175 = vunpack.c.l.b16 %v5945
          %v8176 = vunpack.c.h.b16 %v5945
          %v8177 = vunpack.c.l.b16 %v5946
          %v8178 = vunpack.c.h.b16 %v5946
          %v8179 = vunpack.c.l.b16 %v5947
          %v8180 = vunpack.c.h.b16 %v5947
          %v8181 = vunpack.c.l.b16 %v5948
          %v8182 = vunpack.c.h.b16 %v5948
          %v8183 = vunpack.c.l.b16 %v5949
          %v8184 = vunpack.c.h.b16 %v5949
          %v8185 = vunpack.c.l.b16 %v5950
          %v8186 = vunpack.c.h.b16 %v5950
          %v8187 = vunpack.c.l.b16 %v5951
          %v8188 = vunpack.c.h.b16 %v5951
          %v8189 = vunpack.c.l.b16 %v5952
          %v8190 = vunpack.c.h.b16 %v5952
          %v8191 = vunpack.c.l.b16 %v5953
          %v8192 = vunpack.c.h.b16 %v5953
          %v8193 = vunpack.c.l.b16 %v5954
          %v8194 = vunpack.c.h.b16 %v5954
          %v8195 = vunpack.c.l.b16 %v5955
          %v8196 = vunpack.c.h.b16 %v5955
          %v8197 = vunpack.c.l.b16 %v5956
          %v8198 = vunpack.c.h.b16 %v5956
          %v8199 = vunpack.c.l.b16 %v5957
          %v8200 = vunpack.c.h.b16 %v5957
          %v8201 = vunpack.c.l.b16 %v5958
          %v8202 = vunpack.c.h.b16 %v5958
          %v8203 = vunpack.c.l.b16 %v5959
          %v8204 = vunpack.c.h.b16 %v5959
          %v8205 = vunpack.c.l.b16 %v5960
          %v8206 = vunpack.c.h.b16 %v5960
          %v8207 = vunpack.c.l.b16 %v5961
          %v8208 = vunpack.c.h.b16 %v5961
          %v8209 = vunpack.c.l.b16 %v5962
          %v8210 = vunpack.c.h.b16 %v5962
          %v8211 = vunpack.c.l.b16 %v5963
          %v8212 = vunpack.c.h.b16 %v5963
          %v8213 = vunpack.c.l.b16 %v5964
          %v8214 = vunpack.c.h.b16 %v5964
          %v8215 = vunpack.c.l.b16 %v5965
          %v8216 = vunpack.c.h.b16 %v5965
          %v8217 = vunpack.c.l.b16 %v5966
          %v8218 = vunpack.c.h.b16 %v5966
          %v8219 = vunpack.c.l.b16 %v5967
          %v8220 = vunpack.c.h.b16 %v5967
          %v8221 = vunpack.c.l.b16 %v5968
          %v8222 = vunpack.c.h.b16 %v5968
          %v8223 = vunpack.c.l.b16 %v5969
          %v8224 = vunpack.c.h.b16 %v5969
          %v8225 = vunpack.c.l.b16 %v5970
          %v8226 = vunpack.c.h.b16 %v5970
          %v8227 = vunpack.c.l.b16 %v5971
          %v8228 = vunpack.c.h.b16 %v5971
          %v8229 = vunpack.c.l.b16 %v5972
          %v8230 = vunpack.c.h.b16 %v5972
          %v8231 = vunpack.c.l.b16 %v5973
          %v8232 = vunpack.c.h.b16 %v5973
          %v8233 = vunpack.c.l.b16 %v5974
          %v8234 = vunpack.c.h.b16 %v5974
          %v8235 = vunpack.c.l.b16 %v5975
          %v8236 = vunpack.c.h.b16 %v5975
          %v8237 = vunpack.c.l.b16 %v5976
          %v8238 = vunpack.c.h.b16 %v5976
          %v8239 = vunpack.c.l.b16 %v5977
          %v8240 = vunpack.c.h.b16 %v5977
          %v8241 = vunpack.c.l.b16 %v5978
          %v8242 = vunpack.c.h.b16 %v5978
          %v8243 = vunpack.c.l.b16 %v5979
          %v8244 = vunpack.c.h.b16 %v5979
          %v8245 = vunpack.c.l.b16 %v5980
          %v8246 = vunpack.c.h.b16 %v5980
          %v8247 = vunpack.c.l.b16 %v5981
          %v8248 = vunpack.c.h.b16 %v5981
          %v8249 = vunpack.c.l.b16 %v5982
          %v8250 = vunpack.c.h.b16 %v5982
          %v8251 = vunpack.c.l.b16 %v5983
          %v8252 = vunpack.c.h.b16 %v5983
          %v8253 = vunpack.c.l.b16 %v5984
          %v8254 = vunpack.c.h.b16 %v5984
          %v8255 = vunpack.c.l.b16 %v5985
          %v8256 = vunpack.c.h.b16 %v5985
          %v8257 = vunpack.c.l.b16 %v5986
          %v8258 = vunpack.c.h.b16 %v5986
          %v8259 = vunpack.c.l.b16 %v5987
          %v8260 = vunpack.c.h.b16 %v5987
          %v8261 = vunpack.c.l.b16 %v5988
          %v8262 = vunpack.c.h.b16 %v5988
          %v8263 = vunpack.c.l.b16 %v5989
          %v8264 = vunpack.c.h.b16 %v5989
          %v8265 = vunpack.c.l.b16 %v5990
          %v8266 = vunpack.c.h.b16 %v5990
          %v8267 = vunpack.c.l.b16 %v5991
          %v8268 = vunpack.c.h.b16 %v5991
          %v8269 = vunpack.c.l.b16 %v5992
          %v8270 = vunpack.c.h.b16 %v5992
          %v8271 = vunpack.c.l.b16 %v5993
          %v8272 = vunpack.c.h.b16 %v5993
          %v8273 = vunpack.c.l.b16 %v5994
          %v8274 = vunpack.c.h.b16 %v5994
          %v8275 = vunpack.c.l.b16 %v5995
          %v8276 = vunpack.c.h.b16 %v5995
          %v8277 = vunpack.c.l.b16 %v5996
          %v8278 = vunpack.c.h.b16 %v5996
          %v8279 = vunpack.c.l.b16 %v5997
          %v8280 = vunpack.c.h.b16 %v5997
          %v8281 = vunpack.c.l.b16 %v5998
          %v8282 = vunpack.c.h.b16 %v5998
          %v8283 = vunpack.c.l.b16 %v5999
          %v8284 = vunpack.c.h.b16 %v5999
          %v8285 = vunpack.c.l.b16 %v6000
          %v8286 = vunpack.c.h.b16 %v6000
          %v8287 = vunpack.c.l.b16 %v6001
          %v8288 = vunpack.c.h.b16 %v6001
          %v8289 = vunpack.c.l.b16 %v6002
          %v8290 = vunpack.c.h.b16 %v6002
          %v8291 = vunpack.c.l.b16 %v6003
          %v8292 = vunpack.c.h.b16 %v6003
          %v8293 = vunpack.c.l.b16 %v6004
          %v8294 = vunpack.c.h.b16 %v6004
          %v8295 = vunpack.c.l.b16 %v6005
          %v8296 = vunpack.c.h.b16 %v6005
          %v8297 = vunpack.c.l.b16 %v6006
          %v8298 = vunpack.c.h.b16 %v6006
          %v8299 = vunpack.c.l.b16 %v6007
          %v8300 = vunpack.c.h.b16 %v6007
          %v8301 = vunpack.c.l.b16 %v6008
          %v8302 = vunpack.c.h.b16 %v6008
          %v8303 = vunpack.c.l.b16 %v6009
          %v8304 = vunpack.c.h.b16 %v6009
          %v8305 = vunpack.c.l.b16 %v6010
          %v8306 = vunpack.c.h.b16 %v6010
          %v8307 = vunpack.c.l.b16 %v6011
          %v8308 = vunpack.c.h.b16 %v6011
          %v8309 = vunpack.c.l.b16 %v6012
          %v8310 = vunpack.c.h.b16 %v6012
          %v8311 = vunpack.c.l.b16 %v6013
          %v8312 = vunpack.c.h.b16 %v6013
          %v8313 = vunpack.c.l.b16 %v6014
          %v8314 = vunpack.c.h.b16 %v6014
          %v8315 = vunpack.c.l.b16 %v6015
          %v8316 = vunpack.c.h.b16 %v6015
          %v8317 = vunpack.c.l.b16 %v6016
          %v8318 = vunpack.c.h.b16 %v6016
          %v8319 = vunpack.c.l.b16 %v6017
          %v8320 = vunpack.c.h.b16 %v6017
          %v8321 = vunpack.c.l.b16 %v6018
          %v8322 = vunpack.c.h.b16 %v6018
          %v8323 = vunpack.c.l.b16 %v6019
          %v8324 = vunpack.c.h.b16 %v6019
          %v8325 = vunpack.c.l.b16 %v6020
          %v8326 = vunpack.c.h.b16 %v6020
          %v8327 = vunpack.c.l.b16 %v6021
          %v8328 = vunpack.c.h.b16 %v6021
          %v8329 = vunpack.c.l.b16 %v6022
          %v8330 = vunpack.c.h.b16 %v6022
          %v8331 = vunpack.c.l.b16 %v6023
          %v8332 = vunpack.c.h.b16 %v6023
          %v8333 = vunpack.c.l.b16 %v6024
          %v8334 = vunpack.c.h.b16 %v6024
          %v8335 = vunpack.c.l.b16 %v6025
          %v8336 = vunpack.c.h.b16 %v6025
          %v8337 = vunpack.c.l.b16 %v6026
          %v8338 = vunpack.c.h.b16 %v6026
          %v8339 = vunpack.c.l.b16 %v6027
          %v8340 = vunpack.c.h.b16 %v6027
          %v8341 = vunpack.c.l.b16 %v6028
          %v8342 = vunpack.c.h.b16 %v6028
          %v8343 = vunpack.c.l.b16 %v6029
          %v8344 = vunpack.c.h.b16 %v6029
          %v8345 = vunpack.c.l.b16 %v6030
          %v8346 = vunpack.c.h.b16 %v6030
          %v8347 = vunpack.c.l.b16 %v6031
          %v8348 = vunpack.c.h.b16 %v6031
          %v8349 = vunpack.c.l.b16 %v6032
          %v8350 = vunpack.c.h.b16 %v6032
          %v8351 = vunpack.c.l.b16 %v6033
          %v8352 = vunpack.c.h.b16 %v6033
          %v8353 = vunpack.c.l.b16 %v6034
          %v8354 = vunpack.c.h.b16 %v6034
          %v8355 = vunpack.c.l.b16 %v6035
          %v8356 = vunpack.c.h.b16 %v6035
          %v8357 = vunpack.c.l.b16 %v6036
          %v8358 = vunpack.c.h.b16 %v6036
          %v8359 = vunpack.c.l.b16 %v6037
          %v8360 = vunpack.c.h.b16 %v6037
          %v8361 = vunpack.c.l.b16 %v6038
          %v8362 = vunpack.c.h.b16 %v6038
          %v8363 = vunpack.c.l.b16 %v6039
          %v8364 = vunpack.c.h.b16 %v6039
          %v8365 = vunpack.c.l.b16 %v6040
          %v8366 = vunpack.c.h.b16 %v6040
          %v8367 = vunpack.c.l.b16 %v6041
          %v8368 = vunpack.c.h.b16 %v6041
          %v8369 = vunpack.c.l.b16 %v6042
          %v8370 = vunpack.c.h.b16 %v6042
          %v8371 = vunpack.c.l.b16 %v6043
          %v8372 = vunpack.c.h.b16 %v6043
          %v8373 = vunpack.c.l.b16 %v6044
          %v8374 = vunpack.c.h.b16 %v6044
          %v8375 = vunpack.c.l.b16 %v6045
          %v8376 = vunpack.c.h.b16 %v6045
          %v8377 = vunpack.c.l.b16 %v6046
          %v8378 = vunpack.c.h.b16 %v6046
          %v8379 = vunpack.c.l.b16 %v6047
          %v8380 = vunpack.c.h.b16 %v6047
          %v8381 = vunpack.c.l.b16 %v6048
          %v8382 = vunpack.c.h.b16 %v6048
          %v8383 = vunpack.c.l.b16 %v6049
          %v8384 = vunpack.c.h.b16 %v6049
          %v8385 = vunpack.c.l.b16 %v6050
          %v8386 = vunpack.c.h.b16 %v6050
          %v8387 = vunpack.c.l.b16 %v6051
          %v8388 = vunpack.c.h.b16 %v6051
          %v8389 = vunpack.c.l.b16 %v6052
          %v8390 = vunpack.c.h.b16 %v6052
          %v8391 = vunpack.c.l.b16 %v6053
          %v8392 = vunpack.c.h.b16 %v6053
          %v8393 = vunpack.c.l.b16 %v6054
          %v8394 = vunpack.c.h.b16 %v6054
          %v8395 = vunpack.c.l.b16 %v6055
          %v8396 = vunpack.c.h.b16 %v6055
          %v8397 = vunpack.c.l.b16 %v6056
          %v8398 = vunpack.c.h.b16 %v6056
          %v8399 = vunpack.c.l.b16 %v6057
          %v8400 = vunpack.c.h.b16 %v6057
          %v8401 = vunpack.c.l.b16 %v6058
          %v8402 = vunpack.c.h.b16 %v6058
          %v8403 = vunpack.c.l.b16 %v6059
          %v8404 = vunpack.c.h.b16 %v6059
          %v8405 = vunpack.c.l.b16 %v6060
          %v8406 = vunpack.c.h.b16 %v6060
          %v8407 = vunpack.c.l.b16 %v6061
          %v8408 = vunpack.c.h.b16 %v6061
          %v8409 = vunpack.c.l.b16 %v6062
          %v8410 = vunpack.c.h.b16 %v6062
          %v8411 = vunpack.c.l.b16 %v6063
          %v8412 = vunpack.c.h.b16 %v6063
          %v8413 = vunpack.c.l.b16 %v6064
          %v8414 = vunpack.c.h.b16 %v6064
          %v8415 = vunpack.c.l.b16 %v6065
          %v8416 = vunpack.c.h.b16 %v6065
          %v8417 = vunpack.c.l.b16 %v6066
          %v8418 = vunpack.c.h.b16 %v6066
          %v8419 = vunpack.c.l.b16 %v6067
          %v8420 = vunpack.c.h.b16 %v6067
          %v8421 = vunpack.c.l.b16 %v6068
          %v8422 = vunpack.c.h.b16 %v6068
          %v8423 = vunpack.c.l.b16 %v6069
          %v8424 = vunpack.c.h.b16 %v6069
          %v8425 = vunpack.c.l.b16 %v6070
          %v8426 = vunpack.c.h.b16 %v6070
          %v8427 = vunpack.c.l.b16 %v6071
          %v8428 = vunpack.c.h.b16 %v6071
          %v8429 = vunpack.c.l.b16 %v6072
          %v8430 = vunpack.c.h.b16 %v6072
          %v8431 = vunpack.c.l.b16 %v6073
          %v8432 = vunpack.c.h.b16 %v6073
          %v8433 = vunpack.c.l.b16 %v6074
          %v8434 = vunpack.c.h.b16 %v6074
          %v8435 = vunpack.c.l.b16 %v6075
          %v8436 = vunpack.c.h.b16 %v6075
          %v8437 = vunpack.c.l.b16 %v6076
          %v8438 = vunpack.c.h.b16 %v6076
          %v8439 = vunpack.c.l.b16 %v6077
          %v8440 = vunpack.c.h.b16 %v6077
          %v8441 = vunpack.c.l.b16 %v6078
          %v8442 = vunpack.c.h.b16 %v6078
          %v8443 = vunpack.c.l.b16 %v6079
          %v8444 = vunpack.c.h.b16 %v6079
          %v8445 = vunpack.c.l.b16 %v6080
          %v8446 = vunpack.c.h.b16 %v6080
          %v8447 = vunpack.c.l.b16 %v6081
          %v8448 = vunpack.c.h.b16 %v6081
          %v8449 = vunpack.c.l.b16 %v6082
          %v8450 = vunpack.c.h.b16 %v6082
          %v8451 = vunpack.c.l.b16 %v6083
          %v8452 = vunpack.c.h.b16 %v6083
          %v8453 = vunpack.c.l.b16 %v6084
          %v8454 = vunpack.c.h.b16 %v6084
          %v8455 = vunpack.c.l.b16 %v6085
          %v8456 = vunpack.c.h.b16 %v6085
          %v8457 = vunpack.c.l.b16 %v6086
          %v8458 = vunpack.c.h.b16 %v6086
          %v8459 = vunpack.c.l.b16 %v6087
          %v8460 = vunpack.c.h.b16 %v6087
          %v8461 = vunpack.c.l.b16 %v6088
          %v8462 = vunpack.c.h.b16 %v6088
          %v8463 = vunpack.c.l.b16 %v6089
          %v8464 = vunpack.c.h.b16 %v6089
          %v8465 = vunpack.c.l.b16 %v6090
          %v8466 = vunpack.c.h.b16 %v6090
          %v8467 = vunpack.c.l.b16 %v6091
          %v8468 = vunpack.c.h.b16 %v6091
          %v8469 = vunpack.c.l.b16 %v6092
          %v8470 = vunpack.c.h.b16 %v6092
          %v8471 = vunpack.c.l.b16 %v6093
          %v8472 = vunpack.c.h.b16 %v6093
          %v8473 = vunpack.c.l.b16 %v6094
          %v8474 = vunpack.c.h.b16 %v6094
          %v8475 = vunpack.c.l.b16 %v6095
          %v8476 = vunpack.c.h.b16 %v6095
          %v8477 = vunpack.c.l.b16 %v6096
          %v8478 = vunpack.c.h.b16 %v6096
          %v8479 = vunpack.c.l.b16 %v6097
          %v8480 = vunpack.c.h.b16 %v6097
          %v8481 = vunpack.c.l.b16 %v6098
          %v8482 = vunpack.c.h.b16 %v6098
          %v8483 = vunpack.c.l.b16 %v6099
          %v8484 = vunpack.c.h.b16 %v6099
          %v8485 = vunpack.c.l.b16 %v6100
          %v8486 = vunpack.c.h.b16 %v6100
          %v8487 = vunpack.c.l.b16 %v6101
          %v8488 = vunpack.c.h.b16 %v6101
          %v8489 = vunpack.c.l.b16 %v6102
          %v8490 = vunpack.c.h.b16 %v6102
          %v8491 = vunpack.c.l.b16 %v6103
          %v8492 = vunpack.c.h.b16 %v6103
          %v8493 = vunpack.c.l.b16 %v6104
          %v8494 = vunpack.c.h.b16 %v6104
          %v8495 = vunpack.c.l.b16 %v6105
          %v8496 = vunpack.c.h.b16 %v6105
          %v8497 = vunpack.c.l.b16 %v6106
          %v8498 = vunpack.c.h.b16 %v6106
          %v8499 = vunpack.c.l.b16 %v6107
          %v8500 = vunpack.c.h.b16 %v6107
          %v8501 = vunpack.c.l.b16 %v6108
          %v8502 = vunpack.c.h.b16 %v6108
          %v8503 = vunpack.c.l.b16 %v6109
          %v8504 = vunpack.c.h.b16 %v6109
          %v8505 = vunpack.c.l.b16 %v6110
          %v8506 = vunpack.c.h.b16 %v6110
          %v8507 = vunpack.c.l.b16 %v6111
          %v8508 = vunpack.c.h.b16 %v6111
          %v8509 = vunpack.c.l.b16 %v6112
          %v8510 = vunpack.c.h.b16 %v6112
          %v8511 = vunpack.c.l.b16 %v6113
          %v8512 = vunpack.c.h.b16 %v6113
          %v8513 = vunpack.c.l.b16 %v6114
          %v8514 = vunpack.c.h.b16 %v6114
          %v8515 = vunpack.c.l.b16 %v6115
          %v8516 = vunpack.c.h.b16 %v6115
          %v8517 = vunpack.c.l.b16 %v6116
          %v8518 = vunpack.c.h.b16 %v6116
          %v8519 = vunpack.c.l.b16 %v6117
          %v8520 = vunpack.c.h.b16 %v6117
          %v8521 = vunpack.c.l.b16 %v6118
          %v8522 = vunpack.c.h.b16 %v6118
          %v8523 = vunpack.c.l.b16 %v6119
          %v8524 = vunpack.c.h.b16 %v6119
          %v8525 = vunpack.c.l.b16 %v6120
          %v8526 = vunpack.c.h.b16 %v6120
          %v8527 = vunpack.c.l.b16 %v6121
          %v8528 = vunpack.c.h.b16 %v6121
          %v8529 = vunpack.c.l.b16 %v6122
          %v8530 = vunpack.c.h.b16 %v6122
          %v8531 = vunpack.c.l.b16 %v6123
          %v8532 = vunpack.c.h.b16 %v6123
          %v8533 = vunpack.c.l.b16 %v6124
          %v8534 = vunpack.c.h.b16 %v6124
          %v8535 = vunpack.c.l.b16 %v6125
          %v8536 = vunpack.c.h.b16 %v6125
          %v8537 = vunpack.c.l.b16 %v6126
          %v8538 = vunpack.c.h.b16 %v6126
          %v8539 = vunpack.c.l.b16 %v6127
          %v8540 = vunpack.c.h.b16 %v6127
          %v8541 = vunpack.c.l.b16 %v6128
          %v8542 = vunpack.c.h.b16 %v6128
          %v8543 = vunpack.c.l.b16 %v6129
          %v8544 = vunpack.c.h.b16 %v6129
          %v8545 = vunpack.c.l.b16 %v6130
          %v8546 = vunpack.c.h.b16 %v6130
          %v8547 = vunpack.c.l.b16 %v6131
          %v8548 = vunpack.c.h.b16 %v6131
          %v8549 = vunpack.c.l.b16 %v6132
          %v8550 = vunpack.c.h.b16 %v6132
          %v8551 = vunpack.c.l.b16 %v6133
          %v8552 = vunpack.c.h.b16 %v6133
          %v8553 = vunpack.c.l.b16 %v6134
          %v8554 = vunpack.c.h.b16 %v6134
          %v8555 = vunpack.c.l.b16 %v6135
          %v8556 = vunpack.c.h.b16 %v6135
          %v8557 = vunpack.c.l.b16 %v6136
          %v8558 = vunpack.c.h.b16 %v6136
          %v8559 = vunpack.c.l.b16 %v6137
          %v8560 = vunpack.c.h.b16 %v6137
          %v8561 = vunpack.c.l.b16 %v6138
          %v8562 = vunpack.c.h.b16 %v6138
          %v8563 = vunpack.c.l.b16 %v6139
          %v8564 = vunpack.c.h.b16 %v6139
          %v8565 = vunpack.c.l.b16 %v6140
          %v8566 = vunpack.c.h.b16 %v6140
          %v8567 = vunpack.c.l.b16 %v6141
          %v8568 = vunpack.c.h.b16 %v6141
          %v8569 = vunpack.c.l.b16 %v6142
          %v8570 = vunpack.c.h.b16 %v6142
          %v8571 = vunpack.c.l.b16 %v6143
          %v8572 = vunpack.c.h.b16 %v6143
          %v8573 = vunpack.c.l.b16 %v6144
          %v8574 = vunpack.c.h.b16 %v6144
          %v8575 = vunpack.c.l.b16 %v6145
          %v8576 = vunpack.c.h.b16 %v6145
          %v8577 = vunpack.c.l.b16 %v6146
          %v8578 = vunpack.c.h.b16 %v6146
          %v8579 = vunpack.c.l.b16 %v6147
          %v8580 = vunpack.c.h.b16 %v6147
          %v8581 = vunpack.c.l.b16 %v6148
          %v8582 = vunpack.c.h.b16 %v6148
          %v8583 = vunpack.c.l.b16 %v6149
          %v8584 = vunpack.c.h.b16 %v6149
          %v8585 = vunpack.c.l.b16 %v6150
          %v8586 = vunpack.c.h.b16 %v6150
          %v8587 = vunpack.c.l.b16 %v6151
          %v8588 = vunpack.c.h.b16 %v6151
          %v8589 = vunpack.c.l.b16 %v6152
          %v8590 = vunpack.c.h.b16 %v6152
          %v8591 = vunpack.c.l.b16 %v6153
          %v8592 = vunpack.c.h.b16 %v6153
          %v8593 = vunpack.c.l.b16 %v6154
          %v8594 = vunpack.c.h.b16 %v6154
          %v8595 = vunpack.c.l.b16 %v6155
          %v8596 = vunpack.c.h.b16 %v6155
          %v8597 = vunpack.c.l.b16 %v6156
          %v8598 = vunpack.c.h.b16 %v6156
          %v8599 = vunpack.c.l.b16 %v6157
          %v8600 = vunpack.c.h.b16 %v6157
          %v8601 = vunpack.c.l.b16 %v6158
          %v8602 = vunpack.c.h.b16 %v6158
          %v8603 = vunpack.c.l.b16 %v6159
          %v8604 = vunpack.c.h.b16 %v6159
          %v8605 = vunpack.c.l.b16 %v6160
          %v8606 = vunpack.c.h.b16 %v6160
          %v8607 = vunpack.c.l.b16 %v6161
          %v8608 = vunpack.c.h.b16 %v6161
          %v8609 = vunpack.c.l.b16 %v6162
          %v8610 = vunpack.c.h.b16 %v6162
          %v8611 = vunpack.c.l.b16 %v6163
          %v8612 = vunpack.c.h.b16 %v6163
          %v8613 = vunpack.c.l.b16 %v6164
          %v8614 = vunpack.c.h.b16 %v6164
          %v8615 = vunpack.c.l.b16 %v6165
          %v8616 = vunpack.c.h.b16 %v6165
          %v8617 = vunpack.c.l.b16 %v6166
          %v8618 = vunpack.c.h.b16 %v6166
          %v8619 = vunpack.c.l.b16 %v6167
          %v8620 = vunpack.c.h.b16 %v6167
          %v8621 = vunpack.c.l.b16 %v6168
          %v8622 = vunpack.c.h.b16 %v6168
          %v8623 = vpack.c.b16 %v7033, %v7023
          %v8624 = vpack.c.b16 %v7034, %v7024
          %v8625 = vpack.c.b16 %v7035, %v7025
          %v8626 = vpack.c.b16 %v7036, %v7026
          %v8627 = vpack.c.b16 %v7037, %v7027
          %v8628 = vpack.c.b16 %v7038, %v7028
          %v8629 = vpack.c.b16 %v7039, %v7029
          %v8630 = vpack.c.b16 %v7040, %v7030
          %v8631 = vpack.c.b16 %v7041, %v7031
          %v8632 = vpack.c.b16 %v7042, %v7032
          %v8633 = vpack.c.b16 %v7053, %v7043
          %v8634 = vpack.c.b16 %v7054, %v7044
          %v8635 = vpack.c.b16 %v7055, %v7045
          %v8636 = vpack.c.b16 %v7056, %v7046
          %v8637 = vpack.c.b16 %v7057, %v7047
          %v8638 = vpack.c.b16 %v7058, %v7048
          %v8639 = vpack.c.b16 %v7059, %v7049
          %v8640 = vpack.c.b16 %v7060, %v7050
          %v8641 = vpack.c.b16 %v7061, %v7051
          %v8642 = vpack.c.b16 %v7062, %v7052
          %v8643 = vpack.c.b16 %v7073, %v7063
          %v8644 = vpack.c.b16 %v7074, %v7064
          %v8645 = vpack.c.b16 %v7075, %v7065
          %v8646 = vpack.c.b16 %v7076, %v7066
          %v8647 = vpack.c.b16 %v7077, %v7067
          %v8648 = vpack.c.b16 %v7078, %v7068
          %v8649 = vpack.c.b16 %v7079, %v7069
          %v8650 = vpack.c.b16 %v7080, %v7070
          %v8651 = vpack.c.b16 %v7081, %v7071
          %v8652 = vpack.c.b16 %v7082, %v7072
          %v8653 = vpack.c.b16 %v7093, %v7083
          %v8654 = vpack.c.b16 %v7094, %v7084
          %v8655 = vpack.c.b16 %v7095, %v7085
          %v8656 = vpack.c.b16 %v7096, %v7086
          %v8657 = vpack.c.b16 %v7097, %v7087
          %v8658 = vpack.c.b16 %v7098, %v7088
          %v8659 = vpack.c.b16 %v7099, %v7089
          %v8660 = vpack.c.b16 %v7100, %v7090
          %v8661 = vpack.c.b16 %v7101, %v7091
          %v8662 = vpack.c.b16 %v7102, %v7092
          %v8663 = vpack.c.b16 %v7113, %v7103
          %v8664 = vpack.c.b16 %v7114, %v7104
          %v8665 = vpack.c.b16 %v7115, %v7105
          %v8666 = vpack.c.b16 %v7116, %v7106
          %v8667 = vpack.c.b16 %v7117, %v7107
          %v8668 = vpack.c.b16 %v7118, %v7108
          %v8669 = vpack.c.b16 %v7119, %v7109
          %v8670 = vpack.c.b16 %v7120, %v7110
          %v8671 = vpack.c.b16 %v7121, %v7111
          %v8672 = vpack.c.b16 %v7122, %v7112
          %v8673 = vpack.c.b16 %v7133, %v7123
          %v8674 = vpack.c.b16 %v7134, %v7124
          %v8675 = vpack.c.b16 %v7135, %v7125
          %v8676 = vpack.c.b16 %v7136, %v7126
          %v8677 = vpack.c.b16 %v7137, %v7127
          %v8678 = vpack.c.b16 %v7138, %v7128
          %v8679 = vpack.c.b16 %v7139, %v7129
          %v8680 = vpack.c.b16 %v7140, %v7130
          %v8681 = vpack.c.b16 %v7141, %v7131
          %v8682 = vpack.c.b16 %v7142, %v7132
          %v8683 = vpack.c.b16 %v7153, %v7143
          %v8684 = vpack.c.b16 %v7154, %v7144
          %v8685 = vpack.c.b16 %v7155, %v7145
          %v8686 = vpack.c.b16 %v7156, %v7146
          %v8687 = vpack.c.b16 %v7157, %v7147
          %v8688 = vpack.c.b16 %v7158, %v7148
          %v8689 = vpack.c.b16 %v7159, %v7149
          %v8690 = vpack.c.b16 %v7160, %v7150
          %v8691 = vpack.c.b16 %v7161, %v7151
          %v8692 = vpack.c.b16 %v7162, %v7152
          %v8693 = vpack.c.b16 %v7173, %v7163
          %v8694 = vpack.c.b16 %v7174, %v7164
          %v8695 = vpack.c.b16 %v7175, %v7165
          %v8696 = vpack.c.b16 %v7176, %v7166
          %v8697 = vpack.c.b16 %v7177, %v7167
          %v8698 = vpack.c.b16 %v7178, %v7168
          %v8699 = vpack.c.b16 %v7179, %v7169
          %v8700 = vpack.c.b16 %v7180, %v7170
          %v8701 = vpack.c.b16 %v7181, %v7171
          %v8702 = vpack.c.b16 %v7182, %v7172
          %v8703 = vpack.c.b16 %v7193, %v7183
          %v8704 = vpack.c.b16 %v7194, %v7184
          %v8705 = vpack.c.b16 %v7195, %v7185
          %v8706 = vpack.c.b16 %v7196, %v7186
          %v8707 = vpack.c.b16 %v7197, %v7187
          %v8708 = vpack.c.b16 %v7198, %v7188
          %v8709 = vpack.c.b16 %v7199, %v7189
          %v8710 = vpack.c.b16 %v7200, %v7190
          %v8711 = vpack.c.b16 %v7201, %v7191
          %v8712 = vpack.c.b16 %v7202, %v7192
          %v8713 = vpack.c.b16 %v7213, %v7203
          %v8714 = vpack.c.b16 %v7214, %v7204
          %v8715 = vpack.c.b16 %v7215, %v7205
          %v8716 = vpack.c.b16 %v7216, %v7206
          %v8717 = vpack.c.b16 %v7217, %v7207
          %v8718 = vpack.c.b16 %v7218, %v7208
          %v8719 = vpack.c.b16 %v7219, %v7209
          %v8720 = vpack.c.b16 %v7220, %v7210
          %v8721 = vpack.c.b16 %v7221, %v7211
          %v8722 = vpack.c.b16 %v7222, %v7212
          %v8723 = vpack.c.b16 %v7233, %v7223
          %v8724 = vpack.c.b16 %v7234, %v7224
          %v8725 = vpack.c.b16 %v7235, %v7225
          %v8726 = vpack.c.b16 %v7236, %v7226
          %v8727 = vpack.c.b16 %v7237, %v7227
          %v8728 = vpack.c.b16 %v7238, %v7228
          %v8729 = vpack.c.b16 %v7239, %v7229
          %v8730 = vpack.c.b16 %v7240, %v7230
          %v8731 = vpack.c.b16 %v7241, %v7231
          %v8732 = vpack.c.b16 %v7242, %v7232
          %v8733 = vpack.c.b16 %v7253, %v7243
          %v8734 = vpack.c.b16 %v7254, %v7244
          %v8735 = vpack.c.b16 %v7255, %v7245
          %v8736 = vpack.c.b16 %v7256, %v7246
          %v8737 = vpack.c.b16 %v7257, %v7247
          %v8738 = vpack.c.b16 %v7258, %v7248
          %v8739 = vpack.c.b16 %v7259, %v7249
          %v8740 = vpack.c.b16 %v7260, %v7250
          %v8741 = vpack.c.b16 %v7261, %v7251
          %v8742 = vpack.c.b16 %v7262, %v7252
          %v8743 = vpack.c.b16 %v7273, %v7263
          %v8744 = vpack.c.b16 %v7274, %v7264
          %v8745 = vpack.c.b16 %v7275, %v7265
          %v8746 = vpack.c.b16 %v7276, %v7266
          %v8747 = vpack.c.b16 %v7277, %v7267
          %v8748 = vpack.c.b16 %v7278, %v7268
          %v8749 = vpack.c.b16 %v7279, %v7269
          %v8750 = vpack.c.b16 %v7280, %v7270
          %v8751 = vpack.c.b16 %v7281, %v7271
          %v8752 = vpack.c.b16 %v7282, %v7272
          %v8753 = vpack.c.b16 %v7293, %v7283
          %v8754 = vpack.c.b16 %v7294, %v7284
          %v8755 = vpack.c.b16 %v7295, %v7285
          %v8756 = vpack.c.b16 %v7296, %v7286
          %v8757 = vpack.c.b16 %v7297, %v7287
          %v8758 = vpack.c.b16 %v7298, %v7288
          %v8759 = vpack.c.b16 %v7299, %v7289
          %v8760 = vpack.c.b16 %v7300, %v7290
          %v8761 = vpack.c.b16 %v7301, %v7291
          %v8762 = vpack.c.b16 %v7302, %v7292
          %v8763 = vpack.c.b16 %v7313, %v7303
          %v8764 = vpack.c.b16 %v7314, %v7304
          %v8765 = vpack.c.b16 %v7315, %v7305
          %v8766 = vpack.c.b16 %v7316, %v7306
          %v8767 = vpack.c.b16 %v7317, %v7307
          %v8768 = vpack.c.b16 %v7318, %v7308
          %v8769 = vpack.c.b16 %v7319, %v7309
          %v8770 = vpack.c.b16 %v7320, %v7310
          %v8771 = vpack.c.b16 %v7321, %v7311
          %v8772 = vpack.c.b16 %v7322, %v7312
          %v8773 = vpack.c.b16 %v7333, %v7323
          %v8774 = vpack.c.b16 %v7334, %v7324
          %v8775 = vpack.c.b16 %v7335, %v7325
          %v8776 = vpack.c.b16 %v7336, %v7326
          %v8777 = vpack.c.b16 %v7337, %v7327
          %v8778 = vpack.c.b16 %v7338, %v7328
          %v8779 = vpack.c.b16 %v7339, %v7329
          %v8780 = vpack.c.b16 %v7340, %v7330
          %v8781 = vpack.c.b16 %v7341, %v7331
          %v8782 = vpack.c.b16 %v7342, %v7332
          %v8783 = vpack.c.b16 %v7353, %v7343
          %v8784 = vpack.c.b16 %v7354, %v7344
          %v8785 = vpack.c.b16 %v7355, %v7345
          %v8786 = vpack.c.b16 %v7356, %v7346
          %v8787 = vpack.c.b16 %v7357, %v7347
          %v8788 = vpack.c.b16 %v7358, %v7348
          %v8789 = vpack.c.b16 %v7359, %v7349
          %v8790 = vpack.c.b16 %v7360, %v7350
          %v8791 = vpack.c.b16 %v7361, %v7351
          %v8792 = vpack.c.b16 %v7362, %v7352
          %v8793 = vpack.c.b16 %v7373, %v7363
          %v8794 = vpack.c.b16 %v7374, %v7364
          %v8795 = vpack.c.b16 %v7375, %v7365
          %v8796 = vpack.c.b16 %v7376, %v7366
          %v8797 = vpack.c.b16 %v7377, %v7367
          %v8798 = vpack.c.b16 %v7378, %v7368
          %v8799 = vpack.c.b16 %v7379, %v7369
          %v8800 = vpack.c.b16 %v7380, %v7370
          %v8801 = vpack.c.b16 %v7381, %v7371
          %v8802 = vpack.c.b16 %v7382, %v7372
          %v8803 = vpack.c.b16 %v7393, %v7383
          %v8804 = vpack.c.b16 %v7394, %v7384
          %v8805 = vpack.c.b16 %v7395, %v7385
          %v8806 = vpack.c.b16 %v7396, %v7386
          %v8807 = vpack.c.b16 %v7397, %v7387
          %v8808 = vpack.c.b16 %v7398, %v7388
          %v8809 = vpack.c.b16 %v7399, %v7389
          %v8810 = vpack.c.b16 %v7400, %v7390
          %v8811 = vpack.c.b16 %v7401, %v7391
          %v8812 = vpack.c.b16 %v7402, %v7392
          %v8813 = vpack.c.b16 %v7413, %v7403
          %v8814 = vpack.c.b16 %v7414, %v7404
          %v8815 = vpack.c.b16 %v7415, %v7405
          %v8816 = vpack.c.b16 %v7416, %v7406
          %v8817 = vpack.c.b16 %v7417, %v7407
          %v8818 = vpack.c.b16 %v7418, %v7408
          %v8819 = vpack.c.b16 %v7419, %v7409
          %v8820 = vpack.c.b16 %v7420, %v7410
          %v8821 = vpack.c.b16 %v7421, %v7411
          %v8822 = vpack.c.b16 %v7422, %v7412
          %v8823 = vpack.c.b16 %v7433, %v7423
          %v8824 = vpack.c.b16 %v7434, %v7424
          %v8825 = vpack.c.b16 %v7435, %v7425
          %v8826 = vpack.c.b16 %v7436, %v7426
          %v8827 = vpack.c.b16 %v7437, %v7427
          %v8828 = vpack.c.b16 %v7438, %v7428
          %v8829 = vpack.c.b16 %v7439, %v7429
          %v8830 = vpack.c.b16 %v7440, %v7430
          %v8831 = vpack.c.b16 %v7441, %v7431
          %v8832 = vpack.c.b16 %v7442, %v7432
          %v8833 = vpack.c.b16 %v7453, %v7443
          %v8834 = vpack.c.b16 %v7454, %v7444
          %v8835 = vpack.c.b16 %v7455, %v7445
          %v8836 = vpack.c.b16 %v7456, %v7446
          %v8837 = vpack.c.b16 %v7457, %v7447
          %v8838 = vpack.c.b16 %v7458, %v7448
          %v8839 = vpack.c.b16 %v7459, %v7449
          %v8840 = vpack.c.b16 %v7460, %v7450
          %v8841 = vpack.c.b16 %v7461, %v7451
          %v8842 = vpack.c.b16 %v7462, %v7452
          %v8843 = vpack.c.b16 %v7473, %v7463
          %v8844 = vpack.c.b16 %v7474, %v7464
          %v8845 = vpack.c.b16 %v7475, %v7465
          %v8846 = vpack.c.b16 %v7476, %v7466
          %v8847 = vpack.c.b16 %v7477, %v7467
          %v8848 = vpack.c.b16 %v7478, %v7468
          %v8849 = vpack.c.b16 %v7479, %v7469
          %v8850 = vpack.c.b16 %v7480, %v7470
          %v8851 = vpack.c.b16 %v7481, %v7471
          %v8852 = vpack.c.b16 %v7482, %v7472
          %v8853 = vpack.c.b16 %v7493, %v7483
          %v8854 = vpack.c.b16 %v7494, %v7484
          %v8855 = vpack.c.b16 %v7495, %v7485
          %v8856 = vpack.c.b16 %v7496, %v7486
          %v8857 = vpack.c.b16 %v7497, %v7487
          %v8858 = vpack.c.b16 %v7498, %v7488
          %v8859 = vpack.c.b16 %v7499, %v7489
          %v8860 = vpack.c.b16 %v7500, %v7490
          %v8861 = vpack.c.b16 %v7501, %v7491
          %v8862 = vpack.c.b16 %v7502, %v7492
          %v8863 = vpack.c.b16 %v7513, %v7503
          %v8864 = vpack.c.b16 %v7514, %v7504
          %v8865 = vpack.c.b16 %v7515, %v7505
          %v8866 = vpack.c.b16 %v7516, %v7506
          %v8867 = vpack.c.b16 %v7517, %v7507
          %v8868 = vpack.c.b16 %v7518, %v7508
          %v8869 = vpack.c.b16 %v7519, %v7509
          %v8870 = vpack.c.b16 %v7520, %v7510
          %v8871 = vpack.c.b16 %v7521, %v7511
          %v8872 = vpack.c.b16 %v7522, %v7512
          %v8873 = vpack.c.b16 %v7533, %v7523
          %v8874 = vpack.c.b16 %v7534, %v7524
          %v8875 = vpack.c.b16 %v7535, %v7525
          %v8876 = vpack.c.b16 %v7536, %v7526
          %v8877 = vpack.c.b16 %v7537, %v7527
          %v8878 = vpack.c.b16 %v7538, %v7528
          %v8879 = vpack.c.b16 %v7539, %v7529
          %v8880 = vpack.c.b16 %v7540, %v7530
          %v8881 = vpack.c.b16 %v7541, %v7531
          %v8882 = vpack.c.b16 %v7542, %v7532
          %v8883 = vpack.c.b16 %v7553, %v7543
          %v8884 = vpack.c.b16 %v7554, %v7544
          %v8885 = vpack.c.b16 %v7555, %v7545
          %v8886 = vpack.c.b16 %v7556, %v7546
          %v8887 = vpack.c.b16 %v7557, %v7547
          %v8888 = vpack.c.b16 %v7558, %v7548
          %v8889 = vpack.c.b16 %v7559, %v7549
          %v8890 = vpack.c.b16 %v7560, %v7550
          %v8891 = vpack.c.b16 %v7561, %v7551
          %v8892 = vpack.c.b16 %v7562, %v7552
          %v8893 = vpack.c.b16 %v7573, %v7563
          %v8894 = vpack.c.b16 %v7574, %v7564
          %v8895 = vpack.c.b16 %v7575, %v7565
          %v8896 = vpack.c.b16 %v7576, %v7566
          %v8897 = vpack.c.b16 %v7577, %v7567
          %v8898 = vpack.c.b16 %v7578, %v7568
          %v8899 = vpack.c.b16 %v7579, %v7569
          %v8900 = vpack.c.b16 %v7580, %v7570
          %v8901 = vpack.c.b16 %v7581, %v7571
          %v8902 = vpack.c.b16 %v7582, %v7572
          %v8903 = vpack.c.b16 %v7593, %v7583
          %v8904 = vpack.c.b16 %v7594, %v7584
          %v8905 = vpack.c.b16 %v7595, %v7585
          %v8906 = vpack.c.b16 %v7596, %v7586
          %v8907 = vpack.c.b16 %v7597, %v7587
          %v8908 = vpack.c.b16 %v7598, %v7588
          %v8909 = vpack.c.b16 %v7599, %v7589
          %v8910 = vpack.c.b16 %v7600, %v7590
          %v8911 = vpack.c.b16 %v7601, %v7591
          %v8912 = vpack.c.b16 %v7602, %v7592
          %v8913 = vpack.c.b16 %v7613, %v7603
          %v8914 = vpack.c.b16 %v7614, %v7604
          %v8915 = vpack.c.b16 %v7615, %v7605
          %v8916 = vpack.c.b16 %v7616, %v7606
          %v8917 = vpack.c.b16 %v7617, %v7607
          %v8918 = vpack.c.b16 %v7618, %v7608
          %v8919 = vpack.c.b16 %v7619, %v7609
          %v8920 = vpack.c.b16 %v7620, %v7610
          %v8921 = vpack.c.b16 %v7621, %v7611
          %v8922 = vpack.c.b16 %v7622, %v7612
          %v8923 = vpack.c.b16 %v7633, %v7623
          %v8924 = vpack.c.b16 %v7634, %v7624
          %v8925 = vpack.c.b16 %v7635, %v7625
          %v8926 = vpack.c.b16 %v7636, %v7626
          %v8927 = vpack.c.b16 %v7637, %v7627
          %v8928 = vpack.c.b16 %v7638, %v7628
          %v8929 = vpack.c.b16 %v7639, %v7629
          %v8930 = vpack.c.b16 %v7640, %v7630
          %v8931 = vpack.c.b16 %v7641, %v7631
          %v8932 = vpack.c.b16 %v7642, %v7632
          %v8933 = vpack.c.b16 %v7653, %v7643
          %v8934 = vpack.c.b16 %v7654, %v7644
          %v8935 = vpack.c.b16 %v7655, %v7645
          %v8936 = vpack.c.b16 %v7656, %v7646
          %v8937 = vpack.c.b16 %v7657, %v7647
          %v8938 = vpack.c.b16 %v7658, %v7648
          %v8939 = vpack.c.b16 %v7659, %v7649
          %v8940 = vpack.c.b16 %v7660, %v7650
          %v8941 = vpack.c.b16 %v7661, %v7651
          %v8942 = vpack.c.b16 %v7662, %v7652
          %v8943 = vpack.c.b16 %v7673, %v7663
          %v8944 = vpack.c.b16 %v7674, %v7664
          %v8945 = vpack.c.b16 %v7675, %v7665
          %v8946 = vpack.c.b16 %v7676, %v7666
          %v8947 = vpack.c.b16 %v7677, %v7667
          %v8948 = vpack.c.b16 %v7678, %v7668
          %v8949 = vpack.c.b16 %v7679, %v7669
          %v8950 = vpack.c.b16 %v7680, %v7670
          %v8951 = vpack.c.b16 %v7681, %v7671
          %v8952 = vpack.c.b16 %v7682, %v7672
          %v8953 = vpack.c.b16 %v7693, %v7683
          %v8954 = vpack.c.b16 %v7694, %v7684
          %v8955 = vpack.c.b16 %v7695, %v7685
          %v8956 = vpack.c.b16 %v7696, %v7686
          %v8957 = vpack.c.b16 %v7697, %v7687
          %v8958 = vpack.c.b16 %v7698, %v7688
          %v8959 = vpack.c.b16 %v7699, %v7689
          %v8960 = vpack.c.b16 %v7700, %v7690
          %v8961 = vpack.c.b16 %v7701, %v7691
          %v8962 = vpack.c.b16 %v7702, %v7692
          %v8963 = vpack.c.b16 %v7713, %v7703
          %v8964 = vpack.c.b16 %v7714, %v7704
          %v8965 = vpack.c.b16 %v7715, %v7705
          %v8966 = vpack.c.b16 %v7716, %v7706
          %v8967 = vpack.c.b16 %v7717, %v7707
          %v8968 = vpack.c.b16 %v7718, %v7708
          %v8969 = vpack.c.b16 %v7719, %v7709
          %v8970 = vpack.c.b16 %v7720, %v7710
          %v8971 = vpack.c.b16 %v7721, %v7711
          %v8972 = vpack.c.b16 %v7722, %v7712
          %v8973 = vpack.c.b16 %v7733, %v7723
          %v8974 = vpack.c.b16 %v7734, %v7724
          %v8975 = vpack.c.b16 %v7735, %v7725
          %v8976 = vpack.c.b16 %v7736, %v7726
          %v8977 = vpack.c.b16 %v7737, %v7727
          %v8978 = vpack.c.b16 %v7738, %v7728
          %v8979 = vpack.c.b16 %v7739, %v7729
          %v8980 = vpack.c.b16 %v7740, %v7730
          %v8981 = vpack.c.b16 %v7741, %v7731
          %v8982 = vpack.c.b16 %v7742, %v7732
          %v8983 = vpack.c.b16 %v7753, %v7743
          %v8984 = vpack.c.b16 %v7754, %v7744
          %v8985 = vpack.c.b16 %v7755, %v7745
          %v8986 = vpack.c.b16 %v7756, %v7746
          %v8987 = vpack.c.b16 %v7757, %v7747
          %v8988 = vpack.c.b16 %v7758, %v7748
          %v8989 = vpack.c.b16 %v7759, %v7749
          %v8990 = vpack.c.b16 %v7760, %v7750
          %v8991 = vpack.c.b16 %v7761, %v7751
          %v8992 = vpack.c.b16 %v7762, %v7752
          %v8993 = vpack.c.b16 %v7773, %v7763
          %v8994 = vpack.c.b16 %v7774, %v7764
          %v8995 = vpack.c.b16 %v7775, %v7765
          %v8996 = vpack.c.b16 %v7776, %v7766
          %v8997 = vpack.c.b16 %v7777, %v7767
          %v8998 = vpack.c.b16 %v7778, %v7768
          %v8999 = vpack.c.b16 %v7779, %v7769
          %v9000 = vpack.c.b16 %v7780, %v7770
          %v9001 = vpack.c.b16 %v7781, %v7771
          %v9002 = vpack.c.b16 %v7782, %v7772
          %v9003 = vpack.c.b16 %v7793, %v7783
          %v9004 = vpack.c.b16 %v7794, %v7784
          %v9005 = vpack.c.b16 %v7795, %v7785
          %v9006 = vpack.c.b16 %v7796, %v7786
          %v9007 = vpack.c.b16 %v7797, %v7787
          %v9008 = vpack.c.b16 %v7798, %v7788
          %v9009 = vpack.c.b16 %v7799, %v7789
          %v9010 = vpack.c.b16 %v7800, %v7790
          %v9011 = vpack.c.b16 %v7801, %v7791
          %v9012 = vpack.c.b16 %v7802, %v7792
          %v9013 = vpack.c.b16 %v7813, %v7803
          %v9014 = vpack.c.b16 %v7814, %v7804
          %v9015 = vpack.c.b16 %v7815, %v7805
          %v9016 = vpack.c.b16 %v7816, %v7806
          %v9017 = vpack.c.b16 %v7817, %v7807
          %v9018 = vpack.c.b16 %v7818, %v7808
          %v9019 = vpack.c.b16 %v7819, %v7809
          %v9020 = vpack.c.b16 %v7820, %v7810
          %v9021 = vpack.c.b16 %v7821, %v7811
          %v9022 = vpack.c.b16 %v7822, %v7812
          %v9023 = vpack.c.b16 %v7833, %v7823
          %v9024 = vpack.c.b16 %v7834, %v7824
          %v9025 = vpack.c.b16 %v7835, %v7825
          %v9026 = vpack.c.b16 %v7836, %v7826
          %v9027 = vpack.c.b16 %v7837, %v7827
          %v9028 = vpack.c.b16 %v7838, %v7828
          %v9029 = vpack.c.b16 %v7839, %v7829
          %v9030 = vpack.c.b16 %v7840, %v7830
          %v9031 = vpack.c.b16 %v7841, %v7831
          %v9032 = vpack.c.b16 %v7842, %v7832
          %v9033 = vpack.c.b16 %v7853, %v7843
          %v9034 = vpack.c.b16 %v7854, %v7844
          %v9035 = vpack.c.b16 %v7855, %v7845
          %v9036 = vpack.c.b16 %v7856, %v7846
          %v9037 = vpack.c.b16 %v7857, %v7847
          %v9038 = vpack.c.b16 %v7858, %v7848
          %v9039 = vpack.c.b16 %v7859, %v7849
          %v9040 = vpack.c.b16 %v7860, %v7850
          %v9041 = vpack.c.b16 %v7861, %v7851
          %v9042 = vpack.c.b16 %v7862, %v7852
          %v9043 = vpack.c.b16 %v7873, %v7863
          %v9044 = vpack.c.b16 %v7874, %v7864
          %v9045 = vpack.c.b16 %v7875, %v7865
          %v9046 = vpack.c.b16 %v7876, %v7866
          %v9047 = vpack.c.b16 %v7877, %v7867
          %v9048 = vpack.c.b16 %v7878, %v7868
          %v9049 = vpack.c.b16 %v7879, %v7869
          %v9050 = vpack.c.b16 %v7880, %v7870
          %v9051 = vpack.c.b16 %v7881, %v7871
          %v9052 = vpack.c.b16 %v7882, %v7872
          %v9053 = vpack.c.b16 %v7893, %v7883
          %v9054 = vpack.c.b16 %v7894, %v7884
          %v9055 = vpack.c.b16 %v7895, %v7885
          %v9056 = vpack.c.b16 %v7896, %v7886
          %v9057 = vpack.c.b16 %v7897, %v7887
          %v9058 = vpack.c.b16 %v7898, %v7888
          %v9059 = vpack.c.b16 %v7899, %v7889
          %v9060 = vpack.c.b16 %v7900, %v7890
          %v9061 = vpack.c.b16 %v7901, %v7891
          %v9062 = vpack.c.b16 %v7902, %v7892
          %v9063 = vpack.c.b16 %v7913, %v7903
          %v9064 = vpack.c.b16 %v7914, %v7904
          %v9065 = vpack.c.b16 %v7915, %v7905
          %v9066 = vpack.c.b16 %v7916, %v7906
          %v9067 = vpack.c.b16 %v7917, %v7907
          %v9068 = vpack.c.b16 %v7918, %v7908
          %v9069 = vpack.c.b16 %v7919, %v7909
          %v9070 = vpack.c.b16 %v7920, %v7910
          %v9071 = vpack.c.b16 %v7921, %v7911
          %v9072 = vpack.c.b16 %v7922, %v7912
          %v9073 = vpack.c.b16 %v7933, %v7923
          %v9074 = vpack.c.b16 %v7934, %v7924
          %v9075 = vpack.c.b16 %v7935, %v7925
          %v9076 = vpack.c.b16 %v7936, %v7926
          %v9077 = vpack.c.b16 %v7937, %v7927
          %v9078 = vpack.c.b16 %v7938, %v7928
          %v9079 = vpack.c.b16 %v7939, %v7929
          %v9080 = vpack.c.b16 %v7940, %v7930
          %v9081 = vpack.c.b16 %v7941, %v7931
          %v9082 = vpack.c.b16 %v7942, %v7932
          %v9083 = vpack.c.b16 %v7953, %v7943
          %v9084 = vpack.c.b16 %v7954, %v7944
          %v9085 = vpack.c.b16 %v7955, %v7945
          %v9086 = vpack.c.b16 %v7956, %v7946
          %v9087 = vpack.c.b16 %v7957, %v7947
          %v9088 = vpack.c.b16 %v7958, %v7948
          %v9089 = vpack.c.b16 %v7959, %v7949
          %v9090 = vpack.c.b16 %v7960, %v7950
          %v9091 = vpack.c.b16 %v7961, %v7951
          %v9092 = vpack.c.b16 %v7962, %v7952
          %v9093 = vpack.c.b16 %v7973, %v7963
          %v9094 = vpack.c.b16 %v7974, %v7964
          %v9095 = vpack.c.b16 %v7975, %v7965
          %v9096 = vpack.c.b16 %v7976, %v7966
          %v9097 = vpack.c.b16 %v7977, %v7967
          %v9098 = vpack.c.b16 %v7978, %v7968
          %v9099 = vpack.c.b16 %v7979, %v7969
          %v9100 = vpack.c.b16 %v7980, %v7970
          %v9101 = vpack.c.b16 %v7981, %v7971
          %v9102 = vpack.c.b16 %v7982, %v7972
          %v9103 = vpack.c.b16 %v7993, %v7983
          %v9104 = vpack.c.b16 %v7994, %v7984
          %v9105 = vpack.c.b16 %v7995, %v7985
          %v9106 = vpack.c.b16 %v7996, %v7986
          %v9107 = vpack.c.b16 %v7997, %v7987
          %v9108 = vpack.c.b16 %v7998, %v7988
          %v9109 = vpack.c.b16 %v7999, %v7989
          %v9110 = vpack.c.b16 %v8000, %v7990
          %v9111 = vpack.c.b16 %v8001, %v7991
          %v9112 = vpack.c.b16 %v8002, %v7992
          %v9113 = vpack.c.b16 %v8013, %v8003
          %v9114 = vpack.c.b16 %v8014, %v8004
          %v9115 = vpack.c.b16 %v8015, %v8005
          %v9116 = vpack.c.b16 %v8016, %v8006
          %v9117 = vpack.c.b16 %v8017, %v8007
          %v9118 = vpack.c.b16 %v8018, %v8008
          %v9119 = vpack.c.b16 %v8019, %v8009
          %v9120 = vpack.c.b16 %v8020, %v8010
          %v9121 = vpack.c.b16 %v8021, %v8011
          %v9122 = vpack.c.b16 %v8022, %v8012
          %v9123 = vpack.c.b16 %v8033, %v8023
          %v9124 = vpack.c.b16 %v8034, %v8024
          %v9125 = vpack.c.b16 %v8035, %v8025
          %v9126 = vpack.c.b16 %v8036, %v8026
          %v9127 = vpack.c.b16 %v8037, %v8027
          %v9128 = vpack.c.b16 %v8038, %v8028
          %v9129 = vpack.c.b16 %v8039, %v8029
          %v9130 = vpack.c.b16 %v8040, %v8030
          %v9131 = vpack.c.b16 %v8041, %v8031
          %v9132 = vpack.c.b16 %v8042, %v8032
          %v9133 = vpack.c.b16 %v8053, %v8043
          %v9134 = vpack.c.b16 %v8054, %v8044
          %v9135 = vpack.c.b16 %v8055, %v8045
          %v9136 = vpack.c.b16 %v8056, %v8046
          %v9137 = vpack.c.b16 %v8057, %v8047
          %v9138 = vpack.c.b16 %v8058, %v8048
          %v9139 = vpack.c.b16 %v8059, %v8049
          %v9140 = vpack.c.b16 %v8060, %v8050
          %v9141 = vpack.c.b16 %v8061, %v8051
          %v9142 = vpack.c.b16 %v8062, %v8052
          %v9143 = vpack.c.b16 %v8073, %v8063
          %v9144 = vpack.c.b16 %v8074, %v8064
          %v9145 = vpack.c.b16 %v8075, %v8065
          %v9146 = vpack.c.b16 %v8076, %v8066
          %v9147 = vpack.c.b16 %v8077, %v8067
          %v9148 = vpack.c.b16 %v8078, %v8068
          %v9149 = vpack.c.b16 %v8079, %v8069
          %v9150 = vpack.c.b16 %v8080, %v8070
          %v9151 = vpack.c.b16 %v8081, %v8071
          %v9152 = vpack.c.b16 %v8082, %v8072
          %v9153 = vpack.c.b16 %v8093, %v8083
          %v9154 = vpack.c.b16 %v8094, %v8084
          %v9155 = vpack.c.b16 %v8095, %v8085
          %v9156 = vpack.c.b16 %v8096, %v8086
          %v9157 = vpack.c.b16 %v8097, %v8087
          %v9158 = vpack.c.b16 %v8098, %v8088
          %v9159 = vpack.c.b16 %v8099, %v8089
          %v9160 = vpack.c.b16 %v8100, %v8090
          %v9161 = vpack.c.b16 %v8101, %v8091
          %v9162 = vpack.c.b16 %v8102, %v8092
          %v9163 = vpack.c.b16 %v8113, %v8103
          %v9164 = vpack.c.b16 %v8114, %v8104
          %v9165 = vpack.c.b16 %v8115, %v8105
          %v9166 = vpack.c.b16 %v8116, %v8106
          %v9167 = vpack.c.b16 %v8117, %v8107
          %v9168 = vpack.c.b16 %v8118, %v8108
          %v9169 = vpack.c.b16 %v8119, %v8109
          %v9170 = vpack.c.b16 %v8120, %v8110
          %v9171 = vpack.c.b16 %v8121, %v8111
          %v9172 = vpack.c.b16 %v8122, %v8112
          %v9173 = vpack.c.b16 %v8133, %v8123
          %v9174 = vpack.c.b16 %v8134, %v8124
          %v9175 = vpack.c.b16 %v8135, %v8125
          %v9176 = vpack.c.b16 %v8136, %v8126
          %v9177 = vpack.c.b16 %v8137, %v8127
          %v9178 = vpack.c.b16 %v8138, %v8128
          %v9179 = vpack.c.b16 %v8139, %v8129
          %v9180 = vpack.c.b16 %v8140, %v8130
          %v9181 = vpack.c.b16 %v8141, %v8131
          %v9182 = vpack.c.b16 %v8142, %v8132
          %v9183 = vpack.c.b16 %v8153, %v8143
          %v9184 = vpack.c.b16 %v8154, %v8144
          %v9185 = vpack.c.b16 %v8155, %v8145
          %v9186 = vpack.c.b16 %v8156, %v8146
          %v9187 = vpack.c.b16 %v8157, %v8147
          %v9188 = vpack.c.b16 %v8158, %v8148
          %v9189 = vpack.c.b16 %v8159, %v8149
          %v9190 = vpack.c.b16 %v8160, %v8150
          %v9191 = vpack.c.b16 %v8161, %v8151
          %v9192 = vpack.c.b16 %v8162, %v8152
          %v9193 = vpack.c.b16 %v8173, %v8163
          %v9194 = vpack.c.b16 %v8174, %v8164
          %v9195 = vpack.c.b16 %v8175, %v8165
          %v9196 = vpack.c.b16 %v8176, %v8166
          %v9197 = vpack.c.b16 %v8177, %v8167
          %v9198 = vpack.c.b16 %v8178, %v8168
          %v9199 = vpack.c.b16 %v8179, %v8169
          %v9200 = vpack.c.b16 %v8180, %v8170
          %v9201 = vpack.c.b16 %v8181, %v8171
          %v9202 = vpack.c.b16 %v8182, %v8172
          %v9203 = vpack.c.b16 %v8193, %v8183
          %v9204 = vpack.c.b16 %v8194, %v8184
          %v9205 = vpack.c.b16 %v8195, %v8185
          %v9206 = vpack.c.b16 %v8196, %v8186
          %v9207 = vpack.c.b16 %v8197, %v8187
          %v9208 = vpack.c.b16 %v8198, %v8188
          %v9209 = vpack.c.b16 %v8199, %v8189
          %v9210 = vpack.c.b16 %v8200, %v8190
          %v9211 = vpack.c.b16 %v8201, %v8191
          %v9212 = vpack.c.b16 %v8202, %v8192
          %v9213 = vpack.c.b16 %v8213, %v8203
          %v9214 = vpack.c.b16 %v8214, %v8204
          %v9215 = vpack.c.b16 %v8215, %v8205
          %v9216 = vpack.c.b16 %v8216, %v8206
          %v9217 = vpack.c.b16 %v8217, %v8207
          %v9218 = vpack.c.b16 %v8218, %v8208
          %v9219 = vpack.c.b16 %v8219, %v8209
          %v9220 = vpack.c.b16 %v8220, %v8210
          %v9221 = vpack.c.b16 %v8221, %v8211
          %v9222 = vpack.c.b16 %v8222, %v8212
          %v9223 = vpack.c.b16 %v8233, %v8223
          %v9224 = vpack.c.b16 %v8234, %v8224
          %v9225 = vpack.c.b16 %v8235, %v8225
          %v9226 = vpack.c.b16 %v8236, %v8226
          %v9227 = vpack.c.b16 %v8237, %v8227
          %v9228 = vpack.c.b16 %v8238, %v8228
          %v9229 = vpack.c.b16 %v8239, %v8229
          %v9230 = vpack.c.b16 %v8240, %v8230
          %v9231 = vpack.c.b16 %v8241, %v8231
          %v9232 = vpack.c.b16 %v8242, %v8232
          %v9233 = vpack.c.b16 %v8253, %v8243
          %v9234 = vpack.c.b16 %v8254, %v8244
          %v9235 = vpack.c.b16 %v8255, %v8245
          %v9236 = vpack.c.b16 %v8256, %v8246
          %v9237 = vpack.c.b16 %v8257, %v8247
          %v9238 = vpack.c.b16 %v8258, %v8248
          %v9239 = vpack.c.b16 %v8259, %v8249
          %v9240 = vpack.c.b16 %v8260, %v8250
          %v9241 = vpack.c.b16 %v8261, %v8251
          %v9242 = vpack.c.b16 %v8262, %v8252
          %v9243 = vpack.c.b16 %v8273, %v8263
          %v9244 = vpack.c.b16 %v8274, %v8264
          %v9245 = vpack.c.b16 %v8275, %v8265
          %v9246 = vpack.c.b16 %v8276, %v8266
          %v9247 = vpack.c.b16 %v8277, %v8267
          %v9248 = vpack.c.b16 %v8278, %v8268
          %v9249 = vpack.c.b16 %v8279, %v8269
          %v9250 = vpack.c.b16 %v8280, %v8270
          %v9251 = vpack.c.b16 %v8281, %v8271
          %v9252 = vpack.c.b16 %v8282, %v8272
          %v9253 = vpack.c.b16 %v8293, %v8283
          %v9254 = vpack.c.b16 %v8294, %v8284
          %v9255 = vpack.c.b16 %v8295, %v8285
          %v9256 = vpack.c.b16 %v8296, %v8286
          %v9257 = vpack.c.b16 %v8297, %v8287
          %v9258 = vpack.c.b16 %v8298, %v8288
          %v9259 = vpack.c.b16 %v8299, %v8289
          %v9260 = vpack.c.b16 %v8300, %v8290
          %v9261 = vpack.c.b16 %v8301, %v8291
          %v9262 = vpack.c.b16 %v8302, %v8292
          %v9263 = vpack.c.b16 %v8313, %v8303
          %v9264 = vpack.c.b16 %v8314, %v8304
          %v9265 = vpack.c.b16 %v8315, %v8305
          %v9266 = vpack.c.b16 %v8316, %v8306
          %v9267 = vpack.c.b16 %v8317, %v8307
          %v9268 = vpack.c.b16 %v8318, %v8308
          %v9269 = vpack.c.b16 %v8319, %v8309
          %v9270 = vpack.c.b16 %v8320, %v8310
          %v9271 = vpack.c.b16 %v8321, %v8311
          %v9272 = vpack.c.b16 %v8322, %v8312
          %v9273 = vpack.c.b16 %v8333, %v8323
          %v9274 = vpack.c.b16 %v8334, %v8324
          %v9275 = vpack.c.b16 %v8335, %v8325
          %v9276 = vpack.c.b16 %v8336, %v8326
          %v9277 = vpack.c.b16 %v8337, %v8327
          %v9278 = vpack.c.b16 %v8338, %v8328
          %v9279 = vpack.c.b16 %v8339, %v8329
          %v9280 = vpack.c.b16 %v8340, %v8330
          %v9281 = vpack.c.b16 %v8341, %v8331
          %v9282 = vpack.c.b16 %v8342, %v8332
          %v9283 = vpack.c.b16 %v8353, %v8343
          %v9284 = vpack.c.b16 %v8354, %v8344
          %v9285 = vpack.c.b16 %v8355, %v8345
          %v9286 = vpack.c.b16 %v8356, %v8346
          %v9287 = vpack.c.b16 %v8357, %v8347
          %v9288 = vpack.c.b16 %v8358, %v8348
          %v9289 = vpack.c.b16 %v8359, %v8349
          %v9290 = vpack.c.b16 %v8360, %v8350
          %v9291 = vpack.c.b16 %v8361, %v8351
          %v9292 = vpack.c.b16 %v8362, %v8352
          %v9293 = vpack.c.b16 %v8373, %v8363
          %v9294 = vpack.c.b16 %v8374, %v8364
          %v9295 = vpack.c.b16 %v8375, %v8365
          %v9296 = vpack.c.b16 %v8376, %v8366
          %v9297 = vpack.c.b16 %v8377, %v8367
          %v9298 = vpack.c.b16 %v8378, %v8368
          %v9299 = vpack.c.b16 %v8379, %v8369
          %v9300 = vpack.c.b16 %v8380, %v8370
          %v9301 = vpack.c.b16 %v8381, %v8371
          %v9302 = vpack.c.b16 %v8382, %v8372
          %v9303 = vpack.c.b16 %v8393, %v8383
          %v9304 = vpack.c.b16 %v8394, %v8384
          %v9305 = vpack.c.b16 %v8395, %v8385
          %v9306 = vpack.c.b16 %v8396, %v8386
          %v9307 = vpack.c.b16 %v8397, %v8387
          %v9308 = vpack.c.b16 %v8398, %v8388
          %v9309 = vpack.c.b16 %v8399, %v8389
          %v9310 = vpack.c.b16 %v8400, %v8390
          %v9311 = vpack.c.b16 %v8401, %v8391
          %v9312 = vpack.c.b16 %v8402, %v8392
          %v9313 = vpack.c.b16 %v8413, %v8403
          %v9314 = vpack.c.b16 %v8414, %v8404
          %v9315 = vpack.c.b16 %v8415, %v8405
          %v9316 = vpack.c.b16 %v8416, %v8406
          %v9317 = vpack.c.b16 %v8417, %v8407
          %v9318 = vpack.c.b16 %v8418, %v8408
          %v9319 = vpack.c.b16 %v8419, %v8409
          %v9320 = vpack.c.b16 %v8420, %v8410
          %v9321 = vpack.c.b16 %v8421, %v8411
          %v9322 = vpack.c.b16 %v8422, %v8412
          %v9323 = vpack.c.b16 %v8433, %v8423
          %v9324 = vpack.c.b16 %v8434, %v8424
          %v9325 = vpack.c.b16 %v8435, %v8425
          %v9326 = vpack.c.b16 %v8436, %v8426
          %v9327 = vpack.c.b16 %v8437, %v8427
          %v9328 = vpack.c.b16 %v8438, %v8428
          %v9329 = vpack.c.b16 %v8439, %v8429
          %v9330 = vpack.c.b16 %v8440, %v8430
          %v9331 = vpack.c.b16 %v8441, %v8431
          %v9332 = vpack.c.b16 %v8442, %v8432
          %v9333 = vpack.c.b16 %v8453, %v8443
          %v9334 = vpack.c.b16 %v8454, %v8444
          %v9335 = vpack.c.b16 %v8455, %v8445
          %v9336 = vpack.c.b16 %v8456, %v8446
          %v9337 = vpack.c.b16 %v8457, %v8447
          %v9338 = vpack.c.b16 %v8458, %v8448
          %v9339 = vpack.c.b16 %v8459, %v8449
          %v9340 = vpack.c.b16 %v8460, %v8450
          %v9341 = vpack.c.b16 %v8461, %v8451
          %v9342 = vpack.c.b16 %v8462, %v8452
          %v9343 = vpack.c.b16 %v8473, %v8463
          %v9344 = vpack.c.b16 %v8474, %v8464
          %v9345 = vpack.c.b16 %v8475, %v8465
          %v9346 = vpack.c.b16 %v8476, %v8466
          %v9347 = vpack.c.b16 %v8477, %v8467
          %v9348 = vpack.c.b16 %v8478, %v8468
          %v9349 = vpack.c.b16 %v8479, %v8469
          %v9350 = vpack.c.b16 %v8480, %v8470
          %v9351 = vpack.c.b16 %v8481, %v8471
          %v9352 = vpack.c.b16 %v8482, %v8472
          %v9353 = vpack.c.b16 %v8493, %v8483
          %v9354 = vpack.c.b16 %v8494, %v8484
          %v9355 = vpack.c.b16 %v8495, %v8485
          %v9356 = vpack.c.b16 %v8496, %v8486
          %v9357 = vpack.c.b16 %v8497, %v8487
          %v9358 = vpack.c.b16 %v8498, %v8488
          %v9359 = vpack.c.b16 %v8499, %v8489
          %v9360 = vpack.c.b16 %v8500, %v8490
          %v9361 = vpack.c.b16 %v8501, %v8491
          %v9362 = vpack.c.b16 %v8502, %v8492
          %v9363 = vpack.c.b16 %v8513, %v8503
          %v9364 = vpack.c.b16 %v8514, %v8504
          %v9365 = vpack.c.b16 %v8515, %v8505
          %v9366 = vpack.c.b16 %v8516, %v8506
          %v9367 = vpack.c.b16 %v8517, %v8507
          %v9368 = vpack.c.b16 %v8518, %v8508
          %v9369 = vpack.c.b16 %v8519, %v8509
          %v9370 = vpack.c.b16 %v8520, %v8510
          %v9371 = vpack.c.b16 %v8521, %v8511
          %v9372 = vpack.c.b16 %v8522, %v8512
          %v9373 = vpack.c.b16 %v8533, %v8523
          %v9374 = vpack.c.b16 %v8534, %v8524
          %v9375 = vpack.c.b16 %v8535, %v8525
          %v9376 = vpack.c.b16 %v8536, %v8526
          %v9377 = vpack.c.b16 %v8537, %v8527
          %v9378 = vpack.c.b16 %v8538, %v8528
          %v9379 = vpack.c.b16 %v8539, %v8529
          %v9380 = vpack.c.b16 %v8540, %v8530
          %v9381 = vpack.c.b16 %v8541, %v8531
          %v9382 = vpack.c.b16 %v8542, %v8532
          %v9383 = vpack.c.b16 %v8553, %v8543
          %v9384 = vpack.c.b16 %v8554, %v8544
          %v9385 = vpack.c.b16 %v8555, %v8545
          %v9386 = vpack.c.b16 %v8556, %v8546
          %v9387 = vpack.c.b16 %v8557, %v8547
          %v9388 = vpack.c.b16 %v8558, %v8548
          %v9389 = vpack.c.b16 %v8559, %v8549
          %v9390 = vpack.c.b16 %v8560, %v8550
          %v9391 = vpack.c.b16 %v8561, %v8551
          %v9392 = vpack.c.b16 %v8562, %v8552
          %v9393 = vpack.c.b16 %v8573, %v8563
          %v9394 = vpack.c.b16 %v8574, %v8564
          %v9395 = vpack.c.b16 %v8575, %v8565
          %v9396 = vpack.c.b16 %v8576, %v8566
          %v9397 = vpack.c.b16 %v8577, %v8567
          %v9398 = vpack.c.b16 %v8578, %v8568
          %v9399 = vpack.c.b16 %v8579, %v8569
          %v9400 = vpack.c.b16 %v8580, %v8570
          %v9401 = vpack.c.b16 %v8581, %v8571
          %v9402 = vpack.c.b16 %v8582, %v8572
          %v9403 = vpack.c.b16 %v8593, %v8583
          %v9404 = vpack.c.b16 %v8594, %v8584
          %v9405 = vpack.c.b16 %v8595, %v8585
          %v9406 = vpack.c.b16 %v8596, %v8586
          %v9407 = vpack.c.b16 %v8597, %v8587
          %v9408 = vpack.c.b16 %v8598, %v8588
          %v9409 = vpack.c.b16 %v8599, %v8589
          %v9410 = vpack.c.b16 %v8600, %v8590
          %v9411 = vpack.c.b16 %v8601, %v8591
          %v9412 = vpack.c.b16 %v8602, %v8592
          %v9413 = vpack.c.b16 %v8613, %v8603
          %v9414 = vpack.c.b16 %v8614, %v8604
          %v9415 = vpack.c.b16 %v8615, %v8605
          %v9416 = vpack.c.b16 %v8616, %v8606
          %v9417 = vpack.c.b16 %v8617, %v8607
          %v9418 = vpack.c.b16 %v8618, %v8608
          %v9419 = vpack.c.b16 %v8619, %v8609
          %v9420 = vpack.c.b16 %v8620, %v8610
          %v9421 = vpack.c.b16 %v8621, %v8611
          %v9422 = vpack.c.b16 %v8622, %v8612
          %10223 = vmatprep.subr.bf16.mxu0 %v8624
          %10224 = vmatpush1.bf16.msra.mxu0 %v8623
          %10225 = vmatprep.subr.bf16.mxu0 %v8634
          %10226 = vmatpush1.bf16.msra.mxu0 %v8633
          %10227 = vmatprep.subr.bf16.mxu0 %v8644
          %10228 = vmatpush1.bf16.msra.mxu0 %v8643
          %10229 = vmatprep.subr.bf16.mxu0 %v8654
          %10230 = vmatpush1.bf16.msra.mxu0 %v8653
          %10231 = vmatprep.subr.bf16.mxu0 %v8664
          %10232 = vmatpush1.bf16.msra.mxu0 %v8663
          %10233 = vmatprep.subr.bf16.mxu0 %v8674
          %10234 = vmatpush1.bf16.msra.mxu0 %v8673
          %10235 = vmatprep.subr.bf16.mxu0 %v8684
          %10236 = vmatpush1.bf16.msra.mxu0 %v8683
          %10237 = vmatprep.subr.bf16.mxu0 %v8694
          %10238 = vmatpush1.bf16.msra.mxu0 %v8693
          %10239 = vmatprep.subr.bf16.mxu0 %v8704
          %10240 = vmatpush1.bf16.msra.mxu0 %v8703
          %10241 = vmatprep.subr.bf16.mxu0 %v8714
          %10242 = vmatpush1.bf16.msra.mxu0 %v8713
          %10243 = vmatprep.subr.bf16.mxu0 %v8724
          %10244 = vmatpush1.bf16.msra.mxu0 %v8723
          %10245 = vmatprep.subr.bf16.mxu0 %v8734
          %10246 = vmatpush1.bf16.msra.mxu0 %v8733
          %10247 = vmatprep.subr.bf16.mxu0 %v8744
          %10248 = vmatpush1.bf16.msra.mxu0 %v8743
          %10249 = vmatprep.subr.bf16.mxu0 %v8754
          %10250 = vmatpush1.bf16.msra.mxu0 %v8753
          %10251 = vmatprep.subr.bf16.mxu0 %v8764
          %10252 = vmatpush1.bf16.msra.mxu0 %v8763
          %10253 = vmatprep.subr.bf16.mxu0 %v8774
          %10254 = vmatpush1.bf16.msra.mxu0 %v8773
          %10255 = vmatprep.mubr.bf16.mxu0 %v5360
          %10256 = vmatmul.mubr.bf16.gmra.mrb[0].mxu0 %v5359
          %v10257 = vpop.f32.mrb[0].mxu0
          %v10258 = vadd.f32 %v6176, %v10257
          %v10259 = vpop.f32.mrb[0].mxu0
          %v10260 = vadd.f32 %v6180, %v10259
          %v10261 = vpop.f32.mrb[0].mxu0
          %v10262 = vadd.f32 %v6176, %v10261
          %v10263 = vpop.f32.mrb[0].mxu0
          %v10264 = vadd.f32 %v6180, %v10263
          %10265 = vdwg.mxu0
          %10266 = vmatprep.subr.bf16.mxu0 %v8784
          %10267 = vmatpush1.bf16.msra.mxu0 %v8783
          %10268 = vmatprep.subr.bf16.mxu0 %v8794
          %10269 = vmatpush1.bf16.msra.mxu0 %v8793
          %10270 = vmatprep.subr.bf16.mxu0 %v8804
          %10271 = vmatpush1.bf16.msra.mxu0 %v8803
          %10272 = vmatprep.subr.bf16.mxu0 %v8814
          %10273 = vmatpush1.bf16.msra.mxu0 %v8813
          %10274 = vmatprep.subr.bf16.mxu0 %v8824
          %10275 = vmatpush1.bf16.msra.mxu0 %v8823
          %10276 = vmatprep.subr.bf16.mxu0 %v8834
          %10277 = vmatpush1.bf16.msra.mxu0 %v8833
          %10278 = vmatprep.subr.bf16.mxu0 %v8844
          %10279 = vmatpush1.bf16.msra.mxu0 %v8843
          %10280 = vmatprep.subr.bf16.mxu0 %v8854
          %10281 = vmatpush1.bf16.msra.mxu0 %v8853
          %10282 = vmatprep.subr.bf16.mxu0 %v8864
          %10283 = vmatpush1.bf16.msra.mxu0 %v8863
          %10284 = vmatprep.subr.bf16.mxu0 %v8874
          %10285 = vmatpush1.bf16.msra.mxu0 %v8873
          %10286 = vmatprep.subr.bf16.mxu0 %v8884
          %10287 = vmatpush1.bf16.msra.mxu0 %v8883
          %10288 = vmatprep.subr.bf16.mxu0 %v8894
          %10289 = vmatpush1.bf16.msra.mxu0 %v8893
          %10290 = vmatprep.subr.bf16.mxu0 %v8904
          %10291 = vmatpush1.bf16.msra.mxu0 %v8903
          %10292 = vmatprep.subr.bf16.mxu0 %v8914
          %10293 = vmatpush1.bf16.msra.mxu0 %v8913
          %10294 = vmatprep.subr.bf16.mxu0 %v8924
          %10295 = vmatpush1.bf16.msra.mxu0 %v8923
          %10296 = vmatprep.subr.bf16.mxu0 %v8934
          %10297 = vmatpush1.bf16.msra.mxu0 %v8933
          %10298 = vmatprep.mubr.bf16.mxu0 %v5362
          %10299 = vmatmul.mubr.bf16.gmra.mrb[0].mxu0 %v5361
          %v10300 = vpop.f32.mrb[0].mxu0
          %v10301 = vadd.f32 %v10258, %v10300
          %v10302 = vpop.f32.mrb[0].mxu0
          %v10303 = vadd.f32 %v10260, %v10302
          %v10304 = vpop.f32.mrb[0].mxu0
          %v10305 = vadd.f32 %v10262, %v10304
          %v10306 = vpop.f32.mrb[0].mxu0
          %v10307 = vadd.f32 %v10264, %v10306
          %10308 = vdwg.mxu0
          %10309 = vmatprep.subr.bf16.mxu0 %v8944
          %10310 = vmatpush1.bf16.msra.mxu0 %v8943
          %10311 = vmatprep.subr.bf16.mxu0 %v8954
          %10312 = vmatpush1.bf16.msra.mxu0 %v8953
          %10313 = vmatprep.subr.bf16.mxu0 %v8964
          %10314 = vmatpush1.bf16.msra.mxu0 %v8963
          %10315 = vmatprep.subr.bf16.mxu0 %v8974
          %10316 = vmatpush1.bf16.msra.mxu0 %v8973
          %10317 = vmatprep.subr.bf16.mxu0 %v8984
          %10318 = vmatpush1.bf16.msra.mxu0 %v8983
          %10319 = vmatprep.subr.bf16.mxu0 %v8994
          %10320 = vmatpush1.bf16.msra.mxu0 %v8993
          %10321 = vmatprep.subr.bf16.mxu0 %v9004
          %10322 = vmatpush1.bf16.msra.mxu0 %v9003
          %10323 = vmatprep.subr.bf16.mxu0 %v9014
          %10324 = vmatpush1.bf16.msra.mxu0 %v9013
          %10325 = vmatprep.subr.bf16.mxu0 %v9024
          %10326 = vmatpush1.bf16.msra.mxu0 %v9023
          %10327 = vmatprep.subr.bf16.mxu0 %v9034
          %10328 = vmatpush1.bf16.msra.mxu0 %v9033
          %10329 = vmatprep.subr.bf16.mxu0 %v9044
          %10330 = vmatpush1.bf16.msra.mxu0 %v9043
          %10331 = vmatprep.subr.bf16.mxu0 %v9054
          %10332 = vmatpush1.bf16.msra.mxu0 %v9053
          %10333 = vmatprep.subr.bf16.mxu0 %v9064
          %10334 = vmatpush1.bf16.msra.mxu0 %v9063
          %10335 = vmatprep.subr.bf16.mxu0 %v9074
          %10336 = vmatpush1.bf16.msra.mxu0 %v9073
          %10337 = vmatprep.subr.bf16.mxu0 %v9084
          %10338 = vmatpush1.bf16.msra.mxu0 %v9083
          %10339 = vmatprep.subr.bf16.mxu0 %v9094
          %10340 = vmatpush1.bf16.msra.mxu0 %v9093
          %10341 = vmatprep.mubr.bf16.mxu0 %v5364
          %10342 = vmatmul.mubr.bf16.gmra.mrb[0].mxu0 %v5363
          %v10343 = vpop.f32.mrb[0].mxu0
          %v10344 = vadd.f32 %v10301, %v10343
          %v10345 = vpop.f32.mrb[0].mxu0
          %v10346 = vadd.f32 %v10303, %v10345
          %v10347 = vpop.f32.mrb[0].mxu0
          %v10348 = vadd.f32 %v10305, %v10347
          %v10349 = vpop.f32.mrb[0].mxu0
          %v10350 = vadd.f32 %v10307, %v10349
          %10351 = vdwg.mxu0
          %10352 = vmatprep.subr.bf16.mxu0 %v9104
          %10353 = vmatpush1.bf16.msra.mxu0 %v9103
          %10354 = vmatprep.subr.bf16.mxu0 %v9114
          %10355 = vmatpush1.bf16.msra.mxu0 %v9113
          %10356 = vmatprep.subr.bf16.mxu0 %v9124
          %10357 = vmatpush1.bf16.msra.mxu0 %v9123
          %10358 = vmatprep.subr.bf16.mxu0 %v9134
          %10359 = vmatpush1.bf16.msra.mxu0 %v9133
          %10360 = vmatprep.subr.bf16.mxu0 %v9144
          %10361 = vmatpush1.bf16.msra.mxu0 %v9143
          %10362 = vmatprep.subr.bf16.mxu0 %v9154
          %10363 = vmatpush1.bf16.msra.mxu0 %v9153
          %10364 = vmatprep.subr.bf16.mxu0 %v9164
          %10365 = vmatpush1.bf16.msra.mxu0 %v9163
          %10366 = vmatprep.subr.bf16.mxu0 %v9174
          %10367 = vmatpush1.bf16.msra.mxu0 %v9173
          %10368 = vmatprep.subr.bf16.mxu0 %v9184
          %10369 = vmatpush1.bf16.msra.mxu0 %v9183
          %10370 = vmatprep.subr.bf16.mxu0 %v9194
          %10371 = vmatpush1.bf16.msra.mxu0 %v9193
          %10372 = vmatprep.subr.bf16.mxu0 %v9204
          %10373 = vmatpush1.bf16.msra.mxu0 %v9203
          %10374 = vmatprep.subr.bf16.mxu0 %v9214
          %10375 = vmatpush1.bf16.msra.mxu0 %v9213
          %10376 = vmatprep.subr.bf16.mxu0 %v9224
          %10377 = vmatpush1.bf16.msra.mxu0 %v9223
          %10378 = vmatprep.subr.bf16.mxu0 %v9234
          %10379 = vmatpush1.bf16.msra.mxu0 %v9233
          %10380 = vmatprep.subr.bf16.mxu0 %v9244
          %10381 = vmatpush1.bf16.msra.mxu0 %v9243
          %10382 = vmatprep.subr.bf16.mxu0 %v9254
          %10383 = vmatpush1.bf16.msra.mxu0 %v9253
          %10384 = vmatprep.mubr.bf16.mxu0 %v5366
          %10385 = vmatmul.mubr.bf16.gmra.mrb[0].mxu0 %v5365
          %v10386 = vpop.f32.mrb[0].mxu0
          %v10387 = vadd.f32 %v10344, %v10386
          %v10388 = vpop.f32.mrb[0].mxu0
          %v10389 = vadd.f32 %v10346, %v10388
          %v10390 = vpop.f32.mrb[0].mxu0
          %v10391 = vadd.f32 %v10348, %v10390
          %v10392 = vpop.f32.mrb[0].mxu0
          %v10393 = vadd.f32 %v10350, %v10392
          %10394 = vdwg.mxu0
          %10395 = vmatprep.subr.bf16.mxu0 %v9264
          %10396 = vmatpush1.bf16.msra.mxu0 %v9263
          %10397 = vmatprep.subr.bf16.mxu0 %v9274
          %10398 = vmatpush1.bf16.msra.mxu0 %v9273
          %10399 = vmatprep.subr.bf16.mxu0 %v9284
          %10400 = vmatpush1.bf16.msra.mxu0 %v9283
          %10401 = vmatprep.subr.bf16.mxu0 %v9294
          %10402 = vmatpush1.bf16.msra.mxu0 %v9293
          %10403 = vmatprep.subr.bf16.mxu0 %v9304
          %10404 = vmatpush1.bf16.msra.mxu0 %v9303
          %10405 = vmatprep.subr.bf16.mxu0 %v9314
          %10406 = vmatpush1.bf16.msra.mxu0 %v9313
          %10407 = vmatprep.subr.bf16.mxu0 %v9324
          %10408 = vmatpush1.bf16.msra.mxu0 %v9323
          %10409 = vmatprep.subr.bf16.mxu0 %v9334
          %10410 = vmatpush1.bf16.msra.mxu0 %v9333
          %10411 = vmatprep.subr.bf16.mxu0 %v9344
          %10412 = vmatpush1.bf16.msra.mxu0 %v9343
          %10413 = vmatprep.subr.bf16.mxu0 %v9354
          %10414 = vmatpush1.bf16.msra.mxu0 %v9353
          %10415 = vmatprep.subr.bf16.mxu0 %v9364
          %10416 = vmatpush1.bf16.msra.mxu0 %v9363
          %10417 = vmatprep.subr.bf16.mxu0 %v9374
          %10418 = vmatpush1.bf16.msra.mxu0 %v9373
          %10419 = vmatprep.subr.bf16.mxu0 %v9384
          %10420 = vmatpush1.bf16.msra.mxu0 %v9383
          %10421 = vmatprep.subr.bf16.mxu0 %v9394
          %10422 = vmatpush1.bf16.msra.mxu0 %v9393
          %10423 = vmatprep.subr.bf16.mxu0 %v9404
          %10424 = vmatpush1.bf16.msra.mxu0 %v9403
          %10425 = vmatprep.subr.bf16.mxu0 %v9414
          %10426 = vmatpush1.bf16.msra.mxu0 %v9413
          %10427 = vmatprep.mubr.bf16.mxu0 %v5368
          %10428 = vmatmul.mubr.bf16.gmra.mrb[0].mxu0 %v5367
          %v10429 = vpop.f32.mrb[0].mxu0
          %v10430 = vadd.f32 %v10387, %v10429
          %v10431 = vpop.f32.mrb[0].mxu0
          %v10432 = vadd.f32 %v10389, %v10431
          %v10433 = vpop.f32.mrb[0].mxu0
          %v10434 = vadd.f32 %v10391, %v10433
          %v10435 = vpop.f32.mrb[0].mxu0
          %v10436 = vadd.f32 %v10393, %v10435
          %10437 = vdwg.mxu0
          %10438 = vmatprep.subr.bf16.mxu0 %v8626
          %10439 = vmatpush1.bf16.msra.mxu0 %v8625
          %10440 = vmatprep.subr.bf16.mxu0 %v8636
          %10441 = vmatpush1.bf16.msra.mxu0 %v8635
          %10442 = vmatprep.subr.bf16.mxu0 %v8646
          %10443 = vmatpush1.bf16.msra.mxu0 %v8645
          %10444 = vmatprep.subr.bf16.mxu0 %v8656
          %10445 = vmatpush1.bf16.msra.mxu0 %v8655
          %10446 = vmatprep.subr.bf16.mxu0 %v8666
          %10447 = vmatpush1.bf16.msra.mxu0 %v8665
          %10448 = vmatprep.subr.bf16.mxu0 %v8676
          %10449 = vmatpush1.bf16.msra.mxu0 %v8675
          %10450 = vmatprep.subr.bf16.mxu0 %v8686
          %10451 = vmatpush1.bf16.msra.mxu0 %v8685
          %10452 = vmatprep.subr.bf16.mxu0 %v8696
          %10453 = vmatpush1.bf16.msra.mxu0 %v8695
          %10454 = vmatprep.subr.bf16.mxu0 %v8706
          %10455 = vmatpush1.bf16.msra.mxu0 %v8705
          %10456 = vmatprep.subr.bf16.mxu0 %v8716
          %10457 = vmatpush1.bf16.msra.mxu0 %v8715
          %10458 = vmatprep.subr.bf16.mxu0 %v8726
          %10459 = vmatpush1.bf16.msra.mxu0 %v8725
          %10460 = vmatprep.subr.bf16.mxu0 %v8736
          %10461 = vmatpush1.bf16.msra.mxu0 %v8735
          %10462 = vmatprep.subr.bf16.mxu0 %v8746
          %10463 = vmatpush1.bf16.msra.mxu0 %v8745
          %10464 = vmatprep.subr.bf16.mxu0 %v8756
          %10465 = vmatpush1.bf16.msra.mxu0 %v8755
          %10466 = vmatprep.subr.bf16.mxu0 %v8766
          %10467 = vmatpush1.bf16.msra.mxu0 %v8765
          %10468 = vmatprep.subr.bf16.mxu0 %v8776
          %10469 = vmatpush1.bf16.msra.mxu0 %v8775
          %10470 = vmatprep.mubr.bf16.mxu0 %v5360
          %10471 = vmatmul.mubr.bf16.gmra.mrb[0].mxu0 %v5359
          %v10472 = vpop.f32.mrb[0].mxu0
          %v10473 = vadd.f32 %v6184, %v10472
          %v10474 = vpop.f32.mrb[0].mxu0
          %v10475 = vadd.f32 %v6188, %v10474
          %v10476 = vpop.f32.mrb[0].mxu0
          %v10477 = vadd.f32 %v6184, %v10476
          %v10478 = vpop.f32.mrb[0].mxu0
          %v10479 = vadd.f32 %v6188, %v10478
          %10480 = vdwg.mxu0
          %10481 = vmatprep.subr.bf16.mxu0 %v8786
          %10482 = vmatpush1.bf16.msra.mxu0 %v8785
          %10483 = vmatprep.subr.bf16.mxu0 %v8796
          %10484 = vmatpush1.bf16.msra.mxu0 %v8795
          %10485 = vmatprep.subr.bf16.mxu0 %v8806
          %10486 = vmatpush1.bf16.msra.mxu0 %v8805
          %10487 = vmatprep.subr.bf16.mxu0 %v8816
          %10488 = vmatpush1.bf16.msra.mxu0 %v8815
          %10489 = vmatprep.subr.bf16.mxu0 %v8826
          %10490 = vmatpush1.bf16.msra.mxu0 %v8825
          %10491 = vmatprep.subr.bf16.mxu0 %v8836
          %10492 = vmatpush1.bf16.msra.mxu0 %v8835
          %10493 = vmatprep.subr.bf16.mxu0 %v8846
          %10494 = vmatpush1.bf16.msra.mxu0 %v8845
          %10495 = vmatprep.subr.bf16.mxu0 %v8856
          %10496 = vmatpush1.bf16.msra.mxu0 %v8855
          %10497 = vmatprep.subr.bf16.mxu0 %v8866
          %10498 = vmatpush1.bf16.msra.mxu0 %v8865
          %10499 = vmatprep.subr.bf16.mxu0 %v8876
          %10500 = vmatpush1.bf16.msra.mxu0 %v8875
          %10501 = vmatprep.subr.bf16.mxu0 %v8886
          %10502 = vmatpush1.bf16.msra.mxu0 %v8885
          %10503 = vmatprep.subr.bf16.mxu0 %v8896
          %10504 = vmatpush1.bf16.msra.mxu0 %v8895
          %10505 = vmatprep.subr.bf16.mxu0 %v8906
          %10506 = vmatpush1.bf16.msra.mxu0 %v8905
          %10507 = vmatprep.subr.bf16.mxu0 %v8916
          %10508 = vmatpush1.bf16.msra.mxu0 %v8915
          %10509 = vmatprep.subr.bf16.mxu0 %v8926
          %10510 = vmatpush1.bf16.msra.mxu0 %v8925
          %10511 = vmatprep.subr.bf16.mxu0 %v8936
          %10512 = vmatpush1.bf16.msra.mxu0 %v8935
          %10513 = vmatprep.mubr.bf16.mxu0 %v5362
          %10514 = vmatmul.mubr.bf16.gmra.mrb[0].mxu0 %v5361
          %v10515 = vpop.f32.mrb[0].mxu0
          %v10516 = vadd.f32 %v10473, %v10515
          %v10517 = vpop.f32.mrb[0].mxu0
          %v10518 = vadd.f32 %v10475, %v10517
          %v10519 = vpop.f32.mrb[0].mxu0
          %v10520 = vadd.f32 %v10477, %v10519
          %v10521 = vpop.f32.mrb[0].mxu0
          %v10522 = vadd.f32 %v10479, %v10521
          %10523 = vdwg.mxu0
          %10524 = vmatprep.subr.bf16.mxu0 %v8946
          %10525 = vmatpush1.bf16.msra.mxu0 %v8945
          %10526 = vmatprep.subr.bf16.mxu0 %v8956
          %10527 = vmatpush1.bf16.msra.mxu0 %v8955
          %10528 = vmatprep.subr.bf16.mxu0 %v8966
          %10529 = vmatpush1.bf16.msra.mxu0 %v8965
          %10530 = vmatprep.subr.bf16.mxu0 %v8976
          %10531 = vmatpush1.bf16.msra.mxu0 %v8975
          %10532 = vmatprep.subr.bf16.mxu0 %v8986
          %10533 = vmatpush1.bf16.msra.mxu0 %v8985
          %10534 = vmatprep.subr.bf16.mxu0 %v8996
          %10535 = vmatpush1.bf16.msra.mxu0 %v8995
          %10536 = vmatprep.subr.bf16.mxu0 %v9006
          %10537 = vmatpush1.bf16.msra.mxu0 %v9005
          %10538 = vmatprep.subr.bf16.mxu0 %v9016
          %10539 = vmatpush1.bf16.msra.mxu0 %v9015
          %10540 = vmatprep.subr.bf16.mxu0 %v9026
          %10541 = vmatpush1.bf16.msra.mxu0 %v9025
          %10542 = vmatprep.subr.bf16.mxu0 %v9036
          %10543 = vmatpush1.bf16.msra.mxu0 %v9035
          %10544 = vmatprep.subr.bf16.mxu0 %v9046
          %10545 = vmatpush1.bf16.msra.mxu0 %v9045
          %10546 = vmatprep.subr.bf16.mxu0 %v9056
          %10547 = vmatpush1.bf16.msra.mxu0 %v9055
          %10548 = vmatprep.subr.bf16.mxu0 %v9066
          %10549 = vmatpush1.bf16.msra.mxu0 %v9065
          %10550 = vmatprep.subr.bf16.mxu0 %v9076
          %10551 = vmatpush1.bf16.msra.mxu0 %v9075
          %10552 = vmatprep.subr.bf16.mxu0 %v9086
          %10553 = vmatpush1.bf16.msra.mxu0 %v9085
          %10554 = vmatprep.subr.bf16.mxu0 %v9096
          %10555 = vmatpush1.bf16.msra.mxu0 %v9095
          %10556 = vmatprep.mubr.bf16.mxu0 %v5364
          %10557 = vmatmul.mubr.bf16.gmra.mrb[0].mxu0 %v5363
          %v10558 = vpop.f32.mrb[0].mxu0
          %v10559 = vadd.f32 %v10516, %v10558
          %v10560 = vpop.f32.mrb[0].mxu0
          %v10561 = vadd.f32 %v10518, %v10560
          %v10562 = vpop.f32.mrb[0].mxu0
          %v10563 = vadd.f32 %v10520, %v10562
          %v10564 = vpop.f32.mrb[0].mxu0
          %v10565 = vadd.f32 %v10522, %v10564
          %10566 = vdwg.mxu0
          %10567 = vmatprep.subr.bf16.mxu0 %v9106
          %10568 = vmatpush1.bf16.msra.mxu0 %v9105
          %10569 = vmatprep.subr.bf16.mxu0 %v9116
          %10570 = vmatpush1.bf16.msra.mxu0 %v9115
          %10571 = vmatprep.subr.bf16.mxu0 %v9126
          %10572 = vmatpush1.bf16.msra.mxu0 %v9125
          %10573 = vmatprep.subr.bf16.mxu0 %v9136
          %10574 = vmatpush1.bf16.msra.mxu0 %v9135
          %10575 = vmatprep.subr.bf16.mxu0 %v9146
          %10576 = vmatpush1.bf16.msra.mxu0 %v9145
          %10577 = vmatprep.subr.bf16.mxu0 %v9156
          %10578 = vmatpush1.bf16.msra.mxu0 %v9155
          %10579 = vmatprep.subr.bf16.mxu0 %v9166
          %10580 = vmatpush1.bf16.msra.mxu0 %v9165
          %10581 = vmatprep.subr.bf16.mxu0 %v9176
          %10582 = vmatpush1.bf16.msra.mxu0 %v9175
          %10583 = vmatprep.subr.bf16.mxu0 %v9186
          %10584 = vmatpush1.bf16.msra.mxu0 %v9185
          %10585 = vmatprep.subr.bf16.mxu0 %v9196
          %10586 = vmatpush1.bf16.msra.mxu0 %v9195
          %10587 = vmatprep.subr.bf16.mxu0 %v9206
          %10588 = vmatpush1.bf16.msra.mxu0 %v9205
          %10589 = vmatprep.subr.bf16.mxu0 %v9216
          %10590 = vmatpush1.bf16.msra.mxu0 %v9215
          %10591 = vmatprep.subr.bf16.mxu0 %v9226
          %10592 = vmatpush1.bf16.msra.mxu0 %v9225
          %10593 = vmatprep.subr.bf16.mxu0 %v9236
          %10594 = vmatpush1.bf16.msra.mxu0 %v9235
          %10595 = vmatprep.subr.bf16.mxu0 %v9246
          %10596 = vmatpush1.bf16.msra.mxu0 %v9245
          %10597 = vmatprep.subr.bf16.mxu0 %v9256
          %10598 = vmatpush1.bf16.msra.mxu0 %v9255
          %10599 = vmatprep.mubr.bf16.mxu0 %v5366
          %10600 = vmatmul.mubr.bf16.gmra.mrb[0].mxu0 %v5365
          %v10601 = vpop.f32.mrb[0].mxu0
          %v10602 = vadd.f32 %v10559, %v10601
          %v10603 = vpop.f32.mrb[0].mxu0
          %v10604 = vadd.f32 %v10561, %v10603
          %v10605 = vpop.f32.mrb[0].mxu0
          %v10606 = vadd.f32 %v10563, %v10605
          %v10607 = vpop.f32.mrb[0].mxu0
          %v10608 = vadd.f32 %v10565, %v10607
          %10609 = vdwg.mxu0
          %10610 = vmatprep.subr.bf16.mxu0 %v9266
          %10611 = vmatpush1.bf16.msra.mxu0 %v9265
          %10612 = vmatprep.subr.bf16.mxu0 %v9276
          %10613 = vmatpush1.bf16.msra.mxu0 %v9275
          %10614 = vmatprep.subr.bf16.mxu0 %v9286
          %10615 = vmatpush1.bf16.msra.mxu0 %v9285
          %10616 = vmatprep.subr.bf16.mxu0 %v9296
          %10617 = vmatpush1.bf16.msra.mxu0 %v9295
          %10618 = vmatprep.subr.bf16.mxu0 %v9306
          %10619 = vmatpush1.bf16.msra.mxu0 %v9305
          %10620 = vmatprep.subr.bf16.mxu0 %v9316
          %10621 = vmatpush1.bf16.msra.mxu0 %v9315
          %10622 = vmatprep.subr.bf16.mxu0 %v9326
          %10623 = vmatpush1.bf16.msra.mxu0 %v9325
          %10624 = vmatprep.subr.bf16.mxu0 %v9336
          %10625 = vmatpush1.bf16.msra.mxu0 %v9335
          %10626 = vmatprep.subr.bf16.mxu0 %v9346
          %10627 = vmatpush1.bf16.msra.mxu0 %v9345
          %10628 = vmatprep.subr.bf16.mxu0 %v9356
          %10629 = vmatpush1.bf16.msra.mxu0 %v9355
          %10630 = vmatprep.subr.bf16.mxu0 %v9366
          %10631 = vmatpush1.bf16.msra.mxu0 %v9365
          %10632 = vmatprep.subr.bf16.mxu0 %v9376
          %10633 = vmatpush1.bf16.msra.mxu0 %v9375
          %10634 = vmatprep.subr.bf16.mxu0 %v9386
          %10635 = vmatpush1.bf16.msra.mxu0 %v9385
          %10636 = vmatprep.subr.bf16.mxu0 %v9396
          %10637 = vmatpush1.bf16.msra.mxu0 %v9395
          %10638 = vmatprep.subr.bf16.mxu0 %v9406
          %10639 = vmatpush1.bf16.msra.mxu0 %v9405
          %10640 = vmatprep.subr.bf16.mxu0 %v9416
          %10641 = vmatpush1.bf16.msra.mxu0 %v9415
          %10642 = vmatprep.mubr.bf16.mxu0 %v5368
          %10643 = vmatmul.mubr.bf16.gmra.mrb[0].mxu0 %v5367
          %v10644 = vpop.f32.mrb[0].mxu0
          %v10645 = vadd.f32 %v10602, %v10644
          %v10646 = vpop.f32.mrb[0].mxu0
          %v10647 = vadd.f32 %v10604, %v10646
          %v10648 = vpop.f32.mrb[0].mxu0
          %v10649 = vadd.f32 %v10606, %v10648
          %v10650 = vpop.f32.mrb[0].mxu0
          %v10651 = vadd.f32 %v10608, %v10650
          %10652 = vdwg.mxu0
          %10653 = vmatprep.subr.bf16.mxu0 %v8628
          %10654 = vmatpush1.bf16.msra.mxu0 %v8627
          %10655 = vmatprep.subr.bf16.mxu0 %v8638
          %10656 = vmatpush1.bf16.msra.mxu0 %v8637
          %10657 = vmatprep.subr.bf16.mxu0 %v8648
          %10658 = vmatpush1.bf16.msra.mxu0 %v8647
          %10659 = vmatprep.subr.bf16.mxu0 %v8658
          %10660 = vmatpush1.bf16.msra.mxu0 %v8657
          %10661 = vmatprep.subr.bf16.mxu0 %v8668
          %10662 = vmatpush1.bf16.msra.mxu0 %v8667
          %10663 = vmatprep.subr.bf16.mxu0 %v8678
          %10664 = vmatpush1.bf16.msra.mxu0 %v8677
          %10665 = vmatprep.subr.bf16.mxu0 %v8688
          %10666 = vmatpush1.bf16.msra.mxu0 %v8687
          %10667 = vmatprep.subr.bf16.mxu0 %v8698
          %10668 = vmatpush1.bf16.msra.mxu0 %v8697
          %10669 = vmatprep.subr.bf16.mxu0 %v8708
          %10670 = vmatpush1.bf16.msra.mxu0 %v8707
          %10671 = vmatprep.subr.bf16.mxu0 %v8718
          %10672 = vmatpush1.bf16.msra.mxu0 %v8717
          %10673 = vmatprep.subr.bf16.mxu0 %v8728
          %10674 = vmatpush1.bf16.msra.mxu0 %v8727
          %10675 = vmatprep.subr.bf16.mxu0 %v8738
          %10676 = vmatpush1.bf16.msra.mxu0 %v8737
          %10677 = vmatprep.subr.bf16.mxu0 %v8748
          %10678 = vmatpush1.bf16.msra.mxu0 %v8747
          %10679 = vmatprep.subr.bf16.mxu0 %v8758
          %10680 = vmatpush1.bf16.msra.mxu0 %v8757
          %10681 = vmatprep.subr.bf16.mxu0 %v8768
          %10682 = vmatpush1.bf16.msra.mxu0 %v8767
          %10683 = vmatprep.subr.bf16.mxu0 %v8778
          %10684 = vmatpush1.bf16.msra.mxu0 %v8777
          %10685 = vmatprep.mubr.bf16.mxu0 %v5360
          %10686 = vmatmul.mubr.bf16.gmra.mrb[0].mxu0 %v5359
          %v10687 = vpop.f32.mrb[0].mxu0
          %v10688 = vadd.f32 %v6192, %v10687
          %v10689 = vpop.f32.mrb[0].mxu0
          %v10690 = vadd.f32 %v6196, %v10689
          %v10691 = vpop.f32.mrb[0].mxu0
          %v10692 = vadd.f32 %v6192, %v10691
          %v10693 = vpop.f32.mrb[0].mxu0
          %v10694 = vadd.f32 %v6196, %v10693
          %10695 = vdwg.mxu0
          %10696 = vmatprep.subr.bf16.mxu0 %v8788
          %10697 = vmatpush1.bf16.msra.mxu0 %v8787
          %10698 = vmatprep.subr.bf16.mxu0 %v8798
          %10699 = vmatpush1.bf16.msra.mxu0 %v8797
          %10700 = vmatprep.subr.bf16.mxu0 %v8808
          %10701 = vmatpush1.bf16.msra.mxu0 %v8807
          %10702 = vmatprep.subr.bf16.mxu0 %v8818
          %10703 = vmatpush1.bf16.msra.mxu0 %v8817
          %10704 = vmatprep.subr.bf16.mxu0 %v8828
          %10705 = vmatpush1.bf16.msra.mxu0 %v8827
          %10706 = vmatprep.subr.bf16.mxu0 %v8838
          %10707 = vmatpush1.bf16.msra.mxu0 %v8837
          %10708 = vmatprep.subr.bf16.mxu0 %v8848
          %10709 = vmatpush1.bf16.msra.mxu0 %v8847
          %10710 = vmatprep.subr.bf16.mxu0 %v8858
          %10711 = vmatpush1.bf16.msra.mxu0 %v8857
          %10712 = vmatprep.subr.bf16.mxu0 %v8868
          %10713 = vmatpush1.bf16.msra.mxu0 %v8867
          %10714 = vmatprep.subr.bf16.mxu0 %v8878
          %10715 = vmatpush1.bf16.msra.mxu0 %v8877
          %10716 = vmatprep.subr.bf16.mxu0 %v8888
          %10717 = vmatpush1.bf16.msra.mxu0 %v8887
          %10718 = vmatprep.subr.bf16.mxu0 %v8898
          %10719 = vmatpush1.bf16.msra.mxu0 %v8897
          %10720 = vmatprep.subr.bf16.mxu0 %v8908
          %10721 = vmatpush1.bf16.msra.mxu0 %v8907
          %10722 = vmatprep.subr.bf16.mxu0 %v8918
          %10723 = vmatpush1.bf16.msra.mxu0 %v8917
          %10724 = vmatprep.subr.bf16.mxu0 %v8928
          %10725 = vmatpush1.bf16.msra.mxu0 %v8927
          %10726 = vmatprep.subr.bf16.mxu0 %v8938
          %10727 = vmatpush1.bf16.msra.mxu0 %v8937
          %10728 = vmatprep.mubr.bf16.mxu0 %v5362
          %10729 = vmatmul.mubr.bf16.gmra.mrb[0].mxu0 %v5361
          %v10730 = vpop.f32.mrb[0].mxu0
          %v10731 = vadd.f32 %v10688, %v10730
          %v10732 = vpop.f32.mrb[0].mxu0
          %v10733 = vadd.f32 %v10690, %v10732
          %v10734 = vpop.f32.mrb[0].mxu0
          %v10735 = vadd.f32 %v10692, %v10734
          %v10736 = vpop.f32.mrb[0].mxu0
          %v10737 = vadd.f32 %v10694, %v10736
          %10738 = vdwg.mxu0
          %10739 = vmatprep.subr.bf16.mxu0 %v8948
          %10740 = vmatpush1.bf16.msra.mxu0 %v8947
          %10741 = vmatprep.subr.bf16.mxu0 %v8958
          %10742 = vmatpush1.bf16.msra.mxu0 %v8957
          %10743 = vmatprep.subr.bf16.mxu0 %v8968
          %10744 = vmatpush1.bf16.msra.mxu0 %v8967
          %10745 = vmatprep.subr.bf16.mxu0 %v8978
          %10746 = vmatpush1.bf16.msra.mxu0 %v8977
          %10747 = vmatprep.subr.bf16.mxu0 %v8988
          %10748 = vmatpush1.bf16.msra.mxu0 %v8987
          %10749 = vmatprep.subr.bf16.mxu0 %v8998
          %10750 = vmatpush1.bf16.msra.mxu0 %v8997
          %10751 = vmatprep.subr.bf16.mxu0 %v9008
          %10752 = vmatpush1.bf16.msra.mxu0 %v9007
          %10753 = vmatprep.subr.bf16.mxu0 %v9018
          %10754 = vmatpush1.bf16.msra.mxu0 %v9017
          %10755 = vmatprep.subr.bf16.mxu0 %v9028
          %10756 = vmatpush1.bf16.msra.mxu0 %v9027
          %10757 = vmatprep.subr.bf16.mxu0 %v9038
          %10758 = vmatpush1.bf16.msra.mxu0 %v9037
          %10759 = vmatprep.subr.bf16.mxu0 %v9048
          %10760 = vmatpush1.bf16.msra.mxu0 %v9047
          %10761 = vmatprep.subr.bf16.mxu0 %v9058
          %10762 = vmatpush1.bf16.msra.mxu0 %v9057
          %10763 = vmatprep.subr.bf16.mxu0 %v9068
          %10764 = vmatpush1.bf16.msra.mxu0 %v9067
          %10765 = vmatprep.subr.bf16.mxu0 %v9078
          %10766 = vmatpush1.bf16.msra.mxu0 %v9077
          %10767 = vmatprep.subr.bf16.mxu0 %v9088
          %10768 = vmatpush1.bf16.msra.mxu0 %v9087
          %10769 = vmatprep.subr.bf16.mxu0 %v9098
          %10770 = vmatpush1.bf16.msra.mxu0 %v9097
          %10771 = vmatprep.mubr.bf16.mxu0 %v5364
          %10772 = vmatmul.mubr.bf16.gmra.mrb[0].mxu0 %v5363
          %v10773 = vpop.f32.mrb[0].mxu0
          %v10774 = vadd.f32 %v10731, %v10773
          %v10775 = vpop.f32.mrb[0].mxu0
          %v10776 = vadd.f32 %v10733, %v10775
          %v10777 = vpop.f32.mrb[0].mxu0
          %v10778 = vadd.f32 %v10735, %v10777
          %v10779 = vpop.f32.mrb[0].mxu0
          %v10780 = vadd.f32 %v10737, %v10779
          %10781 = vdwg.mxu0
          %10782 = vmatprep.subr.bf16.mxu0 %v9108
          %10783 = vmatpush1.bf16.msra.mxu0 %v9107
          %10784 = vmatprep.subr.bf16.mxu0 %v9118
          %10785 = vmatpush1.bf16.msra.mxu0 %v9117
          %10786 = vmatprep.subr.bf16.mxu0 %v9128
          %10787 = vmatpush1.bf16.msra.mxu0 %v9127
          %10788 = vmatprep.subr.bf16.mxu0 %v9138
          %10789 = vmatpush1.bf16.msra.mxu0 %v9137
          %10790 = vmatprep.subr.bf16.mxu0 %v9148
          %10791 = vmatpush1.bf16.msra.mxu0 %v9147
          %10792 = vmatprep.subr.bf16.mxu0 %v9158
          %10793 = vmatpush1.bf16.msra.mxu0 %v9157
          %10794 = vmatprep.subr.bf16.mxu0 %v9168
          %10795 = vmatpush1.bf16.msra.mxu0 %v9167
          %10796 = vmatprep.subr.bf16.mxu0 %v9178
          %10797 = vmatpush1.bf16.msra.mxu0 %v9177
          %10798 = vmatprep.subr.bf16.mxu0 %v9188
          %10799 = vmatpush1.bf16.msra.mxu0 %v9187
          %10800 = vmatprep.subr.bf16.mxu0 %v9198
          %10801 = vmatpush1.bf16.msra.mxu0 %v9197
          %10802 = vmatprep.subr.bf16.mxu0 %v9208
          %10803 = vmatpush1.bf16.msra.mxu0 %v9207
          %10804 = vmatprep.subr.bf16.mxu0 %v9218
          %10805 = vmatpush1.bf16.msra.mxu0 %v9217
          %10806 = vmatprep.subr.bf16.mxu0 %v9228
          %10807 = vmatpush1.bf16.msra.mxu0 %v9227
          %10808 = vmatprep.subr.bf16.mxu0 %v9238
          %10809 = vmatpush1.bf16.msra.mxu0 %v9237
          %10810 = vmatprep.subr.bf16.mxu0 %v9248
          %10811 = vmatpush1.bf16.msra.mxu0 %v9247
          %10812 = vmatprep.subr.bf16.mxu0 %v9258
          %10813 = vmatpush1.bf16.msra.mxu0 %v9257
          %10814 = vmatprep.mubr.bf16.mxu0 %v5366
          %10815 = vmatmul.mubr.bf16.gmra.mrb[0].mxu0 %v5365
          %v10816 = vpop.f32.mrb[0].mxu0
          %v10817 = vadd.f32 %v10774, %v10816
          %v10818 = vpop.f32.mrb[0].mxu0
          %v10819 = vadd.f32 %v10776, %v10818
          %v10820 = vpop.f32.mrb[0].mxu0
          %v10821 = vadd.f32 %v10778, %v10820
          %v10822 = vpop.f32.mrb[0].mxu0
          %v10823 = vadd.f32 %v10780, %v10822
          %10824 = vdwg.mxu0
          %10825 = vmatprep.subr.bf16.mxu0 %v9268
          %10826 = vmatpush1.bf16.msra.mxu0 %v9267
          %10827 = vmatprep.subr.bf16.mxu0 %v9278
          %10828 = vmatpush1.bf16.msra.mxu0 %v9277
          %10829 = vmatprep.subr.bf16.mxu0 %v9288
          %10830 = vmatpush1.bf16.msra.mxu0 %v9287
          %10831 = vmatprep.subr.bf16.mxu0 %v9298
          %10832 = vmatpush1.bf16.msra.mxu0 %v9297
          %10833 = vmatprep.subr.bf16.mxu0 %v9308
          %10834 = vmatpush1.bf16.msra.mxu0 %v9307
          %10835 = vmatprep.subr.bf16.mxu0 %v9318
          %10836 = vmatpush1.bf16.msra.mxu0 %v9317
          %10837 = vmatprep.subr.bf16.mxu0 %v9328
          %10838 = vmatpush1.bf16.msra.mxu0 %v9327
          %10839 = vmatprep.subr.bf16.mxu0 %v9338
          %10840 = vmatpush1.bf16.msra.mxu0 %v9337
          %10841 = vmatprep.subr.bf16.mxu0 %v9348
          %10842 = vmatpush1.bf16.msra.mxu0 %v9347
          %10843 = vmatprep.subr.bf16.mxu0 %v9358
          %10844 = vmatpush1.bf16.msra.mxu0 %v9357
          %10845 = vmatprep.subr.bf16.mxu0 %v9368
          %10846 = vmatpush1.bf16.msra.mxu0 %v9367
          %10847 = vmatprep.subr.bf16.mxu0 %v9378
          %10848 = vmatpush1.bf16.msra.mxu0 %v9377
          %10849 = vmatprep.subr.bf16.mxu0 %v9388
          %10850 = vmatpush1.bf16.msra.mxu0 %v9387
          %10851 = vmatprep.subr.bf16.mxu0 %v9398
          %10852 = vmatpush1.bf16.msra.mxu0 %v9397
          %10853 = vmatprep.subr.bf16.mxu0 %v9408
          %10854 = vmatpush1.bf16.msra.mxu0 %v9407
          %10855 = vmatprep.subr.bf16.mxu0 %v9418
          %10856 = vmatpush1.bf16.msra.mxu0 %v9417
          %10857 = vmatprep.mubr.bf16.mxu0 %v5368
          %10858 = vmatmul.mubr.bf16.gmra.mrb[0].mxu0 %v5367
          %v10859 = vpop.f32.mrb[0].mxu0
          %v10860 = vadd.f32 %v10817, %v10859
          %v10861 = vpop.f32.mrb[0].mxu0
          %v10862 = vadd.f32 %v10819, %v10861
          %v10863 = vpop.f32.mrb[0].mxu0
          %v10864 = vadd.f32 %v10821, %v10863
          %v10865 = vpop.f32.mrb[0].mxu0
          %v10866 = vadd.f32 %v10823, %v10865
          %10867 = vdwg.mxu0
          %10868 = vmatprep.subr.bf16.mxu0 %v8630
          %10869 = vmatpush1.bf16.msra.mxu0 %v8629
          %10870 = vmatprep.subr.bf16.mxu0 %v8640
          %10871 = vmatpush1.bf16.msra.mxu0 %v8639
          %10872 = vmatprep.subr.bf16.mxu0 %v8650
          %10873 = vmatpush1.bf16.msra.mxu0 %v8649
          %10874 = vmatprep.subr.bf16.mxu0 %v8660
          %10875 = vmatpush1.bf16.msra.mxu0 %v8659
          %10876 = vmatprep.subr.bf16.mxu0 %v8670
          %10877 = vmatpush1.bf16.msra.mxu0 %v8669
          %10878 = vmatprep.subr.bf16.mxu0 %v8680
          %10879 = vmatpush1.bf16.msra.mxu0 %v8679
          %10880 = vmatprep.subr.bf16.mxu0 %v8690
          %10881 = vmatpush1.bf16.msra.mxu0 %v8689
          %10882 = vmatprep.subr.bf16.mxu0 %v8700
          %10883 = vmatpush1.bf16.msra.mxu0 %v8699
          %10884 = vmatprep.subr.bf16.mxu0 %v8710
          %10885 = vmatpush1.bf16.msra.mxu0 %v8709
          %10886 = vmatprep.subr.bf16.mxu0 %v8720
          %10887 = vmatpush1.bf16.msra.mxu0 %v8719
          %10888 = vmatprep.subr.bf16.mxu0 %v8730
          %10889 = vmatpush1.bf16.msra.mxu0 %v8729
          %10890 = vmatprep.subr.bf16.mxu0 %v8740
          %10891 = vmatpush1.bf16.msra.mxu0 %v8739
          %10892 = vmatprep.subr.bf16.mxu0 %v8750
          %10893 = vmatpush1.bf16.msra.mxu0 %v8749
          %10894 = vmatprep.subr.bf16.mxu0 %v8760
          %10895 = vmatpush1.bf16.msra.mxu0 %v8759
          %10896 = vmatprep.subr.bf16.mxu0 %v8770
          %10897 = vmatpush1.bf16.msra.mxu0 %v8769
          %10898 = vmatprep.subr.bf16.mxu0 %v8780
          %10899 = vmatpush1.bf16.msra.mxu0 %v8779
          %10900 = vmatprep.mubr.bf16.mxu0 %v5360
          %10901 = vmatmul.mubr.bf16.gmra.mrb[0].mxu0 %v5359
          %v10902 = vpop.f32.mrb[0].mxu0
          %v10903 = vadd.f32 %v6200, %v10902
          %v10904 = vpop.f32.mrb[0].mxu0
          %v10905 = vadd.f32 %v6204, %v10904
          %v10906 = vpop.f32.mrb[0].mxu0
          %v10907 = vadd.f32 %v6200, %v10906
          %v10908 = vpop.f32.mrb[0].mxu0
          %v10909 = vadd.f32 %v6204, %v10908
          %10910 = vdwg.mxu0
          %10911 = vmatprep.subr.bf16.mxu0 %v8790
          %10912 = vmatpush1.bf16.msra.mxu0 %v8789
          %10913 = vmatprep.subr.bf16.mxu0 %v8800
          %10914 = vmatpush1.bf16.msra.mxu0 %v8799
          %10915 = vmatprep.subr.bf16.mxu0 %v8810
          %10916 = vmatpush1.bf16.msra.mxu0 %v8809
          %10917 = vmatprep.subr.bf16.mxu0 %v8820
          %10918 = vmatpush1.bf16.msra.mxu0 %v8819
          %10919 = vmatprep.subr.bf16.mxu0 %v8830
          %10920 = vmatpush1.bf16.msra.mxu0 %v8829
          %10921 = vmatprep.subr.bf16.mxu0 %v8840
          %10922 = vmatpush1.bf16.msra.mxu0 %v8839
          %10923 = vmatprep.subr.bf16.mxu0 %v8850
          %10924 = vmatpush1.bf16.msra.mxu0 %v8849
          %10925 = vmatprep.subr.bf16.mxu0 %v8860
          %10926 = vmatpush1.bf16.msra.mxu0 %v8859
          %10927 = vmatprep.subr.bf16.mxu0 %v8870
          %10928 = vmatpush1.bf16.msra.mxu0 %v8869
          %10929 = vmatprep.subr.bf16.mxu0 %v8880
          %10930 = vmatpush1.bf16.msra.mxu0 %v8879
          %10931 = vmatprep.subr.bf16.mxu0 %v8890
          %10932 = vmatpush1.bf16.msra.mxu0 %v8889
          %10933 = vmatprep.subr.bf16.mxu0 %v8900
          %10934 = vmatpush1.bf16.msra.mxu0 %v8899
          %10935 = vmatprep.subr.bf16.mxu0 %v8910
          %10936 = vmatpush1.bf16.msra.mxu0 %v8909
          %10937 = vmatprep.subr.bf16.mxu0 %v8920
          %10938 = vmatpush1.bf16.msra.mxu0 %v8919
          %10939 = vmatprep.subr.bf16.mxu0 %v8930
          %10940 = vmatpush1.bf16.msra.mxu0 %v8929
          %10941 = vmatprep.subr.bf16.mxu0 %v8940
          %10942 = vmatpush1.bf16.msra.mxu0 %v8939
          %10943 = vmatprep.mubr.bf16.mxu0 %v5362
          %10944 = vmatmul.mubr.bf16.gmra.mrb[0].mxu0 %v5361
          %v10945 = vpop.f32.mrb[0].mxu0
          %v10946 = vadd.f32 %v10903, %v10945
          %v10947 = vpop.f32.mrb[0].mxu0
          %v10948 = vadd.f32 %v10905, %v10947
          %v10949 = vpop.f32.mrb[0].mxu0
          %v10950 = vadd.f32 %v10907, %v10949
          %v10951 = vpop.f32.mrb[0].mxu0
          %v10952 = vadd.f32 %v10909, %v10951
          %10953 = vdwg.mxu0
          %10954 = vmatprep.subr.bf16.mxu0 %v8950
          %10955 = vmatpush1.bf16.msra.mxu0 %v8949
          %10956 = vmatprep.subr.bf16.mxu0 %v8960
          %10957 = vmatpush1.bf16.msra.mxu0 %v8959
          %10958 = vmatprep.subr.bf16.mxu0 %v8970
          %10959 = vmatpush1.bf16.msra.mxu0 %v8969
          %10960 = vmatprep.subr.bf16.mxu0 %v8980
          %10961 = vmatpush1.bf16.msra.mxu0 %v8979
          %10962 = vmatprep.subr.bf16.mxu0 %v8990
          %10963 = vmatpush1.bf16.msra.mxu0 %v8989
          %10964 = vmatprep.subr.bf16.mxu0 %v9000
          %10965 = vmatpush1.bf16.msra.mxu0 %v8999
          %10966 = vmatprep.subr.bf16.mxu0 %v9010
          %10967 = vmatpush1.bf16.msra.mxu0 %v9009
          %10968 = vmatprep.subr.bf16.mxu0 %v9020
          %10969 = vmatpush1.bf16.msra.mxu0 %v9019
          %10970 = vmatprep.subr.bf16.mxu0 %v9030
          %10971 = vmatpush1.bf16.msra.mxu0 %v9029
          %10972 = vmatprep.subr.bf16.mxu0 %v9040
          %10973 = vmatpush1.bf16.msra.mxu0 %v9039
          %10974 = vmatprep.subr.bf16.mxu0 %v9050
          %10975 = vmatpush1.bf16.msra.mxu0 %v9049
          %10976 = vmatprep.subr.bf16.mxu0 %v9060
          %10977 = vmatpush1.bf16.msra.mxu0 %v9059
          %10978 = vmatprep.subr.bf16.mxu0 %v9070
          %10979 = vmatpush1.bf16.msra.mxu0 %v9069
          %10980 = vmatprep.subr.bf16.mxu0 %v9080
          %10981 = vmatpush1.bf16.msra.mxu0 %v9079
          %10982 = vmatprep.subr.bf16.mxu0 %v9090
          %10983 = vmatpush1.bf16.msra.mxu0 %v9089
          %10984 = vmatprep.subr.bf16.mxu0 %v9100
          %10985 = vmatpush1.bf16.msra.mxu0 %v9099
          %10986 = vmatprep.mubr.bf16.mxu0 %v5364
          %10987 = vmatmul.mubr.bf16.gmra.mrb[0].mxu0 %v5363
          %v10988 = vpop.f32.mrb[0].mxu0
          %v10989 = vadd.f32 %v10946, %v10988
          %v10990 = vpop.f32.mrb[0].mxu0
          %v10991 = vadd.f32 %v10948, %v10990
          %v10992 = vpop.f32.mrb[0].mxu0
          %v10993 = vadd.f32 %v10950, %v10992
          %v10994 = vpop.f32.mrb[0].mxu0
          %v10995 = vadd.f32 %v10952, %v10994
          %10996 = vdwg.mxu0
          %10997 = vmatprep.subr.bf16.mxu0 %v9110
          %10998 = vmatpush1.bf16.msra.mxu0 %v9109
          %10999 = vmatprep.subr.bf16.mxu0 %v9120
          %11000 = vmatpush1.bf16.msra.mxu0 %v9119
          %11001 = vmatprep.subr.bf16.mxu0 %v9130
          %11002 = vmatpush1.bf16.msra.mxu0 %v9129
          %11003 = vmatprep.subr.bf16.mxu0 %v9140
          %11004 = vmatpush1.bf16.msra.mxu0 %v9139
          %11005 = vmatprep.subr.bf16.mxu0 %v9150
          %11006 = vmatpush1.bf16.msra.mxu0 %v9149
          %11007 = vmatprep.subr.bf16.mxu0 %v9160
          %11008 = vmatpush1.bf16.msra.mxu0 %v9159
          %11009 = vmatprep.subr.bf16.mxu0 %v9170
          %11010 = vmatpush1.bf16.msra.mxu0 %v9169
          %11011 = vmatprep.subr.bf16.mxu0 %v9180
          %11012 = vmatpush1.bf16.msra.mxu0 %v9179
          %11013 = vmatprep.subr.bf16.mxu0 %v9190
          %11014 = vmatpush1.bf16.msra.mxu0 %v9189
          %11015 = vmatprep.subr.bf16.mxu0 %v9200
          %11016 = vmatpush1.bf16.msra.mxu0 %v9199
          %11017 = vmatprep.subr.bf16.mxu0 %v9210
          %11018 = vmatpush1.bf16.msra.mxu0 %v9209
          %11019 = vmatprep.subr.bf16.mxu0 %v9220
          %11020 = vmatpush1.bf16.msra.mxu0 %v9219
          %11021 = vmatprep.subr.bf16.mxu0 %v9230
          %11022 = vmatpush1.bf16.msra.mxu0 %v9229
          %11023 = vmatprep.subr.bf16.mxu0 %v9240
          %11024 = vmatpush1.bf16.msra.mxu0 %v9239
          %11025 = vmatprep.subr.bf16.mxu0 %v9250
          %11026 = vmatpush1.bf16.msra.mxu0 %v9249
          %11027 = vmatprep.subr.bf16.mxu0 %v9260
          %11028 = vmatpush1.bf16.msra.mxu0 %v9259
          %11029 = vmatprep.mubr.bf16.mxu0 %v5366
          %11030 = vmatmul.mubr.bf16.gmra.mrb[0].mxu0 %v5365
          %v11031 = vpop.f32.mrb[0].mxu0
          %v11032 = vadd.f32 %v10989, %v11031
          %v11033 = vpop.f32.mrb[0].mxu0
          %v11034 = vadd.f32 %v10991, %v11033
          %v11035 = vpop.f32.mrb[0].mxu0
          %v11036 = vadd.f32 %v10993, %v11035
          %v11037 = vpop.f32.mrb[0].mxu0
          %v11038 = vadd.f32 %v10995, %v11037
          %11039 = vdwg.mxu0
          %11040 = vmatprep.subr.bf16.mxu0 %v9270
          %11041 = vmatpush1.bf16.msra.mxu0 %v9269
          %11042 = vmatprep.subr.bf16.mxu0 %v9280
          %11043 = vmatpush1.bf16.msra.mxu0 %v9279
          %11044 = vmatprep.subr.bf16.mxu0 %v9290
          %11045 = vmatpush1.bf16.msra.mxu0 %v9289
          %11046 = vmatprep.subr.bf16.mxu0 %v9300
          %11047 = vmatpush1.bf16.msra.mxu0 %v9299
          %11048 = vmatprep.subr.bf16.mxu0 %v9310
          %11049 = vmatpush1.bf16.msra.mxu0 %v9309
          %11050 = vmatprep.subr.bf16.mxu0 %v9320
          %11051 = vmatpush1.bf16.msra.mxu0 %v9319
          %11052 = vmatprep.subr.bf16.mxu0 %v9330
          %11053 = vmatpush1.bf16.msra.mxu0 %v9329
          %11054 = vmatprep.subr.bf16.mxu0 %v9340
          %11055 = vmatpush1.bf16.msra.mxu0 %v9339
          %11056 = vmatprep.subr.bf16.mxu0 %v9350
          %11057 = vmatpush1.bf16.msra.mxu0 %v9349
          %11058 = vmatprep.subr.bf16.mxu0 %v9360
          %11059 = vmatpush1.bf16.msra.mxu0 %v9359
          %11060 = vmatprep.subr.bf16.mxu0 %v9370
          %11061 = vmatpush1.bf16.msra.mxu0 %v9369
          %11062 = vmatprep.subr.bf16.mxu0 %v9380
          %11063 = vmatpush1.bf16.msra.mxu0 %v9379
          %11064 = vmatprep.subr.bf16.mxu0 %v9390
          %11065 = vmatpush1.bf16.msra.mxu0 %v9389
          %11066 = vmatprep.subr.bf16.mxu0 %v9400
          %11067 = vmatpush1.bf16.msra.mxu0 %v9399
          %11068 = vmatprep.subr.bf16.mxu0 %v9410
          %11069 = vmatpush1.bf16.msra.mxu0 %v9409
          %11070 = vmatprep.subr.bf16.mxu0 %v9420
          %11071 = vmatpush1.bf16.msra.mxu0 %v9419
          %11072 = vmatprep.mubr.bf16.mxu0 %v5368
          %11073 = vmatmul.mubr.bf16.gmra.mrb[0].mxu0 %v5367
          %v11074 = vpop.f32.mrb[0].mxu0
          %v11075 = vadd.f32 %v11032, %v11074
          %v11076 = vpop.f32.mrb[0].mxu0
          %v11077 = vadd.f32 %v11034, %v11076
          %v11078 = vpop.f32.mrb[0].mxu0
          %v11079 = vadd.f32 %v11036, %v11078
          %v11080 = vpop.f32.mrb[0].mxu0
          %v11081 = vadd.f32 %v11038, %v11080
          %11082 = vdwg.mxu0
          %11083 = vmatprep.subr.bf16.mxu0 %v8632
          %11084 = vmatpush1.bf16.msra.mxu0 %v8631
          %11085 = vmatprep.subr.bf16.mxu0 %v8642
          %11086 = vmatpush1.bf16.msra.mxu0 %v8641
          %11087 = vmatprep.subr.bf16.mxu0 %v8652
          %11088 = vmatpush1.bf16.msra.mxu0 %v8651
          %11089 = vmatprep.subr.bf16.mxu0 %v8662
          %11090 = vmatpush1.bf16.msra.mxu0 %v8661
          %11091 = vmatprep.subr.bf16.mxu0 %v8672
          %11092 = vmatpush1.bf16.msra.mxu0 %v8671
          %11093 = vmatprep.subr.bf16.mxu0 %v8682
          %11094 = vmatpush1.bf16.msra.mxu0 %v8681
          %11095 = vmatprep.subr.bf16.mxu0 %v8692
          %11096 = vmatpush1.bf16.msra.mxu0 %v8691
          %11097 = vmatprep.subr.bf16.mxu0 %v8702
          %11098 = vmatpush1.bf16.msra.mxu0 %v8701
          %11099 = vmatprep.subr.bf16.mxu0 %v8712
          %11100 = vmatpush1.bf16.msra.mxu0 %v8711
          %11101 = vmatprep.subr.bf16.mxu0 %v8722
          %11102 = vmatpush1.bf16.msra.mxu0 %v8721
          %11103 = vmatprep.subr.bf16.mxu0 %v8732
          %11104 = vmatpush1.bf16.msra.mxu0 %v8731
          %11105 = vmatprep.subr.bf16.mxu0 %v8742
          %11106 = vmatpush1.bf16.msra.mxu0 %v8741
          %11107 = vmatprep.subr.bf16.mxu0 %v8752
          %11108 = vmatpush1.bf16.msra.mxu0 %v8751
          %11109 = vmatprep.subr.bf16.mxu0 %v8762
          %11110 = vmatpush1.bf16.msra.mxu0 %v8761
          %11111 = vmatprep.subr.bf16.mxu0 %v8772
          %11112 = vmatpush1.bf16.msra.mxu0 %v8771
          %11113 = vmatprep.subr.bf16.mxu0 %v8782
          %11114 = vmatpush1.bf16.msra.mxu0 %v8781
          %11115 = vmatprep.mubr.bf16.mxu0 %v5360
          %11116 = vmatmul.mubr.bf16.gmra.mrb[0].mxu0 %v5359
          %v11117 = vpop.f32.mrb[0].mxu0
          %v11118 = vadd.f32 %v6208, %v11117
          %v11119 = vpop.f32.mrb[0].mxu0
          %v11120 = vadd.f32 %v6212, %v11119
          %v11121 = vpop.f32.mrb[0].mxu0
          %v11122 = vadd.f32 %v6208, %v11121
          %v11123 = vpop.f32.mrb[0].mxu0
          %v11124 = vadd.f32 %v6212, %v11123
          %11125 = vdwg.mxu0
          %11126 = vmatprep.subr.bf16.mxu0 %v8792
          %11127 = vmatpush1.bf16.msra.mxu0 %v8791
          %11128 = vmatprep.subr.bf16.mxu0 %v8802
          %11129 = vmatpush1.bf16.msra.mxu0 %v8801
          %11130 = vmatprep.subr.bf16.mxu0 %v8812
          %11131 = vmatpush1.bf16.msra.mxu0 %v8811
          %11132 = vmatprep.subr.bf16.mxu0 %v8822
          %11133 = vmatpush1.bf16.msra.mxu0 %v8821
          %11134 = vmatprep.subr.bf16.mxu0 %v8832
          %11135 = vmatpush1.bf16.msra.mxu0 %v8831
          %11136 = vmatprep.subr.bf16.mxu0 %v8842
          %11137 = vmatpush1.bf16.msra.mxu0 %v8841
          %11138 = vmatprep.subr.bf16.mxu0 %v8852
          %11139 = vmatpush1.bf16.msra.mxu0 %v8851
          %11140 = vmatprep.subr.bf16.mxu0 %v8862
          %11141 = vmatpush1.bf16.msra.mxu0 %v8861
          %11142 = vmatprep.subr.bf16.mxu0 %v8872
          %11143 = vmatpush1.bf16.msra.mxu0 %v8871
          %11144 = vmatprep.subr.bf16.mxu0 %v8882
          %11145 = vmatpush1.bf16.msra.mxu0 %v8881
          %11146 = vmatprep.subr.bf16.mxu0 %v8892
          %11147 = vmatpush1.bf16.msra.mxu0 %v8891
          %11148 = vmatprep.subr.bf16.mxu0 %v8902
          %11149 = vmatpush1.bf16.msra.mxu0 %v8901
          %11150 = vmatprep.subr.bf16.mxu0 %v8912
          %11151 = vmatpush1.bf16.msra.mxu0 %v8911
          %11152 = vmatprep.subr.bf16.mxu0 %v8922
          %11153 = vmatpush1.bf16.msra.mxu0 %v8921
          %11154 = vmatprep.subr.bf16.mxu0 %v8932
          %11155 = vmatpush1.bf16.msra.mxu0 %v8931
          %11156 = vmatprep.subr.bf16.mxu0 %v8942
          %11157 = vmatpush1.bf16.msra.mxu0 %v8941
          %11158 = vmatprep.mubr.bf16.mxu0 %v5362
          %11159 = vmatmul.mubr.bf16.gmra.mrb[0].mxu0 %v5361
          %v11160 = vpop.f32.mrb[0].mxu0
          %v11161 = vadd.f32 %v11118, %v11160
          %v11162 = vpop.f32.mrb[0].mxu0
          %v11163 = vadd.f32 %v11120, %v11162
          %v11164 = vpop.f32.mrb[0].mxu0
          %v11165 = vadd.f32 %v11122, %v11164
          %v11166 = vpop.f32.mrb[0].mxu0
          %v11167 = vadd.f32 %v11124, %v11166
          %11168 = vdwg.mxu0
          %11169 = vmatprep.subr.bf16.mxu0 %v8952
          %11170 = vmatpush1.bf16.msra.mxu0 %v8951
          %11171 = vmatprep.subr.bf16.mxu0 %v8962
          %11172 = vmatpush1.bf16.msra.mxu0 %v8961
          %11173 = vmatprep.subr.bf16.mxu0 %v8972
          %11174 = vmatpush1.bf16.msra.mxu0 %v8971
          %11175 = vmatprep.subr.bf16.mxu0 %v8982
          %11176 = vmatpush1.bf16.msra.mxu0 %v8981
          %11177 = vmatprep.subr.bf16.mxu0 %v8992
          %11178 = vmatpush1.bf16.msra.mxu0 %v8991
          %11179 = vmatprep.subr.bf16.mxu0 %v9002
          %11180 = vmatpush1.bf16.msra.mxu0 %v9001
          %11181 = vmatprep.subr.bf16.mxu0 %v9012
          %11182 = vmatpush1.bf16.msra.mxu0 %v9011
          %11183 = vmatprep.subr.bf16.mxu0 %v9022
          %11184 = vmatpush1.bf16.msra.mxu0 %v9021
          %11185 = vmatprep.subr.bf16.mxu0 %v9032
          %11186 = vmatpush1.bf16.msra.mxu0 %v9031
          %11187 = vmatprep.subr.bf16.mxu0 %v9042
          %11188 = vmatpush1.bf16.msra.mxu0 %v9041
          %11189 = vmatprep.subr.bf16.mxu0 %v9052
          %11190 = vmatpush1.bf16.msra.mxu0 %v9051
          %11191 = vmatprep.subr.bf16.mxu0 %v9062
          %11192 = vmatpush1.bf16.msra.mxu0 %v9061
          %11193 = vmatprep.subr.bf16.mxu0 %v9072
          %11194 = vmatpush1.bf16.msra.mxu0 %v9071
          %11195 = vmatprep.subr.bf16.mxu0 %v9082
          %11196 = vmatpush1.bf16.msra.mxu0 %v9081
          %11197 = vmatprep.subr.bf16.mxu0 %v9092
          %11198 = vmatpush1.bf16.msra.mxu0 %v9091
          %11199 = vmatprep.subr.bf16.mxu0 %v9102
          %11200 = vmatpush1.bf16.msra.mxu0 %v9101
          %11201 = vmatprep.mubr.bf16.mxu0 %v5364
          %11202 = vmatmul.mubr.bf16.gmra.mrb[0].mxu0 %v5363
          %v11203 = vpop.f32.mrb[0].mxu0
          %v11204 = vadd.f32 %v11161, %v11203
          %v11205 = vpop.f32.mrb[0].mxu0
          %v11206 = vadd.f32 %v11163, %v11205
          %v11207 = vpop.f32.mrb[0].mxu0
          %v11208 = vadd.f32 %v11165, %v11207
          %v11209 = vpop.f32.mrb[0].mxu0
          %v11210 = vadd.f32 %v11167, %v11209
          %11211 = vdwg.mxu0
          %11212 = vmatprep.subr.bf16.mxu0 %v9112
          %11213 = vmatpush1.bf16.msra.mxu0 %v9111
          %11214 = vmatprep.subr.bf16.mxu0 %v9122
          %11215 = vmatpush1.bf16.msra.mxu0 %v9121
          %11216 = vmatprep.subr.bf16.mxu0 %v9132
          %11217 = vmatpush1.bf16.msra.mxu0 %v9131
          %11218 = vmatprep.subr.bf16.mxu0 %v9142
          %11219 = vmatpush1.bf16.msra.mxu0 %v9141
          %11220 = vmatprep.subr.bf16.mxu0 %v9152
          %11221 = vmatpush1.bf16.msra.mxu0 %v9151
          %11222 = vmatprep.subr.bf16.mxu0 %v9162
          %11223 = vmatpush1.bf16.msra.mxu0 %v9161
          %11224 = vmatprep.subr.bf16.mxu0 %v9172
          %11225 = vmatpush1.bf16.msra.mxu0 %v9171
          %11226 = vmatprep.subr.bf16.mxu0 %v9182
          %11227 = vmatpush1.bf16.msra.mxu0 %v9181
          %11228 = vmatprep.subr.bf16.mxu0 %v9192
          %11229 = vmatpush1.bf16.msra.mxu0 %v9191
          %11230 = vmatprep.subr.bf16.mxu0 %v9202
          %11231 = vmatpush1.bf16.msra.mxu0 %v9201
          %11232 = vmatprep.subr.bf16.mxu0 %v9212
          %11233 = vmatpush1.bf16.msra.mxu0 %v9211
          %11234 = vmatprep.subr.bf16.mxu0 %v9222
          %11235 = vmatpush1.bf16.msra.mxu0 %v9221
          %11236 = vmatprep.subr.bf16.mxu0 %v9232
          %11237 = vmatpush1.bf16.msra.mxu0 %v9231
          %11238 = vmatprep.subr.bf16.mxu0 %v9242
          %11239 = vmatpush1.bf16.msra.mxu0 %v9241
          %11240 = vmatprep.subr.bf16.mxu0 %v9252
          %11241 = vmatpush1.bf16.msra.mxu0 %v9251
          %11242 = vmatprep.subr.bf16.mxu0 %v9262
          %11243 = vmatpush1.bf16.msra.mxu0 %v9261
          %11244 = vmatprep.mubr.bf16.mxu0 %v5366
          %11245 = vmatmul.mubr.bf16.gmra.mrb[0].mxu0 %v5365
          %v11246 = vpop.f32.mrb[0].mxu0
          %v11247 = vadd.f32 %v11204, %v11246
          %v11248 = vpop.f32.mrb[0].mxu0
          %v11249 = vadd.f32 %v11206, %v11248
          %v11250 = vpop.f32.mrb[0].mxu0
          %v11251 = vadd.f32 %v11208, %v11250
          %v11252 = vpop.f32.mrb[0].mxu0
          %v11253 = vadd.f32 %v11210, %v11252
          %11254 = vdwg.mxu0
          %11255 = vmatprep.subr.bf16.mxu0 %v9272
          %11256 = vmatpush1.bf16.msra.mxu0 %v9271
          %11257 = vmatprep.subr.bf16.mxu0 %v9282
          %11258 = vmatpush1.bf16.msra.mxu0 %v9281
          %11259 = vmatprep.subr.bf16.mxu0 %v9292
          %11260 = vmatpush1.bf16.msra.mxu0 %v9291
          %11261 = vmatprep.subr.bf16.mxu0 %v9302
          %11262 = vmatpush1.bf16.msra.mxu0 %v9301
          %11263 = vmatprep.subr.bf16.mxu0 %v9312
          %11264 = vmatpush1.bf16.msra.mxu0 %v9311
          %11265 = vmatprep.subr.bf16.mxu0 %v9322
          %11266 = vmatpush1.bf16.msra.mxu0 %v9321
          %11267 = vmatprep.subr.bf16.mxu0 %v9332
          %11268 = vmatpush1.bf16.msra.mxu0 %v9331
          %11269 = vmatprep.subr.bf16.mxu0 %v9342
          %11270 = vmatpush1.bf16.msra.mxu0 %v9341
          %11271 = vmatprep.subr.bf16.mxu0 %v9352
          %11272 = vmatpush1.bf16.msra.mxu0 %v9351
          %11273 = vmatprep.subr.bf16.mxu0 %v9362
          %11274 = vmatpush1.bf16.msra.mxu0 %v9361
          %11275 = vmatprep.subr.bf16.mxu0 %v9372
          %11276 = vmatpush1.bf16.msra.mxu0 %v9371
          %11277 = vmatprep.subr.bf16.mxu0 %v9382
          %11278 = vmatpush1.bf16.msra.mxu0 %v9381
          %11279 = vmatprep.subr.bf16.mxu0 %v9392
          %11280 = vmatpush1.bf16.msra.mxu0 %v9391
          %11281 = vmatprep.subr.bf16.mxu0 %v9402
          %11282 = vmatpush1.bf16.msra.mxu0 %v9401
          %11283 = vmatprep.subr.bf16.mxu0 %v9412
          %11284 = vmatpush1.bf16.msra.mxu0 %v9411
          %11285 = vmatprep.subr.bf16.mxu0 %v9422
          %11286 = vmatpush1.bf16.msra.mxu0 %v9421
          %11287 = vmatprep.mubr.bf16.mxu0 %v5368
          %11288 = vmatmul.mubr.bf16.gmra.mrb[0].mxu0 %v5367
          %v11289 = vpop.f32.mrb[0].mxu0
          %v11290 = vadd.f32 %v11247, %v11289
          %v11291 = vpop.f32.mrb[0].mxu0
          %v11292 = vadd.f32 %v11249, %v11291
          %v11293 = vpop.f32.mrb[0].mxu0
          %v11294 = vadd.f32 %v11251, %v11293
          %v11295 = vpop.f32.mrb[0].mxu0
          %v11296 = vadd.f32 %v11253, %v11295
          %11297 = vdwg.mxu0
          %v11298 = vmax.f32 %v10430, 0.0
          %v11299 = vmax.f32 %v10432, 0.0
          %v11300 = vmax.f32 %v10645, 0.0
          %v11301 = vmax.f32 %v10647, 0.0
          %v11302 = vmax.f32 %v10860, 0.0
          %v11303 = vmax.f32 %v10862, 0.0
          %v11304 = vmax.f32 %v11075, 0.0
          %v11305 = vmax.f32 %v11077, 0.0
          %v11306 = vmax.f32 %v11290, 0.0
          %v11307 = vmax.f32 %v11292, 0.0
          %v11308 = vmax.f32 %v10434, 0.0
          %v11309 = vmax.f32 %v10436, 0.0
          %v11310 = vmax.f32 %v10649, 0.0
          %v11311 = vmax.f32 %v10651, 0.0
          %v11312 = vmax.f32 %v10864, 0.0
          %v11313 = vmax.f32 %v10866, 0.0
          %v11314 = vmax.f32 %v11079, 0.0
          %v11315 = vmax.f32 %v11081, 0.0
          %v11316 = vmax.f32 %v11294, 0.0
          %v11317 = vmax.f32 %v11296, 0.0
          %v11318 = vpack.c.bf16 %v11308, %v11298
          %v11319 = vpack.c.bf16 %v11309, %v11299
          %v11320 = vpack.c.bf16 %v11310, %v11300
          %v11321 = vpack.c.bf16 %v11311, %v11301
          %v11322 = vpack.c.bf16 %v11312, %v11302
          %v11323 = vpack.c.bf16 %v11313, %v11303
          %v11324 = vpack.c.bf16 %v11314, %v11304
          %v11325 = vpack.c.bf16 %v11315, %v11305
          %v11326 = vpack.c.bf16 %v11316, %v11306
          %v11327 = vpack.c.bf16 %v11317, %v11307
          %v11328 = vld [vmem:[#allocation11] sm:$0xf]
          %v11329 = vld [vmem:[#allocation11 + $0x4] sm:$0xf]
          %v11330 = vld [vmem:[#allocation11 + $0x8] sm:$0xf]
          %v11331 = vld [vmem:[#allocation11 + $0xc] sm:$0xf]
          %v11332 = vld [vmem:[#allocation11 + $0x10] sm:$0xf]
          %v11333 = vld [vmem:[#allocation11 + $0x14] sm:$0xf]
          %v11334 = vld [vmem:[#allocation11 + $0x18] sm:$0xf]
          %v11335 = vld [vmem:[#allocation11 + $0x1c] sm:$0xf]
          %v11336 = vld [vmem:[#allocation11 + $0x20] sm:$0xf]
          %v11337 = vld [vmem:[#allocation11 + $0x24] sm:$0xf]
          %v11338 = vld [vmem:[#allocation11 + $0x28] sm:$0xf]
          %v11339 = vld [vmem:[#allocation11 + $0x2c] sm:$0xf]
          %v11340 = vld [vmem:[#allocation11 + $0x30] sm:$0xf]
          %v11341 = vld [vmem:[#allocation11 + $0x34] sm:$0xf]
          %v11342 = vld [vmem:[#allocation11 + $0x38] sm:$0xf]
          %v11343 = vld [vmem:[#allocation11 + $0x3c] sm:$0xf]
          %v11344 = vld [vmem:[#allocation11 + $0x40] sm:$0xf]
          %v11345 = vld [vmem:[#allocation11 + $0x44] sm:$0xf]
          %v11346 = vld [vmem:[#allocation11 + $0x48] sm:$0xf]
          %v11347 = vld [vmem:[#allocation11 + $0x4c] sm:$0xf]
          %v11348 = vld [vmem:[#allocation11 + $0x50] sm:$0xf]
          %v11349 = vld [vmem:[#allocation11 + $0x54] sm:$0xf]
          %v11350 = vld [vmem:[#allocation11 + $0x58] sm:$0xf]
          %v11351 = vld [vmem:[#allocation11 + $0x5c] sm:$0xf]
          %v11352 = vld [vmem:[#allocation11 + $0x60] sm:$0xf]
          %v11353 = vld [vmem:[#allocation11 + $0x64] sm:$0xf]
          %v11354 = vld [vmem:[#allocation11 + $0x68] sm:$0xf]
          %v11355 = vld [vmem:[#allocation11 + $0x6c] sm:$0xf]
          %v11356 = vld [vmem:[#allocation11 + $0x70] sm:$0xf]
          %v11357 = vld [vmem:[#allocation11 + $0x74] sm:$0xf]
          %v11358 = vld [vmem:[#allocation11 + $0x78] sm:$0xf]
          %v11359 = vld [vmem:[#allocation11 + $0x7c] sm:$0xf]
          %v11360 = vld [vmem:[#allocation11 + $0x80] sm:$0xf]
          %v11361 = vld [vmem:[#allocation11 + $0x84] sm:$0xf]
          %v11362 = vld [vmem:[#allocation11 + $0x88] sm:$0xf]
          %v11363 = vld [vmem:[#allocation11 + $0x8c] sm:$0xf]
          %v11364 = vld [vmem:[#allocation11 + $0x90] sm:$0xf]
          %v11365 = vld [vmem:[#allocation11 + $0x94] sm:$0xf]
          %v11366 = vld [vmem:[#allocation11 + $0x98] sm:$0xf]
          %v11367 = vld [vmem:[#allocation11 + $0x9c] sm:$0xf]
          %v11368 = vld [vmem:[#allocation11 + $0xa0] sm:$0xf]
          %v11369 = vld [vmem:[#allocation11 + $0xa4] sm:$0xf]
          %v11370 = vld [vmem:[#allocation11 + $0xa8] sm:$0xf]
          %v11371 = vld [vmem:[#allocation11 + $0xac] sm:$0xf]
          %v11372 = vld [vmem:[#allocation11 + $0xb0] sm:$0xf]
          %v11373 = vld [vmem:[#allocation11 + $0xb4] sm:$0xf]
          %v11374 = vld [vmem:[#allocation11 + $0xb8] sm:$0xf]
          %v11375 = vld [vmem:[#allocation11 + $0xbc] sm:$0xf]
          %v11376 = vld [vmem:[#allocation11 + $0xc0] sm:$0xf]
          %v11377 = vld [vmem:[#allocation11 + $0xc4] sm:$0xf]
          %v11378 = vld [vmem:[#allocation11 + $0xc8] sm:$0xf]
          %v11379 = vld [vmem:[#allocation11 + $0xcc] sm:$0xf]
          %v11380 = vld [vmem:[#allocation11 + $0xd0] sm:$0xf]
          %v11381 = vld [vmem:[#allocation11 + $0xd4] sm:$0xf]
          %v11382 = vld [vmem:[#allocation11 + $0xd8] sm:$0xf]
          %v11383 = vld [vmem:[#allocation11 + $0xdc] sm:$0xf]
          %v11384 = vld [vmem:[#allocation11 + $0xe0] sm:$0xf]
          %v11385 = vld [vmem:[#allocation11 + $0xe4] sm:$0xf]
          %v11386 = vld [vmem:[#allocation11 + $0xe8] sm:$0xf]
          %v11387 = vld [vmem:[#allocation11 + $0xec] sm:$0xf]
          %v11388 = vld [vmem:[#allocation11 + $0xf0] sm:$0xf]
          %v11389 = vld [vmem:[#allocation11 + $0xf4] sm:$0xf]
          %v11390 = vld [vmem:[#allocation11 + $0xf8] sm:$0xf]
          %v11391 = vld [vmem:[#allocation11 + $0xfc] sm:$0xf]
          %v11392 = vld [vmem:[#allocation11 + $0x100] sm:$0xf]
          %v11393 = vld [vmem:[#allocation11 + $0x104] sm:$0xf]
          %v11394 = vld [vmem:[#allocation11 + $0x108] sm:$0xf]
          %v11395 = vld [vmem:[#allocation11 + $0x10c] sm:$0xf]
          %v11396 = vld [vmem:[#allocation11 + $0x110] sm:$0xf]
          %v11397 = vld [vmem:[#allocation11 + $0x114] sm:$0xf]
          %v11398 = vld [vmem:[#allocation11 + $0x118] sm:$0xf]
          %v11399 = vld [vmem:[#allocation11 + $0x11c] sm:$0xf]
          %v11400 = vld [vmem:[#allocation11 + $0x120] sm:$0xf]
          %v11401 = vld [vmem:[#allocation11 + $0x124] sm:$0xf]
          %v11402 = vld [vmem:[#allocation11 + $0x128] sm:$0xf]
          %v11403 = vld [vmem:[#allocation11 + $0x12c] sm:$0xf]
          %v11404 = vld [vmem:[#allocation11 + $0x130] sm:$0xf]
          %v11405 = vld [vmem:[#allocation11 + $0x134] sm:$0xf]
          %v11406 = vld [vmem:[#allocation11 + $0x138] sm:$0xf]
          %v11407 = vld [vmem:[#allocation11 + $0x13c] sm:$0xf]
          %v11408 = vld [vmem:[#allocation11 + $0x140] sm:$0xf]
          %v11409 = vld [vmem:[#allocation11 + $0x144] sm:$0xf]
          %v11410 = vld [vmem:[#allocation11 + $0x148] sm:$0xf]
          %v11411 = vld [vmem:[#allocation11 + $0x14c] sm:$0xf]
          %v11412 = vld [vmem:[#allocation11 + $0x150] sm:$0xf]
          %v11413 = vld [vmem:[#allocation11 + $0x154] sm:$0xf]
          %v11414 = vld [vmem:[#allocation11 + $0x158] sm:$0xf]
          %v11415 = vld [vmem:[#allocation11 + $0x15c] sm:$0xf]
          %v11416 = vld [vmem:[#allocation11 + $0x160] sm:$0xf]
          %v11417 = vld [vmem:[#allocation11 + $0x164] sm:$0xf]
          %v11418 = vld [vmem:[#allocation11 + $0x168] sm:$0xf]
          %v11419 = vld [vmem:[#allocation11 + $0x16c] sm:$0xf]
          %v11420 = vld [vmem:[#allocation11 + $0x170] sm:$0xf]
          %v11421 = vld [vmem:[#allocation11 + $0x174] sm:$0xf]
          %v11422 = vld [vmem:[#allocation11 + $0x178] sm:$0xf]
          %v11423 = vld [vmem:[#allocation11 + $0x17c] sm:$0xf]
          %v11424 = vld [vmem:[#allocation11 + $0x180] sm:$0xf]
          %v11425 = vld [vmem:[#allocation11 + $0x184] sm:$0xf]
          %v11426 = vld [vmem:[#allocation11 + $0x188] sm:$0xf]
          %v11427 = vld [vmem:[#allocation11 + $0x18c] sm:$0xf]
          %v11428 = vld [vmem:[#allocation11 + $0x190] sm:$0xf]
          %v11429 = vld [vmem:[#allocation11 + $0x194] sm:$0xf]
          %v11430 = vld [vmem:[#allocation11 + $0x198] sm:$0xf]
          %v11431 = vld [vmem:[#allocation11 + $0x19c] sm:$0xf]
          %v11432 = vld [vmem:[#allocation11 + $0x1a0] sm:$0xf]
          %v11433 = vld [vmem:[#allocation11 + $0x1a4] sm:$0xf]
          %v11434 = vld [vmem:[#allocation11 + $0x1a8] sm:$0xf]
          %v11435 = vld [vmem:[#allocation11 + $0x1ac] sm:$0xf]
          %v11436 = vld [vmem:[#allocation11 + $0x1b0] sm:$0xf]
          %v11437 = vld [vmem:[#allocation11 + $0x1b4] sm:$0xf]
          %v11438 = vld [vmem:[#allocation11 + $0x1b8] sm:$0xf]
          %v11439 = vld [vmem:[#allocation11 + $0x1bc] sm:$0xf]
          %v11440 = vld [vmem:[#allocation11 + $0x1c0] sm:$0xf]
          %v11441 = vld [vmem:[#allocation11 + $0x1c4] sm:$0xf]
          %v11442 = vld [vmem:[#allocation11 + $0x1c8] sm:$0xf]
          %v11443 = vld [vmem:[#allocation11 + $0x1cc] sm:$0xf]
          %v11444 = vld [vmem:[#allocation11 + $0x1d0] sm:$0xf]
          %v11445 = vld [vmem:[#allocation11 + $0x1d4] sm:$0xf]
          %v11446 = vld [vmem:[#allocation11 + $0x1d8] sm:$0xf]
          %v11447 = vld [vmem:[#allocation11 + $0x1dc] sm:$0xf]
          %v11448 = vld [vmem:[#allocation11 + $0x1e0] sm:$0xf]
          %v11449 = vld [vmem:[#allocation11 + $0x1e4] sm:$0xf]
          %v11450 = vld [vmem:[#allocation11 + $0x1e8] sm:$0xf]
          %v11451 = vld [vmem:[#allocation11 + $0x1ec] sm:$0xf]
          %v11452 = vld [vmem:[#allocation11 + $0x1f0] sm:$0xf]
          %v11453 = vld [vmem:[#allocation11 + $0x1f4] sm:$0xf]
          %v11454 = vld [vmem:[#allocation11 + $0x1f8] sm:$0xf]
          %v11455 = vld [vmem:[#allocation11 + $0x1fc] sm:$0xf]
          %v11456 = vld [vmem:[#allocation11 + $0x200] sm:$0xf]
          %v11457 = vld [vmem:[#allocation11 + $0x204] sm:$0xf]
          %v11458 = vld [vmem:[#allocation11 + $0x208] sm:$0xf]
          %v11459 = vld [vmem:[#allocation11 + $0x20c] sm:$0xf]
          %v11460 = vld [vmem:[#allocation11 + $0x210] sm:$0xf]
          %v11461 = vld [vmem:[#allocation11 + $0x214] sm:$0xf]
          %v11462 = vld [vmem:[#allocation11 + $0x218] sm:$0xf]
          %v11463 = vld [vmem:[#allocation11 + $0x21c] sm:$0xf]
          %v11464 = vld [vmem:[#allocation11 + $0x220] sm:$0xf]
          %v11465 = vld [vmem:[#allocation11 + $0x224] sm:$0xf]
          %v11466 = vld [vmem:[#allocation11 + $0x228] sm:$0xf]
          %v11467 = vld [vmem:[#allocation11 + $0x22c] sm:$0xf]
          %v11468 = vld [vmem:[#allocation11 + $0x230] sm:$0xf]
          %v11469 = vld [vmem:[#allocation11 + $0x234] sm:$0xf]
          %v11470 = vld [vmem:[#allocation11 + $0x238] sm:$0xf]
          %v11471 = vld [vmem:[#allocation11 + $0x23c] sm:$0xf]
          %v11472 = vld [vmem:[#allocation11 + $0x240] sm:$0xf]
          %v11473 = vld [vmem:[#allocation11 + $0x244] sm:$0xf]
          %v11474 = vld [vmem:[#allocation11 + $0x248] sm:$0xf]
          %v11475 = vld [vmem:[#allocation11 + $0x24c] sm:$0xf]
          %v11476 = vld [vmem:[#allocation11 + $0x250] sm:$0xf]
          %v11477 = vld [vmem:[#allocation11 + $0x254] sm:$0xf]
          %v11478 = vld [vmem:[#allocation11 + $0x258] sm:$0xf]
          %v11479 = vld [vmem:[#allocation11 + $0x25c] sm:$0xf]
          %v11480 = vld [vmem:[#allocation11 + $0x260] sm:$0xf]
          %v11481 = vld [vmem:[#allocation11 + $0x264] sm:$0xf]
          %v11482 = vld [vmem:[#allocation11 + $0x268] sm:$0xf]
          %v11483 = vld [vmem:[#allocation11 + $0x26c] sm:$0xf]
          %v11484 = vld [vmem:[#allocation11 + $0x270] sm:$0xf]
          %v11485 = vld [vmem:[#allocation11 + $0x274] sm:$0xf]
          %v11486 = vld [vmem:[#allocation11 + $0x278] sm:$0xf]
          %v11487 = vld [vmem:[#allocation11 + $0x27c] sm:$0xf]
          %v11488 = vld [vmem:[#allocation12] sm:$0x1]
          %v11490 = vlaneseq
          %v11491 = vshrl.u32 %v11490, 7
          %v11492 = vsub.s32 0, %v11491
          %v11493 = vrot.slane %v11488, %v11492
          %v11655 = vunpack.c.l.b16 %v11328
          %v11656 = vunpack.c.l.b16 %v11329
          %v11657 = vunpack.c.l.b16 %v11330
          %v11658 = vunpack.c.l.b16 %v11331
          %v11659 = vunpack.c.l.b16 %v11332
          %v11660 = vunpack.c.l.b16 %v11333
          %v11661 = vunpack.c.l.b16 %v11334
          %v11662 = vunpack.c.l.b16 %v11335
          %v11663 = vunpack.c.l.b16 %v11336
          %v11664 = vunpack.c.l.b16 %v11337
          %v11665 = vunpack.c.l.b16 %v11338
          %v11666 = vunpack.c.l.b16 %v11339
          %v11667 = vunpack.c.l.b16 %v11340
          %v11668 = vunpack.c.l.b16 %v11341
          %v11669 = vunpack.c.l.b16 %v11342
          %v11670 = vunpack.c.l.b16 %v11343
          %v11671 = vunpack.c.l.b16 %v11344
          %v11672 = vunpack.c.l.b16 %v11345
          %v11673 = vunpack.c.l.b16 %v11346
          %v11674 = vunpack.c.l.b16 %v11347
          %v11675 = vunpack.c.l.b16 %v11348
          %v11676 = vunpack.c.l.b16 %v11349
          %v11677 = vunpack.c.l.b16 %v11350
          %v11678 = vunpack.c.l.b16 %v11351
          %v11679 = vunpack.c.l.b16 %v11352
          %v11680 = vunpack.c.l.b16 %v11353
          %v11681 = vunpack.c.l.b16 %v11354
          %v11682 = vunpack.c.l.b16 %v11355
          %v11683 = vunpack.c.l.b16 %v11356
          %v11684 = vunpack.c.l.b16 %v11357
          %v11685 = vunpack.c.l.b16 %v11358
          %v11686 = vunpack.c.l.b16 %v11359
          %v11687 = vunpack.c.l.b16 %v11360
          %v11688 = vunpack.c.l.b16 %v11361
          %v11689 = vunpack.c.l.b16 %v11362
          %v11690 = vunpack.c.l.b16 %v11363
          %v11691 = vunpack.c.l.b16 %v11364
          %v11692 = vunpack.c.l.b16 %v11365
          %v11693 = vunpack.c.l.b16 %v11366
          %v11694 = vunpack.c.l.b16 %v11367
          %v11695 = vunpack.c.l.b16 %v11368
          %v11696 = vunpack.c.l.b16 %v11369
          %v11697 = vunpack.c.l.b16 %v11370
          %v11698 = vunpack.c.l.b16 %v11371
          %v11699 = vunpack.c.l.b16 %v11372
          %v11700 = vunpack.c.l.b16 %v11373
          %v11701 = vunpack.c.l.b16 %v11374
          %v11702 = vunpack.c.l.b16 %v11375
          %v11703 = vunpack.c.l.b16 %v11376
          %v11704 = vunpack.c.l.b16 %v11377
          %v11705 = vunpack.c.l.b16 %v11378
          %v11706 = vunpack.c.l.b16 %v11379
          %v11707 = vunpack.c.l.b16 %v11380
          %v11708 = vunpack.c.l.b16 %v11381
          %v11709 = vunpack.c.l.b16 %v11382
          %v11710 = vunpack.c.l.b16 %v11383
          %v11711 = vunpack.c.l.b16 %v11384
          %v11712 = vunpack.c.l.b16 %v11385
          %v11713 = vunpack.c.l.b16 %v11386
          %v11714 = vunpack.c.l.b16 %v11387
          %v11715 = vunpack.c.l.b16 %v11388
          %v11716 = vunpack.c.l.b16 %v11389
          %v11717 = vunpack.c.l.b16 %v11390
          %v11718 = vunpack.c.l.b16 %v11391
          %v11719 = vunpack.c.l.b16 %v11392
          %v11720 = vunpack.c.l.b16 %v11393
          %v11721 = vunpack.c.l.b16 %v11394
          %v11722 = vunpack.c.l.b16 %v11395
          %v11723 = vunpack.c.l.b16 %v11396
          %v11724 = vunpack.c.l.b16 %v11397
          %v11725 = vunpack.c.l.b16 %v11398
          %v11726 = vunpack.c.l.b16 %v11399
          %v11727 = vunpack.c.l.b16 %v11400
          %v11728 = vunpack.c.l.b16 %v11401
          %v11729 = vunpack.c.l.b16 %v11402
          %v11730 = vunpack.c.l.b16 %v11403
          %v11731 = vunpack.c.l.b16 %v11404
          %v11732 = vunpack.c.l.b16 %v11405
          %v11733 = vunpack.c.l.b16 %v11406
          %v11734 = vunpack.c.l.b16 %v11407
          %v11735 = vunpack.c.l.b16 %v11408
          %v11736 = vunpack.c.l.b16 %v11409
          %v11737 = vunpack.c.l.b16 %v11410
          %v11738 = vunpack.c.l.b16 %v11411
          %v11739 = vunpack.c.l.b16 %v11412
          %v11740 = vunpack.c.l.b16 %v11413
          %v11741 = vunpack.c.l.b16 %v11414
          %v11742 = vunpack.c.l.b16 %v11415
          %v11743 = vunpack.c.l.b16 %v11416
          %v11744 = vunpack.c.l.b16 %v11417
          %v11745 = vunpack.c.l.b16 %v11418
          %v11746 = vunpack.c.l.b16 %v11419
          %v11747 = vunpack.c.l.b16 %v11420
          %v11748 = vunpack.c.l.b16 %v11421
          %v11749 = vunpack.c.l.b16 %v11422
          %v11750 = vunpack.c.l.b16 %v11423
          %v11751 = vunpack.c.l.b16 %v11424
          %v11752 = vunpack.c.l.b16 %v11425
          %v11753 = vunpack.c.l.b16 %v11426
          %v11754 = vunpack.c.l.b16 %v11427
          %v11755 = vunpack.c.l.b16 %v11428
          %v11756 = vunpack.c.l.b16 %v11429
          %v11757 = vunpack.c.l.b16 %v11430
          %v11758 = vunpack.c.l.b16 %v11431
          %v11759 = vunpack.c.l.b16 %v11432
          %v11760 = vunpack.c.l.b16 %v11433
          %v11761 = vunpack.c.l.b16 %v11434
          %v11762 = vunpack.c.l.b16 %v11435
          %v11763 = vunpack.c.l.b16 %v11436
          %v11764 = vunpack.c.l.b16 %v11437
          %v11765 = vunpack.c.l.b16 %v11438
          %v11766 = vunpack.c.l.b16 %v11439
          %v11767 = vunpack.c.l.b16 %v11440
          %v11768 = vunpack.c.l.b16 %v11441
          %v11769 = vunpack.c.l.b16 %v11442
          %v11770 = vunpack.c.l.b16 %v11443
          %v11771 = vunpack.c.l.b16 %v11444
          %v11772 = vunpack.c.l.b16 %v11445
          %v11773 = vunpack.c.l.b16 %v11446
          %v11774 = vunpack.c.l.b16 %v11447
          %v11775 = vunpack.c.l.b16 %v11448
          %v11776 = vunpack.c.l.b16 %v11449
          %v11777 = vunpack.c.l.b16 %v11450
          %v11778 = vunpack.c.l.b16 %v11451
          %v11779 = vunpack.c.l.b16 %v11452
          %v11780 = vunpack.c.l.b16 %v11453
          %v11781 = vunpack.c.l.b16 %v11454
          %v11782 = vunpack.c.l.b16 %v11455
          %v11783 = vunpack.c.l.b16 %v11456
          %v11784 = vunpack.c.l.b16 %v11457
          %v11785 = vunpack.c.l.b16 %v11458
          %v11786 = vunpack.c.l.b16 %v11459
          %v11787 = vunpack.c.l.b16 %v11460
          %v11788 = vunpack.c.l.b16 %v11461
          %v11789 = vunpack.c.l.b16 %v11462
          %v11790 = vunpack.c.l.b16 %v11463
          %v11791 = vunpack.c.l.b16 %v11464
          %v11792 = vunpack.c.l.b16 %v11465
          %v11793 = vunpack.c.l.b16 %v11466
          %v11794 = vunpack.c.l.b16 %v11467
          %v11795 = vunpack.c.l.b16 %v11468
          %v11796 = vunpack.c.l.b16 %v11469
          %v11797 = vunpack.c.l.b16 %v11470
          %v11798 = vunpack.c.l.b16 %v11471
          %v11799 = vunpack.c.l.b16 %v11472
          %v11800 = vunpack.c.l.b16 %v11473
          %v11801 = vunpack.c.l.b16 %v11474
          %v11802 = vunpack.c.l.b16 %v11475
          %v11803 = vunpack.c.l.b16 %v11476
          %v11804 = vunpack.c.l.b16 %v11477
          %v11805 = vunpack.c.l.b16 %v11478
          %v11806 = vunpack.c.l.b16 %v11479
          %v11807 = vunpack.c.l.b16 %v11480
          %v11808 = vunpack.c.l.b16 %v11481
          %v11809 = vunpack.c.l.b16 %v11482
          %v11810 = vunpack.c.l.b16 %v11483
          %v11811 = vunpack.c.l.b16 %v11484
          %v11812 = vunpack.c.l.b16 %v11485
          %v11813 = vunpack.c.l.b16 %v11486
          %v11814 = vunpack.c.l.b16 %v11487
          %v11815 = vpack.c.b16 %v11656, %v11655
          %v11816 = vpack.c.b16 %v11658, %v11657
          %v11817 = vpack.c.b16 %v11660, %v11659
          %v11818 = vpack.c.b16 %v11662, %v11661
          %v11819 = vpack.c.b16 %v11664, %v11663
          %v11820 = vpack.c.b16 %v11666, %v11665
          %v11821 = vpack.c.b16 %v11668, %v11667
          %v11822 = vpack.c.b16 %v11670, %v11669
          %v11823 = vpack.c.b16 %v11672, %v11671
          %v11824 = vpack.c.b16 %v11674, %v11673
          %v11825 = vpack.c.b16 %v11676, %v11675
          %v11826 = vpack.c.b16 %v11678, %v11677
          %v11827 = vpack.c.b16 %v11680, %v11679
          %v11828 = vpack.c.b16 %v11682, %v11681
          %v11829 = vpack.c.b16 %v11684, %v11683
          %v11830 = vpack.c.b16 %v11686, %v11685
          %v11831 = vpack.c.b16 %v11688, %v11687
          %v11832 = vpack.c.b16 %v11690, %v11689
          %v11833 = vpack.c.b16 %v11692, %v11691
          %v11834 = vpack.c.b16 %v11694, %v11693
          %v11835 = vpack.c.b16 %v11696, %v11695
          %v11836 = vpack.c.b16 %v11698, %v11697
          %v11837 = vpack.c.b16 %v11700, %v11699
          %v11838 = vpack.c.b16 %v11702, %v11701
          %v11839 = vpack.c.b16 %v11704, %v11703
          %v11840 = vpack.c.b16 %v11706, %v11705
          %v11841 = vpack.c.b16 %v11708, %v11707
          %v11842 = vpack.c.b16 %v11710, %v11709
          %v11843 = vpack.c.b16 %v11712, %v11711
          %v11844 = vpack.c.b16 %v11714, %v11713
          %v11845 = vpack.c.b16 %v11716, %v11715
          %v11846 = vpack.c.b16 %v11718, %v11717
          %v11847 = vpack.c.b16 %v11720, %v11719
          %v11848 = vpack.c.b16 %v11722, %v11721
          %v11849 = vpack.c.b16 %v11724, %v11723
          %v11850 = vpack.c.b16 %v11726, %v11725
          %v11851 = vpack.c.b16 %v11728, %v11727
          %v11852 = vpack.c.b16 %v11730, %v11729
          %v11853 = vpack.c.b16 %v11732, %v11731
          %v11854 = vpack.c.b16 %v11734, %v11733
          %v11855 = vpack.c.b16 %v11736, %v11735
          %v11856 = vpack.c.b16 %v11738, %v11737
          %v11857 = vpack.c.b16 %v11740, %v11739
          %v11858 = vpack.c.b16 %v11742, %v11741
          %v11859 = vpack.c.b16 %v11744, %v11743
          %v11860 = vpack.c.b16 %v11746, %v11745
          %v11861 = vpack.c.b16 %v11748, %v11747
          %v11862 = vpack.c.b16 %v11750, %v11749
          %v11863 = vpack.c.b16 %v11752, %v11751
          %v11864 = vpack.c.b16 %v11754, %v11753
          %v11865 = vpack.c.b16 %v11756, %v11755
          %v11866 = vpack.c.b16 %v11758, %v11757
          %v11867 = vpack.c.b16 %v11760, %v11759
          %v11868 = vpack.c.b16 %v11762, %v11761
          %v11869 = vpack.c.b16 %v11764, %v11763
          %v11870 = vpack.c.b16 %v11766, %v11765
          %v11871 = vpack.c.b16 %v11768, %v11767
          %v11872 = vpack.c.b16 %v11770, %v11769
          %v11873 = vpack.c.b16 %v11772, %v11771
          %v11874 = vpack.c.b16 %v11774, %v11773
          %v11875 = vpack.c.b16 %v11776, %v11775
          %v11876 = vpack.c.b16 %v11778, %v11777
          %v11877 = vpack.c.b16 %v11780, %v11779
          %v11878 = vpack.c.b16 %v11782, %v11781
          %v11879 = vpack.c.b16 %v11784, %v11783
          %v11880 = vpack.c.b16 %v11786, %v11785
          %v11881 = vpack.c.b16 %v11788, %v11787
          %v11882 = vpack.c.b16 %v11790, %v11789
          %v11883 = vpack.c.b16 %v11792, %v11791
          %v11884 = vpack.c.b16 %v11794, %v11793
          %v11885 = vpack.c.b16 %v11796, %v11795
          %v11886 = vpack.c.b16 %v11798, %v11797
          %v11887 = vpack.c.b16 %v11800, %v11799
          %v11888 = vpack.c.b16 %v11802, %v11801
          %v11889 = vpack.c.b16 %v11804, %v11803
          %v11890 = vpack.c.b16 %v11806, %v11805
          %v11891 = vpack.c.b16 %v11808, %v11807
          %v11892 = vpack.c.b16 %v11810, %v11809
          %v11893 = vpack.c.b16 %v11812, %v11811
          %v11894 = vpack.c.b16 %v11814, %v11813
          %11975 = vmatprep.subr.bf16.mxu0 0
          %11976 = vmatpush1.bf16.msra.mxu0 %v11815
          %11977 = vmatprep.subr.bf16.mxu0 0
          %11978 = vmatpush1.bf16.msra.mxu0 %v11816
          %11979 = vmatprep.subr.bf16.mxu0 0
          %11980 = vmatpush1.bf16.msra.mxu0 %v11817
          %11981 = vmatprep.subr.bf16.mxu0 0
          %11982 = vmatpush1.bf16.msra.mxu0 %v11818
          %11983 = vmatprep.subr.bf16.mxu0 0
          %11984 = vmatpush1.bf16.msra.mxu0 %v11819
          %11985 = vmatprep.subr.bf16.mxu0 0
          %11986 = vmatpush1.bf16.msra.mxu0 %v11820
          %11987 = vmatprep.subr.bf16.mxu0 0
          %11988 = vmatpush1.bf16.msra.mxu0 %v11821
          %11989 = vmatprep.subr.bf16.mxu0 0
          %11990 = vmatpush1.bf16.msra.mxu0 %v11822
          %11991 = vmatprep.subr.bf16.mxu0 0
          %11992 = vmatpush1.bf16.msra.mxu0 %v11823
          %11993 = vmatprep.subr.bf16.mxu0 0
          %11994 = vmatpush1.bf16.msra.mxu0 %v11824
          %11995 = vmatprep.subr.bf16.mxu0 0
          %11996 = vmatpush1.bf16.msra.mxu0 %v11825
          %11997 = vmatprep.subr.bf16.mxu0 0
          %11998 = vmatpush1.bf16.msra.mxu0 %v11826
          %11999 = vmatprep.subr.bf16.mxu0 0
          %12000 = vmatpush1.bf16.msra.mxu0 %v11827
          %12001 = vmatprep.subr.bf16.mxu0 0
          %12002 = vmatpush1.bf16.msra.mxu0 %v11828
          %12003 = vmatprep.subr.bf16.mxu0 0
          %12004 = vmatpush1.bf16.msra.mxu0 %v11829
          %12005 = vmatprep.subr.bf16.mxu0 0
          %12006 = vmatpush1.bf16.msra.mxu0 %v11830
          %12007 = vmatprep.mubr.bf16.mxu0 %v11319
          %12008 = vmatmul.mubr.bf16.gmra.mrb[0].mxu0 %v11318
          %v12009 = vpop.f32.mrb[0].mxu0
          %v12010 = vadd.f32 %v11493, %v12009
          %v12011 = vpop.f32.mrb[0].mxu0
          %v12012 = vpop.f32.mrb[0].mxu0
          %v12013 = vadd.f32 %v11493, %v12012
          %v12014 = vpop.f32.mrb[0].mxu0
          %12015 = vdwg.mxu0
          %12016 = vmatprep.subr.bf16.mxu0 0
          %12017 = vmatpush1.bf16.msra.mxu0 %v11831
          %12018 = vmatprep.subr.bf16.mxu0 0
          %12019 = vmatpush1.bf16.msra.mxu0 %v11832
          %12020 = vmatprep.subr.bf16.mxu0 0
          %12021 = vmatpush1.bf16.msra.mxu0 %v11833
          %12022 = vmatprep.subr.bf16.mxu0 0
          %12023 = vmatpush1.bf16.msra.mxu0 %v11834
          %12024 = vmatprep.subr.bf16.mxu0 0
          %12025 = vmatpush1.bf16.msra.mxu0 %v11835
          %12026 = vmatprep.subr.bf16.mxu0 0
          %12027 = vmatpush1.bf16.msra.mxu0 %v11836
          %12028 = vmatprep.subr.bf16.mxu0 0
          %12029 = vmatpush1.bf16.msra.mxu0 %v11837
          %12030 = vmatprep.subr.bf16.mxu0 0
          %12031 = vmatpush1.bf16.msra.mxu0 %v11838
          %12032 = vmatprep.subr.bf16.mxu0 0
          %12033 = vmatpush1.bf16.msra.mxu0 %v11839
          %12034 = vmatprep.subr.bf16.mxu0 0
          %12035 = vmatpush1.bf16.msra.mxu0 %v11840
          %12036 = vmatprep.subr.bf16.mxu0 0
          %12037 = vmatpush1.bf16.msra.mxu0 %v11841
          %12038 = vmatprep.subr.bf16.mxu0 0
          %12039 = vmatpush1.bf16.msra.mxu0 %v11842
          %12040 = vmatprep.subr.bf16.mxu0 0
          %12041 = vmatpush1.bf16.msra.mxu0 %v11843
          %12042 = vmatprep.subr.bf16.mxu0 0
          %12043 = vmatpush1.bf16.msra.mxu0 %v11844
          %12044 = vmatprep.subr.bf16.mxu0 0
          %12045 = vmatpush1.bf16.msra.mxu0 %v11845
          %12046 = vmatprep.subr.bf16.mxu0 0
          %12047 = vmatpush1.bf16.msra.mxu0 %v11846
          %12048 = vmatprep.mubr.bf16.mxu0 %v11321
          %12049 = vmatmul.mubr.bf16.gmra.mrb[0].mxu0 %v11320
          %v12050 = vpop.f32.mrb[0].mxu0
          %v12051 = vadd.f32 %v12010, %v12050
          %v12052 = vpop.f32.mrb[0].mxu0
          %v12053 = vpop.f32.mrb[0].mxu0
          %v12054 = vadd.f32 %v12013, %v12053
          %v12055 = vpop.f32.mrb[0].mxu0
          %12056 = vdwg.mxu0
          %12057 = vmatprep.subr.bf16.mxu0 0
          %12058 = vmatpush1.bf16.msra.mxu0 %v11847
          %12059 = vmatprep.subr.bf16.mxu0 0
          %12060 = vmatpush1.bf16.msra.mxu0 %v11848
          %12061 = vmatprep.subr.bf16.mxu0 0
          %12062 = vmatpush1.bf16.msra.mxu0 %v11849
          %12063 = vmatprep.subr.bf16.mxu0 0
          %12064 = vmatpush1.bf16.msra.mxu0 %v11850
          %12065 = vmatprep.subr.bf16.mxu0 0
          %12066 = vmatpush1.bf16.msra.mxu0 %v11851
          %12067 = vmatprep.subr.bf16.mxu0 0
          %12068 = vmatpush1.bf16.msra.mxu0 %v11852
          %12069 = vmatprep.subr.bf16.mxu0 0
          %12070 = vmatpush1.bf16.msra.mxu0 %v11853
          %12071 = vmatprep.subr.bf16.mxu0 0
          %12072 = vmatpush1.bf16.msra.mxu0 %v11854
          %12073 = vmatprep.subr.bf16.mxu0 0
          %12074 = vmatpush1.bf16.msra.mxu0 %v11855
          %12075 = vmatprep.subr.bf16.mxu0 0
          %12076 = vmatpush1.bf16.msra.mxu0 %v11856
          %12077 = vmatprep.subr.bf16.mxu0 0
          %12078 = vmatpush1.bf16.msra.mxu0 %v11857
          %12079 = vmatprep.subr.bf16.mxu0 0
          %12080 = vmatpush1.bf16.msra.mxu0 %v11858
          %12081 = vmatprep.subr.bf16.mxu0 0
          %12082 = vmatpush1.bf16.msra.mxu0 %v11859
          %12083 = vmatprep.subr.bf16.mxu0 0
          %12084 = vmatpush1.bf16.msra.mxu0 %v11860
          %12085 = vmatprep.subr.bf16.mxu0 0
          %12086 = vmatpush1.bf16.msra.mxu0 %v11861
          %12087 = vmatprep.subr.bf16.mxu0 0
          %12088 = vmatpush1.bf16.msra.mxu0 %v11862
          %12089 = vmatprep.mubr.bf16.mxu0 %v11323
          %12090 = vmatmul.mubr.bf16.gmra.mrb[0].mxu0 %v11322
          %v12091 = vpop.f32.mrb[0].mxu0
          %v12092 = vadd.f32 %v12051, %v12091
          %v12093 = vpop.f32.mrb[0].mxu0
          %v12094 = vpop.f32.mrb[0].mxu0
          %v12095 = vadd.f32 %v12054, %v12094
          %v12096 = vpop.f32.mrb[0].mxu0
          %12097 = vdwg.mxu0
          %12098 = vmatprep.subr.bf16.mxu0 0
          %12099 = vmatpush1.bf16.msra.mxu0 %v11863
          %12100 = vmatprep.subr.bf16.mxu0 0
          %12101 = vmatpush1.bf16.msra.mxu0 %v11864
          %12102 = vmatprep.subr.bf16.mxu0 0
          %12103 = vmatpush1.bf16.msra.mxu0 %v11865
          %12104 = vmatprep.subr.bf16.mxu0 0
          %12105 = vmatpush1.bf16.msra.mxu0 %v11866
          %12106 = vmatprep.subr.bf16.mxu0 0
          %12107 = vmatpush1.bf16.msra.mxu0 %v11867
          %12108 = vmatprep.subr.bf16.mxu0 0
          %12109 = vmatpush1.bf16.msra.mxu0 %v11868
          %12110 = vmatprep.subr.bf16.mxu0 0
          %12111 = vmatpush1.bf16.msra.mxu0 %v11869
          %12112 = vmatprep.subr.bf16.mxu0 0
          %12113 = vmatpush1.bf16.msra.mxu0 %v11870
          %12114 = vmatprep.subr.bf16.mxu0 0
          %12115 = vmatpush1.bf16.msra.mxu0 %v11871
          %12116 = vmatprep.subr.bf16.mxu0 0
          %12117 = vmatpush1.bf16.msra.mxu0 %v11872
          %12118 = vmatprep.subr.bf16.mxu0 0
          %12119 = vmatpush1.bf16.msra.mxu0 %v11873
          %12120 = vmatprep.subr.bf16.mxu0 0
          %12121 = vmatpush1.bf16.msra.mxu0 %v11874
          %12122 = vmatprep.subr.bf16.mxu0 0
          %12123 = vmatpush1.bf16.msra.mxu0 %v11875
          %12124 = vmatprep.subr.bf16.mxu0 0
          %12125 = vmatpush1.bf16.msra.mxu0 %v11876
          %12126 = vmatprep.subr.bf16.mxu0 0
          %12127 = vmatpush1.bf16.msra.mxu0 %v11877
          %12128 = vmatprep.subr.bf16.mxu0 0
          %12129 = vmatpush1.bf16.msra.mxu0 %v11878
          %12130 = vmatprep.mubr.bf16.mxu0 %v11325
          %12131 = vmatmul.mubr.bf16.gmra.mrb[0].mxu0 %v11324
          %v12132 = vpop.f32.mrb[0].mxu0
          %v12133 = vadd.f32 %v12092, %v12132
          %v12134 = vpop.f32.mrb[0].mxu0
          %v12135 = vpop.f32.mrb[0].mxu0
          %v12136 = vadd.f32 %v12095, %v12135
          %v12137 = vpop.f32.mrb[0].mxu0
          %12138 = vdwg.mxu0
          %12139 = vmatprep.subr.bf16.mxu0 0
          %12140 = vmatpush1.bf16.msra.mxu0 %v11879
          %12141 = vmatprep.subr.bf16.mxu0 0
          %12142 = vmatpush1.bf16.msra.mxu0 %v11880
          %12143 = vmatprep.subr.bf16.mxu0 0
          %12144 = vmatpush1.bf16.msra.mxu0 %v11881
          %12145 = vmatprep.subr.bf16.mxu0 0
          %12146 = vmatpush1.bf16.msra.mxu0 %v11882
          %12147 = vmatprep.subr.bf16.mxu0 0
          %12148 = vmatpush1.bf16.msra.mxu0 %v11883
          %12149 = vmatprep.subr.bf16.mxu0 0
          %12150 = vmatpush1.bf16.msra.mxu0 %v11884
          %12151 = vmatprep.subr.bf16.mxu0 0
          %12152 = vmatpush1.bf16.msra.mxu0 %v11885
          %12153 = vmatprep.subr.bf16.mxu0 0
          %12154 = vmatpush1.bf16.msra.mxu0 %v11886
          %12155 = vmatprep.subr.bf16.mxu0 0
          %12156 = vmatpush1.bf16.msra.mxu0 %v11887
          %12157 = vmatprep.subr.bf16.mxu0 0
          %12158 = vmatpush1.bf16.msra.mxu0 %v11888
          %12159 = vmatprep.subr.bf16.mxu0 0
          %12160 = vmatpush1.bf16.msra.mxu0 %v11889
          %12161 = vmatprep.subr.bf16.mxu0 0
          %12162 = vmatpush1.bf16.msra.mxu0 %v11890
          %12163 = vmatprep.subr.bf16.mxu0 0
          %12164 = vmatpush1.bf16.msra.mxu0 %v11891
          %12165 = vmatprep.subr.bf16.mxu0 0
          %12166 = vmatpush1.bf16.msra.mxu0 %v11892
          %12167 = vmatprep.subr.bf16.mxu0 0
          %12168 = vmatpush1.bf16.msra.mxu0 %v11893
          %12169 = vmatprep.subr.bf16.mxu0 0
          %12170 = vmatpush1.bf16.msra.mxu0 %v11894
          %12171 = vmatprep.mubr.bf16.mxu0 %v11327
          %12172 = vmatmul.mubr.bf16.gmra.mrb[0].mxu0 %v11326
          %v12173 = vpop.f32.mrb[0].mxu0
          %v12174 = vadd.f32 %v12133, %v12173
          %v12175 = vpop.f32.mrb[0].mxu0
          %v12176 = vpop.f32.mrb[0].mxu0
          %v12177 = vadd.f32 %v12136, %v12176
          %v12178 = vpop.f32.mrb[0].mxu0
          %12179 = vdwg.mxu0
          %12180 = vst [vmem:[%s7] sm:$0xff] %v12174
          %12181 = vst [vmem:[%s7 + $0x8] sm:$0xff] %v12177
        $region103: #{mlp_encoder_forward.1} parent=66 // pred_fallthru
          _
        // Predicated region
        $region104: #{mlp_encoder_forward.1} parent=66 // pred_check
          %p12182 = pneg %p194
        $region105: #{mlp_encoder_forward.1} parent=66 // pred_check_branch
          %12184 = sbr.rel (%p12182) target = $region107
        $region106: #{mlp_encoder_forward.1} parent=66 // pred_region
          _
        $region107: #{mlp_encoder_forward.1} parent=66 // pred_fallthru
          _
        // Predicated region
        $region108: #{mlp_encoder_forward.1} parent=66 // pred_check
          %p12185 = pneg %p194
        $region109: #{mlp_encoder_forward.1} parent=66 // pred_check_branch
          %12187 = sbr.rel (%p12185) target = $region111
        $region110: #{mlp_encoder_forward.1} parent=66 // pred_region
          _
        $region111: #{mlp_encoder_forward.1} parent=66 // pred_fallthru
          _
      $region67: #{mlp_encoder_forward.1} parent=5 // pred_fallthru
        _
      %p12188 = scmp.le.s32.totalorder 2, %s19
      // Predicated region
      $region112: #{mlp_encoder_forward.1} parent=5 // pred_check
        %p12189 = pneg %p12188
      $region113: #{mlp_encoder_forward.1} parent=5 // pred_check_branch
        %12191 = sbr.rel (%p12189) target = $region115
      $region114: #{mlp_encoder_forward.1} parent=5 // pred_region
        %s12192 = ssub.s32 %s19, 2
      $region115: #{mlp_encoder_forward.1} parent=5 // pred_fallthru
        _
    $region6: #{mlp_encoder_forward.1} parent=1 // loop_footer
      %s23 = sadd.s32 1, %s19
    $region7: #{mlp_encoder_forward.1} parent=1 // loop_footer_branch
      %18 = sbr.rel target = $region3
    $region8: #{mlp_encoder_forward.1} parent=1 // loop_exit
      _
    %12193 = vsyncpa [#allocation5], 1
    %s12194 = scalar_lea.sflag [#allocation5], 1
    %12195 = vsyncpa %s12194, 1
    %12196 = vsyncpa [#allocation7], 1
    %12197 = vsyncpa [#allocation10], 1
    %12198 = vsyncpa [#allocation13], 1

</llo_original>
